<compile_context>
chip_gen: v6e
topology: v6e:2x2x1
jax: 0.10.0
libtpu: 0.0.40
codegen_flags: <defaults>
</compile_context>

<pallas_src>
import functools
import math

import jax
import jax.numpy as jnp
from jax import lax
from jax.experimental import pallas as pl
from jax.experimental.pallas import tpu as pltpu

LN_EPS = 1e-5  # torch.nn.LayerNorm default


# ------------------------- per-generation configuration ----------------------

@functools.lru_cache(maxsize=None)
def _chip_config():
    """Returns (vmem_limit_bytes, assume_two_tensorcores).

    v5e/v6e: 128 MiB VMEM, single TensorCore  -> big limit, single-step grids OK.
    v7x:      64 MiB VMEM per TC, two TCs      -> smaller limit with headroom and
              keep >= 2 grid steps so dimension_semantics=('parallel',) can
              shard the grid across both cores.
    Falls back to the previous known-good settings if the query is unavailable.
    """
    try:
        cap = int(pltpu.get_tpu_info().vmem_capacity_bytes)
    except Exception:
        return 64 * 1024 * 1024, True
    limit = max(32 * 1024 * 1024, min(int(0.75 * cap), 112 * 1024 * 1024))
    two_tc = cap <= 80 * 1024 * 1024          # <= 64 MiB/TC -> v7x-class megacore
    return limit, two_tc


# ----------------------------- Pallas kernels ------------------------------

def _attn_kernel(src_ref, pos_ref, wqk_ref, bqk_ref, wv_ref, bv_ref,
                 wo_ref, bo_ref, out_ref, *, n_heads, approx_recip):
    """bp_tile sequences of batch-first MHA (query=key=src+pos, value=src) + residual.

    src_ref/pos_ref/out_ref: (bp, S, C) blocks of the (BP, S, C) arrays.
    wqk: (C, 2C) fused [Wq*scale | Wk] projection (in x out), bqk: (1, 2C).
    wv:  (C, C), bv: (1, C).   wo: (C, C), bo: (1, C).
    Matmul operands run in wqk.dtype (f32 or bf16); accumulation stays f32.
    """
    bp, S, C = src_ref.shape
    Dh = C // n_heads
    cdt = wqk_ref.dtype                      # compute dtype for MXU operands

    src = src_ref[...]
    # fused positional-embedding add (kq never materialized in HBM)
    kq2 = (src + pos_ref[...]).astype(cdt).reshape(bp * S, C)
    x2 = src.astype(cdt).reshape(bp * S, C)

    # Fused full-width projections: Q and K from one (C, 2C) matmul, V from (C, C).
    # bp_tile is sized so M = bp*S is large (>= 256 where BP allows) -> good MXU fill.
    qk = jnp.dot(kq2, wqk_ref[...], preferred_element_type=jnp.float32) + bqk_ref[...]
    v = jnp.dot(x2, wv_ref[...], preferred_element_type=jnp.float32) + bv_ref[...]
    qk3 = qk.reshape(bp, S, 2 * C).astype(cdt)
    v3 = v.reshape(bp, S, C).astype(cdt)

    # Per-head scaled-dot-product attention, batched over the bp sequences with a
    # single leading batch dim (the only dot_general batching that Mosaic reliably
    # lowers in-kernel).  1/sqrt(Dh) is already folded into the Q half of wqk/bqk.
    # TODO(synk): fold this loop into one 'bqhd,bkhd->bhqk' / 'bhqk,bkhd->bqhd'
    #   pair once multi-batch-dim dot_general lowers through Mosaic; today the H
    #   lane slices of width Dh cost XLU relayouts.
    # TODO(synk): for production S (hundreds+), tile flash-attention style
    #   (online softmax over K/V chunks in VMEM scratch, bias broadcasts hoisted
    #   out of the chunk loop) instead of materializing the (bp, S, S) scores.
    head_outs = []
    for h in range(n_heads):
        qh = qk3[:, :, h * Dh:(h + 1) * Dh]
        kh = qk3[:, :, C + h * Dh:C + (h + 1) * Dh]
        vh = v3[:, :, h * Dh:(h + 1) * Dh]
        s = jnp.einsum("bqd,bkd->bqk", qh, kh,
                       preferred_element_type=jnp.float32)          # (bp, S, S)
        s = s - jnp.max(s, axis=-1, keepdims=True)
        e = jnp.exp(s)
        denom = jnp.sum(e, axis=-1, keepdims=True)
        if approx_recip:
            # EUP-slot reciprocal: softmax rows sum to 1 only to ~1e-3 relative;
            # numerics choice for the bf16 fast path, exact divide on f32 path.
            prob = e * pl.reciprocal(denom, approx=True)
        else:
            prob = e / denom
        head_outs.append(jnp.einsum("bqk,bkd->bqd", prob.astype(cdt), vh,
                                    preferred_element_type=jnp.float32))

    # Concatenate heads -> one fused (bp*S, C) x (C, C) output projection.
    o = jnp.concatenate(head_outs, axis=-1).astype(cdt).reshape(bp * S, C)
    attn = jnp.dot(o, wo_ref[...], preferred_element_type=jnp.float32) + bo_ref[...]

    out_ref[...] = (src.astype(jnp.float32)
                    + attn.reshape(bp, S, C)).astype(out_ref.dtype)


def _norm_ffn_kernel(x_ref, g1_ref, b1_ref, w1_ref, c1_ref,
                     w2_ref, c2_ref, g2_ref, b2_ref, out_ref):
    """norm1 -> Linear(C,F) -> ReLU -> Linear(F,C) -> residual -> norm2 (per-row).

    Ragged edge blocks may read undefined padded rows; since every op here is
    per-row, the garbage stays confined to masked-out rows.
    """
    cdt = w1_ref.dtype
    x = x_ref[...].astype(jnp.float32)                               # (tm, C)
    mu = jnp.mean(x, axis=-1, keepdims=True)
    var = jnp.mean((x - mu) ** 2, axis=-1, keepdims=True)
    y = (x - mu) * lax.rsqrt(var + LN_EPS) * g1_ref[...] + b1_ref[...]
    h = jnp.dot(y.astype(cdt), w1_ref[...],
                preferred_element_type=jnp.float32) + c1_ref[...]
    h = jnp.maximum(h, 0.0)                                          # relu
    z = y + jnp.dot(h.astype(cdt), w2_ref[...],
                    preferred_element_type=jnp.float32) + c2_ref[...]
    mu2 = jnp.mean(z, axis=-1, keepdims=True)
    var2 = jnp.mean((z - mu2) ** 2, axis=-1, keepdims=True)
    out = (z - mu2) * lax.rsqrt(var2 + LN_EPS) * g2_ref[...] + b2_ref[...]
    out_ref[...] = out.astype(out_ref.dtype)


# ----------------------------- tiling heuristics ----------------------------

def _pick_bp_tile(BP, S, C, act_bytes, w_bytes, budget, require_two_steps):
    """Largest divisor of BP whose per-grid-step VMEM footprint fits `budget`.

    The footprint models: double-buffered src/pos/out blocks at their real
    dtype, the f32 QK/V projection results plus their compute-dtype copies, the
    f32 score temporaries (s/exp/prob), the concatenated head outputs, and the
    (default double-buffered) weight blocks.  The ">= 2 grid steps" constraint
    is applied only on two-TensorCore chips (v7x) so 'parallel' sharding has
    work for both cores; on single-TC chips bp_tile may equal BP.
    """
    def footprint(t):
        m = t * S
        io = 3 * 2 * m * C * act_bytes                       # src/pos/out, x2 buffers
        proj = (2 * m * C + m * C) * (4 + act_bytes)         # qk & v: f32 + cast copy
        scores = 3 * t * S * S * 4                           # s / exp / prob (f32)
        heads = 2 * m * C * 4                                # concat(head_outs) + attn
        weights = 2 * (4 * C * C + 6 * C) * w_bytes          # wqk|wv|wo (+biases), x2
        return io + proj + scores + heads + weights

    best = 1
    for t in range(1, BP + 1):
        if BP % t:
            continue
        if require_two_steps and BP > 1 and BP // t < 2:
            continue
        if footprint(t) <= budget:
            best = t
    return best


def _pick_row_tile(M, two_cores, target=1024):
    """Large HBM-bound row tile (multiple of 8).  Single full-array step on
    single-TC chips; >= 2 steps on v7x so both cores get rows."""
    if not two_cores and M <= target:
        return M
    if M <= 16:
        return M
    t = min(target, max(8, M // (2 if two_cores else 1)))
    return max(8, t - (t % 8))


# ----------------------------- kernel wrappers ------------------------------

def mha_residual(src, pos, p, n_heads):
    """Pallas: src + MultiheadAttention(query=src+pos, key=src+pos, value=src)."""
    BP, S, C = src.shape
    vmem_limit, two_tc = _chip_config()
    bp_t = _pick_bp_tile(BP, S, C,
                         act_bytes=src.dtype.itemsize,
                         w_bytes=p["wqk"].dtype.itemsize,
                         budget=vmem_limit // 2,
                         require_two_steps=two_tc)
    xspec = pl.BlockSpec((bp_t, S, C), lambda b: (b, 0, 0))
    full2d = lambda shp: pl.BlockSpec(shp, lambda b: (0, 0))
    approx = p["wqk"].dtype == jnp.bfloat16
    kernel = functools.partial(_attn_kernel, n_heads=n_heads, approx_recip=approx)
    # TODO(synk): mark the constant weight/bias specs pipeline_mode=pl.Buffered(1)
    #   (they are never re-fetched); negligible at C=128 but buys back VMEM at
    #   production d_model, mostly on v7x.
    # TODO(synk): on v7x, optionally cast the projection weights to fp8 (f32
    #   accumulation) if the MXU slot is the binding unit after the other fixes.
    return pl.pallas_call(
        kernel,
        out_shape=jax.ShapeDtypeStruct((BP, S, C), src.dtype),
        grid=(BP // bp_t,),
        in_specs=[xspec, xspec,
                  full2d((C, 2 * C)), full2d((1, 2 * C)),
                  full2d((C, C)), full2d((1, C)),
                  full2d((C, C)), full2d((1, C))],
        out_specs=xspec,
        compiler_params=pltpu.CompilerParams(
            dimension_semantics=("parallel",),
            vmem_limit_bytes=vmem_limit),
    )(src, pos, p["wqk"], p["bqk"], p["wv_t"], p["bv_row"], p["wo_t"], p["bo_row"])


def norm_ffn(x, p):
    """Pallas: norm2(norm1(x) + linear2(relu(linear1(norm1(x)))))."""
    M, C = x.shape
    F = p["w1_t"].shape[1]
    vmem_limit, two_tc = _chip_config()
    tm = _pick_row_tile(M, two_tc)
    row = lambda n: pl.BlockSpec((1, n), lambda i: (0, 0))
    return pl.pallas_call(
        _norm_ffn_kernel,
        out_shape=jax.ShapeDtypeStruct((M, C), x.dtype),
        grid=(pl.cdiv(M, tm),),                 # ragged tail -> masked edge block
        in_specs=[
            pl.BlockSpec((tm, C), lambda i: (i, 0)),
            row(C), row(C),
            pl.BlockSpec((C, F), lambda i: (0, 0)), row(F),
            pl.BlockSpec((F, C), lambda i: (0, 0)), row(C),
            row(C), row(C),
        ],
        out_specs=pl.BlockSpec((tm, C), lambda i: (i, 0)),
        compiler_params=pltpu.CompilerParams(
            dimension_semantics=("parallel",),
            vmem_limit_bytes=vmem_limit),
    )(x, p["g1_row"], p["b1_row"], p["w1_t"], p["c1_row"],
      p["w2_t"], p["c2_row"], p["g2_row"], p["b2_row"])


# ----------------------------- pure-JAX reference ---------------------------

def _layernorm_ref(x, g, b):
    mu = x.mean(-1, keepdims=True)
    var = ((x - mu) ** 2).mean(-1, keepdims=True)
    return (x - mu) / jnp.sqrt(var + LN_EPS) * g + b


def _mha_residual_ref(kq, src, p, n_heads):
    BP, S, C = kq.shape
    Dh = C // n_heads
    Wq, Wk, Wv = jnp.split(p["in_proj_w"], 3, axis=0)
    bq, bk, bv = jnp.split(p["in_proj_b"], 3, axis=0)
    q = (kq @ Wq.T + bq).reshape(BP, S, n_heads, Dh).transpose(0, 2, 1, 3)
    k = (kq @ Wk.T + bk).reshape(BP, S, n_heads, Dh).transpose(0, 2, 1, 3)
    v = (src @ Wv.T + bv).reshape(BP, S, n_heads, Dh).transpose(0, 2, 1, 3)
    s = jnp.einsum("bhqd,bhkd->bhqk", q, k) / math.sqrt(Dh)
    a = jax.nn.softmax(s, axis=-1)
    o = jnp.einsum("bhqk,bhkd->bhqd", a, v).transpose(0, 2, 1, 3).reshape(BP, S, C)
    o = o @ p["out_proj_w"].T + p["out_proj_b"]
    return src + o


def _norm_ffn_ref(x, p):
    y = _layernorm_ref(x, p["ln1_g"], p["ln1_b"])
    h = jnp.maximum(y @ p["lin1_w"].T + p["lin1_b"], 0.0)
    z = y + h @ p["lin2_w"].T + p["lin2_b"]
    return _layernorm_ref(z, p["ln2_g"], p["ln2_b"])


# ----------------------------- full forward (glue) ---------------------------

def temporal_attention_forward(src, pos, patch_mask_indices, params, n_heads,
                               use_pallas=True):
    BT, LHW, C = src.shape
    B, T = pos.shape[:2]
    P, N = patch_mask_indices.shape
    assert B * T == BT and P * N == LHW

    # '(B T) LHW C -> LHW T B C'  /  'B T LHW C -> LHW T B C'
    # The whole forward is jitted by the caller so this gather/transpose glue
    # fuses into single HBM passes.
    # TODO(synk): move the patch gather (and the argsort inverse write-back)
    #   into the attention kernel via PrefetchScalarGridSpec scalar-prefetched
    #   indices + data-dependent index_maps to drop the remaining extra copies.
    src_r = src.reshape(B, T, LHW, C).transpose(2, 1, 0, 3)
    pos_r = pos.transpose(2, 1, 0, 3)
    patch_indices = patch_mask_indices.reshape(-1)            # (P*N,)
    src_g = jnp.take(src_r, patch_indices, axis=0)
    pos_g = jnp.take(pos_r, patch_indices, axis=0)
    # '(P N) T B C -> (B P) (N T) C'
    src_s = src_g.reshape(P, N, T, B, C).transpose(3, 0, 1, 2, 4).reshape(B * P, N * T, C)
    pos_s = pos_g.reshape(P, N, T, B, C).transpose(3, 0, 1, 2, 4).reshape(B * P, N * T, C)

    # TODO(synk): the >500-token chunked_self_attention path is mathematically
    # identical (pure batch chunking) and is folded into the single kernel call.
    if use_pallas:
        attn_res = mha_residual(src_s, pos_s, params, n_heads)  # kq add fused in-kernel
    else:
        attn_res = _mha_residual_ref(src_s + pos_s, src_s, params, n_heads)

    # '(B P) (N T) C -> (P N) (B T) C'
    x = attn_res.reshape(B, P, N, T, C).transpose(1, 2, 0, 3, 4).reshape(P * N, B * T, C)
    reverse_indices = jnp.argsort(patch_indices)
    x = jnp.take(x, reverse_indices, axis=0)                  # undo patch gather
    x = x.transpose(1, 0, 2)                                  # 'LHW BT C -> BT LHW C'

    flat = x.reshape(BT * LHW, C)
    out = norm_ffn(flat, params) if use_pallas else _norm_ffn_ref(flat, params)
    return out.reshape(BT, LHW, C)


# ----------------------------- parameters ------------------------------------

def init_params(key, d_model, d_ffn, n_heads):
    C, F, H = d_model, d_ffn, n_heads
    Dh = C // H
    ks = jax.random.split(key, 12)
    p = {
        # PyTorch-layout parameters (deterministic synthetic init)
        "in_proj_w": 0.05 * jax.random.normal(ks[0], (3 * C, C), jnp.float32),
        "in_proj_b": 0.05 * jax.random.normal(ks[1], (3 * C,), jnp.float32),
        "out_proj_w": 0.05 * jax.random.normal(ks[2], (C, C), jnp.float32),
        "out_proj_b": 0.05 * jax.random.normal(ks[3], (C,), jnp.float32),
        "lin1_w": 0.05 * jax.random.normal(ks[4], (F, C), jnp.float32),
        "lin1_b": 0.05 * jax.random.normal(ks[5], (F,), jnp.float32),
        "lin2_w": 0.05 * jax.random.normal(ks[6], (C, F), jnp.float32),
        "lin2_b": 0.05 * jax.random.normal(ks[7], (C,), jnp.float32),
        "ln1_g": 1.0 + 0.1 * jax.random.normal(ks[8], (C,), jnp.float32),
        "ln1_b": 0.05 * jax.random.normal(ks[9], (C,), jnp.float32),
        "ln2_g": 1.0 + 0.1 * jax.random.normal(ks[10], (C,), jnp.float32),
        "ln2_b": 0.05 * jax.random.normal(ks[11], (C,), jnp.float32),
    }
    # Kernel-layout views (in x out), Q|K fused and 1/sqrt(Dh) folded into Q.
    Wq, Wk, Wv = jnp.split(p["in_proj_w"], 3, axis=0)          # each (C, C)
    bq, bk, bv = jnp.split(p["in_proj_b"], 3, axis=0)
    scale = 1.0 / math.sqrt(Dh)
    p.update({
        "wqk": jnp.concatenate([Wq.T * scale, Wk.T], axis=1),   # (C, 2C)
        "bqk": jnp.concatenate([bq * scale, bk]).reshape(1, 2 * C),
        "wv_t": Wv.T, "bv_row": bv.reshape(1, C),
        "wo_t": p["out_proj_w"].T, "bo_row": p["out_proj_b"].reshape(1, C),
        "w1_t": p["lin1_w"].T, "c1_row": p["lin1_b"].reshape(1, F),
        "w2_t": p["lin2_w"].T, "c2_row": p["lin2_b"].reshape(1, C),
        "g1_row": p["ln1_g"].reshape(1, C), "b1_row": p["ln1_b"].reshape(1, C),
        "g2_row": p["ln2_g"].reshape(1, C), "b2_row": p["ln2_b"].reshape(1, C),
    })
    return p


def with_compute_dtype(p, dtype):
    """Cast the big matmul weights to `dtype` (bf16 fast path); biases and
    LayerNorm params stay f32, accumulation inside the kernels stays f32."""
    q = dict(p)
    for k in ("wqk", "wv_t", "wo_t", "w1_t", "w2_t"):
        q[k] = p[k].astype(dtype)
    return q


# ----------------------------- main -------------------------------------------

if __name__ == "__main__":
    # Small shapes consistent with the module: d_model=128, n_heads=4, d_ffn=256,
    # B=2, T=4, L*H*W=32, patches P=4 of area N=8 (P*N == L*H*W), seq S = N*T = 32.
    B, T, LHW, C = 2, 4, 32, 128
    n_heads, d_ffn = 4, 256
    P, N = 4, 8

    key = jax.random.PRNGKey(0)
    k_src, k_pos, k_idx, k_par = jax.random.split(key, 4)
    src = jax.random.normal(k_src, (B * T, LHW, C), jnp.float32)
    pos = jax.random.normal(k_pos, (B, T, LHW, C), jnp.float32)
    patch_mask_indices = jax.random.permutation(k_idx, LHW).reshape(P, N).astype(jnp.int32)
    params = init_params(k_par, C, d_ffn, n_heads)

    fwd = jax.jit(temporal_attention_forward,
                  static_argnames=("n_heads", "use_pallas"))

    # f32 path (strict check against the pure-JAX reference)
    out = fwd(src, pos, patch_mask_indices, params, n_heads=n_heads, use_pallas=True)
    out = jax.block_until_ready(out)
    ref = fwd(src, pos, patch_mask_indices, params, n_heads=n_heads, use_pallas=False)
    ref = jax.block_until_ready(ref)
    assert out.shape == (B * T, LHW, C), out.shape
    assert jnp.allclose(out, ref, atol=5e-4, rtol=5e-4), float(jnp.abs(out - ref).max())

    # bf16 weights/activations, f32 accumulation (perf path); looser check.
    p_bf16 = with_compute_dtype(params, jnp.bfloat16)
    out_bf16 = fwd(src.astype(jnp.bfloat16), pos.astype(jnp.bfloat16),
                   patch_mask_indices, p_bf16, n_heads=n_heads, use_pallas=True)
    out_bf16 = jax.block_until_ready(out_bf16).astype(jnp.float32)
    assert jnp.allclose(out_bf16, ref, atol=2e-1, rtol=2e-1), \
        float(jnp.abs(out_bf16 - ref).max())

    print("KERNEL_OK")
</pallas_src>

<mosaic_0001>
module attributes {stable_mosaic.version = 11 : i64} {
  func.func @_attn_kernel(%arg0: i32, %arg1: memref<4x32x128xf32, #tpu.memory_space<vmem>>, %arg2: memref<4x32x128xf32, #tpu.memory_space<vmem>>, %arg3: memref<128x256xf32, #tpu.memory_space<vmem>>, %arg4: memref<1x256xf32, #tpu.memory_space<vmem>>, %arg5: memref<128x128xf32, #tpu.memory_space<vmem>>, %arg6: memref<1x128xf32, #tpu.memory_space<vmem>>, %arg7: memref<128x128xf32, #tpu.memory_space<vmem>>, %arg8: memref<1x128xf32, #tpu.memory_space<vmem>>, %arg9: memref<4x32x128xf32, #tpu.memory_space<vmem>>) attributes {dimension_semantics = [#tpu.dimension_semantics<parallel>], iteration_bounds = array<i64: 2>, scalar_prefetch = 0 : i64, scratch_operands = 0 : i64, tpu.core_type = #tpu.core_type<tc>, window_params = [{transform_indices = @transform_0, window_bounds = array<i64: 4, 32, 128>}, {transform_indices = @transform_1, window_bounds = array<i64: 4, 32, 128>}, {pipeline_mode = #tpu.pipeline_mode<synchronous>, transform_indices = @transform_2, window_bounds = array<i64: 128, 256>}, {pipeline_mode = #tpu.pipeline_mode<synchronous>, transform_indices = @transform_3, window_bounds = array<i64: 1, 256>}, {pipeline_mode = #tpu.pipeline_mode<synchronous>, transform_indices = @transform_4, window_bounds = array<i64: 128, 128>}, {pipeline_mode = #tpu.pipeline_mode<synchronous>, transform_indices = @transform_5, window_bounds = array<i64: 1, 128>}, {pipeline_mode = #tpu.pipeline_mode<synchronous>, transform_indices = @transform_6, window_bounds = array<i64: 128, 128>}, {pipeline_mode = #tpu.pipeline_mode<synchronous>, transform_indices = @transform_7, window_bounds = array<i64: 1, 128>}, {transform_indices = @transform_8, window_bounds = array<i64: 4, 32, 128>}]} {
    %c0 = arith.constant 0 : index
    %c0_0 = arith.constant 0 : index
    %c0_1 = arith.constant 0 : index
    %0 = vector.load %arg1[%c0, %c0_0, %c0_1] : memref<4x32x128xf32, #tpu.memory_space<vmem>>, vector<4x32x128xf32>
    %c0_2 = arith.constant 0 : index
    %c0_3 = arith.constant 0 : index
    %c0_4 = arith.constant 0 : index
    %1 = vector.load %arg2[%c0_2, %c0_3, %c0_4] : memref<4x32x128xf32, #tpu.memory_space<vmem>>, vector<4x32x128xf32>
    %2 = arith.addf %0, %1 : vector<4x32x128xf32>
    %3 = vector.shape_cast %2 : vector<4x32x128xf32> to vector<128x128xf32>
    %4 = vector.shape_cast %0 : vector<4x32x128xf32> to vector<128x128xf32>
    %c0_5 = arith.constant 0 : index
    %c0_6 = arith.constant 0 : index
    %5 = vector.load %arg3[%c0_5, %c0_6] : memref<128x256xf32, #tpu.memory_space<vmem>>, vector<128x256xf32>
    %cst = arith.constant dense<0.000000e+00> : vector<128x256xf32>
    %6 = tpu.matmul %3, %5, %cst {dimension_numbers = #tpu.dot_dimension_numbers<[1], [0], [0], [1], [0, 0, 1, 1], [], []>} : vector<128x128xf32>, vector<128x256xf32>, vector<128x256xf32> -> vector<128x256xf32>
    %c0_7 = arith.constant 0 : index
    %c0_8 = arith.constant 0 : index
    %7 = vector.load %arg4[%c0_7, %c0_8] : memref<1x256xf32, #tpu.memory_space<vmem>>, vector<1x256xf32>
    %8 = vector.broadcast %7 : vector<1x256xf32> to vector<128x256xf32>
    %9 = arith.addf %6, %8 : vector<128x256xf32>
    %c0_9 = arith.constant 0 : index
    %c0_10 = arith.constant 0 : index
    %10 = vector.load %arg5[%c0_9, %c0_10] : memref<128x128xf32, #tpu.memory_space<vmem>>, vector<128x128xf32>
    %cst_11 = arith.constant dense<0.000000e+00> : vector<128x128xf32>
    %11 = tpu.matmul %4, %10, %cst_11 {dimension_numbers = #tpu.dot_dimension_numbers<[1], [0], [0], [1], [0, 0, 1, 1], [], []>} : vector<128x128xf32>, vector<128x128xf32>, vector<128x128xf32> -> vector<128x128xf32>
    %c0_12 = arith.constant 0 : index
    %c0_13 = arith.constant 0 : index
    %12 = vector.load %arg6[%c0_12, %c0_13] : memref<1x128xf32, #tpu.memory_space<vmem>>, vector<1x128xf32>
    %13 = vector.broadcast %12 : vector<1x128xf32> to vector<128x128xf32>
    %14 = arith.addf %11, %13 : vector<128x128xf32>
    %15 = vector.shape_cast %9 : vector<128x256xf32> to vector<4x32x256xf32>
    %16 = vector.shape_cast %14 : vector<128x128xf32> to vector<4x32x128xf32>
    %17 = vector.extract_strided_slice %15 {offsets = [0, 0, 0], sizes = [4, 32, 32], strides = [1, 1, 1]} : vector<4x32x256xf32> to vector<4x32x32xf32>
    %18 = vector.extract_strided_slice %15 {offsets = [0, 0, 128], sizes = [4, 32, 32], strides = [1, 1, 1]} : vector<4x32x256xf32> to vector<4x32x32xf32>
    %19 = vector.extract_strided_slice %16 {offsets = [0, 0, 0], sizes = [4, 32, 32], strides = [1, 1, 1]} : vector<4x32x128xf32> to vector<4x32x32xf32>
    "tpu.trace_start"() <{level = 10 : i32, message = "bqd,bkd->bqk"}> : () -> ()
    %cst_14 = arith.constant dense<0.000000e+00> : vector<4x32x32xf32>
    %20 = tpu.matmul %17, %18, %cst_14 {dimension_numbers = #tpu.dot_dimension_numbers<[2], [2], [1], [1], [0, 0, 0, 1, 1, 1], [0], [0]>} : vector<4x32x32xf32>, vector<4x32x32xf32>, vector<4x32x32xf32> -> vector<4x32x32xf32>
    "tpu.trace_stop"() : () -> ()
    %cst_15 = arith.constant dense<0xFF800000> : vector<4x32xf32>
    %21 = vector.multi_reduction <maximumf>, %20, %cst_15 [2] : vector<4x32x32xf32> to vector<4x32xf32>
    %22 = vector.shape_cast %21 : vector<4x32xf32> to vector<4x32x1xf32>
    %23 = vector.broadcast %22 : vector<4x32x1xf32> to vector<4x32x32xf32>
    %24 = arith.subf %20, %23 : vector<4x32x32xf32>
    %25 = math.exp %24 : vector<4x32x32xf32>
    %cst_16 = arith.constant dense<0.000000e+00> : vector<4x32xf32>
    %26 = vector.multi_reduction <add>, %25, %cst_16 [2] : vector<4x32x32xf32> to vector<4x32xf32>
    %27 = vector.shape_cast %26 : vector<4x32xf32> to vector<4x32x1xf32>
    %28 = vector.broadcast %27 : vector<4x32x1xf32> to vector<4x32x32xf32>
    %29 = arith.divf %25, %28 : vector<4x32x32xf32>
    "tpu.trace_start"() <{level = 10 : i32, message = "bqk,bkd->bqd"}> : () -> ()
    %cst_17 = arith.constant dense<0.000000e+00> : vector<4x32x32xf32>
    %30 = tpu.matmul %29, %19, %cst_17 {dimension_numbers = #tpu.dot_dimension_numbers<[2], [1], [1], [2], [0, 0, 0, 1, 1, 2], [0], [0]>} : vector<4x32x32xf32>, vector<4x32x32xf32>, vector<4x32x32xf32> -> vector<4x32x32xf32>
    "tpu.trace_stop"() : () -> ()
    %31 = vector.extract_strided_slice %15 {offsets = [0, 0, 32], sizes = [4, 32, 32], strides = [1, 1, 1]} : vector<4x32x256xf32> to vector<4x32x32xf32>
    %32 = vector.extract_strided_slice %15 {offsets = [0, 0, 160], sizes = [4, 32, 32], strides = [1, 1, 1]} : vector<4x32x256xf32> to vector<4x32x32xf32>
    %33 = vector.extract_strided_slice %16 {offsets = [0, 0, 32], sizes = [4, 32, 32], strides = [1, 1, 1]} : vector<4x32x128xf32> to vector<4x32x32xf32>
    "tpu.trace_start"() <{level = 10 : i32, message = "bqd,bkd->bqk"}> : () -> ()
    %cst_18 = arith.constant dense<0.000000e+00> : vector<4x32x32xf32>
    %34 = tpu.matmul %31, %32, %cst_18 {dimension_numbers = #tpu.dot_dimension_numbers<[2], [2], [1], [1], [0, 0, 0, 1, 1, 1], [0], [0]>} : vector<4x32x32xf32>, vector<4x32x32xf32>, vector<4x32x32xf32> -> vector<4x32x32xf32>
    "tpu.trace_stop"() : () -> ()
    %cst_19 = arith.constant dense<0xFF800000> : vector<4x32xf32>
    %35 = vector.multi_reduction <maximumf>, %34, %cst_19 [2] : vector<4x32x32xf32> to vector<4x32xf32>
    %36 = vector.shape_cast %35 : vector<4x32xf32> to vector<4x32x1xf32>
    %37 = vector.broadcast %36 : vector<4x32x1xf32> to vector<4x32x32xf32>
    %38 = arith.subf %34, %37 : vector<4x32x32xf32>
    %39 = math.exp %38 : vector<4x32x32xf32>
    %cst_20 = arith.constant dense<0.000000e+00> : vector<4x32xf32>
    %40 = vector.multi_reduction <add>, %39, %cst_20 [2] : vector<4x32x32xf32> to vector<4x32xf32>
    %41 = vector.shape_cast %40 : vector<4x32xf32> to vector<4x32x1xf32>
    %42 = vector.broadcast %41 : vector<4x32x1xf32> to vector<4x32x32xf32>
    %43 = arith.divf %39, %42 : vector<4x32x32xf32>
    "tpu.trace_start"() <{level = 10 : i32, message = "bqk,bkd->bqd"}> : () -> ()
    %cst_21 = arith.constant dense<0.000000e+00> : vector<4x32x32xf32>
    %44 = tpu.matmul %43, %33, %cst_21 {dimension_numbers = #tpu.dot_dimension_numbers<[2], [1], [1], [2], [0, 0, 0, 1, 1, 2], [0], [0]>} : vector<4x32x32xf32>, vector<4x32x32xf32>, vector<4x32x32xf32> -> vector<4x32x32xf32>
    "tpu.trace_stop"() : () -> ()
    %45 = vector.extract_strided_slice %15 {offsets = [0, 0, 64], sizes = [4, 32, 32], strides = [1, 1, 1]} : vector<4x32x256xf32> to vector<4x32x32xf32>
    %46 = vector.extract_strided_slice %15 {offsets = [0, 0, 192], sizes = [4, 32, 32], strides = [1, 1, 1]} : vector<4x32x256xf32> to vector<4x32x32xf32>
    %47 = vector.extract_strided_slice %16 {offsets = [0, 0, 64], sizes = [4, 32, 32], strides = [1, 1, 1]} : vector<4x32x128xf32> to vector<4x32x32xf32>
    "tpu.trace_start"() <{level = 10 : i32, message = "bqd,bkd->bqk"}> : () -> ()
    %cst_22 = arith.constant dense<0.000000e+00> : vector<4x32x32xf32>
    %48 = tpu.matmul %45, %46, %cst_22 {dimension_numbers = #tpu.dot_dimension_numbers<[2], [2], [1], [1], [0, 0, 0, 1, 1, 1], [0], [0]>} : vector<4x32x32xf32>, vector<4x32x32xf32>, vector<4x32x32xf32> -> vector<4x32x32xf32>
    "tpu.trace_stop"() : () -> ()
    %cst_23 = arith.constant dense<0xFF800000> : vector<4x32xf32>
    %49 = vector.multi_reduction <maximumf>, %48, %cst_23 [2] : vector<4x32x32xf32> to vector<4x32xf32>
    %50 = vector.shape_cast %49 : vector<4x32xf32> to vector<4x32x1xf32>
    %51 = vector.broadcast %50 : vector<4x32x1xf32> to vector<4x32x32xf32>
    %52 = arith.subf %48, %51 : vector<4x32x32xf32>
    %53 = math.exp %52 : vector<4x32x32xf32>
    %cst_24 = arith.constant dense<0.000000e+00> : vector<4x32xf32>
    %54 = vector.multi_reduction <add>, %53, %cst_24 [2] : vector<4x32x32xf32> to vector<4x32xf32>
    %55 = vector.shape_cast %54 : vector<4x32xf32> to vector<4x32x1xf32>
    %56 = vector.broadcast %55 : vector<4x32x1xf32> to vector<4x32x32xf32>
    %57 = arith.divf %53, %56 : vector<4x32x32xf32>
    "tpu.trace_start"() <{level = 10 : i32, message = "bqk,bkd->bqd"}> : () -> ()
    %cst_25 = arith.constant dense<0.000000e+00> : vector<4x32x32xf32>
    %58 = tpu.matmul %57, %47, %cst_25 {dimension_numbers = #tpu.dot_dimension_numbers<[2], [1], [1], [2], [0, 0, 0, 1, 1, 2], [0], [0]>} : vector<4x32x32xf32>, vector<4x32x32xf32>, vector<4x32x32xf32> -> vector<4x32x32xf32>
    "tpu.trace_stop"() : () -> ()
    %59 = vector.extract_strided_slice %15 {offsets = [0, 0, 96], sizes = [4, 32, 32], strides = [1, 1, 1]} : vector<4x32x256xf32> to vector<4x32x32xf32>
    %60 = vector.extract_strided_slice %15 {offsets = [0, 0, 224], sizes = [4, 32, 32], strides = [1, 1, 1]} : vector<4x32x256xf32> to vector<4x32x32xf32>
    %61 = vector.extract_strided_slice %16 {offsets = [0, 0, 96], sizes = [4, 32, 32], strides = [1, 1, 1]} : vector<4x32x128xf32> to vector<4x32x32xf32>
    "tpu.trace_start"() <{level = 10 : i32, message = "bqd,bkd->bqk"}> : () -> ()
    %cst_26 = arith.constant dense<0.000000e+00> : vector<4x32x32xf32>
    %62 = tpu.matmul %59, %60, %cst_26 {dimension_numbers = #tpu.dot_dimension_numbers<[2], [2], [1], [1], [0, 0, 0, 1, 1, 1], [0], [0]>} : vector<4x32x32xf32>, vector<4x32x32xf32>, vector<4x32x32xf32> -> vector<4x32x32xf32>
    "tpu.trace_stop"() : () -> ()
    %cst_27 = arith.constant dense<0xFF800000> : vector<4x32xf32>
    %63 = vector.multi_reduction <maximumf>, %62, %cst_27 [2] : vector<4x32x32xf32> to vector<4x32xf32>
    %64 = vector.shape_cast %63 : vector<4x32xf32> to vector<4x32x1xf32>
    %65 = vector.broadcast %64 : vector<4x32x1xf32> to vector<4x32x32xf32>
    %66 = arith.subf %62, %65 : vector<4x32x32xf32>
    %67 = math.exp %66 : vector<4x32x32xf32>
    %cst_28 = arith.constant dense<0.000000e+00> : vector<4x32xf32>
    %68 = vector.multi_reduction <add>, %67, %cst_28 [2] : vector<4x32x32xf32> to vector<4x32xf32>
    %69 = vector.shape_cast %68 : vector<4x32xf32> to vector<4x32x1xf32>
    %70 = vector.broadcast %69 : vector<4x32x1xf32> to vector<4x32x32xf32>
    %71 = arith.divf %67, %70 : vector<4x32x32xf32>
    "tpu.trace_start"() <{level = 10 : i32, message = "bqk,bkd->bqd"}> : () -> ()
    %cst_29 = arith.constant dense<0.000000e+00> : vector<4x32x32xf32>
    %72 = tpu.matmul %71, %61, %cst_29 {dimension_numbers = #tpu.dot_dimension_numbers<[2], [1], [1], [2], [0, 0, 0, 1, 1, 2], [0], [0]>} : vector<4x32x32xf32>, vector<4x32x32xf32>, vector<4x32x32xf32> -> vector<4x32x32xf32>
    "tpu.trace_stop"() : () -> ()
    %73 = tpu.concatenate %30, %44, %58, %72 in 2 : vector<4x32x32xf32>, vector<4x32x32xf32>, vector<4x32x32xf32>, vector<4x32x32xf32> -> vector<4x32x128xf32>
    %74 = vector.shape_cast %73 : vector<4x32x128xf32> to vector<128x128xf32>
    %c0_30 = arith.constant 0 : index
    %c0_31 = arith.constant 0 : index
    %75 = vector.load %arg7[%c0_30, %c0_31] : memref<128x128xf32, #tpu.memory_space<vmem>>, vector<128x128xf32>
    %cst_32 = arith.constant dense<0.000000e+00> : vector<128x128xf32>
    %76 = tpu.matmul %74, %75, %cst_32 {dimension_numbers = #tpu.dot_dimension_numbers<[1], [0], [0], [1], [0, 0, 1, 1], [], []>} : vector<128x128xf32>, vector<128x128xf32>, vector<128x128xf32> -> vector<128x128xf32>
    %c0_33 = arith.constant 0 : index
    %c0_34 = arith.constant 0 : index
    %77 = vector.load %arg8[%c0_33, %c0_34] : memref<1x128xf32, #tpu.memory_space<vmem>>, vector<1x128xf32>
    %78 = vector.broadcast %77 : vector<1x128xf32> to vector<128x128xf32>
    %79 = arith.addf %76, %78 : vector<128x128xf32>
    %80 = vector.shape_cast %79 : vector<128x128xf32> to vector<4x32x128xf32>
    %81 = arith.addf %0, %80 : vector<4x32x128xf32>
    %c0_35 = arith.constant 0 : index
    %c0_36 = arith.constant 0 : index
    %c0_37 = arith.constant 0 : index
    %82 = vector.load %arg9[%c0_35, %c0_36, %c0_37] : memref<4x32x128xf32, #tpu.memory_space<vmem>>, vector<4x32x128xf32>
    tpu.vector_store %arg9[%c0_35, %c0_36, %c0_37], %81 {strides = array<i32>} : memref<4x32x128xf32, #tpu.memory_space<vmem>>, vector<4x32x128xf32>,
    return
  }
  func.func @transform_0(%arg0: i32) -> (i32, i32, i32) {
    %c0_i32 = arith.constant 0 : i32
    %c0_i32_0 = arith.constant 0 : i32
    %c0_i32_1 = arith.constant 0 : i32
    return %arg0, %c0_i32, %c0_i32_0 : i32, i32, i32
  }
  func.func @transform_1(%arg0: i32) -> (i32, i32, i32) {
    %c0_i32 = arith.constant 0 : i32
    %c0_i32_0 = arith.constant 0 : i32
    %c0_i32_1 = arith.constant 0 : i32
    return %arg0, %c0_i32, %c0_i32_0 : i32, i32, i32
  }
  func.func @transform_2(%arg0: i32) -> (i32, i32) {
    %c0_i32 = arith.constant 0 : i32
    %c0_i32_0 = arith.constant 0 : i32
    %c0_i32_1 = arith.constant 0 : i32
    return %c0_i32, %c0_i32_0 : i32, i32
  }
  func.func @transform_3(%arg0: i32) -> (i32, i32) {
    %c0_i32 = arith.constant 0 : i32
    %c0_i32_0 = arith.constant 0 : i32
    %c0_i32_1 = arith.constant 0 : i32
    return %c0_i32, %c0_i32_0 : i32, i32
  }
  func.func @transform_4(%arg0: i32) -> (i32, i32) {
    %c0_i32 = arith.constant 0 : i32
    %c0_i32_0 = arith.constant 0 : i32
    %c0_i32_1 = arith.constant 0 : i32
    return %c0_i32, %c0_i32_0 : i32, i32
  }
  func.func @transform_5(%arg0: i32) -> (i32, i32) {
    %c0_i32 = arith.constant 0 : i32
    %c0_i32_0 = arith.constant 0 : i32
    %c0_i32_1 = arith.constant 0 : i32
    return %c0_i32, %c0_i32_0 : i32, i32
  }
  func.func @transform_6(%arg0: i32) -> (i32, i32) {
    %c0_i32 = arith.constant 0 : i32
    %c0_i32_0 = arith.constant 0 : i32
    %c0_i32_1 = arith.constant 0 : i32
    return %c0_i32, %c0_i32_0 : i32, i32
  }
  func.func @transform_7(%arg0: i32) -> (i32, i32) {
    %c0_i32 = arith.constant 0 : i32
    %c0_i32_0 = arith.constant 0 : i32
    %c0_i32_1 = arith.constant 0 : i32
    return %c0_i32, %c0_i32_0 : i32, i32
  }
  func.func @transform_8(%arg0: i32) -> (i32, i32, i32) {
    %c0_i32 = arith.constant 0 : i32
    %c0_i32_0 = arith.constant 0 : i32
    %c0_i32_1 = arith.constant 0 : i32
    return %arg0, %c0_i32, %c0_i32_0 : i32, i32, i32
  }
}

module attributes {stable_mosaic.version = 11 : i64} {
  func.func @_norm_ffn_kernel(%arg0: i32, %arg1: memref<128x128xf32, #tpu.memory_space<vmem>>, %arg2: memref<1x128xf32, #tpu.memory_space<vmem>>, %arg3: memref<1x128xf32, #tpu.memory_space<vmem>>, %arg4: memref<128x256xf32, #tpu.memory_space<vmem>>, %arg5: memref<1x256xf32, #tpu.memory_space<vmem>>, %arg6: memref<256x128xf32, #tpu.memory_space<vmem>>, %arg7: memref<1x128xf32, #tpu.memory_space<vmem>>, %arg8: memref<1x128xf32, #tpu.memory_space<vmem>>, %arg9: memref<1x128xf32, #tpu.memory_space<vmem>>, %arg10: memref<128x128xf32, #tpu.memory_space<vmem>>) attributes {dimension_semantics = [#tpu.dimension_semantics<parallel>], iteration_bounds = array<i64: 2>, scalar_prefetch = 0 : i64, scratch_operands = 0 : i64, tpu.core_type = #tpu.core_type<tc>, window_params = [{transform_indices = @transform_0, window_bounds = array<i64: 128, 128>}, {pipeline_mode = #tpu.pipeline_mode<synchronous>, transform_indices = @transform_1, window_bounds = array<i64: 1, 128>}, {pipeline_mode = #tpu.pipeline_mode<synchronous>, transform_indices = @transform_2, window_bounds = array<i64: 1, 128>}, {pipeline_mode = #tpu.pipeline_mode<synchronous>, transform_indices = @transform_3, window_bounds = array<i64: 128, 256>}, {pipeline_mode = #tpu.pipeline_mode<synchronous>, transform_indices = @transform_4, window_bounds = array<i64: 1, 256>}, {pipeline_mode = #tpu.pipeline_mode<synchronous>, transform_indices = @transform_5, window_bounds = array<i64: 256, 128>}, {pipeline_mode = #tpu.pipeline_mode<synchronous>, transform_indices = @transform_6, window_bounds = array<i64: 1, 128>}, {pipeline_mode = #tpu.pipeline_mode<synchronous>, transform_indices = @transform_7, window_bounds = array<i64: 1, 128>}, {pipeline_mode = #tpu.pipeline_mode<synchronous>, transform_indices = @transform_8, window_bounds = array<i64: 1, 128>}, {transform_indices = @transform_9, window_bounds = array<i64: 128, 128>}]} {
    %c0 = arith.constant 0 : index
    %c0_0 = arith.constant 0 : index
    %0 = vector.load %arg1[%c0, %c0_0] : memref<128x128xf32, #tpu.memory_space<vmem>>, vector<128x128xf32>
    %cst = arith.constant dense<0.000000e+00> : vector<128xf32>
    %1 = vector.multi_reduction <add>, %0, %cst [1] : vector<128x128xf32> to vector<128xf32>
    %2 = vector.shape_cast %1 : vector<128xf32> to vector<128x1xf32>
    %cst_1 = arith.constant 1.280000e+02 : f32
    %3 = vector.broadcast %cst_1 : f32 to vector<128x1xf32>
    %4 = arith.divf %2, %3 : vector<128x1xf32>
    %5 = vector.broadcast %4 : vector<128x1xf32> to vector<128x128xf32>
    %6 = arith.subf %0, %5 : vector<128x128xf32>
    %7 = arith.mulf %6, %6 : vector<128x128xf32>
    %cst_2 = arith.constant dense<0.000000e+00> : vector<128xf32>
    %8 = vector.multi_reduction <add>, %7, %cst_2 [1] : vector<128x128xf32> to vector<128xf32>
    %9 = vector.shape_cast %8 : vector<128xf32> to vector<128x1xf32>
    %cst_3 = arith.constant 1.280000e+02 : f32
    %10 = vector.broadcast %cst_3 : f32 to vector<128x1xf32>
    %11 = arith.divf %9, %10 : vector<128x1xf32>
    %12 = vector.broadcast %4 : vector<128x1xf32> to vector<128x128xf32>
    %13 = arith.subf %0, %12 : vector<128x128xf32>
    %cst_4 = arith.constant 9.99999974E-6 : f32
    %14 = vector.broadcast %cst_4 : f32 to vector<128x1xf32>
    %15 = arith.addf %11, %14 : vector<128x1xf32>
    %16 = math.rsqrt %15 : vector<128x1xf32>
    %17 = vector.broadcast %16 : vector<128x1xf32> to vector<128x128xf32>
    %18 = arith.mulf %13, %17 : vector<128x128xf32>
    %c0_5 = arith.constant 0 : index
    %c0_6 = arith.constant 0 : index
    %19 = vector.load %arg2[%c0_5, %c0_6] : memref<1x128xf32, #tpu.memory_space<vmem>>, vector<1x128xf32>
    %20 = vector.broadcast %19 : vector<1x128xf32> to vector<128x128xf32>
    %21 = arith.mulf %18, %20 : vector<128x128xf32>
    %c0_7 = arith.constant 0 : index
    %c0_8 = arith.constant 0 : index
    %22 = vector.load %arg3[%c0_7, %c0_8] : memref<1x128xf32, #tpu.memory_space<vmem>>, vector<1x128xf32>
    %23 = vector.broadcast %22 : vector<1x128xf32> to vector<128x128xf32>
    %24 = arith.addf %21, %23 : vector<128x128xf32>
    %c0_9 = arith.constant 0 : index
    %c0_10 = arith.constant 0 : index
    %25 = vector.load %arg4[%c0_9, %c0_10] : memref<128x256xf32, #tpu.memory_space<vmem>>, vector<128x256xf32>
    %cst_11 = arith.constant dense<0.000000e+00> : vector<128x256xf32>
    %26 = tpu.matmul %24, %25, %cst_11 {dimension_numbers = #tpu.dot_dimension_numbers<[1], [0], [0], [1], [0, 0, 1, 1], [], []>} : vector<128x128xf32>, vector<128x256xf32>, vector<128x256xf32> -> vector<128x256xf32>
    %c0_12 = arith.constant 0 : index
    %c0_13 = arith.constant 0 : index
    %27 = vector.load %arg5[%c0_12, %c0_13] : memref<1x256xf32, #tpu.memory_space<vmem>>, vector<1x256xf32>
    %28 = vector.broadcast %27 : vector<1x256xf32> to vector<128x256xf32>
    %29 = arith.addf %26, %28 : vector<128x256xf32>
    %cst_14 = arith.constant 0.000000e+00 : f32
    %30 = vector.broadcast %cst_14 : f32 to vector<128x256xf32>
    %31 = arith.maximumf %29, %30 : vector<128x256xf32>
    %c0_15 = arith.constant 0 : index
    %c0_16 = arith.constant 0 : index
    %32 = vector.load %arg6[%c0_15, %c0_16] : memref<256x128xf32, #tpu.memory_space<vmem>>, vector<256x128xf32>
    %cst_17 = arith.constant dense<0.000000e+00> : vector<128x128xf32>
    %33 = tpu.matmul %31, %32, %cst_17 {dimension_numbers = #tpu.dot_dimension_numbers<[1], [0], [0], [1], [0, 0, 1, 1], [], []>} : vector<128x256xf32>, vector<256x128xf32>, vector<128x128xf32> -> vector<128x128xf32>
    %34 = arith.addf %24, %33 : vector<128x128xf32>
    %c0_18 = arith.constant 0 : index
    %c0_19 = arith.constant 0 : index
    %35 = vector.load %arg7[%c0_18, %c0_19] : memref<1x128xf32, #tpu.memory_space<vmem>>, vector<1x128xf32>
    %36 = vector.broadcast %35 : vector<1x128xf32> to vector<128x128xf32>
    %37 = arith.addf %34, %36 : vector<128x128xf32>
    %cst_20 = arith.constant dense<0.000000e+00> : vector<128xf32>
    %38 = vector.multi_reduction <add>, %37, %cst_20 [1] : vector<128x128xf32> to vector<128xf32>
    %39 = vector.shape_cast %38 : vector<128xf32> to vector<128x1xf32>
    %cst_21 = arith.constant 1.280000e+02 : f32
    %40 = vector.broadcast %cst_21 : f32 to vector<128x1xf32>
    %41 = arith.divf %39, %40 : vector<128x1xf32>
    %42 = vector.broadcast %41 : vector<128x1xf32> to vector<128x128xf32>
    %43 = arith.subf %37, %42 : vector<128x128xf32>
    %44 = arith.mulf %43, %43 : vector<128x128xf32>
    %cst_22 = arith.constant dense<0.000000e+00> : vector<128xf32>
    %45 = vector.multi_reduction <add>, %44, %cst_22 [1] : vector<128x128xf32> to vector<128xf32>
    %46 = vector.shape_cast %45 : vector<128xf32> to vector<128x1xf32>
    %cst_23 = arith.constant 1.280000e+02 : f32
    %47 = vector.broadcast %cst_23 : f32 to vector<128x1xf32>
    %48 = arith.divf %46, %47 : vector<128x1xf32>
    %49 = vector.broadcast %41 : vector<128x1xf32> to vector<128x128xf32>
    %50 = arith.subf %37, %49 : vector<128x128xf32>
    %cst_24 = arith.constant 9.99999974E-6 : f32
    %51 = vector.broadcast %cst_24 : f32 to vector<128x1xf32>
    %52 = arith.addf %48, %51 : vector<128x1xf32>
    %53 = math.rsqrt %52 : vector<128x1xf32>
    %54 = vector.broadcast %53 : vector<128x1xf32> to vector<128x128xf32>
    %55 = arith.mulf %50, %54 : vector<128x128xf32>
    %c0_25 = arith.constant 0 : index
    %c0_26 = arith.constant 0 : index
    %56 = vector.load %arg8[%c0_25, %c0_26] : memref<1x128xf32, #tpu.memory_space<vmem>>, vector<1x128xf32>
    %57 = vector.broadcast %56 : vector<1x128xf32> to vector<128x128xf32>
    %58 = arith.mulf %55, %57 : vector<128x128xf32>
    %c0_27 = arith.constant 0 : index
    %c0_28 = arith.constant 0 : index
    %59 = vector.load %arg9[%c0_27, %c0_28] : memref<1x128xf32, #tpu.memory_space<vmem>>, vector<1x128xf32>
    %60 = vector.broadcast %59 : vector<1x128xf32> to vector<128x128xf32>
    %61 = arith.addf %58, %60 : vector<128x128xf32>
    %c0_29 = arith.constant 0 : index
    %c0_30 = arith.constant 0 : index
    %62 = vector.load %arg10[%c0_29, %c0_30] : memref<128x128xf32, #tpu.memory_space<vmem>>, vector<128x128xf32>
    tpu.vector_store %arg10[%c0_29, %c0_30], %61 {strides = array<i32>} : memref<128x128xf32, #tpu.memory_space<vmem>>, vector<128x128xf32>,
    return
  }
  func.func @transform_0(%arg0: i32) -> (i32, i32) {
    %c0_i32 = arith.constant 0 : i32
    %c0_i32_0 = arith.constant 0 : i32
    return %arg0, %c0_i32 : i32, i32
  }
  func.func @transform_1(%arg0: i32) -> (i32, i32) {
    %c0_i32 = arith.constant 0 : i32
    %c0_i32_0 = arith.constant 0 : i32
    %c0_i32_1 = arith.constant 0 : i32
    return %c0_i32, %c0_i32_0 : i32, i32
  }
  func.func @transform_2(%arg0: i32) -> (i32, i32) {
    %c0_i32 = arith.constant 0 : i32
    %c0_i32_0 = arith.constant 0 : i32
    %c0_i32_1 = arith.constant 0 : i32
    return %c0_i32, %c0_i32_0 : i32, i32
  }
  func.func @transform_3(%arg0: i32) -> (i32, i32) {
    %c0_i32 = arith.constant 0 : i32
    %c0_i32_0 = arith.constant 0 : i32
    %c0_i32_1 = arith.constant 0 : i32
    return %c0_i32, %c0_i32_0 : i32, i32
  }
  func.func @transform_4(%arg0: i32) -> (i32, i32) {
    %c0_i32 = arith.constant 0 : i32
    %c0_i32_0 = arith.constant 0 : i32
    %c0_i32_1 = arith.constant 0 : i32
    return %c0_i32, %c0_i32_0 : i32, i32
  }
  func.func @transform_5(%arg0: i32) -> (i32, i32) {
    %c0_i32 = arith.constant 0 : i32
    %c0_i32_0 = arith.constant 0 : i32
    %c0_i32_1 = arith.constant 0 : i32
    return %c0_i32, %c0_i32_0 : i32, i32
  }
  func.func @transform_6(%arg0: i32) -> (i32, i32) {
    %c0_i32 = arith.constant 0 : i32
    %c0_i32_0 = arith.constant 0 : i32
    %c0_i32_1 = arith.constant 0 : i32
    return %c0_i32, %c0_i32_0 : i32, i32
  }
  func.func @transform_7(%arg0: i32) -> (i32, i32) {
    %c0_i32 = arith.constant 0 : i32
    %c0_i32_0 = arith.constant 0 : i32
    %c0_i32_1 = arith.constant 0 : i32
    return %c0_i32, %c0_i32_0 : i32, i32
  }
  func.func @transform_8(%arg0: i32) -> (i32, i32) {
    %c0_i32 = arith.constant 0 : i32
    %c0_i32_0 = arith.constant 0 : i32
    %c0_i32_1 = arith.constant 0 : i32
    return %c0_i32, %c0_i32_0 : i32, i32
  }
  func.func @transform_9(%arg0: i32) -> (i32, i32) {
    %c0_i32 = arith.constant 0 : i32
    %c0_i32_0 = arith.constant 0 : i32
    return %arg0, %c0_i32 : i32, i32
  }
}

</mosaic_0001>

<llo_original>
// kernel: temporal_attention_forward.3
$region0: #{temporal_attention_forward.3}
  #allocation0 [shape = 'u32[]', space=smem, size = 0x4, offset = 0x4, fixed_abs, tag = 'smem constant byte address 0x4 - core index']
  #allocation1 [shape = 'u32[144,128]{1,0:T(1,128)}', space=vmem, size = 0x12000, scoped, tag = 'internal scratch']
  %s0 = inlined_call_operand.vmem [shape: f32[256,128], index: 0, kind: input, shape index: {}]
  %s1 = inlined_call_operand.vmem [shape: f32[1,128], index: 1, kind: input, shape index: {}]
  %s2 = inlined_call_operand.vmem [shape: f32[1,128], index: 2, kind: input, shape index: {}]
  %s3 = inlined_call_operand.vmem [shape: f32[128,256], index: 3, kind: input, shape index: {}]
  %s4 = inlined_call_operand.vmem [shape: f32[1,256], index: 4, kind: input, shape index: {}]
  %s5 = inlined_call_operand.vmem [shape: f32[256,128], index: 5, kind: input, shape index: {}]
  %s6 = inlined_call_operand.vmem [shape: f32[1,128], index: 6, kind: input, shape index: {}]
  %s7 = inlined_call_operand.vmem [shape: f32[1,128], index: 7, kind: input, shape index: {}]
  %s8 = inlined_call_operand.vmem [shape: f32[1,128], index: 8, kind: input, shape index: {}]
  %s9 = inlined_call_operand.hbm [shape: f32[256,128], index: 9, kind: output, shape index: {}]
  %s10 = sld [smem:[#allocation0]]
  $region69: #{temporal_attention_forward.3} parent=0
    _
  %s12 = ssub.s32 1, %s10
  %s13 = scalar_select 0, %s12, %s10
  $region1: #{temporal_attention_forward.3} parent=0
    #allocation2 [shape = 'u8[131072]{0}', space=vmem, size = 0x20000, scoped, tag = 'output window, operand 0']
    #allocation3 [shape = 's32[2]{0}', space=sflag, size = 0x8, scoped, tag = 'scoped memory for temporal_attention_forward.3']
    %14 = vsyncpa [#allocation3], 0
    %s15 = scalar_lea.sflag [#allocation3], 1
    %16 = vsyncpa %s15, 0
    loop: start=0, step=1, limit=4
    $region2: #{temporal_attention_forward.3} parent=1 // loop_pre_header
      _
    $region3: #{temporal_attention_forward.3} parent=1 // loop_header
      %s18 = sphi 0, %s22
      %p19 = scmp.ge.s32.totalorder %s18, 4
      %s28 = sphi 0, %s30
      %s31 = sphi 0, %s28
      %s32 = sphi 0, %s31
      %s48 = sphi 0, %s32
      %s52 = sphi 0, %s52
      %s54 = sphi 0, %s52
      %s55 = sphi 0, %s54
      %s69 = sphi 0, %s55
      %s73 = sphi 0, %s73
      %s75 = sphi 0, %s73
      %s76 = sphi 0, %s75
      %s90 = sphi 0, %s76
      %s94 = sphi 0, %s94
      %s96 = sphi 0, %s94
      %s97 = sphi 0, %s96
      %s111 = sphi 0, %s97
      %s115 = sphi 0, %s115
      %s117 = sphi 0, %s115
      %s118 = sphi 0, %s117
      %s132 = sphi 0, %s118
      %s136 = sphi 0, %s136
      %s138 = sphi 0, %s136
      %s139 = sphi 0, %s138
      %s153 = sphi 0, %s139
      %s157 = sphi 0, %s157
      %s159 = sphi 0, %s157
      %s160 = sphi 0, %s159
      %s174 = sphi 0, %s160
      %s178 = sphi 0, %s178
      %s180 = sphi 0, %s178
      %s181 = sphi 0, %s180
      %s195 = sphi 0, %s181
      %s199 = sphi 0, %s199
      %s201 = sphi 0, %s199
      %s202 = sphi 0, %s201
      %s216 = sphi 0, %s202
      %s222 = sphi 0, %s224
      %s225 = sphi 0, %s222
      %s226 = sphi 0, %s225
      %s242 = sphi 0, %s226
    $region4: #{temporal_attention_forward.3} parent=1 // loop_header_branch
      %21 = sbr.rel (%p19) target = $region8
    $region5: #{temporal_attention_forward.3} parent=1 // loop_body
      %s23 = ssub.s32 %s18, 1
      %s24 = ssub.s32 %s18, 2
      %s25 = sadd.s32 %s18, 1
      %s26 = ssub.s32 %s18, %s25
      %p27 = scmp.eq.s32.totalorder %s26, 0
      %s29 = sadd.s32 %s28, 1
      %s30 = scalar_select %p27, %s28, %s29
      %p33 = pneg %p27
      %p34 = scmp.eq.s32.totalorder %s18, 1
      %p35 = por %p33, %p34
      %p36 = scmp.ne.s32.totalorder %s28, %s31
      %p37 = scmp.eq.s32.totalorder %s18, 0
      %p38 = por %p36, %p37
      %p39 = scmp.ne.s32.totalorder %s28, %s31
      %p40 = scmp.eq.s32.totalorder %s23, 1
      %p41 = por %p39, %p40
      %p42 = scmp.ne.s32.totalorder %s31, %s32
      %p43 = scmp.eq.s32.totalorder %s23, 0
      %p44 = por %p42, %p43
      %p45 = scmp.ne.s32.totalorder %s31, %s32
      %p46 = scmp.eq.s32.totalorder %s24, 1
      %p47 = por %p45, %p46
      %p49 = scmp.ne.s32.totalorder %s32, %s48
      %p50 = scmp.eq.s32.totalorder %s24, 0
      %p51 = por %p49, %p50
      %s53 = sadd.s32 %s52, 1
      %p56 = scmp.eq.s32.totalorder %s18, 1
      %p57 = scmp.ne.s32.totalorder %s52, %s54
      %p58 = scmp.eq.s32.totalorder %s18, 0
      %p59 = por %p57, %p58
      %p60 = scmp.ne.s32.totalorder %s52, %s54
      %p61 = scmp.eq.s32.totalorder %s23, 1
      %p62 = por %p60, %p61
      %p63 = scmp.ne.s32.totalorder %s54, %s55
      %p64 = scmp.eq.s32.totalorder %s23, 0
      %p65 = por %p63, %p64
      %p66 = scmp.ne.s32.totalorder %s54, %s55
      %p67 = scmp.eq.s32.totalorder %s24, 1
      %p68 = por %p66, %p67
      %p70 = scmp.ne.s32.totalorder %s55, %s69
      %p71 = scmp.eq.s32.totalorder %s24, 0
      %p72 = por %p70, %p71
      %s74 = sadd.s32 %s73, 1
      %p77 = scmp.eq.s32.totalorder %s18, 1
      %p78 = scmp.ne.s32.totalorder %s73, %s75
      %p79 = scmp.eq.s32.totalorder %s18, 0
      %p80 = por %p78, %p79
      %p81 = scmp.ne.s32.totalorder %s73, %s75
      %p82 = scmp.eq.s32.totalorder %s23, 1
      %p83 = por %p81, %p82
      %p84 = scmp.ne.s32.totalorder %s75, %s76
      %p85 = scmp.eq.s32.totalorder %s23, 0
      %p86 = por %p84, %p85
      %p87 = scmp.ne.s32.totalorder %s75, %s76
      %p88 = scmp.eq.s32.totalorder %s24, 1
      %p89 = por %p87, %p88
      %p91 = scmp.ne.s32.totalorder %s76, %s90
      %p92 = scmp.eq.s32.totalorder %s24, 0
      %p93 = por %p91, %p92
      %s95 = sadd.s32 %s94, 1
      %p98 = scmp.eq.s32.totalorder %s18, 1
      %p99 = scmp.ne.s32.totalorder %s94, %s96
      %p100 = scmp.eq.s32.totalorder %s18, 0
      %p101 = por %p99, %p100
      %p102 = scmp.ne.s32.totalorder %s94, %s96
      %p103 = scmp.eq.s32.totalorder %s23, 1
      %p104 = por %p102, %p103
      %p105 = scmp.ne.s32.totalorder %s96, %s97
      %p106 = scmp.eq.s32.totalorder %s23, 0
      %p107 = por %p105, %p106
      %p108 = scmp.ne.s32.totalorder %s96, %s97
      %p109 = scmp.eq.s32.totalorder %s24, 1
      %p110 = por %p108, %p109
      %p112 = scmp.ne.s32.totalorder %s97, %s111
      %p113 = scmp.eq.s32.totalorder %s24, 0
      %p114 = por %p112, %p113
      %s116 = sadd.s32 %s115, 1
      %p119 = scmp.eq.s32.totalorder %s18, 1
      %p120 = scmp.ne.s32.totalorder %s115, %s117
      %p121 = scmp.eq.s32.totalorder %s18, 0
      %p122 = por %p120, %p121
      %p123 = scmp.ne.s32.totalorder %s115, %s117
      %p124 = scmp.eq.s32.totalorder %s23, 1
      %p125 = por %p123, %p124
      %p126 = scmp.ne.s32.totalorder %s117, %s118
      %p127 = scmp.eq.s32.totalorder %s23, 0
      %p128 = por %p126, %p127
      %p129 = scmp.ne.s32.totalorder %s117, %s118
      %p130 = scmp.eq.s32.totalorder %s24, 1
      %p131 = por %p129, %p130
      %p133 = scmp.ne.s32.totalorder %s118, %s132
      %p134 = scmp.eq.s32.totalorder %s24, 0
      %p135 = por %p133, %p134
      %s137 = sadd.s32 %s136, 1
      %p140 = scmp.eq.s32.totalorder %s18, 1
      %p141 = scmp.ne.s32.totalorder %s136, %s138
      %p142 = scmp.eq.s32.totalorder %s18, 0
      %p143 = por %p141, %p142
      %p144 = scmp.ne.s32.totalorder %s136, %s138
      %p145 = scmp.eq.s32.totalorder %s23, 1
      %p146 = por %p144, %p145
      %p147 = scmp.ne.s32.totalorder %s138, %s139
      %p148 = scmp.eq.s32.totalorder %s23, 0
      %p149 = por %p147, %p148
      %p150 = scmp.ne.s32.totalorder %s138, %s139
      %p151 = scmp.eq.s32.totalorder %s24, 1
      %p152 = por %p150, %p151
      %p154 = scmp.ne.s32.totalorder %s139, %s153
      %p155 = scmp.eq.s32.totalorder %s24, 0
      %p156 = por %p154, %p155
      %s158 = sadd.s32 %s157, 1
      %p161 = scmp.eq.s32.totalorder %s18, 1
      %p162 = scmp.ne.s32.totalorder %s157, %s159
      %p163 = scmp.eq.s32.totalorder %s18, 0
      %p164 = por %p162, %p163
      %p165 = scmp.ne.s32.totalorder %s157, %s159
      %p166 = scmp.eq.s32.totalorder %s23, 1
      %p167 = por %p165, %p166
      %p168 = scmp.ne.s32.totalorder %s159, %s160
      %p169 = scmp.eq.s32.totalorder %s23, 0
      %p170 = por %p168, %p169
      %p171 = scmp.ne.s32.totalorder %s159, %s160
      %p172 = scmp.eq.s32.totalorder %s24, 1
      %p173 = por %p171, %p172
      %p175 = scmp.ne.s32.totalorder %s160, %s174
      %p176 = scmp.eq.s32.totalorder %s24, 0
      %p177 = por %p175, %p176
      %s179 = sadd.s32 %s178, 1
      %p182 = scmp.eq.s32.totalorder %s18, 1
      %p183 = scmp.ne.s32.totalorder %s178, %s180
      %p184 = scmp.eq.s32.totalorder %s18, 0
      %p185 = por %p183, %p184
      %p186 = scmp.ne.s32.totalorder %s178, %s180
      %p187 = scmp.eq.s32.totalorder %s23, 1
      %p188 = por %p186, %p187
      %p189 = scmp.ne.s32.totalorder %s180, %s181
      %p190 = scmp.eq.s32.totalorder %s23, 0
      %p191 = por %p189, %p190
      %p192 = scmp.ne.s32.totalorder %s180, %s181
      %p193 = scmp.eq.s32.totalorder %s24, 1
      %p194 = por %p192, %p193
      %p196 = scmp.ne.s32.totalorder %s181, %s195
      %p197 = scmp.eq.s32.totalorder %s24, 0
      %p198 = por %p196, %p197
      %s200 = sadd.s32 %s199, 1
      %p203 = scmp.eq.s32.totalorder %s18, 1
      %p204 = scmp.ne.s32.totalorder %s199, %s201
      %p205 = scmp.eq.s32.totalorder %s18, 0
      %p206 = por %p204, %p205
      %p207 = scmp.ne.s32.totalorder %s199, %s201
      %p208 = scmp.eq.s32.totalorder %s23, 1
      %p209 = por %p207, %p208
      %p210 = scmp.ne.s32.totalorder %s201, %s202
      %p211 = scmp.eq.s32.totalorder %s23, 0
      %p212 = por %p210, %p211
      %p213 = scmp.ne.s32.totalorder %s201, %s202
      %p214 = scmp.eq.s32.totalorder %s24, 1
      %p215 = por %p213, %p214
      %p217 = scmp.ne.s32.totalorder %s202, %s216
      %p218 = scmp.eq.s32.totalorder %s24, 0
      %p219 = por %p217, %p218
      %s220 = ssub.s32 %s18, %s25
      %p221 = scmp.eq.s32.totalorder %s220, 0
      %s223 = sadd.s32 %s222, 1
      %s224 = scalar_select %p221, %s222, %s223
      %p227 = pneg %p221
      %p228 = scmp.eq.s32.totalorder %s18, 1
      %p229 = por %p227, %p228
      %p230 = scmp.ne.s32.totalorder %s222, %s225
      %p231 = scmp.eq.s32.totalorder %s18, 0
      %p232 = por %p230, %p231
      %p233 = scmp.ne.s32.totalorder %s222, %s225
      %p234 = scmp.eq.s32.totalorder %s23, 1
      %p235 = por %p233, %p234
      %p236 = scmp.ne.s32.totalorder %s225, %s226
      %p237 = scmp.eq.s32.totalorder %s23, 0
      %p238 = por %p236, %p237
      %p239 = scmp.ne.s32.totalorder %s225, %s226
      %p240 = scmp.eq.s32.totalorder %s24, 1
      %p241 = por %p239, %p240
      %p243 = scmp.ne.s32.totalorder %s226, %s242
      %p244 = scmp.eq.s32.totalorder %s24, 0
      %p245 = por %p243, %p244
      %p246 = scmp.le.s32.totalorder 1, %s18
      %p247 = scmp.lt.s32.totalorder %s18, 3
      %p248 = pnand %p246, %p247
      %p249 = pneg %p248
      // Predicated region
      $region9: #{temporal_attention_forward.3} parent=5 // pred_check
        _
      $region10: #{temporal_attention_forward.3} parent=5 // pred_check_branch
        %251 = sbr.rel (%p248) target = $region12
      $region11: #{temporal_attention_forward.3} parent=5 // pred_region
        %s252 = ssub.s32 %s18, 1
        // Predicated region
        $region13: #{temporal_attention_forward.3} parent=11 // pred_check
          %p253 = pneg %p65
        $region14: #{temporal_attention_forward.3} parent=11 // pred_check_branch
          %255 = sbr.rel (%p253) target = $region16
        $region15: #{temporal_attention_forward.3} parent=11 // pred_region
          _
        $region16: #{temporal_attention_forward.3} parent=11 // pred_fallthru
          _
        // Predicated region
        $region17: #{temporal_attention_forward.3} parent=11 // pred_check
          %p256 = pneg %p86
        $region18: #{temporal_attention_forward.3} parent=11 // pred_check_branch
          %258 = sbr.rel (%p256) target = $region20
        $region19: #{temporal_attention_forward.3} parent=11 // pred_region
          _
        $region20: #{temporal_attention_forward.3} parent=11 // pred_fallthru
          _
        // Predicated region
        $region21: #{temporal_attention_forward.3} parent=11 // pred_check
          %p259 = pneg %p107
        $region22: #{temporal_attention_forward.3} parent=11 // pred_check_branch
          %261 = sbr.rel (%p259) target = $region24
        $region23: #{temporal_attention_forward.3} parent=11 // pred_region
          _
        $region24: #{temporal_attention_forward.3} parent=11 // pred_fallthru
          _
        // Predicated region
        $region25: #{temporal_attention_forward.3} parent=11 // pred_check
          %p262 = pneg %p128
        $region26: #{temporal_attention_forward.3} parent=11 // pred_check_branch
          %264 = sbr.rel (%p262) target = $region28
        $region27: #{temporal_attention_forward.3} parent=11 // pred_region
          _
        $region28: #{temporal_attention_forward.3} parent=11 // pred_fallthru
          _
        // Predicated region
        $region29: #{temporal_attention_forward.3} parent=11 // pred_check
          %p265 = pneg %p149
        $region30: #{temporal_attention_forward.3} parent=11 // pred_check_branch
          %267 = sbr.rel (%p265) target = $region32
        $region31: #{temporal_attention_forward.3} parent=11 // pred_region
          _
        $region32: #{temporal_attention_forward.3} parent=11 // pred_fallthru
          _
        // Predicated region
        $region33: #{temporal_attention_forward.3} parent=11 // pred_check
          %p268 = pneg %p170
        $region34: #{temporal_attention_forward.3} parent=11 // pred_check_branch
          %270 = sbr.rel (%p268) target = $region36
        $region35: #{temporal_attention_forward.3} parent=11 // pred_region
          _
        $region36: #{temporal_attention_forward.3} parent=11 // pred_fallthru
          _
        // Predicated region
        $region37: #{temporal_attention_forward.3} parent=11 // pred_check
          %p271 = pneg %p191
        $region38: #{temporal_attention_forward.3} parent=11 // pred_check_branch
          %273 = sbr.rel (%p271) target = $region40
        $region39: #{temporal_attention_forward.3} parent=11 // pred_region
          _
        $region40: #{temporal_attention_forward.3} parent=11 // pred_fallthru
          _
        // Predicated region
        $region41: #{temporal_attention_forward.3} parent=11 // pred_check
          %p274 = pneg %p212
        $region42: #{temporal_attention_forward.3} parent=11 // pred_check_branch
          %276 = sbr.rel (%p274) target = $region44
        $region43: #{temporal_attention_forward.3} parent=11 // pred_region
          _
        $region44: #{temporal_attention_forward.3} parent=11 // pred_fallthru
          _
      $region12: #{temporal_attention_forward.3} parent=5 // pred_fallthru
        _
      %p277 = scmp.lt.s32.totalorder %s18, 2
      // Predicated region
      $region45: #{temporal_attention_forward.3} parent=5 // pred_check
        %p278 = pneg %p277
      $region46: #{temporal_attention_forward.3} parent=5 // pred_check_branch
        %280 = sbr.rel (%p278) target = $region48
      $region47: #{temporal_attention_forward.3} parent=5 // pred_region
        // Predicated region
        $region49: #{temporal_attention_forward.3} parent=47 // pred_check
          %p281 = pneg %p38
        $region50: #{temporal_attention_forward.3} parent=47 // pred_check_branch
          %283 = sbr.rel (%p281) target = $region52
        $region51: #{temporal_attention_forward.3} parent=47 // pred_region
          %s284 = smul.u32 16, %s18
          %p285 = scmp.lt.s32.totalorder %s284, 31
          %s286 = scalar_select %p285, %s284, 31
          %s287 = smul.addr %s286, 8
          %s288 = scalar_lea.vmem %s0, %s287
          %s289 = smul.u32 16, %s18
        $region52: #{temporal_attention_forward.3} parent=47 // pred_fallthru
          _
      $region48: #{temporal_attention_forward.3} parent=5 // pred_fallthru
        _
      %p290 = scmp.le.s32.totalorder 1, %s18
      %p291 = scmp.lt.s32.totalorder %s18, 3
      %p292 = pnand %p290, %p291
      %p293 = pneg %p292
      // Predicated region
      $region53: #{temporal_attention_forward.3} parent=5 // pred_check
        _
      $region54: #{temporal_attention_forward.3} parent=5 // pred_check_branch
        %295 = sbr.rel (%p292) target = $region56
      $region55: #{temporal_attention_forward.3} parent=5 // pred_region
        %s296 = ssub.s32 %s18, 1
        %s297 = smul.u32 16, %s23
        %p298 = scmp.lt.s32.totalorder %s297, 31
        %s299 = scalar_select %p298, %s297, 31
        %s300 = smul.addr %s299, 8
        %s301 = scalar_lea.vmem %s0, %s300
        %p302 = pneg %p44
        %p303 = pneg %p41
        %p304 = pneg %p65
        %p305 = pneg %p62
        %p306 = pneg %p86
        %p307 = pneg %p83
        %p308 = pneg %p107
        %p309 = pneg %p104
        %p310 = pneg %p128
        %p311 = pneg %p125
        %p312 = pneg %p149
        %p313 = pneg %p146
        %p314 = pneg %p170
        %p315 = pneg %p167
        %p316 = pneg %p191
        %p317 = pneg %p188
        %p318 = pneg %p212
        %p319 = pneg %p209
        %p320 = pneg %p238
        %p321 = pneg %p235
        %s322 = sand.u32 %s225, 1
        %s323 = scalar_lea.sflag [#allocation3], %s322
        %s324 = sand.u32 %s225, 1
        %s325 = smul.addr %s324, 128
        %s326 = scalar_lea.vmem [#allocation2], %s325
        %s327 = smul.u32 16, %s23
        %p328 = scmp.lt.s32.totalorder %s327, 31
        %s329 = scalar_select %p328, %s327, 31
        %s330 = smul.addr %s329, 8
        %s331 = scalar_lea.vmem %s0, %s330
        %s332 = smul.u32 16, %s23
        %s333 = smul.u32 16, %s23
        %v334 = vld [vmem:[%s331] sm:$0xff]
        %v335 = vld [vmem:[%s331 + $0x8] sm:$0xff]
        %v336 = vld [vmem:[%s331 + $0x10] sm:$0xff]
        %v337 = vld [vmem:[%s331 + $0x18] sm:$0xff]
        %v338 = vld [vmem:[%s331 + $0x20] sm:$0xff]
        %v339 = vld [vmem:[%s331 + $0x28] sm:$0xff]
        %v340 = vld [vmem:[%s331 + $0x30] sm:$0xff]
        %v341 = vld [vmem:[%s331 + $0x38] sm:$0xff]
        %v342 = vld [vmem:[%s331 + $0x40] sm:$0xff]
        %v343 = vld [vmem:[%s331 + $0x48] sm:$0xff]
        %v344 = vld [vmem:[%s331 + $0x50] sm:$0xff]
        %v345 = vld [vmem:[%s331 + $0x58] sm:$0xff]
        %v346 = vld [vmem:[%s331 + $0x60] sm:$0xff]
        %v347 = vld [vmem:[%s331 + $0x68] sm:$0xff]
        %v348 = vld [vmem:[%s331 + $0x70] sm:$0xff]
        %v349 = vld [vmem:[%s331 + $0x78] sm:$0xff]
        %350 = vadd.xlane.f32.xlu0 %v334
        %v351 = vpop.xlane.xlu0 %350
        %352 = vadd.xlane.f32.xlu0 %v335
        %v353 = vpop.xlane.xlu0 %352
        %354 = vadd.xlane.f32.xlu0 %v336
        %v355 = vpop.xlane.xlu0 %354
        %356 = vadd.xlane.f32.xlu0 %v337
        %v357 = vpop.xlane.xlu0 %356
        %358 = vadd.xlane.f32.xlu0 %v338
        %v359 = vpop.xlane.xlu0 %358
        %360 = vadd.xlane.f32.xlu0 %v339
        %v361 = vpop.xlane.xlu0 %360
        %362 = vadd.xlane.f32.xlu0 %v340
        %v363 = vpop.xlane.xlu0 %362
        %364 = vadd.xlane.f32.xlu0 %v341
        %v365 = vpop.xlane.xlu0 %364
        %366 = vadd.xlane.f32.xlu0 %v342
        %v367 = vpop.xlane.xlu0 %366
        %368 = vadd.xlane.f32.xlu0 %v343
        %v369 = vpop.xlane.xlu0 %368
        %370 = vadd.xlane.f32.xlu0 %v344
        %v371 = vpop.xlane.xlu0 %370
        %372 = vadd.xlane.f32.xlu0 %v345
        %v373 = vpop.xlane.xlu0 %372
        %374 = vadd.xlane.f32.xlu0 %v346
        %v375 = vpop.xlane.xlu0 %374
        %376 = vadd.xlane.f32.xlu0 %v347
        %v377 = vpop.xlane.xlu0 %376
        %378 = vadd.xlane.f32.xlu0 %v348
        %v379 = vpop.xlane.xlu0 %378
        %380 = vadd.xlane.f32.xlu0 %v349
        %v381 = vpop.xlane.xlu0 %380
        %v382 = vrcp.pop 128.0
        %v383 = vmul.f32 %v351, %v382
        %v384 = vmul.f32 %v353, %v382
        %v385 = vmul.f32 %v355, %v382
        %v386 = vmul.f32 %v357, %v382
        %v387 = vmul.f32 %v359, %v382
        %v388 = vmul.f32 %v361, %v382
        %v389 = vmul.f32 %v363, %v382
        %v390 = vmul.f32 %v365, %v382
        %v391 = vmul.f32 %v367, %v382
        %v392 = vmul.f32 %v369, %v382
        %v393 = vmul.f32 %v371, %v382
        %v394 = vmul.f32 %v373, %v382
        %v395 = vmul.f32 %v375, %v382
        %v396 = vmul.f32 %v377, %v382
        %v397 = vmul.f32 %v379, %v382
        %v398 = vmul.f32 %v381, %v382
        %v399 = vsub.f32 %v334, %v383
        %v400 = vsub.f32 %v335, %v384
        %v401 = vsub.f32 %v336, %v385
        %v402 = vsub.f32 %v337, %v386
        %v403 = vsub.f32 %v338, %v387
        %v404 = vsub.f32 %v339, %v388
        %v405 = vsub.f32 %v340, %v389
        %v406 = vsub.f32 %v341, %v390
        %v407 = vsub.f32 %v342, %v391
        %v408 = vsub.f32 %v343, %v392
        %v409 = vsub.f32 %v344, %v393
        %v410 = vsub.f32 %v345, %v394
        %v411 = vsub.f32 %v346, %v395
        %v412 = vsub.f32 %v347, %v396
        %v413 = vsub.f32 %v348, %v397
        %v414 = vsub.f32 %v349, %v398
        %v415 = vmul.f32 %v399, %v399
        %v416 = vmul.f32 %v400, %v400
        %v417 = vmul.f32 %v401, %v401
        %v418 = vmul.f32 %v402, %v402
        %v419 = vmul.f32 %v403, %v403
        %v420 = vmul.f32 %v404, %v404
        %v421 = vmul.f32 %v405, %v405
        %v422 = vmul.f32 %v406, %v406
        %v423 = vmul.f32 %v407, %v407
        %v424 = vmul.f32 %v408, %v408
        %v425 = vmul.f32 %v409, %v409
        %v426 = vmul.f32 %v410, %v410
        %v427 = vmul.f32 %v411, %v411
        %v428 = vmul.f32 %v412, %v412
        %v429 = vmul.f32 %v413, %v413
        %v430 = vmul.f32 %v414, %v414
        %431 = vadd.xlane.f32.xlu0 %v415
        %v432 = vpop.xlane.xlu0 %431
        %433 = vadd.xlane.f32.xlu0 %v416
        %v434 = vpop.xlane.xlu0 %433
        %435 = vadd.xlane.f32.xlu0 %v417
        %v436 = vpop.xlane.xlu0 %435
        %437 = vadd.xlane.f32.xlu0 %v418
        %v438 = vpop.xlane.xlu0 %437
        %439 = vadd.xlane.f32.xlu0 %v419
        %v440 = vpop.xlane.xlu0 %439
        %441 = vadd.xlane.f32.xlu0 %v420
        %v442 = vpop.xlane.xlu0 %441
        %443 = vadd.xlane.f32.xlu0 %v421
        %v444 = vpop.xlane.xlu0 %443
        %445 = vadd.xlane.f32.xlu0 %v422
        %v446 = vpop.xlane.xlu0 %445
        %447 = vadd.xlane.f32.xlu0 %v423
        %v448 = vpop.xlane.xlu0 %447
        %449 = vadd.xlane.f32.xlu0 %v424
        %v450 = vpop.xlane.xlu0 %449
        %451 = vadd.xlane.f32.xlu0 %v425
        %v452 = vpop.xlane.xlu0 %451
        %453 = vadd.xlane.f32.xlu0 %v426
        %v454 = vpop.xlane.xlu0 %453
        %455 = vadd.xlane.f32.xlu0 %v427
        %v456 = vpop.xlane.xlu0 %455
        %457 = vadd.xlane.f32.xlu0 %v428
        %v458 = vpop.xlane.xlu0 %457
        %459 = vadd.xlane.f32.xlu0 %v429
        %v460 = vpop.xlane.xlu0 %459
        %461 = vadd.xlane.f32.xlu0 %v430
        %v462 = vpop.xlane.xlu0 %461
        %v463 = vmul.f32 %v432, %v382
        %v464 = vmul.f32 %v434, %v382
        %v465 = vmul.f32 %v436, %v382
        %v466 = vmul.f32 %v438, %v382
        %v467 = vmul.f32 %v440, %v382
        %v468 = vmul.f32 %v442, %v382
        %v469 = vmul.f32 %v444, %v382
        %v470 = vmul.f32 %v446, %v382
        %v471 = vmul.f32 %v448, %v382
        %v472 = vmul.f32 %v450, %v382
        %v473 = vmul.f32 %v452, %v382
        %v474 = vmul.f32 %v454, %v382
        %v475 = vmul.f32 %v456, %v382
        %v476 = vmul.f32 %v458, %v382
        %v477 = vmul.f32 %v460, %v382
        %v478 = vmul.f32 %v462, %v382
        %v479 = vadd.f32 %v463, 1e-05
        %v480 = vadd.f32 %v464, 1e-05
        %v481 = vadd.f32 %v465, 1e-05
        %v482 = vadd.f32 %v466, 1e-05
        %v483 = vadd.f32 %v467, 1e-05
        %v484 = vadd.f32 %v468, 1e-05
        %v485 = vadd.f32 %v469, 1e-05
        %v486 = vadd.f32 %v470, 1e-05
        %v487 = vadd.f32 %v471, 1e-05
        %v488 = vadd.f32 %v472, 1e-05
        %v489 = vadd.f32 %v473, 1e-05
        %v490 = vadd.f32 %v474, 1e-05
        %v491 = vadd.f32 %v475, 1e-05
        %v492 = vadd.f32 %v476, 1e-05
        %v493 = vadd.f32 %v477, 1e-05
        %v494 = vadd.f32 %v478, 1e-05
        %v495 = vrsqrt.pop %v479
        %v496 = vrsqrt.pop %v480
        %v497 = vrsqrt.pop %v481
        %v498 = vrsqrt.pop %v482
        %v499 = vrsqrt.pop %v483
        %v500 = vrsqrt.pop %v484
        %v501 = vrsqrt.pop %v485
        %v502 = vrsqrt.pop %v486
        %v503 = vrsqrt.pop %v487
        %v504 = vrsqrt.pop %v488
        %v505 = vrsqrt.pop %v489
        %v506 = vrsqrt.pop %v490
        %v507 = vrsqrt.pop %v491
        %v508 = vrsqrt.pop %v492
        %v509 = vrsqrt.pop %v493
        %v510 = vrsqrt.pop %v494
        %v511 = vmul.f32 %v399, %v495
        %v512 = vmul.f32 %v400, %v496
        %v513 = vmul.f32 %v401, %v497
        %v514 = vmul.f32 %v402, %v498
        %v515 = vmul.f32 %v403, %v499
        %v516 = vmul.f32 %v404, %v500
        %v517 = vmul.f32 %v405, %v501
        %v518 = vmul.f32 %v406, %v502
        %v519 = vmul.f32 %v407, %v503
        %v520 = vmul.f32 %v408, %v504
        %v521 = vmul.f32 %v409, %v505
        %v522 = vmul.f32 %v410, %v506
        %v523 = vmul.f32 %v411, %v507
        %v524 = vmul.f32 %v412, %v508
        %v525 = vmul.f32 %v413, %v509
        %v526 = vmul.f32 %v414, %v510
        %v527 = vld [vmem:[%s1] sm:$0x1]
        %v529 = vlaneseq
        %v530 = vshrl.u32 %v529, 7
        %v531 = vsub.s32 0, %v530
        %v532 = vrot.slane %v527, %v531
        %v534 = vmul.f32 %v511, %v532
        %v535 = vmul.f32 %v512, %v532
        %v536 = vmul.f32 %v513, %v532
        %v537 = vmul.f32 %v514, %v532
        %v538 = vmul.f32 %v515, %v532
        %v539 = vmul.f32 %v516, %v532
        %v540 = vmul.f32 %v517, %v532
        %v541 = vmul.f32 %v518, %v532
        %v542 = vmul.f32 %v519, %v532
        %v543 = vmul.f32 %v520, %v532
        %v544 = vmul.f32 %v521, %v532
        %v545 = vmul.f32 %v522, %v532
        %v546 = vmul.f32 %v523, %v532
        %v547 = vmul.f32 %v524, %v532
        %v548 = vmul.f32 %v525, %v532
        %v549 = vmul.f32 %v526, %v532
        %v550 = vld [vmem:[%s2] sm:$0x1]
        %v552 = vlaneseq
        %v553 = vshrl.u32 %v552, 7
        %v554 = vsub.s32 0, %v553
        %v555 = vrot.slane %v550, %v554
        %v557 = vadd.f32 %v534, %v555
        %v558 = vadd.f32 %v535, %v555
        %v559 = vadd.f32 %v536, %v555
        %v560 = vadd.f32 %v537, %v555
        %v561 = vadd.f32 %v538, %v555
        %v562 = vadd.f32 %v539, %v555
        %v563 = vadd.f32 %v540, %v555
        %v564 = vadd.f32 %v541, %v555
        %v565 = vadd.f32 %v542, %v555
        %v566 = vadd.f32 %v543, %v555
        %v567 = vadd.f32 %v544, %v555
        %v568 = vadd.f32 %v545, %v555
        %v569 = vadd.f32 %v546, %v555
        %v570 = vadd.f32 %v547, %v555
        %v571 = vadd.f32 %v548, %v555
        %v572 = vadd.f32 %v549, %v555
        %v573 = vld [vmem:[%s3] sm:$0xff]
        %v574 = vld [vmem:[%s3 + $0x8] sm:$0xff]
        %v575 = vld [vmem:[%s3 + $0x10] sm:$0xff]
        %v576 = vld [vmem:[%s3 + $0x18] sm:$0xff]
        %v577 = vld [vmem:[%s3 + $0x20] sm:$0xff]
        %v578 = vld [vmem:[%s3 + $0x28] sm:$0xff]
        %v579 = vld [vmem:[%s3 + $0x30] sm:$0xff]
        %v580 = vld [vmem:[%s3 + $0x38] sm:$0xff]
        %v581 = vld [vmem:[%s3 + $0x40] sm:$0xff]
        %v582 = vld [vmem:[%s3 + $0x48] sm:$0xff]
        %v583 = vld [vmem:[%s3 + $0x50] sm:$0xff]
        %v584 = vld [vmem:[%s3 + $0x58] sm:$0xff]
        %v585 = vld [vmem:[%s3 + $0x60] sm:$0xff]
        %v586 = vld [vmem:[%s3 + $0x68] sm:$0xff]
        %v587 = vld [vmem:[%s3 + $0x70] sm:$0xff]
        %v588 = vld [vmem:[%s3 + $0x78] sm:$0xff]
        %v589 = vld [vmem:[%s3 + $0x80] sm:$0xff]
        %v590 = vld [vmem:[%s3 + $0x88] sm:$0xff]
        %v591 = vld [vmem:[%s3 + $0x90] sm:$0xff]
        %v592 = vld [vmem:[%s3 + $0x98] sm:$0xff]
        %v593 = vld [vmem:[%s3 + $0xa0] sm:$0xff]
        %v594 = vld [vmem:[%s3 + $0xa8] sm:$0xff]
        %v595 = vld [vmem:[%s3 + $0xb0] sm:$0xff]
        %v596 = vld [vmem:[%s3 + $0xb8] sm:$0xff]
        %v597 = vld [vmem:[%s3 + $0xc0] sm:$0xff]
        %v598 = vld [vmem:[%s3 + $0xc8] sm:$0xff]
        %v599 = vld [vmem:[%s3 + $0xd0] sm:$0xff]
        %v600 = vld [vmem:[%s3 + $0xd8] sm:$0xff]
        %v601 = vld [vmem:[%s3 + $0xe0] sm:$0xff]
        %v602 = vld [vmem:[%s3 + $0xe8] sm:$0xff]
        %v603 = vld [vmem:[%s3 + $0xf0] sm:$0xff]
        %v604 = vld [vmem:[%s3 + $0xf8] sm:$0xff]
        %v605 = vld [vmem:[%s4] sm:$0x3]
        %v607 = vlaneseq
        %v608 = vshrl.u32 %v607, 7
        %v609 = vsub.s32 0, %v608
        %v610 = vrot.slane %v605, %v609
        %v611 = vlaneseq
        %v612 = vshrl.u32 %v611, 7
        %v613 = vsub.s32 1, %v612
        %v614 = vrot.slane %v605, %v613
        %617 = vmatprep.subr.mxu0 %v604
        %618 = vmatpush1.msra.mxu0 %v603
        %619 = vmatprep.subr.mxu0 %v602
        %620 = vmatpush1.msra.mxu0 %v601
        %621 = vmatprep.subr.mxu0 %v600
        %622 = vmatpush1.msra.mxu0 %v599
        %623 = vmatprep.subr.mxu0 %v598
        %624 = vmatpush1.msra.mxu0 %v597
        %625 = vmatprep.subr.mxu0 %v596
        %626 = vmatpush1.msra.mxu0 %v595
        %627 = vmatprep.subr.mxu0 %v594
        %628 = vmatpush1.msra.mxu0 %v593
        %629 = vmatprep.subr.mxu0 %v592
        %630 = vmatpush1.msra.mxu0 %v591
        %631 = vmatprep.subr.mxu0 %v590
        %632 = vmatpush1.msra.mxu0 %v589
        %633 = vmatprep.subr.mxu0 %v588
        %634 = vmatpush1.msra.mxu0 %v587
        %635 = vmatprep.subr.mxu0 %v586
        %636 = vmatpush1.msra.mxu0 %v585
        %637 = vmatprep.subr.mxu0 %v584
        %638 = vmatpush1.msra.mxu0 %v583
        %639 = vmatprep.subr.mxu0 %v582
        %640 = vmatpush1.msra.mxu0 %v581
        %641 = vmatprep.subr.mxu0 %v580
        %642 = vmatpush1.msra.mxu0 %v579
        %643 = vmatprep.subr.mxu0 %v578
        %644 = vmatpush1.msra.mxu0 %v577
        %645 = vmatprep.subr.mxu0 %v576
        %646 = vmatpush1.msra.mxu0 %v575
        %647 = vmatprep.subr.mxu0 %v574
        %648 = vmatpush1.msra.mxu0 %v573
        %649 = vmatprep.subr.mxu0 0.0
        %650 = vmatpush2.msra.mxu0 0.0
        %651 = vmatprep.subr.mxu0 0.0
        %652 = vmatpush2.msra.mxu0 0.0
        %653 = vmatprep.subr.mxu0 0.0
        %654 = vmatpush2.msra.mxu0 0.0
        %655 = vmatprep.subr.mxu0 0.0
        %656 = vmatpush2.msra.mxu0 0.0
        %657 = vmatprep.subr.mxu0 0.0
        %658 = vmatpush2.msra.mxu0 0.0
        %659 = vmatprep.subr.mxu0 0.0
        %660 = vmatpush2.msra.mxu0 0.0
        %661 = vmatprep.subr.mxu0 0.0
        %662 = vmatpush2.msra.mxu0 0.0
        %663 = vmatprep.subr.mxu0 0.0
        %664 = vmatpush2.msra.mxu0 0.0
        %665 = vmatprep.subr.mxu0 0.0
        %666 = vmatpush2.msra.mxu0 0.0
        %667 = vmatprep.subr.mxu0 0.0
        %668 = vmatpush2.msra.mxu0 0.0
        %669 = vmatprep.subr.mxu0 0.0
        %670 = vmatpush2.msra.mxu0 0.0
        %671 = vmatprep.subr.mxu0 0.0
        %672 = vmatpush2.msra.mxu0 0.0
        %673 = vmatprep.subr.mxu0 0.0
        %674 = vmatpush2.msra.mxu0 0.0
        %675 = vmatprep.subr.mxu0 0.0
        %676 = vmatpush2.msra.mxu0 0.0
        %677 = vmatprep.subr.mxu0 0.0
        %678 = vmatpush2.msra.mxu0 0.0
        %679 = vmatprep.subr.mxu0 0.0
        %680 = vmatpush2.msra.mxu0 0.0
        %681 = vmatprep.mubr.f32.mxu0 0.0
        %682 = vmatmul.mubr.f32.gmra.mxu0 %v557
        %v683 = vpop.f32.mrf.mxu0
        %v684 = vadd.f32 %v610, %v683
        %v685 = vpop.f32.mrf.mxu0
        %v686 = vadd.f32 %v614, %v685
        %687 = vmatprep.mubr.f32.mxu0 0.0
        %688 = vmatmul.mubr.f32.gmra.mxu0 %v558
        %v689 = vpop.f32.mrf.mxu0
        %v690 = vadd.f32 %v610, %v689
        %v691 = vpop.f32.mrf.mxu0
        %v692 = vadd.f32 %v614, %v691
        %693 = vmatprep.mubr.f32.mxu0 0.0
        %694 = vmatmul.mubr.f32.gmra.mxu0 %v559
        %v695 = vpop.f32.mrf.mxu0
        %v696 = vadd.f32 %v610, %v695
        %v697 = vpop.f32.mrf.mxu0
        %v698 = vadd.f32 %v614, %v697
        %699 = vmatprep.mubr.f32.mxu0 0.0
        %700 = vmatmul.mubr.f32.gmra.mxu0 %v560
        %v701 = vpop.f32.mrf.mxu0
        %v702 = vadd.f32 %v610, %v701
        %v703 = vpop.f32.mrf.mxu0
        %v704 = vadd.f32 %v614, %v703
        %705 = vmatprep.mubr.f32.mxu0 0.0
        %706 = vmatmul.mubr.f32.gmra.mxu0 %v561
        %v707 = vpop.f32.mrf.mxu0
        %v708 = vadd.f32 %v610, %v707
        %v709 = vpop.f32.mrf.mxu0
        %v710 = vadd.f32 %v614, %v709
        %711 = vmatprep.mubr.f32.mxu0 0.0
        %712 = vmatmul.mubr.f32.gmra.mxu0 %v562
        %v713 = vpop.f32.mrf.mxu0
        %v714 = vadd.f32 %v610, %v713
        %v715 = vpop.f32.mrf.mxu0
        %v716 = vadd.f32 %v614, %v715
        %717 = vmatprep.mubr.f32.mxu0 0.0
        %718 = vmatmul.mubr.f32.gmra.mxu0 %v563
        %v719 = vpop.f32.mrf.mxu0
        %v720 = vadd.f32 %v610, %v719
        %v721 = vpop.f32.mrf.mxu0
        %v722 = vadd.f32 %v614, %v721
        %723 = vmatprep.mubr.f32.mxu0 0.0
        %724 = vmatmul.mubr.f32.gmra.mxu0 %v564
        %v725 = vpop.f32.mrf.mxu0
        %v726 = vadd.f32 %v610, %v725
        %v727 = vpop.f32.mrf.mxu0
        %v728 = vadd.f32 %v614, %v727
        %729 = vmatprep.mubr.f32.mxu0 0.0
        %730 = vmatmul.mubr.f32.gmra.mxu0 %v565
        %v731 = vpop.f32.mrf.mxu0
        %v732 = vadd.f32 %v610, %v731
        %v733 = vpop.f32.mrf.mxu0
        %v734 = vadd.f32 %v614, %v733
        %735 = vmatprep.mubr.f32.mxu0 0.0
        %736 = vmatmul.mubr.f32.gmra.mxu0 %v566
        %v737 = vpop.f32.mrf.mxu0
        %v738 = vadd.f32 %v610, %v737
        %v739 = vpop.f32.mrf.mxu0
        %v740 = vadd.f32 %v614, %v739
        %741 = vmatprep.mubr.f32.mxu0 0.0
        %742 = vmatmul.mubr.f32.gmra.mxu0 %v567
        %v743 = vpop.f32.mrf.mxu0
        %v744 = vadd.f32 %v610, %v743
        %v745 = vpop.f32.mrf.mxu0
        %v746 = vadd.f32 %v614, %v745
        %747 = vmatprep.mubr.f32.mxu0 0.0
        %748 = vmatmul.mubr.f32.gmra.mxu0 %v568
        %v749 = vpop.f32.mrf.mxu0
        %v750 = vadd.f32 %v610, %v749
        %v751 = vpop.f32.mrf.mxu0
        %v752 = vadd.f32 %v614, %v751
        %753 = vmatprep.mubr.f32.mxu0 0.0
        %754 = vmatmul.mubr.f32.gmra.mxu0 %v569
        %v755 = vpop.f32.mrf.mxu0
        %v756 = vadd.f32 %v610, %v755
        %v757 = vpop.f32.mrf.mxu0
        %v758 = vadd.f32 %v614, %v757
        %759 = vmatprep.mubr.f32.mxu0 0.0
        %760 = vmatmul.mubr.f32.gmra.mxu0 %v570
        %v761 = vpop.f32.mrf.mxu0
        %v762 = vadd.f32 %v610, %v761
        %v763 = vpop.f32.mrf.mxu0
        %v764 = vadd.f32 %v614, %v763
        %765 = vmatprep.mubr.f32.mxu0 0.0
        %766 = vmatmul.mubr.f32.gmra.mxu0 %v571
        %v767 = vpop.f32.mrf.mxu0
        %v768 = vadd.f32 %v610, %v767
        %v769 = vpop.f32.mrf.mxu0
        %v770 = vadd.f32 %v614, %v769
        %771 = vmatprep.mubr.f32.mxu0 0.0
        %772 = vmatmul.mubr.f32.gmra.mxu0 %v572
        %v773 = vpop.f32.mrf.mxu0
        %v774 = vadd.f32 %v610, %v773
        %v775 = vpop.f32.mrf.mxu0
        %v776 = vadd.f32 %v614, %v775
        %777 = vdwg.mxu0
        %v778 = vmax.f32 %v684, 0.0
        %v779 = vmax.f32 %v686, 0.0
        %v780 = vmax.f32 %v690, 0.0
        %v781 = vmax.f32 %v692, 0.0
        %v782 = vmax.f32 %v696, 0.0
        %v783 = vmax.f32 %v698, 0.0
        %v784 = vmax.f32 %v702, 0.0
        %v785 = vmax.f32 %v704, 0.0
        %v786 = vmax.f32 %v708, 0.0
        %v787 = vmax.f32 %v710, 0.0
        %v788 = vmax.f32 %v714, 0.0
        %v789 = vmax.f32 %v716, 0.0
        %v790 = vmax.f32 %v720, 0.0
        %v791 = vmax.f32 %v722, 0.0
        %v792 = vmax.f32 %v726, 0.0
        %v793 = vmax.f32 %v728, 0.0
        %v794 = vmax.f32 %v732, 0.0
        %v795 = vmax.f32 %v734, 0.0
        %v796 = vmax.f32 %v738, 0.0
        %v797 = vmax.f32 %v740, 0.0
        %v798 = vmax.f32 %v744, 0.0
        %v799 = vmax.f32 %v746, 0.0
        %v800 = vmax.f32 %v750, 0.0
        %v801 = vmax.f32 %v752, 0.0
        %v802 = vmax.f32 %v756, 0.0
        %v803 = vmax.f32 %v758, 0.0
        %v804 = vmax.f32 %v762, 0.0
        %v805 = vmax.f32 %v764, 0.0
        %v806 = vmax.f32 %v768, 0.0
        %v807 = vmax.f32 %v770, 0.0
        %v808 = vmax.f32 %v774, 0.0
        %v809 = vmax.f32 %v776, 0.0
        %v810 = vld [vmem:[%s5] sm:$0xff]
        %v811 = vld [vmem:[%s5 + $0x8] sm:$0xff]
        %v812 = vld [vmem:[%s5 + $0x10] sm:$0xff]
        %v813 = vld [vmem:[%s5 + $0x18] sm:$0xff]
        %v814 = vld [vmem:[%s5 + $0x20] sm:$0xff]
        %v815 = vld [vmem:[%s5 + $0x28] sm:$0xff]
        %v816 = vld [vmem:[%s5 + $0x30] sm:$0xff]
        %v817 = vld [vmem:[%s5 + $0x38] sm:$0xff]
        %v818 = vld [vmem:[%s5 + $0x40] sm:$0xff]
        %v819 = vld [vmem:[%s5 + $0x48] sm:$0xff]
        %v820 = vld [vmem:[%s5 + $0x50] sm:$0xff]
        %v821 = vld [vmem:[%s5 + $0x58] sm:$0xff]
        %v822 = vld [vmem:[%s5 + $0x60] sm:$0xff]
        %v823 = vld [vmem:[%s5 + $0x68] sm:$0xff]
        %v824 = vld [vmem:[%s5 + $0x70] sm:$0xff]
        %v825 = vld [vmem:[%s5 + $0x78] sm:$0xff]
        %v826 = vld [vmem:[%s5 + $0x80] sm:$0xff]
        %v827 = vld [vmem:[%s5 + $0x88] sm:$0xff]
        %v828 = vld [vmem:[%s5 + $0x90] sm:$0xff]
        %v829 = vld [vmem:[%s5 + $0x98] sm:$0xff]
        %v830 = vld [vmem:[%s5 + $0xa0] sm:$0xff]
        %v831 = vld [vmem:[%s5 + $0xa8] sm:$0xff]
        %v832 = vld [vmem:[%s5 + $0xb0] sm:$0xff]
        %v833 = vld [vmem:[%s5 + $0xb8] sm:$0xff]
        %v834 = vld [vmem:[%s5 + $0xc0] sm:$0xff]
        %v835 = vld [vmem:[%s5 + $0xc8] sm:$0xff]
        %v836 = vld [vmem:[%s5 + $0xd0] sm:$0xff]
        %v837 = vld [vmem:[%s5 + $0xd8] sm:$0xff]
        %v838 = vld [vmem:[%s5 + $0xe0] sm:$0xff]
        %v839 = vld [vmem:[%s5 + $0xe8] sm:$0xff]
        %v840 = vld [vmem:[%s5 + $0xf0] sm:$0xff]
        %v841 = vld [vmem:[%s5 + $0xf8] sm:$0xff]
        %842 = vmatprep.subr.mxu0 0.0
        %843 = vmatpush1.msra.mxu0 %v825
        %844 = vmatprep.subr.mxu0 0.0
        %845 = vmatpush1.msra.mxu0 %v824
        %846 = vmatprep.subr.mxu0 0.0
        %847 = vmatpush1.msra.mxu0 %v823
        %848 = vmatprep.subr.mxu0 0.0
        %849 = vmatpush1.msra.mxu0 %v822
        %850 = vmatprep.subr.mxu0 0.0
        %851 = vmatpush1.msra.mxu0 %v821
        %852 = vmatprep.subr.mxu0 0.0
        %853 = vmatpush1.msra.mxu0 %v820
        %854 = vmatprep.subr.mxu0 0.0
        %855 = vmatpush1.msra.mxu0 %v819
        %856 = vmatprep.subr.mxu0 0.0
        %857 = vmatpush1.msra.mxu0 %v818
        %858 = vmatprep.subr.mxu0 0.0
        %859 = vmatpush1.msra.mxu0 %v817
        %860 = vmatprep.subr.mxu0 0.0
        %861 = vmatpush1.msra.mxu0 %v816
        %862 = vmatprep.subr.mxu0 0.0
        %863 = vmatpush1.msra.mxu0 %v815
        %864 = vmatprep.subr.mxu0 0.0
        %865 = vmatpush1.msra.mxu0 %v814
        %866 = vmatprep.subr.mxu0 0.0
        %867 = vmatpush1.msra.mxu0 %v813
        %868 = vmatprep.subr.mxu0 0.0
        %869 = vmatpush1.msra.mxu0 %v812
        %870 = vmatprep.subr.mxu0 0.0
        %871 = vmatpush1.msra.mxu0 %v811
        %872 = vmatprep.subr.mxu0 0.0
        %873 = vmatpush1.msra.mxu0 %v810
        %874 = vmatprep.subr.mxu0 0.0
        %875 = vmatpush2.msra.mxu0 %v841
        %876 = vmatprep.subr.mxu0 0.0
        %877 = vmatpush2.msra.mxu0 %v840
        %878 = vmatprep.subr.mxu0 0.0
        %879 = vmatpush2.msra.mxu0 %v839
        %880 = vmatprep.subr.mxu0 0.0
        %881 = vmatpush2.msra.mxu0 %v838
        %882 = vmatprep.subr.mxu0 0.0
        %883 = vmatpush2.msra.mxu0 %v837
        %884 = vmatprep.subr.mxu0 0.0
        %885 = vmatpush2.msra.mxu0 %v836
        %886 = vmatprep.subr.mxu0 0.0
        %887 = vmatpush2.msra.mxu0 %v835
        %888 = vmatprep.subr.mxu0 0.0
        %889 = vmatpush2.msra.mxu0 %v834
        %890 = vmatprep.subr.mxu0 0.0
        %891 = vmatpush2.msra.mxu0 %v833
        %892 = vmatprep.subr.mxu0 0.0
        %893 = vmatpush2.msra.mxu0 %v832
        %894 = vmatprep.subr.mxu0 0.0
        %895 = vmatpush2.msra.mxu0 %v831
        %896 = vmatprep.subr.mxu0 0.0
        %897 = vmatpush2.msra.mxu0 %v830
        %898 = vmatprep.subr.mxu0 0.0
        %899 = vmatpush2.msra.mxu0 %v829
        %900 = vmatprep.subr.mxu0 0.0
        %901 = vmatpush2.msra.mxu0 %v828
        %902 = vmatprep.subr.mxu0 0.0
        %903 = vmatpush2.msra.mxu0 %v827
        %904 = vmatprep.subr.mxu0 0.0
        %905 = vmatpush2.msra.mxu0 %v826
        %906 = vmatprep.mubr.f32.mxu0 %v779
        %907 = vmatmul.mubr.f32.gmra.mxu0 %v778
        %v908 = vpop.f32.mrf.mxu0
        %v909 = vadd.f32 0.0, %v908
        %v910 = vpop.f32.mrf.mxu0
        %911 = vmatprep.mubr.f32.mxu0 %v781
        %912 = vmatmul.mubr.f32.gmra.mxu0 %v780
        %v913 = vpop.f32.mrf.mxu0
        %v914 = vadd.f32 0.0, %v913
        %v915 = vpop.f32.mrf.mxu0
        %916 = vmatprep.mubr.f32.mxu0 %v783
        %917 = vmatmul.mubr.f32.gmra.mxu0 %v782
        %v918 = vpop.f32.mrf.mxu0
        %v919 = vadd.f32 0.0, %v918
        %v920 = vpop.f32.mrf.mxu0
        %921 = vmatprep.mubr.f32.mxu0 %v785
        %922 = vmatmul.mubr.f32.gmra.mxu0 %v784
        %v923 = vpop.f32.mrf.mxu0
        %v924 = vadd.f32 0.0, %v923
        %v925 = vpop.f32.mrf.mxu0
        %926 = vmatprep.mubr.f32.mxu0 %v787
        %927 = vmatmul.mubr.f32.gmra.mxu0 %v786
        %v928 = vpop.f32.mrf.mxu0
        %v929 = vadd.f32 0.0, %v928
        %v930 = vpop.f32.mrf.mxu0
        %931 = vmatprep.mubr.f32.mxu0 %v789
        %932 = vmatmul.mubr.f32.gmra.mxu0 %v788
        %v933 = vpop.f32.mrf.mxu0
        %v934 = vadd.f32 0.0, %v933
        %v935 = vpop.f32.mrf.mxu0
        %936 = vmatprep.mubr.f32.mxu0 %v791
        %937 = vmatmul.mubr.f32.gmra.mxu0 %v790
        %v938 = vpop.f32.mrf.mxu0
        %v939 = vadd.f32 0.0, %v938
        %v940 = vpop.f32.mrf.mxu0
        %941 = vmatprep.mubr.f32.mxu0 %v793
        %942 = vmatmul.mubr.f32.gmra.mxu0 %v792
        %v943 = vpop.f32.mrf.mxu0
        %v944 = vadd.f32 0.0, %v943
        %v945 = vpop.f32.mrf.mxu0
        %946 = vmatprep.mubr.f32.mxu0 %v795
        %947 = vmatmul.mubr.f32.gmra.mxu0 %v794
        %v948 = vpop.f32.mrf.mxu0
        %v949 = vadd.f32 0.0, %v948
        %v950 = vpop.f32.mrf.mxu0
        %951 = vmatprep.mubr.f32.mxu0 %v797
        %952 = vmatmul.mubr.f32.gmra.mxu0 %v796
        %v953 = vpop.f32.mrf.mxu0
        %v954 = vadd.f32 0.0, %v953
        %v955 = vpop.f32.mrf.mxu0
        %956 = vmatprep.mubr.f32.mxu0 %v799
        %957 = vmatmul.mubr.f32.gmra.mxu0 %v798
        %v958 = vpop.f32.mrf.mxu0
        %v959 = vadd.f32 0.0, %v958
        %v960 = vpop.f32.mrf.mxu0
        %961 = vmatprep.mubr.f32.mxu0 %v801
        %962 = vmatmul.mubr.f32.gmra.mxu0 %v800
        %v963 = vpop.f32.mrf.mxu0
        %v964 = vadd.f32 0.0, %v963
        %v965 = vpop.f32.mrf.mxu0
        %966 = vmatprep.mubr.f32.mxu0 %v803
        %967 = vmatmul.mubr.f32.gmra.mxu0 %v802
        %v968 = vpop.f32.mrf.mxu0
        %v969 = vadd.f32 0.0, %v968
        %v970 = vpop.f32.mrf.mxu0
        %971 = vmatprep.mubr.f32.mxu0 %v805
        %972 = vmatmul.mubr.f32.gmra.mxu0 %v804
        %v973 = vpop.f32.mrf.mxu0
        %v974 = vadd.f32 0.0, %v973
        %v975 = vpop.f32.mrf.mxu0
        %976 = vmatprep.mubr.f32.mxu0 %v807
        %977 = vmatmul.mubr.f32.gmra.mxu0 %v806
        %v978 = vpop.f32.mrf.mxu0
        %v979 = vadd.f32 0.0, %v978
        %v980 = vpop.f32.mrf.mxu0
        %981 = vmatprep.mubr.f32.mxu0 %v809
        %982 = vmatmul.mubr.f32.gmra.mxu0 %v808
        %v983 = vpop.f32.mrf.mxu0
        %v984 = vadd.f32 0.0, %v983
        %v985 = vpop.f32.mrf.mxu0
        %986 = vdwg.mxu0
        %v987 = vadd.f32 %v557, %v909
        %v988 = vadd.f32 %v558, %v914
        %v989 = vadd.f32 %v559, %v919
        %v990 = vadd.f32 %v560, %v924
        %v991 = vadd.f32 %v561, %v929
        %v992 = vadd.f32 %v562, %v934
        %v993 = vadd.f32 %v563, %v939
        %v994 = vadd.f32 %v564, %v944
        %v995 = vadd.f32 %v565, %v949
        %v996 = vadd.f32 %v566, %v954
        %v997 = vadd.f32 %v567, %v959
        %v998 = vadd.f32 %v568, %v964
        %v999 = vadd.f32 %v569, %v969
        %v1000 = vadd.f32 %v570, %v974
        %v1001 = vadd.f32 %v571, %v979
        %v1002 = vadd.f32 %v572, %v984
        %v1003 = vld [vmem:[%s6] sm:$0x1]
        %v1005 = vlaneseq
        %v1006 = vshrl.u32 %v1005, 7
        %v1007 = vsub.s32 0, %v1006
        %v1008 = vrot.slane %v1003, %v1007
        %v1010 = vadd.f32 %v987, %v1008
        %v1011 = vadd.f32 %v988, %v1008
        %v1012 = vadd.f32 %v989, %v1008
        %v1013 = vadd.f32 %v990, %v1008
        %v1014 = vadd.f32 %v991, %v1008
        %v1015 = vadd.f32 %v992, %v1008
        %v1016 = vadd.f32 %v993, %v1008
        %v1017 = vadd.f32 %v994, %v1008
        %v1018 = vadd.f32 %v995, %v1008
        %v1019 = vadd.f32 %v996, %v1008
        %v1020 = vadd.f32 %v997, %v1008
        %v1021 = vadd.f32 %v998, %v1008
        %v1022 = vadd.f32 %v999, %v1008
        %v1023 = vadd.f32 %v1000, %v1008
        %v1024 = vadd.f32 %v1001, %v1008
        %v1025 = vadd.f32 %v1002, %v1008
        %1026 = vadd.xlane.f32.xlu0 %v1010
        %v1027 = vpop.xlane.xlu0 %1026
        %1028 = vadd.xlane.f32.xlu0 %v1011
        %v1029 = vpop.xlane.xlu0 %1028
        %1030 = vadd.xlane.f32.xlu0 %v1012
        %v1031 = vpop.xlane.xlu0 %1030
        %1032 = vadd.xlane.f32.xlu0 %v1013
        %v1033 = vpop.xlane.xlu0 %1032
        %1034 = vadd.xlane.f32.xlu0 %v1014
        %v1035 = vpop.xlane.xlu0 %1034
        %1036 = vadd.xlane.f32.xlu0 %v1015
        %v1037 = vpop.xlane.xlu0 %1036
        %1038 = vadd.xlane.f32.xlu0 %v1016
        %v1039 = vpop.xlane.xlu0 %1038
        %1040 = vadd.xlane.f32.xlu0 %v1017
        %v1041 = vpop.xlane.xlu0 %1040
        %1042 = vadd.xlane.f32.xlu0 %v1018
        %v1043 = vpop.xlane.xlu0 %1042
        %1044 = vadd.xlane.f32.xlu0 %v1019
        %v1045 = vpop.xlane.xlu0 %1044
        %1046 = vadd.xlane.f32.xlu0 %v1020
        %v1047 = vpop.xlane.xlu0 %1046
        %1048 = vadd.xlane.f32.xlu0 %v1021
        %v1049 = vpop.xlane.xlu0 %1048
        %1050 = vadd.xlane.f32.xlu0 %v1022
        %v1051 = vpop.xlane.xlu0 %1050
        %1052 = vadd.xlane.f32.xlu0 %v1023
        %v1053 = vpop.xlane.xlu0 %1052
        %1054 = vadd.xlane.f32.xlu0 %v1024
        %v1055 = vpop.xlane.xlu0 %1054
        %1056 = vadd.xlane.f32.xlu0 %v1025
        %v1057 = vpop.xlane.xlu0 %1056
        %v1058 = vmul.f32 %v1027, %v382
        %v1059 = vmul.f32 %v1029, %v382
        %v1060 = vmul.f32 %v1031, %v382
        %v1061 = vmul.f32 %v1033, %v382
        %v1062 = vmul.f32 %v1035, %v382
        %v1063 = vmul.f32 %v1037, %v382
        %v1064 = vmul.f32 %v1039, %v382
        %v1065 = vmul.f32 %v1041, %v382
        %v1066 = vmul.f32 %v1043, %v382
        %v1067 = vmul.f32 %v1045, %v382
        %v1068 = vmul.f32 %v1047, %v382
        %v1069 = vmul.f32 %v1049, %v382
        %v1070 = vmul.f32 %v1051, %v382
        %v1071 = vmul.f32 %v1053, %v382
        %v1072 = vmul.f32 %v1055, %v382
        %v1073 = vmul.f32 %v1057, %v382
        %v1074 = vsub.f32 %v1010, %v1058
        %v1075 = vsub.f32 %v1011, %v1059
        %v1076 = vsub.f32 %v1012, %v1060
        %v1077 = vsub.f32 %v1013, %v1061
        %v1078 = vsub.f32 %v1014, %v1062
        %v1079 = vsub.f32 %v1015, %v1063
        %v1080 = vsub.f32 %v1016, %v1064
        %v1081 = vsub.f32 %v1017, %v1065
        %v1082 = vsub.f32 %v1018, %v1066
        %v1083 = vsub.f32 %v1019, %v1067
        %v1084 = vsub.f32 %v1020, %v1068
        %v1085 = vsub.f32 %v1021, %v1069
        %v1086 = vsub.f32 %v1022, %v1070
        %v1087 = vsub.f32 %v1023, %v1071
        %v1088 = vsub.f32 %v1024, %v1072
        %v1089 = vsub.f32 %v1025, %v1073
        %v1090 = vmul.f32 %v1074, %v1074
        %v1091 = vmul.f32 %v1075, %v1075
        %v1092 = vmul.f32 %v1076, %v1076
        %v1093 = vmul.f32 %v1077, %v1077
        %v1094 = vmul.f32 %v1078, %v1078
        %v1095 = vmul.f32 %v1079, %v1079
        %v1096 = vmul.f32 %v1080, %v1080
        %v1097 = vmul.f32 %v1081, %v1081
        %v1098 = vmul.f32 %v1082, %v1082
        %v1099 = vmul.f32 %v1083, %v1083
        %v1100 = vmul.f32 %v1084, %v1084
        %v1101 = vmul.f32 %v1085, %v1085
        %v1102 = vmul.f32 %v1086, %v1086
        %v1103 = vmul.f32 %v1087, %v1087
        %v1104 = vmul.f32 %v1088, %v1088
        %v1105 = vmul.f32 %v1089, %v1089
        %1106 = vadd.xlane.f32.xlu0 %v1090
        %v1107 = vpop.xlane.xlu0 %1106
        %1108 = vadd.xlane.f32.xlu0 %v1091
        %v1109 = vpop.xlane.xlu0 %1108
        %1110 = vadd.xlane.f32.xlu0 %v1092
        %v1111 = vpop.xlane.xlu0 %1110
        %1112 = vadd.xlane.f32.xlu0 %v1093
        %v1113 = vpop.xlane.xlu0 %1112
        %1114 = vadd.xlane.f32.xlu0 %v1094
        %v1115 = vpop.xlane.xlu0 %1114
        %1116 = vadd.xlane.f32.xlu0 %v1095
        %v1117 = vpop.xlane.xlu0 %1116
        %1118 = vadd.xlane.f32.xlu0 %v1096
        %v1119 = vpop.xlane.xlu0 %1118
        %1120 = vadd.xlane.f32.xlu0 %v1097
        %v1121 = vpop.xlane.xlu0 %1120
        %1122 = vadd.xlane.f32.xlu0 %v1098
        %v1123 = vpop.xlane.xlu0 %1122
        %1124 = vadd.xlane.f32.xlu0 %v1099
        %v1125 = vpop.xlane.xlu0 %1124
        %1126 = vadd.xlane.f32.xlu0 %v1100
        %v1127 = vpop.xlane.xlu0 %1126
        %1128 = vadd.xlane.f32.xlu0 %v1101
        %v1129 = vpop.xlane.xlu0 %1128
        %1130 = vadd.xlane.f32.xlu0 %v1102
        %v1131 = vpop.xlane.xlu0 %1130
        %1132 = vadd.xlane.f32.xlu0 %v1103
        %v1133 = vpop.xlane.xlu0 %1132
        %1134 = vadd.xlane.f32.xlu0 %v1104
        %v1135 = vpop.xlane.xlu0 %1134
        %1136 = vadd.xlane.f32.xlu0 %v1105
        %v1137 = vpop.xlane.xlu0 %1136
        %v1138 = vmul.f32 %v1107, %v382
        %v1139 = vmul.f32 %v1109, %v382
        %v1140 = vmul.f32 %v1111, %v382
        %v1141 = vmul.f32 %v1113, %v382
        %v1142 = vmul.f32 %v1115, %v382
        %v1143 = vmul.f32 %v1117, %v382
        %v1144 = vmul.f32 %v1119, %v382
        %v1145 = vmul.f32 %v1121, %v382
        %v1146 = vmul.f32 %v1123, %v382
        %v1147 = vmul.f32 %v1125, %v382
        %v1148 = vmul.f32 %v1127, %v382
        %v1149 = vmul.f32 %v1129, %v382
        %v1150 = vmul.f32 %v1131, %v382
        %v1151 = vmul.f32 %v1133, %v382
        %v1152 = vmul.f32 %v1135, %v382
        %v1153 = vmul.f32 %v1137, %v382
        %v1154 = vadd.f32 %v1138, 1e-05
        %v1155 = vadd.f32 %v1139, 1e-05
        %v1156 = vadd.f32 %v1140, 1e-05
        %v1157 = vadd.f32 %v1141, 1e-05
        %v1158 = vadd.f32 %v1142, 1e-05
        %v1159 = vadd.f32 %v1143, 1e-05
        %v1160 = vadd.f32 %v1144, 1e-05
        %v1161 = vadd.f32 %v1145, 1e-05
        %v1162 = vadd.f32 %v1146, 1e-05
        %v1163 = vadd.f32 %v1147, 1e-05
        %v1164 = vadd.f32 %v1148, 1e-05
        %v1165 = vadd.f32 %v1149, 1e-05
        %v1166 = vadd.f32 %v1150, 1e-05
        %v1167 = vadd.f32 %v1151, 1e-05
        %v1168 = vadd.f32 %v1152, 1e-05
        %v1169 = vadd.f32 %v1153, 1e-05
        %v1170 = vrsqrt.pop %v1154
        %v1171 = vrsqrt.pop %v1155
        %v1172 = vrsqrt.pop %v1156
        %v1173 = vrsqrt.pop %v1157
        %v1174 = vrsqrt.pop %v1158
        %v1175 = vrsqrt.pop %v1159
        %v1176 = vrsqrt.pop %v1160
        %v1177 = vrsqrt.pop %v1161
        %v1178 = vrsqrt.pop %v1162
        %v1179 = vrsqrt.pop %v1163
        %v1180 = vrsqrt.pop %v1164
        %v1181 = vrsqrt.pop %v1165
        %v1182 = vrsqrt.pop %v1166
        %v1183 = vrsqrt.pop %v1167
        %v1184 = vrsqrt.pop %v1168
        %v1185 = vrsqrt.pop %v1169
        %v1186 = vmul.f32 %v1074, %v1170
        %v1187 = vmul.f32 %v1075, %v1171
        %v1188 = vmul.f32 %v1076, %v1172
        %v1189 = vmul.f32 %v1077, %v1173
        %v1190 = vmul.f32 %v1078, %v1174
        %v1191 = vmul.f32 %v1079, %v1175
        %v1192 = vmul.f32 %v1080, %v1176
        %v1193 = vmul.f32 %v1081, %v1177
        %v1194 = vmul.f32 %v1082, %v1178
        %v1195 = vmul.f32 %v1083, %v1179
        %v1196 = vmul.f32 %v1084, %v1180
        %v1197 = vmul.f32 %v1085, %v1181
        %v1198 = vmul.f32 %v1086, %v1182
        %v1199 = vmul.f32 %v1087, %v1183
        %v1200 = vmul.f32 %v1088, %v1184
        %v1201 = vmul.f32 %v1089, %v1185
        %v1202 = vld [vmem:[%s7] sm:$0x1]
        %v1204 = vlaneseq
        %v1205 = vshrl.u32 %v1204, 7
        %v1206 = vsub.s32 0, %v1205
        %v1207 = vrot.slane %v1202, %v1206
        %v1209 = vmul.f32 %v1186, %v1207
        %v1210 = vmul.f32 %v1187, %v1207
        %v1211 = vmul.f32 %v1188, %v1207
        %v1212 = vmul.f32 %v1189, %v1207
        %v1213 = vmul.f32 %v1190, %v1207
        %v1214 = vmul.f32 %v1191, %v1207
        %v1215 = vmul.f32 %v1192, %v1207
        %v1216 = vmul.f32 %v1193, %v1207
        %v1217 = vmul.f32 %v1194, %v1207
        %v1218 = vmul.f32 %v1195, %v1207
        %v1219 = vmul.f32 %v1196, %v1207
        %v1220 = vmul.f32 %v1197, %v1207
        %v1221 = vmul.f32 %v1198, %v1207
        %v1222 = vmul.f32 %v1199, %v1207
        %v1223 = vmul.f32 %v1200, %v1207
        %v1224 = vmul.f32 %v1201, %v1207
        %v1225 = vld [vmem:[%s8] sm:$0x1]
        %v1227 = vlaneseq
        %v1228 = vshrl.u32 %v1227, 7
        %v1229 = vsub.s32 0, %v1228
        %v1230 = vrot.slane %v1225, %v1229
        %v1232 = vadd.f32 %v1209, %v1230
        %v1233 = vadd.f32 %v1210, %v1230
        %v1234 = vadd.f32 %v1211, %v1230
        %v1235 = vadd.f32 %v1212, %v1230
        %v1236 = vadd.f32 %v1213, %v1230
        %v1237 = vadd.f32 %v1214, %v1230
        %v1238 = vadd.f32 %v1215, %v1230
        %v1239 = vadd.f32 %v1216, %v1230
        %v1240 = vadd.f32 %v1217, %v1230
        %v1241 = vadd.f32 %v1218, %v1230
        %v1242 = vadd.f32 %v1219, %v1230
        %v1243 = vadd.f32 %v1220, %v1230
        %v1244 = vadd.f32 %v1221, %v1230
        %v1245 = vadd.f32 %v1222, %v1230
        %v1246 = vadd.f32 %v1223, %v1230
        %v1247 = vadd.f32 %v1224, %v1230
        %1248 = vst [vmem:[%s326] sm:$0xff] %v1232
        %1249 = vst [vmem:[%s326 + $0x8] sm:$0xff] %v1233
        %1250 = vst [vmem:[%s326 + $0x10] sm:$0xff] %v1234
        %1251 = vst [vmem:[%s326 + $0x18] sm:$0xff] %v1235
        %1252 = vst [vmem:[%s326 + $0x20] sm:$0xff] %v1236
        %1253 = vst [vmem:[%s326 + $0x28] sm:$0xff] %v1237
        %1254 = vst [vmem:[%s326 + $0x30] sm:$0xff] %v1238
        %1255 = vst [vmem:[%s326 + $0x38] sm:$0xff] %v1239
        %1256 = vst [vmem:[%s326 + $0x40] sm:$0xff] %v1240
        %1257 = vst [vmem:[%s326 + $0x48] sm:$0xff] %v1241
        %1258 = vst [vmem:[%s326 + $0x50] sm:$0xff] %v1242
        %1259 = vst [vmem:[%s326 + $0x58] sm:$0xff] %v1243
        %1260 = vst [vmem:[%s326 + $0x60] sm:$0xff] %v1244
        %1261 = vst [vmem:[%s326 + $0x68] sm:$0xff] %v1245
        %1262 = vst [vmem:[%s326 + $0x70] sm:$0xff] %v1246
        %1263 = vst [vmem:[%s326 + $0x78] sm:$0xff] %v1247
        %s1264 = sand.u32 %s225, 1
        %s1265 = scalar_lea.sflag [#allocation3], %s1264
        %s1266 = sand.u32 %s225, 1
        %s1267 = smul.addr %s1266, 128
        %s1268 = scalar_lea.vmem [#allocation2], %s1267
        // Predicated region
        $region57: #{temporal_attention_forward.3} parent=55 // pred_check
          %p1269 = pneg %p235
        $region58: #{temporal_attention_forward.3} parent=55 // pred_check_branch
          %1271 = sbr.rel (%p1269) target = $region60
        $region59: #{temporal_attention_forward.3} parent=55 // pred_region
          %s1272 = smul.u32 16, %s23
          %s1274 = ssub.s32 2048, 2048
          %1275 = vsyncadd %s1265, %s1274
          %s1276 = smul.addr %s1272, 128
          %s1277 = scalar_lea.hbm %s9, %s1276
          %s1278 = sshll.u32 %s1268, 4
          %s1279 = int_to_ptr.vmem [resolvable:$true] %s1278
          %1284 = dma.vmem_to_hbm [thread:$0]  %s1279, 2048, %s1277, %s1265, 128, 128, 8
        $region60: #{temporal_attention_forward.3} parent=55 // pred_fallthru
          _
      $region56: #{temporal_attention_forward.3} parent=5 // pred_fallthru
        _
      %p1285 = scmp.le.s32.totalorder 2, %s18
      // Predicated region
      $region61: #{temporal_attention_forward.3} parent=5 // pred_check
        %p1286 = pneg %p1285
      $region62: #{temporal_attention_forward.3} parent=5 // pred_check_branch
        %1288 = sbr.rel (%p1286) target = $region64
      $region63: #{temporal_attention_forward.3} parent=5 // pred_region
        %s1289 = ssub.s32 %s18, 2
        // Predicated region
        $region65: #{temporal_attention_forward.3} parent=63 // pred_check
          %p1290 = pneg %p241
        $region66: #{temporal_attention_forward.3} parent=63 // pred_check_branch
          %1292 = sbr.rel (%p1290) target = $region68
        $region67: #{temporal_attention_forward.3} parent=63 // pred_region
          %s1293 = sand.u32 %s226, 1
          %s1294 = scalar_lea.sflag [#allocation3], %s1293
          %s1295 = sand.u32 %s226, 1
          %s1296 = smul.addr %s1295, 128
          %s1297 = scalar_lea.vmem [#allocation2], %s1296
          %1298 = dma.done %s1294, 2048
        $region68: #{temporal_attention_forward.3} parent=63 // pred_fallthru
          _
      $region64: #{temporal_attention_forward.3} parent=5 // pred_fallthru
        _
    $region6: #{temporal_attention_forward.3} parent=1 // loop_footer
      %s22 = sadd.s32 1, %s18
    $region7: #{temporal_attention_forward.3} parent=1 // loop_footer_branch
      %17 = sbr.rel target = $region3
    $region8: #{temporal_attention_forward.3} parent=1 // loop_exit
      _
    %1299 = vsyncpa [#allocation3], 1
    %s1300 = scalar_lea.sflag [#allocation3], 1
    %1301 = vsyncpa %s1300, 1

// kernel: temporal_attention_forward.2
$region0: #{temporal_attention_forward.2}
  #allocation0 [shape = 'u32[]', space=smem, size = 0x4, offset = 0x4, fixed_abs, tag = 'smem constant byte address 0x4 - core index']
  #allocation1 [shape = 'u32[144,128]{1,0:T(1,128)}', space=vmem, size = 0x12000, scoped, tag = 'internal scratch']
  %s0 = inlined_call_operand.vmem [shape: f32[8,32,128], index: 0, kind: input, shape index: {}]
  %s1 = inlined_call_operand.vmem [shape: f32[8,32,128], index: 1, kind: input, shape index: {}]
  %s2 = inlined_call_operand.vmem [shape: f32[128,256], index: 2, kind: input, shape index: {}]
  %s3 = inlined_call_operand.vmem [shape: f32[1,256], index: 3, kind: input, shape index: {}]
  %s4 = inlined_call_operand.vmem [shape: f32[128,128], index: 4, kind: input, shape index: {}]
  %s5 = inlined_call_operand.vmem [shape: f32[1,128], index: 5, kind: input, shape index: {}]
  %s6 = inlined_call_operand.vmem [shape: f32[128,128], index: 6, kind: input, shape index: {}]
  %s7 = inlined_call_operand.vmem [shape: f32[1,128], index: 7, kind: input, shape index: {}]
  %s8 = inlined_call_operand.vmem [shape: f32[8,32,128], index: 8, kind: output, shape index: {}]
  %s9 = sld [smem:[#allocation0]]
  $region65: #{temporal_attention_forward.2} parent=0
    _
  %s11 = ssub.s32 1, %s9
  %s12 = scalar_select 0, %s11, %s9
  loop: start=0, step=1, limit=4
  $region2: #{temporal_attention_forward.2} parent=0 // loop_pre_header
    _
  $region3: #{temporal_attention_forward.2} parent=0 // loop_header
    %s14 = sphi 0, %s18
    %p15 = scmp.ge.s32.totalorder %s14, 4
    %s24 = sphi 0, %s26
    %s27 = sphi 0, %s24
    %s28 = sphi 0, %s27
    %s44 = sphi 0, %s28
    %s50 = sphi 0, %s52
    %s53 = sphi 0, %s50
    %s54 = sphi 0, %s53
    %s70 = sphi 0, %s54
    %s74 = sphi 0, %s74
    %s76 = sphi 0, %s74
    %s77 = sphi 0, %s76
    %s91 = sphi 0, %s77
    %s95 = sphi 0, %s95
    %s97 = sphi 0, %s95
    %s98 = sphi 0, %s97
    %s112 = sphi 0, %s98
    %s116 = sphi 0, %s116
    %s118 = sphi 0, %s116
    %s119 = sphi 0, %s118
    %s133 = sphi 0, %s119
    %s137 = sphi 0, %s137
    %s139 = sphi 0, %s137
    %s140 = sphi 0, %s139
    %s154 = sphi 0, %s140
    %s158 = sphi 0, %s158
    %s160 = sphi 0, %s158
    %s161 = sphi 0, %s160
    %s175 = sphi 0, %s161
    %s179 = sphi 0, %s179
    %s181 = sphi 0, %s179
    %s182 = sphi 0, %s181
    %s196 = sphi 0, %s182
    %s202 = sphi 0, %s204
    %s205 = sphi 0, %s202
    %s206 = sphi 0, %s205
    %s222 = sphi 0, %s206
  $region4: #{temporal_attention_forward.2} parent=0 // loop_header_branch
    %17 = sbr.rel (%p15) target = $region8
  $region5: #{temporal_attention_forward.2} parent=0 // loop_body
    %s19 = ssub.s32 %s14, 1
    %s20 = ssub.s32 %s14, 2
    %s21 = sadd.s32 %s14, 1
    %s22 = ssub.s32 %s14, %s21
    %p23 = scmp.eq.s32.totalorder %s22, 0
    %s25 = sadd.s32 %s24, 1
    %s26 = scalar_select %p23, %s24, %s25
    %p29 = pneg %p23
    %p30 = scmp.eq.s32.totalorder %s14, 1
    %p31 = por %p29, %p30
    %p32 = scmp.ne.s32.totalorder %s24, %s27
    %p33 = scmp.eq.s32.totalorder %s14, 0
    %p34 = por %p32, %p33
    %p35 = scmp.ne.s32.totalorder %s24, %s27
    %p36 = scmp.eq.s32.totalorder %s19, 1
    %p37 = por %p35, %p36
    %p38 = scmp.ne.s32.totalorder %s27, %s28
    %p39 = scmp.eq.s32.totalorder %s19, 0
    %p40 = por %p38, %p39
    %p41 = scmp.ne.s32.totalorder %s27, %s28
    %p42 = scmp.eq.s32.totalorder %s20, 1
    %p43 = por %p41, %p42
    %p45 = scmp.ne.s32.totalorder %s28, %s44
    %p46 = scmp.eq.s32.totalorder %s20, 0
    %p47 = por %p45, %p46
    %s48 = ssub.s32 %s14, %s21
    %p49 = scmp.eq.s32.totalorder %s48, 0
    %s51 = sadd.s32 %s50, 1
    %s52 = scalar_select %p49, %s50, %s51
    %p55 = pneg %p49
    %p56 = scmp.eq.s32.totalorder %s14, 1
    %p57 = por %p55, %p56
    %p58 = scmp.ne.s32.totalorder %s50, %s53
    %p59 = scmp.eq.s32.totalorder %s14, 0
    %p60 = por %p58, %p59
    %p61 = scmp.ne.s32.totalorder %s50, %s53
    %p62 = scmp.eq.s32.totalorder %s19, 1
    %p63 = por %p61, %p62
    %p64 = scmp.ne.s32.totalorder %s53, %s54
    %p65 = scmp.eq.s32.totalorder %s19, 0
    %p66 = por %p64, %p65
    %p67 = scmp.ne.s32.totalorder %s53, %s54
    %p68 = scmp.eq.s32.totalorder %s20, 1
    %p69 = por %p67, %p68
    %p71 = scmp.ne.s32.totalorder %s54, %s70
    %p72 = scmp.eq.s32.totalorder %s20, 0
    %p73 = por %p71, %p72
    %s75 = sadd.s32 %s74, 1
    %p78 = scmp.eq.s32.totalorder %s14, 1
    %p79 = scmp.ne.s32.totalorder %s74, %s76
    %p80 = scmp.eq.s32.totalorder %s14, 0
    %p81 = por %p79, %p80
    %p82 = scmp.ne.s32.totalorder %s74, %s76
    %p83 = scmp.eq.s32.totalorder %s19, 1
    %p84 = por %p82, %p83
    %p85 = scmp.ne.s32.totalorder %s76, %s77
    %p86 = scmp.eq.s32.totalorder %s19, 0
    %p87 = por %p85, %p86
    %p88 = scmp.ne.s32.totalorder %s76, %s77
    %p89 = scmp.eq.s32.totalorder %s20, 1
    %p90 = por %p88, %p89
    %p92 = scmp.ne.s32.totalorder %s77, %s91
    %p93 = scmp.eq.s32.totalorder %s20, 0
    %p94 = por %p92, %p93
    %s96 = sadd.s32 %s95, 1
    %p99 = scmp.eq.s32.totalorder %s14, 1
    %p100 = scmp.ne.s32.totalorder %s95, %s97
    %p101 = scmp.eq.s32.totalorder %s14, 0
    %p102 = por %p100, %p101
    %p103 = scmp.ne.s32.totalorder %s95, %s97
    %p104 = scmp.eq.s32.totalorder %s19, 1
    %p105 = por %p103, %p104
    %p106 = scmp.ne.s32.totalorder %s97, %s98
    %p107 = scmp.eq.s32.totalorder %s19, 0
    %p108 = por %p106, %p107
    %p109 = scmp.ne.s32.totalorder %s97, %s98
    %p110 = scmp.eq.s32.totalorder %s20, 1
    %p111 = por %p109, %p110
    %p113 = scmp.ne.s32.totalorder %s98, %s112
    %p114 = scmp.eq.s32.totalorder %s20, 0
    %p115 = por %p113, %p114
    %s117 = sadd.s32 %s116, 1
    %p120 = scmp.eq.s32.totalorder %s14, 1
    %p121 = scmp.ne.s32.totalorder %s116, %s118
    %p122 = scmp.eq.s32.totalorder %s14, 0
    %p123 = por %p121, %p122
    %p124 = scmp.ne.s32.totalorder %s116, %s118
    %p125 = scmp.eq.s32.totalorder %s19, 1
    %p126 = por %p124, %p125
    %p127 = scmp.ne.s32.totalorder %s118, %s119
    %p128 = scmp.eq.s32.totalorder %s19, 0
    %p129 = por %p127, %p128
    %p130 = scmp.ne.s32.totalorder %s118, %s119
    %p131 = scmp.eq.s32.totalorder %s20, 1
    %p132 = por %p130, %p131
    %p134 = scmp.ne.s32.totalorder %s119, %s133
    %p135 = scmp.eq.s32.totalorder %s20, 0
    %p136 = por %p134, %p135
    %s138 = sadd.s32 %s137, 1
    %p141 = scmp.eq.s32.totalorder %s14, 1
    %p142 = scmp.ne.s32.totalorder %s137, %s139
    %p143 = scmp.eq.s32.totalorder %s14, 0
    %p144 = por %p142, %p143
    %p145 = scmp.ne.s32.totalorder %s137, %s139
    %p146 = scmp.eq.s32.totalorder %s19, 1
    %p147 = por %p145, %p146
    %p148 = scmp.ne.s32.totalorder %s139, %s140
    %p149 = scmp.eq.s32.totalorder %s19, 0
    %p150 = por %p148, %p149
    %p151 = scmp.ne.s32.totalorder %s139, %s140
    %p152 = scmp.eq.s32.totalorder %s20, 1
    %p153 = por %p151, %p152
    %p155 = scmp.ne.s32.totalorder %s140, %s154
    %p156 = scmp.eq.s32.totalorder %s20, 0
    %p157 = por %p155, %p156
    %s159 = sadd.s32 %s158, 1
    %p162 = scmp.eq.s32.totalorder %s14, 1
    %p163 = scmp.ne.s32.totalorder %s158, %s160
    %p164 = scmp.eq.s32.totalorder %s14, 0
    %p165 = por %p163, %p164
    %p166 = scmp.ne.s32.totalorder %s158, %s160
    %p167 = scmp.eq.s32.totalorder %s19, 1
    %p168 = por %p166, %p167
    %p169 = scmp.ne.s32.totalorder %s160, %s161
    %p170 = scmp.eq.s32.totalorder %s19, 0
    %p171 = por %p169, %p170
    %p172 = scmp.ne.s32.totalorder %s160, %s161
    %p173 = scmp.eq.s32.totalorder %s20, 1
    %p174 = por %p172, %p173
    %p176 = scmp.ne.s32.totalorder %s161, %s175
    %p177 = scmp.eq.s32.totalorder %s20, 0
    %p178 = por %p176, %p177
    %s180 = sadd.s32 %s179, 1
    %p183 = scmp.eq.s32.totalorder %s14, 1
    %p184 = scmp.ne.s32.totalorder %s179, %s181
    %p185 = scmp.eq.s32.totalorder %s14, 0
    %p186 = por %p184, %p185
    %p187 = scmp.ne.s32.totalorder %s179, %s181
    %p188 = scmp.eq.s32.totalorder %s19, 1
    %p189 = por %p187, %p188
    %p190 = scmp.ne.s32.totalorder %s181, %s182
    %p191 = scmp.eq.s32.totalorder %s19, 0
    %p192 = por %p190, %p191
    %p193 = scmp.ne.s32.totalorder %s181, %s182
    %p194 = scmp.eq.s32.totalorder %s20, 1
    %p195 = por %p193, %p194
    %p197 = scmp.ne.s32.totalorder %s182, %s196
    %p198 = scmp.eq.s32.totalorder %s20, 0
    %p199 = por %p197, %p198
    %s200 = ssub.s32 %s14, %s21
    %p201 = scmp.eq.s32.totalorder %s200, 0
    %s203 = sadd.s32 %s202, 1
    %s204 = scalar_select %p201, %s202, %s203
    %p207 = pneg %p201
    %p208 = scmp.eq.s32.totalorder %s14, 1
    %p209 = por %p207, %p208
    %p210 = scmp.ne.s32.totalorder %s202, %s205
    %p211 = scmp.eq.s32.totalorder %s14, 0
    %p212 = por %p210, %p211
    %p213 = scmp.ne.s32.totalorder %s202, %s205
    %p214 = scmp.eq.s32.totalorder %s19, 1
    %p215 = por %p213, %p214
    %p216 = scmp.ne.s32.totalorder %s205, %s206
    %p217 = scmp.eq.s32.totalorder %s19, 0
    %p218 = por %p216, %p217
    %p219 = scmp.ne.s32.totalorder %s205, %s206
    %p220 = scmp.eq.s32.totalorder %s20, 1
    %p221 = por %p219, %p220
    %p223 = scmp.ne.s32.totalorder %s206, %s222
    %p224 = scmp.eq.s32.totalorder %s20, 0
    %p225 = por %p223, %p224
    %p226 = scmp.le.s32.totalorder 1, %s14
    %p227 = scmp.lt.s32.totalorder %s14, 3
    %p228 = pnand %p226, %p227
    %p229 = pneg %p228
    // Predicated region
    $region9: #{temporal_attention_forward.2} parent=5 // pred_check
      _
    $region10: #{temporal_attention_forward.2} parent=5 // pred_check_branch
      %231 = sbr.rel (%p228) target = $region12
    $region11: #{temporal_attention_forward.2} parent=5 // pred_region
      %s232 = ssub.s32 %s14, 1
      // Predicated region
      $region13: #{temporal_attention_forward.2} parent=11 // pred_check
        %p233 = pneg %p87
      $region14: #{temporal_attention_forward.2} parent=11 // pred_check_branch
        %235 = sbr.rel (%p233) target = $region16
      $region15: #{temporal_attention_forward.2} parent=11 // pred_region
        _
      $region16: #{temporal_attention_forward.2} parent=11 // pred_fallthru
        _
      // Predicated region
      $region17: #{temporal_attention_forward.2} parent=11 // pred_check
        %p236 = pneg %p108
      $region18: #{temporal_attention_forward.2} parent=11 // pred_check_branch
        %238 = sbr.rel (%p236) target = $region20
      $region19: #{temporal_attention_forward.2} parent=11 // pred_region
        _
      $region20: #{temporal_attention_forward.2} parent=11 // pred_fallthru
        _
      // Predicated region
      $region21: #{temporal_attention_forward.2} parent=11 // pred_check
        %p239 = pneg %p129
      $region22: #{temporal_attention_forward.2} parent=11 // pred_check_branch
        %241 = sbr.rel (%p239) target = $region24
      $region23: #{temporal_attention_forward.2} parent=11 // pred_region
        _
      $region24: #{temporal_attention_forward.2} parent=11 // pred_fallthru
        _
      // Predicated region
      $region25: #{temporal_attention_forward.2} parent=11 // pred_check
        %p242 = pneg %p150
      $region26: #{temporal_attention_forward.2} parent=11 // pred_check_branch
        %244 = sbr.rel (%p242) target = $region28
      $region27: #{temporal_attention_forward.2} parent=11 // pred_region
        _
      $region28: #{temporal_attention_forward.2} parent=11 // pred_fallthru
        _
      // Predicated region
      $region29: #{temporal_attention_forward.2} parent=11 // pred_check
        %p245 = pneg %p171
      $region30: #{temporal_attention_forward.2} parent=11 // pred_check_branch
        %247 = sbr.rel (%p245) target = $region32
      $region31: #{temporal_attention_forward.2} parent=11 // pred_region
        _
      $region32: #{temporal_attention_forward.2} parent=11 // pred_fallthru
        _
      // Predicated region
      $region33: #{temporal_attention_forward.2} parent=11 // pred_check
        %p248 = pneg %p192
      $region34: #{temporal_attention_forward.2} parent=11 // pred_check_branch
        %250 = sbr.rel (%p248) target = $region36
      $region35: #{temporal_attention_forward.2} parent=11 // pred_region
        _
      $region36: #{temporal_attention_forward.2} parent=11 // pred_fallthru
        _
    $region12: #{temporal_attention_forward.2} parent=5 // pred_fallthru
      _
    %p251 = scmp.lt.s32.totalorder %s14, 2
    // Predicated region
    $region37: #{temporal_attention_forward.2} parent=5 // pred_check
      %p252 = pneg %p251
    $region38: #{temporal_attention_forward.2} parent=5 // pred_check_branch
      %254 = sbr.rel (%p252) target = $region40
    $region39: #{temporal_attention_forward.2} parent=5 // pred_region
      // Predicated region
      $region41: #{temporal_attention_forward.2} parent=39 // pred_check
        %p255 = pneg %p34
      $region42: #{temporal_attention_forward.2} parent=39 // pred_check_branch
        %257 = sbr.rel (%p255) target = $region44
      $region43: #{temporal_attention_forward.2} parent=39 // pred_region
        %s258 = smul.u32 4, %s14
        %p259 = scmp.lt.s32.totalorder %s258, 7
        %s260 = scalar_select %p259, %s258, 7
        %s261 = smul.addr %s260, 4
        %s262 = smul.addr %s261, 8
        %s263 = scalar_lea.vmem %s0, %s262
        %s264 = smul.u32 4, %s14
      $region44: #{temporal_attention_forward.2} parent=39 // pred_fallthru
        _
      // Predicated region
      $region45: #{temporal_attention_forward.2} parent=39 // pred_check
        %p265 = pneg %p60
      $region46: #{temporal_attention_forward.2} parent=39 // pred_check_branch
        %267 = sbr.rel (%p265) target = $region48
      $region47: #{temporal_attention_forward.2} parent=39 // pred_region
        %s268 = smul.u32 4, %s14
        %p269 = scmp.lt.s32.totalorder %s268, 7
        %s270 = scalar_select %p269, %s268, 7
        %s271 = smul.addr %s270, 4
        %s272 = smul.addr %s271, 8
        %s273 = scalar_lea.vmem %s1, %s272
        %s274 = smul.u32 4, %s14
      $region48: #{temporal_attention_forward.2} parent=39 // pred_fallthru
        _
    $region40: #{temporal_attention_forward.2} parent=5 // pred_fallthru
      _
    %p275 = scmp.le.s32.totalorder 1, %s14
    %p276 = scmp.lt.s32.totalorder %s14, 3
    %p277 = pnand %p275, %p276
    %p278 = pneg %p277
    // Predicated region
    $region49: #{temporal_attention_forward.2} parent=5 // pred_check
      _
    $region50: #{temporal_attention_forward.2} parent=5 // pred_check_branch
      %280 = sbr.rel (%p277) target = $region52
    $region51: #{temporal_attention_forward.2} parent=5 // pred_region
      %s281 = ssub.s32 %s14, 1
      %s282 = smul.u32 4, %s19
      %p283 = scmp.lt.s32.totalorder %s282, 7
      %s284 = scalar_select %p283, %s282, 7
      %s285 = smul.addr %s284, 4
      %s286 = smul.addr %s285, 8
      %s287 = scalar_lea.vmem %s0, %s286
      %p288 = pneg %p40
      %p289 = pneg %p37
      %s290 = smul.u32 4, %s19
      %p291 = scmp.lt.s32.totalorder %s290, 7
      %s292 = scalar_select %p291, %s290, 7
      %s293 = smul.addr %s292, 4
      %s294 = smul.addr %s293, 8
      %s295 = scalar_lea.vmem %s1, %s294
      %p296 = pneg %p66
      %p297 = pneg %p63
      %p298 = pneg %p87
      %p299 = pneg %p84
      %p300 = pneg %p108
      %p301 = pneg %p105
      %p302 = pneg %p129
      %p303 = pneg %p126
      %p304 = pneg %p150
      %p305 = pneg %p147
      %p306 = pneg %p171
      %p307 = pneg %p168
      %p308 = pneg %p192
      %p309 = pneg %p189
      %p310 = pneg %p218
      %p311 = pneg %p215
      %s312 = smul.u32 4, %s19
      %p313 = scmp.lt.s32.totalorder %s312, 7
      %s314 = scalar_select %p313, %s312, 7
      %s315 = smul.addr %s314, 4
      %s316 = smul.addr %s315, 8
      %s317 = scalar_lea.vmem %s8, %s316
      %s318 = smul.u32 4, %s19
      %p319 = scmp.lt.s32.totalorder %s318, 7
      %s320 = scalar_select %p319, %s318, 7
      %s321 = smul.addr %s320, 4
      %s322 = smul.addr %s321, 8
      %s323 = scalar_lea.vmem %s0, %s322
      %s324 = smul.u32 4, %s19
      %s325 = smul.u32 4, %s19
      %p326 = scmp.lt.s32.totalorder %s325, 7
      %s327 = scalar_select %p326, %s325, 7
      %s328 = smul.addr %s327, 4
      %s329 = smul.addr %s328, 8
      %s330 = scalar_lea.vmem %s1, %s329
      %s331 = smul.u32 4, %s19
      %s332 = smul.u32 4, %s19
      %p333 = scmp.lt.s32.totalorder %s332, 7
      %s334 = scalar_select %p333, %s332, 7
      %s335 = smul.addr %s334, 4
      %s336 = smul.addr %s335, 8
      %s337 = scalar_lea.vmem %s8, %s336
      %s338 = smul.u32 4, %s19
      %v339 = vld [vmem:[%s323] sm:$0xff]
      %v340 = vld [vmem:[%s323 + $0x8] sm:$0xff]
      %v341 = vld [vmem:[%s323 + $0x10] sm:$0xff]
      %v342 = vld [vmem:[%s323 + $0x18] sm:$0xff]
      %v343 = vld [vmem:[%s323 + $0x20] sm:$0xff]
      %v344 = vld [vmem:[%s323 + $0x28] sm:$0xff]
      %v345 = vld [vmem:[%s323 + $0x30] sm:$0xff]
      %v346 = vld [vmem:[%s323 + $0x38] sm:$0xff]
      %v347 = vld [vmem:[%s323 + $0x40] sm:$0xff]
      %v348 = vld [vmem:[%s323 + $0x48] sm:$0xff]
      %v349 = vld [vmem:[%s323 + $0x50] sm:$0xff]
      %v350 = vld [vmem:[%s323 + $0x58] sm:$0xff]
      %v351 = vld [vmem:[%s323 + $0x60] sm:$0xff]
      %v352 = vld [vmem:[%s323 + $0x68] sm:$0xff]
      %v353 = vld [vmem:[%s323 + $0x70] sm:$0xff]
      %v354 = vld [vmem:[%s323 + $0x78] sm:$0xff]
      %v355 = vld [vmem:[%s330] sm:$0xff]
      %v356 = vld [vmem:[%s330 + $0x8] sm:$0xff]
      %v357 = vld [vmem:[%s330 + $0x10] sm:$0xff]
      %v358 = vld [vmem:[%s330 + $0x18] sm:$0xff]
      %v359 = vld [vmem:[%s330 + $0x20] sm:$0xff]
      %v360 = vld [vmem:[%s330 + $0x28] sm:$0xff]
      %v361 = vld [vmem:[%s330 + $0x30] sm:$0xff]
      %v362 = vld [vmem:[%s330 + $0x38] sm:$0xff]
      %v363 = vld [vmem:[%s330 + $0x40] sm:$0xff]
      %v364 = vld [vmem:[%s330 + $0x48] sm:$0xff]
      %v365 = vld [vmem:[%s330 + $0x50] sm:$0xff]
      %v366 = vld [vmem:[%s330 + $0x58] sm:$0xff]
      %v367 = vld [vmem:[%s330 + $0x60] sm:$0xff]
      %v368 = vld [vmem:[%s330 + $0x68] sm:$0xff]
      %v369 = vld [vmem:[%s330 + $0x70] sm:$0xff]
      %v370 = vld [vmem:[%s330 + $0x78] sm:$0xff]
      %v371 = vadd.f32 %v339, %v355
      %v372 = vadd.f32 %v340, %v356
      %v373 = vadd.f32 %v341, %v357
      %v374 = vadd.f32 %v342, %v358
      %v375 = vadd.f32 %v343, %v359
      %v376 = vadd.f32 %v344, %v360
      %v377 = vadd.f32 %v345, %v361
      %v378 = vadd.f32 %v346, %v362
      %v379 = vadd.f32 %v347, %v363
      %v380 = vadd.f32 %v348, %v364
      %v381 = vadd.f32 %v349, %v365
      %v382 = vadd.f32 %v350, %v366
      %v383 = vadd.f32 %v351, %v367
      %v384 = vadd.f32 %v352, %v368
      %v385 = vadd.f32 %v353, %v369
      %v386 = vadd.f32 %v354, %v370
      %v387 = vld [vmem:[%s2] sm:$0xff]
      %v388 = vld [vmem:[%s2 + $0x8] sm:$0xff]
      %v389 = vld [vmem:[%s2 + $0x10] sm:$0xff]
      %v390 = vld [vmem:[%s2 + $0x18] sm:$0xff]
      %v391 = vld [vmem:[%s2 + $0x20] sm:$0xff]
      %v392 = vld [vmem:[%s2 + $0x28] sm:$0xff]
      %v393 = vld [vmem:[%s2 + $0x30] sm:$0xff]
      %v394 = vld [vmem:[%s2 + $0x38] sm:$0xff]
      %v395 = vld [vmem:[%s2 + $0x40] sm:$0xff]
      %v396 = vld [vmem:[%s2 + $0x48] sm:$0xff]
      %v397 = vld [vmem:[%s2 + $0x50] sm:$0xff]
      %v398 = vld [vmem:[%s2 + $0x58] sm:$0xff]
      %v399 = vld [vmem:[%s2 + $0x60] sm:$0xff]
      %v400 = vld [vmem:[%s2 + $0x68] sm:$0xff]
      %v401 = vld [vmem:[%s2 + $0x70] sm:$0xff]
      %v402 = vld [vmem:[%s2 + $0x78] sm:$0xff]
      %v403 = vld [vmem:[%s2 + $0x80] sm:$0xff]
      %v404 = vld [vmem:[%s2 + $0x88] sm:$0xff]
      %v405 = vld [vmem:[%s2 + $0x90] sm:$0xff]
      %v406 = vld [vmem:[%s2 + $0x98] sm:$0xff]
      %v407 = vld [vmem:[%s2 + $0xa0] sm:$0xff]
      %v408 = vld [vmem:[%s2 + $0xa8] sm:$0xff]
      %v409 = vld [vmem:[%s2 + $0xb0] sm:$0xff]
      %v410 = vld [vmem:[%s2 + $0xb8] sm:$0xff]
      %v411 = vld [vmem:[%s2 + $0xc0] sm:$0xff]
      %v412 = vld [vmem:[%s2 + $0xc8] sm:$0xff]
      %v413 = vld [vmem:[%s2 + $0xd0] sm:$0xff]
      %v414 = vld [vmem:[%s2 + $0xd8] sm:$0xff]
      %v415 = vld [vmem:[%s2 + $0xe0] sm:$0xff]
      %v416 = vld [vmem:[%s2 + $0xe8] sm:$0xff]
      %v417 = vld [vmem:[%s2 + $0xf0] sm:$0xff]
      %v418 = vld [vmem:[%s2 + $0xf8] sm:$0xff]
      %v419 = vld [vmem:[%s3] sm:$0x3]
      %v421 = vlaneseq
      %v422 = vshrl.u32 %v421, 7
      %v423 = vsub.s32 0, %v422
      %v424 = vrot.slane %v419, %v423
      %v425 = vlaneseq
      %v426 = vshrl.u32 %v425, 7
      %v427 = vsub.s32 1, %v426
      %v428 = vrot.slane %v419, %v427
      %431 = vmatprep.subr.mxu0 %v418
      %432 = vmatpush1.msra.mxu0 %v417
      %433 = vmatprep.subr.mxu0 %v416
      %434 = vmatpush1.msra.mxu0 %v415
      %435 = vmatprep.subr.mxu0 %v414
      %436 = vmatpush1.msra.mxu0 %v413
      %437 = vmatprep.subr.mxu0 %v412
      %438 = vmatpush1.msra.mxu0 %v411
      %439 = vmatprep.subr.mxu0 %v410
      %440 = vmatpush1.msra.mxu0 %v409
      %441 = vmatprep.subr.mxu0 %v408
      %442 = vmatpush1.msra.mxu0 %v407
      %443 = vmatprep.subr.mxu0 %v406
      %444 = vmatpush1.msra.mxu0 %v405
      %445 = vmatprep.subr.mxu0 %v404
      %446 = vmatpush1.msra.mxu0 %v403
      %447 = vmatprep.subr.mxu0 %v402
      %448 = vmatpush1.msra.mxu0 %v401
      %449 = vmatprep.subr.mxu0 %v400
      %450 = vmatpush1.msra.mxu0 %v399
      %451 = vmatprep.subr.mxu0 %v398
      %452 = vmatpush1.msra.mxu0 %v397
      %453 = vmatprep.subr.mxu0 %v396
      %454 = vmatpush1.msra.mxu0 %v395
      %455 = vmatprep.subr.mxu0 %v394
      %456 = vmatpush1.msra.mxu0 %v393
      %457 = vmatprep.subr.mxu0 %v392
      %458 = vmatpush1.msra.mxu0 %v391
      %459 = vmatprep.subr.mxu0 %v390
      %460 = vmatpush1.msra.mxu0 %v389
      %461 = vmatprep.subr.mxu0 %v388
      %462 = vmatpush1.msra.mxu0 %v387
      %463 = vmatprep.subr.mxu0 0.0
      %464 = vmatpush2.msra.mxu0 0.0
      %465 = vmatprep.subr.mxu0 0.0
      %466 = vmatpush2.msra.mxu0 0.0
      %467 = vmatprep.subr.mxu0 0.0
      %468 = vmatpush2.msra.mxu0 0.0
      %469 = vmatprep.subr.mxu0 0.0
      %470 = vmatpush2.msra.mxu0 0.0
      %471 = vmatprep.subr.mxu0 0.0
      %472 = vmatpush2.msra.mxu0 0.0
      %473 = vmatprep.subr.mxu0 0.0
      %474 = vmatpush2.msra.mxu0 0.0
      %475 = vmatprep.subr.mxu0 0.0
      %476 = vmatpush2.msra.mxu0 0.0
      %477 = vmatprep.subr.mxu0 0.0
      %478 = vmatpush2.msra.mxu0 0.0
      %479 = vmatprep.subr.mxu0 0.0
      %480 = vmatpush2.msra.mxu0 0.0
      %481 = vmatprep.subr.mxu0 0.0
      %482 = vmatpush2.msra.mxu0 0.0
      %483 = vmatprep.subr.mxu0 0.0
      %484 = vmatpush2.msra.mxu0 0.0
      %485 = vmatprep.subr.mxu0 0.0
      %486 = vmatpush2.msra.mxu0 0.0
      %487 = vmatprep.subr.mxu0 0.0
      %488 = vmatpush2.msra.mxu0 0.0
      %489 = vmatprep.subr.mxu0 0.0
      %490 = vmatpush2.msra.mxu0 0.0
      %491 = vmatprep.subr.mxu0 0.0
      %492 = vmatpush2.msra.mxu0 0.0
      %493 = vmatprep.subr.mxu0 0.0
      %494 = vmatpush2.msra.mxu0 0.0
      %495 = vmatprep.mubr.f32.mxu0 0.0
      %496 = vmatmul.mubr.f32.gmra.mxu0 %v371
      %v497 = vpop.f32.mrf.mxu0
      %v498 = vadd.f32 %v424, %v497
      %v499 = vpop.f32.mrf.mxu0
      %v500 = vadd.f32 %v428, %v499
      %501 = vmatprep.mubr.f32.mxu0 0.0
      %502 = vmatmul.mubr.f32.gmra.mxu0 %v372
      %v503 = vpop.f32.mrf.mxu0
      %v504 = vadd.f32 %v424, %v503
      %v505 = vpop.f32.mrf.mxu0
      %v506 = vadd.f32 %v428, %v505
      %507 = vmatprep.mubr.f32.mxu0 0.0
      %508 = vmatmul.mubr.f32.gmra.mxu0 %v373
      %v509 = vpop.f32.mrf.mxu0
      %v510 = vadd.f32 %v424, %v509
      %v511 = vpop.f32.mrf.mxu0
      %v512 = vadd.f32 %v428, %v511
      %513 = vmatprep.mubr.f32.mxu0 0.0
      %514 = vmatmul.mubr.f32.gmra.mxu0 %v374
      %v515 = vpop.f32.mrf.mxu0
      %v516 = vadd.f32 %v424, %v515
      %v517 = vpop.f32.mrf.mxu0
      %v518 = vadd.f32 %v428, %v517
      %519 = vmatprep.mubr.f32.mxu0 0.0
      %520 = vmatmul.mubr.f32.gmra.mxu0 %v375
      %v521 = vpop.f32.mrf.mxu0
      %v522 = vadd.f32 %v424, %v521
      %v523 = vpop.f32.mrf.mxu0
      %v524 = vadd.f32 %v428, %v523
      %525 = vmatprep.mubr.f32.mxu0 0.0
      %526 = vmatmul.mubr.f32.gmra.mxu0 %v376
      %v527 = vpop.f32.mrf.mxu0
      %v528 = vadd.f32 %v424, %v527
      %v529 = vpop.f32.mrf.mxu0
      %v530 = vadd.f32 %v428, %v529
      %531 = vmatprep.mubr.f32.mxu0 0.0
      %532 = vmatmul.mubr.f32.gmra.mxu0 %v377
      %v533 = vpop.f32.mrf.mxu0
      %v534 = vadd.f32 %v424, %v533
      %v535 = vpop.f32.mrf.mxu0
      %v536 = vadd.f32 %v428, %v535
      %537 = vmatprep.mubr.f32.mxu0 0.0
      %538 = vmatmul.mubr.f32.gmra.mxu0 %v378
      %v539 = vpop.f32.mrf.mxu0
      %v540 = vadd.f32 %v424, %v539
      %v541 = vpop.f32.mrf.mxu0
      %v542 = vadd.f32 %v428, %v541
      %543 = vmatprep.mubr.f32.mxu0 0.0
      %544 = vmatmul.mubr.f32.gmra.mxu0 %v379
      %v545 = vpop.f32.mrf.mxu0
      %v546 = vadd.f32 %v424, %v545
      %v547 = vpop.f32.mrf.mxu0
      %v548 = vadd.f32 %v428, %v547
      %549 = vmatprep.mubr.f32.mxu0 0.0
      %550 = vmatmul.mubr.f32.gmra.mxu0 %v380
      %v551 = vpop.f32.mrf.mxu0
      %v552 = vadd.f32 %v424, %v551
      %v553 = vpop.f32.mrf.mxu0
      %v554 = vadd.f32 %v428, %v553
      %555 = vmatprep.mubr.f32.mxu0 0.0
      %556 = vmatmul.mubr.f32.gmra.mxu0 %v381
      %v557 = vpop.f32.mrf.mxu0
      %v558 = vadd.f32 %v424, %v557
      %v559 = vpop.f32.mrf.mxu0
      %v560 = vadd.f32 %v428, %v559
      %561 = vmatprep.mubr.f32.mxu0 0.0
      %562 = vmatmul.mubr.f32.gmra.mxu0 %v382
      %v563 = vpop.f32.mrf.mxu0
      %v564 = vadd.f32 %v424, %v563
      %v565 = vpop.f32.mrf.mxu0
      %v566 = vadd.f32 %v428, %v565
      %567 = vmatprep.mubr.f32.mxu0 0.0
      %568 = vmatmul.mubr.f32.gmra.mxu0 %v383
      %v569 = vpop.f32.mrf.mxu0
      %v570 = vadd.f32 %v424, %v569
      %v571 = vpop.f32.mrf.mxu0
      %v572 = vadd.f32 %v428, %v571
      %573 = vmatprep.mubr.f32.mxu0 0.0
      %574 = vmatmul.mubr.f32.gmra.mxu0 %v384
      %v575 = vpop.f32.mrf.mxu0
      %v576 = vadd.f32 %v424, %v575
      %v577 = vpop.f32.mrf.mxu0
      %v578 = vadd.f32 %v428, %v577
      %579 = vmatprep.mubr.f32.mxu0 0.0
      %580 = vmatmul.mubr.f32.gmra.mxu0 %v385
      %v581 = vpop.f32.mrf.mxu0
      %v582 = vadd.f32 %v424, %v581
      %v583 = vpop.f32.mrf.mxu0
      %v584 = vadd.f32 %v428, %v583
      %585 = vmatprep.mubr.f32.mxu0 0.0
      %586 = vmatmul.mubr.f32.gmra.mxu0 %v386
      %v587 = vpop.f32.mrf.mxu0
      %v588 = vadd.f32 %v424, %v587
      %v589 = vpop.f32.mrf.mxu0
      %v590 = vadd.f32 %v428, %v589
      %591 = vdwg.mxu0
      %v592 = vld [vmem:[%s4] sm:$0xff]
      %v593 = vld [vmem:[%s4 + $0x8] sm:$0xff]
      %v594 = vld [vmem:[%s4 + $0x10] sm:$0xff]
      %v595 = vld [vmem:[%s4 + $0x18] sm:$0xff]
      %v596 = vld [vmem:[%s4 + $0x20] sm:$0xff]
      %v597 = vld [vmem:[%s4 + $0x28] sm:$0xff]
      %v598 = vld [vmem:[%s4 + $0x30] sm:$0xff]
      %v599 = vld [vmem:[%s4 + $0x38] sm:$0xff]
      %v600 = vld [vmem:[%s4 + $0x40] sm:$0xff]
      %v601 = vld [vmem:[%s4 + $0x48] sm:$0xff]
      %v602 = vld [vmem:[%s4 + $0x50] sm:$0xff]
      %v603 = vld [vmem:[%s4 + $0x58] sm:$0xff]
      %v604 = vld [vmem:[%s4 + $0x60] sm:$0xff]
      %v605 = vld [vmem:[%s4 + $0x68] sm:$0xff]
      %v606 = vld [vmem:[%s4 + $0x70] sm:$0xff]
      %v607 = vld [vmem:[%s4 + $0x78] sm:$0xff]
      %v608 = vld [vmem:[%s5] sm:$0x1]
      %v610 = vlaneseq
      %v611 = vshrl.u32 %v610, 7
      %v612 = vsub.s32 0, %v611
      %v613 = vrot.slane %v608, %v612
      %615 = vmatprep.subr.mxu0 0.0
      %616 = vmatpush1.msra.mxu0 %v607
      %617 = vmatprep.subr.mxu0 0.0
      %618 = vmatpush1.msra.mxu0 %v606
      %619 = vmatprep.subr.mxu0 0.0
      %620 = vmatpush1.msra.mxu0 %v605
      %621 = vmatprep.subr.mxu0 0.0
      %622 = vmatpush1.msra.mxu0 %v604
      %623 = vmatprep.subr.mxu0 0.0
      %624 = vmatpush1.msra.mxu0 %v603
      %625 = vmatprep.subr.mxu0 0.0
      %626 = vmatpush1.msra.mxu0 %v602
      %627 = vmatprep.subr.mxu0 0.0
      %628 = vmatpush1.msra.mxu0 %v601
      %629 = vmatprep.subr.mxu0 0.0
      %630 = vmatpush1.msra.mxu0 %v600
      %631 = vmatprep.subr.mxu0 0.0
      %632 = vmatpush1.msra.mxu0 %v599
      %633 = vmatprep.subr.mxu0 0.0
      %634 = vmatpush1.msra.mxu0 %v598
      %635 = vmatprep.subr.mxu0 0.0
      %636 = vmatpush1.msra.mxu0 %v597
      %637 = vmatprep.subr.mxu0 0.0
      %638 = vmatpush1.msra.mxu0 %v596
      %639 = vmatprep.subr.mxu0 0.0
      %640 = vmatpush1.msra.mxu0 %v595
      %641 = vmatprep.subr.mxu0 0.0
      %642 = vmatpush1.msra.mxu0 %v594
      %643 = vmatprep.subr.mxu0 0.0
      %644 = vmatpush1.msra.mxu0 %v593
      %645 = vmatprep.subr.mxu0 0.0
      %646 = vmatpush1.msra.mxu0 %v592
      %647 = vmatprep.subr.mxu0 0.0
      %648 = vmatpush2.msra.mxu0 0.0
      %649 = vmatprep.subr.mxu0 0.0
      %650 = vmatpush2.msra.mxu0 0.0
      %651 = vmatprep.subr.mxu0 0.0
      %652 = vmatpush2.msra.mxu0 0.0
      %653 = vmatprep.subr.mxu0 0.0
      %654 = vmatpush2.msra.mxu0 0.0
      %655 = vmatprep.subr.mxu0 0.0
      %656 = vmatpush2.msra.mxu0 0.0
      %657 = vmatprep.subr.mxu0 0.0
      %658 = vmatpush2.msra.mxu0 0.0
      %659 = vmatprep.subr.mxu0 0.0
      %660 = vmatpush2.msra.mxu0 0.0
      %661 = vmatprep.subr.mxu0 0.0
      %662 = vmatpush2.msra.mxu0 0.0
      %663 = vmatprep.subr.mxu0 0.0
      %664 = vmatpush2.msra.mxu0 0.0
      %665 = vmatprep.subr.mxu0 0.0
      %666 = vmatpush2.msra.mxu0 0.0
      %667 = vmatprep.subr.mxu0 0.0
      %668 = vmatpush2.msra.mxu0 0.0
      %669 = vmatprep.subr.mxu0 0.0
      %670 = vmatpush2.msra.mxu0 0.0
      %671 = vmatprep.subr.mxu0 0.0
      %672 = vmatpush2.msra.mxu0 0.0
      %673 = vmatprep.subr.mxu0 0.0
      %674 = vmatpush2.msra.mxu0 0.0
      %675 = vmatprep.subr.mxu0 0.0
      %676 = vmatpush2.msra.mxu0 0.0
      %677 = vmatprep.subr.mxu0 0.0
      %678 = vmatpush2.msra.mxu0 0.0
      %679 = vmatprep.mubr.f32.mxu0 0.0
      %680 = vmatmul.mubr.f32.gmra.mxu0 %v339
      %v681 = vpop.f32.mrf.mxu0
      %v682 = vadd.f32 %v613, %v681
      %v683 = vpop.f32.mrf.mxu0
      %684 = vmatprep.mubr.f32.mxu0 0.0
      %685 = vmatmul.mubr.f32.gmra.mxu0 %v340
      %v686 = vpop.f32.mrf.mxu0
      %v687 = vadd.f32 %v613, %v686
      %v688 = vpop.f32.mrf.mxu0
      %689 = vmatprep.mubr.f32.mxu0 0.0
      %690 = vmatmul.mubr.f32.gmra.mxu0 %v341
      %v691 = vpop.f32.mrf.mxu0
      %v692 = vadd.f32 %v613, %v691
      %v693 = vpop.f32.mrf.mxu0
      %694 = vmatprep.mubr.f32.mxu0 0.0
      %695 = vmatmul.mubr.f32.gmra.mxu0 %v342
      %v696 = vpop.f32.mrf.mxu0
      %v697 = vadd.f32 %v613, %v696
      %v698 = vpop.f32.mrf.mxu0
      %699 = vmatprep.mubr.f32.mxu0 0.0
      %700 = vmatmul.mubr.f32.gmra.mxu0 %v343
      %v701 = vpop.f32.mrf.mxu0
      %v702 = vadd.f32 %v613, %v701
      %v703 = vpop.f32.mrf.mxu0
      %704 = vmatprep.mubr.f32.mxu0 0.0
      %705 = vmatmul.mubr.f32.gmra.mxu0 %v344
      %v706 = vpop.f32.mrf.mxu0
      %v707 = vadd.f32 %v613, %v706
      %v708 = vpop.f32.mrf.mxu0
      %709 = vmatprep.mubr.f32.mxu0 0.0
      %710 = vmatmul.mubr.f32.gmra.mxu0 %v345
      %v711 = vpop.f32.mrf.mxu0
      %v712 = vadd.f32 %v613, %v711
      %v713 = vpop.f32.mrf.mxu0
      %714 = vmatprep.mubr.f32.mxu0 0.0
      %715 = vmatmul.mubr.f32.gmra.mxu0 %v346
      %v716 = vpop.f32.mrf.mxu0
      %v717 = vadd.f32 %v613, %v716
      %v718 = vpop.f32.mrf.mxu0
      %719 = vmatprep.mubr.f32.mxu0 0.0
      %720 = vmatmul.mubr.f32.gmra.mxu0 %v347
      %v721 = vpop.f32.mrf.mxu0
      %v722 = vadd.f32 %v613, %v721
      %v723 = vpop.f32.mrf.mxu0
      %724 = vmatprep.mubr.f32.mxu0 0.0
      %725 = vmatmul.mubr.f32.gmra.mxu0 %v348
      %v726 = vpop.f32.mrf.mxu0
      %v727 = vadd.f32 %v613, %v726
      %v728 = vpop.f32.mrf.mxu0
      %729 = vmatprep.mubr.f32.mxu0 0.0
      %730 = vmatmul.mubr.f32.gmra.mxu0 %v349
      %v731 = vpop.f32.mrf.mxu0
      %v732 = vadd.f32 %v613, %v731
      %v733 = vpop.f32.mrf.mxu0
      %734 = vmatprep.mubr.f32.mxu0 0.0
      %735 = vmatmul.mubr.f32.gmra.mxu0 %v350
      %v736 = vpop.f32.mrf.mxu0
      %v737 = vadd.f32 %v613, %v736
      %v738 = vpop.f32.mrf.mxu0
      %739 = vmatprep.mubr.f32.mxu0 0.0
      %740 = vmatmul.mubr.f32.gmra.mxu0 %v351
      %v741 = vpop.f32.mrf.mxu0
      %v742 = vadd.f32 %v613, %v741
      %v743 = vpop.f32.mrf.mxu0
      %744 = vmatprep.mubr.f32.mxu0 0.0
      %745 = vmatmul.mubr.f32.gmra.mxu0 %v352
      %v746 = vpop.f32.mrf.mxu0
      %v747 = vadd.f32 %v613, %v746
      %v748 = vpop.f32.mrf.mxu0
      %749 = vmatprep.mubr.f32.mxu0 0.0
      %750 = vmatmul.mubr.f32.gmra.mxu0 %v353
      %v751 = vpop.f32.mrf.mxu0
      %v752 = vadd.f32 %v613, %v751
      %v753 = vpop.f32.mrf.mxu0
      %754 = vmatprep.mubr.f32.mxu0 0.0
      %755 = vmatmul.mubr.f32.gmra.mxu0 %v354
      %v756 = vpop.f32.mrf.mxu0
      %v757 = vadd.f32 %v613, %v756
      %v758 = vpop.f32.mrf.mxu0
      %759 = vdwg.mxu0
      %vm760 = vcmask 261120
      %v762 = vsel %vm760, %v498, 0
      %v765 = vsel %vm760, %v504, 0
      %v768 = vsel %vm760, %v510, 0
      %v771 = vsel %vm760, %v516, 0
      %v774 = vsel %vm760, %v500, 0
      %v777 = vsel %vm760, %v506, 0
      %v780 = vsel %vm760, %v512, 0
      %v783 = vsel %vm760, %v518, 0
      %785 = vmatprep.subr.mxu0 0.0
      %786 = vmatpush1.xpose.msra.mxu0 0.0
      %787 = vmatprep.subr.mxu0 0.0
      %788 = vmatpush1.xpose.msra.mxu0 0.0
      %789 = vmatprep.subr.mxu0 0.0
      %790 = vmatpush1.xpose.msra.mxu0 0.0
      %791 = vmatprep.subr.mxu0 0.0
      %792 = vmatpush1.xpose.msra.mxu0 0.0
      %793 = vmatprep.subr.mxu0 0.0
      %794 = vmatpush1.xpose.msra.mxu0 0.0
      %795 = vmatprep.subr.mxu0 0.0
      %796 = vmatpush1.xpose.msra.mxu0 0.0
      %797 = vmatprep.subr.mxu0 0.0
      %798 = vmatpush1.xpose.msra.mxu0 0.0
      %799 = vmatprep.subr.mxu0 0.0
      %800 = vmatpush1.xpose.msra.mxu0 0.0
      %801 = vmatprep.subr.mxu0 0.0
      %802 = vmatpush1.xpose.msra.mxu0 0.0
      %803 = vmatprep.subr.mxu0 0.0
      %804 = vmatpush1.xpose.msra.mxu0 0.0
      %805 = vmatprep.subr.mxu0 0.0
      %806 = vmatpush1.xpose.msra.mxu0 0.0
      %807 = vmatprep.subr.mxu0 0.0
      %808 = vmatpush1.xpose.msra.mxu0 0.0
      %809 = vmatprep.subr.mxu0 0.0
      %810 = vmatpush1.xpose.msra.mxu0 %v783
      %811 = vmatprep.subr.mxu0 0.0
      %812 = vmatpush1.xpose.msra.mxu0 %v780
      %813 = vmatprep.subr.mxu0 0.0
      %814 = vmatpush1.xpose.msra.mxu0 %v777
      %815 = vmatprep.subr.mxu0 0.0
      %816 = vmatpush1.xpose.msra.mxu0 %v774
      %817 = vmatprep.subr.mxu0 0.0
      %818 = vmatpush2.xpose.msra.mxu0 0.0
      %819 = vmatprep.subr.mxu0 0.0
      %820 = vmatpush2.xpose.msra.mxu0 0.0
      %821 = vmatprep.subr.mxu0 0.0
      %822 = vmatpush2.xpose.msra.mxu0 0.0
      %823 = vmatprep.subr.mxu0 0.0
      %824 = vmatpush2.xpose.msra.mxu0 0.0
      %825 = vmatprep.subr.mxu0 0.0
      %826 = vmatpush2.xpose.msra.mxu0 0.0
      %827 = vmatprep.subr.mxu0 0.0
      %828 = vmatpush2.xpose.msra.mxu0 0.0
      %829 = vmatprep.subr.mxu0 0.0
      %830 = vmatpush2.xpose.msra.mxu0 0.0
      %831 = vmatprep.subr.mxu0 0.0
      %832 = vmatpush2.xpose.msra.mxu0 0.0
      %833 = vmatprep.subr.mxu0 0.0
      %834 = vmatpush2.xpose.msra.mxu0 0.0
      %835 = vmatprep.subr.mxu0 0.0
      %836 = vmatpush2.xpose.msra.mxu0 0.0
      %837 = vmatprep.subr.mxu0 0.0
      %838 = vmatpush2.xpose.msra.mxu0 0.0
      %839 = vmatprep.subr.mxu0 0.0
      %840 = vmatpush2.xpose.msra.mxu0 0.0
      %841 = vmatprep.subr.mxu0 0.0
      %842 = vmatpush2.xpose.msra.mxu0 0.0
      %843 = vmatprep.subr.mxu0 0.0
      %844 = vmatpush2.xpose.msra.mxu0 0.0
      %845 = vmatprep.subr.mxu0 0.0
      %846 = vmatpush2.xpose.msra.mxu0 0.0
      %847 = vmatprep.subr.mxu0 0.0
      %848 = vmatpush2.xpose.msra.mxu0 0.0
      %849 = vmatprep.mubr.f32.mxu0 0.0
      %850 = vmatmul.mubr.f32.gmra.mxu0 %v762
      %v851 = vpop.f32.mrf.mxu0
      %v852 = vadd.f32 0.0, %v851
      %v853 = vpop.f32.mrf.mxu0
      %854 = vmatprep.mubr.f32.mxu0 0.0
      %855 = vmatmul.mubr.f32.gmra.mxu0 %v765
      %v856 = vpop.f32.mrf.mxu0
      %v857 = vadd.f32 0.0, %v856
      %v858 = vpop.f32.mrf.mxu0
      %859 = vmatprep.mubr.f32.mxu0 0.0
      %860 = vmatmul.mubr.f32.gmra.mxu0 %v768
      %v861 = vpop.f32.mrf.mxu0
      %v862 = vadd.f32 0.0, %v861
      %v863 = vpop.f32.mrf.mxu0
      %864 = vmatprep.mubr.f32.mxu0 0.0
      %865 = vmatmul.mubr.f32.gmra.mxu0 %v771
      %v866 = vpop.f32.mrf.mxu0
      %v867 = vadd.f32 0.0, %v866
      %v868 = vpop.f32.mrf.mxu0
      %869 = vdwg.mxu0
      %v871 = vsel %vm760, %v522, 0
      %v874 = vsel %vm760, %v528, 0
      %v877 = vsel %vm760, %v534, 0
      %v880 = vsel %vm760, %v540, 0
      %v883 = vsel %vm760, %v524, 0
      %v886 = vsel %vm760, %v530, 0
      %v889 = vsel %vm760, %v536, 0
      %v892 = vsel %vm760, %v542, 0
      %894 = vmatprep.subr.mxu0 0.0
      %895 = vmatpush1.xpose.msra.mxu0 0.0
      %896 = vmatprep.subr.mxu0 0.0
      %897 = vmatpush1.xpose.msra.mxu0 0.0
      %898 = vmatprep.subr.mxu0 0.0
      %899 = vmatpush1.xpose.msra.mxu0 0.0
      %900 = vmatprep.subr.mxu0 0.0
      %901 = vmatpush1.xpose.msra.mxu0 0.0
      %902 = vmatprep.subr.mxu0 0.0
      %903 = vmatpush1.xpose.msra.mxu0 0.0
      %904 = vmatprep.subr.mxu0 0.0
      %905 = vmatpush1.xpose.msra.mxu0 0.0
      %906 = vmatprep.subr.mxu0 0.0
      %907 = vmatpush1.xpose.msra.mxu0 0.0
      %908 = vmatprep.subr.mxu0 0.0
      %909 = vmatpush1.xpose.msra.mxu0 0.0
      %910 = vmatprep.subr.mxu0 0.0
      %911 = vmatpush1.xpose.msra.mxu0 0.0
      %912 = vmatprep.subr.mxu0 0.0
      %913 = vmatpush1.xpose.msra.mxu0 0.0
      %914 = vmatprep.subr.mxu0 0.0
      %915 = vmatpush1.xpose.msra.mxu0 0.0
      %916 = vmatprep.subr.mxu0 0.0
      %917 = vmatpush1.xpose.msra.mxu0 0.0
      %918 = vmatprep.subr.mxu0 0.0
      %919 = vmatpush1.xpose.msra.mxu0 %v892
      %920 = vmatprep.subr.mxu0 0.0
      %921 = vmatpush1.xpose.msra.mxu0 %v889
      %922 = vmatprep.subr.mxu0 0.0
      %923 = vmatpush1.xpose.msra.mxu0 %v886
      %924 = vmatprep.subr.mxu0 0.0
      %925 = vmatpush1.xpose.msra.mxu0 %v883
      %926 = vmatprep.subr.mxu0 0.0
      %927 = vmatpush2.xpose.msra.mxu0 0.0
      %928 = vmatprep.subr.mxu0 0.0
      %929 = vmatpush2.xpose.msra.mxu0 0.0
      %930 = vmatprep.subr.mxu0 0.0
      %931 = vmatpush2.xpose.msra.mxu0 0.0
      %932 = vmatprep.subr.mxu0 0.0
      %933 = vmatpush2.xpose.msra.mxu0 0.0
      %934 = vmatprep.subr.mxu0 0.0
      %935 = vmatpush2.xpose.msra.mxu0 0.0
      %936 = vmatprep.subr.mxu0 0.0
      %937 = vmatpush2.xpose.msra.mxu0 0.0
      %938 = vmatprep.subr.mxu0 0.0
      %939 = vmatpush2.xpose.msra.mxu0 0.0
      %940 = vmatprep.subr.mxu0 0.0
      %941 = vmatpush2.xpose.msra.mxu0 0.0
      %942 = vmatprep.subr.mxu0 0.0
      %943 = vmatpush2.xpose.msra.mxu0 0.0
      %944 = vmatprep.subr.mxu0 0.0
      %945 = vmatpush2.xpose.msra.mxu0 0.0
      %946 = vmatprep.subr.mxu0 0.0
      %947 = vmatpush2.xpose.msra.mxu0 0.0
      %948 = vmatprep.subr.mxu0 0.0
      %949 = vmatpush2.xpose.msra.mxu0 0.0
      %950 = vmatprep.subr.mxu0 0.0
      %951 = vmatpush2.xpose.msra.mxu0 0.0
      %952 = vmatprep.subr.mxu0 0.0
      %953 = vmatpush2.xpose.msra.mxu0 0.0
      %954 = vmatprep.subr.mxu0 0.0
      %955 = vmatpush2.xpose.msra.mxu0 0.0
      %956 = vmatprep.subr.mxu0 0.0
      %957 = vmatpush2.xpose.msra.mxu0 0.0
      %958 = vmatprep.mubr.f32.mxu0 0.0
      %959 = vmatmul.mubr.f32.gmra.mxu0 %v871
      %v960 = vpop.f32.mrf.mxu0
      %v961 = vadd.f32 0.0, %v960
      %v962 = vpop.f32.mrf.mxu0
      %963 = vmatprep.mubr.f32.mxu0 0.0
      %964 = vmatmul.mubr.f32.gmra.mxu0 %v874
      %v965 = vpop.f32.mrf.mxu0
      %v966 = vadd.f32 0.0, %v965
      %v967 = vpop.f32.mrf.mxu0
      %968 = vmatprep.mubr.f32.mxu0 0.0
      %969 = vmatmul.mubr.f32.gmra.mxu0 %v877
      %v970 = vpop.f32.mrf.mxu0
      %v971 = vadd.f32 0.0, %v970
      %v972 = vpop.f32.mrf.mxu0
      %973 = vmatprep.mubr.f32.mxu0 0.0
      %974 = vmatmul.mubr.f32.gmra.mxu0 %v880
      %v975 = vpop.f32.mrf.mxu0
      %v976 = vadd.f32 0.0, %v975
      %v977 = vpop.f32.mrf.mxu0
      %978 = vdwg.mxu0
      %v980 = vsel %vm760, %v546, 0
      %v983 = vsel %vm760, %v552, 0
      %v986 = vsel %vm760, %v558, 0
      %v989 = vsel %vm760, %v564, 0
      %v992 = vsel %vm760, %v548, 0
      %v995 = vsel %vm760, %v554, 0
      %v998 = vsel %vm760, %v560, 0
      %v1001 = vsel %vm760, %v566, 0
      %1003 = vmatprep.subr.mxu0 0.0
      %1004 = vmatpush1.xpose.msra.mxu0 0.0
      %1005 = vmatprep.subr.mxu0 0.0
      %1006 = vmatpush1.xpose.msra.mxu0 0.0
      %1007 = vmatprep.subr.mxu0 0.0
      %1008 = vmatpush1.xpose.msra.mxu0 0.0
      %1009 = vmatprep.subr.mxu0 0.0
      %1010 = vmatpush1.xpose.msra.mxu0 0.0
      %1011 = vmatprep.subr.mxu0 0.0
      %1012 = vmatpush1.xpose.msra.mxu0 0.0
      %1013 = vmatprep.subr.mxu0 0.0
      %1014 = vmatpush1.xpose.msra.mxu0 0.0
      %1015 = vmatprep.subr.mxu0 0.0
      %1016 = vmatpush1.xpose.msra.mxu0 0.0
      %1017 = vmatprep.subr.mxu0 0.0
      %1018 = vmatpush1.xpose.msra.mxu0 0.0
      %1019 = vmatprep.subr.mxu0 0.0
      %1020 = vmatpush1.xpose.msra.mxu0 0.0
      %1021 = vmatprep.subr.mxu0 0.0
      %1022 = vmatpush1.xpose.msra.mxu0 0.0
      %1023 = vmatprep.subr.mxu0 0.0
      %1024 = vmatpush1.xpose.msra.mxu0 0.0
      %1025 = vmatprep.subr.mxu0 0.0
      %1026 = vmatpush1.xpose.msra.mxu0 0.0
      %1027 = vmatprep.subr.mxu0 0.0
      %1028 = vmatpush1.xpose.msra.mxu0 %v1001
      %1029 = vmatprep.subr.mxu0 0.0
      %1030 = vmatpush1.xpose.msra.mxu0 %v998
      %1031 = vmatprep.subr.mxu0 0.0
      %1032 = vmatpush1.xpose.msra.mxu0 %v995
      %1033 = vmatprep.subr.mxu0 0.0
      %1034 = vmatpush1.xpose.msra.mxu0 %v992
      %1035 = vmatprep.subr.mxu0 0.0
      %1036 = vmatpush2.xpose.msra.mxu0 0.0
      %1037 = vmatprep.subr.mxu0 0.0
      %1038 = vmatpush2.xpose.msra.mxu0 0.0
      %1039 = vmatprep.subr.mxu0 0.0
      %1040 = vmatpush2.xpose.msra.mxu0 0.0
      %1041 = vmatprep.subr.mxu0 0.0
      %1042 = vmatpush2.xpose.msra.mxu0 0.0
      %1043 = vmatprep.subr.mxu0 0.0
      %1044 = vmatpush2.xpose.msra.mxu0 0.0
      %1045 = vmatprep.subr.mxu0 0.0
      %1046 = vmatpush2.xpose.msra.mxu0 0.0
      %1047 = vmatprep.subr.mxu0 0.0
      %1048 = vmatpush2.xpose.msra.mxu0 0.0
      %1049 = vmatprep.subr.mxu0 0.0
      %1050 = vmatpush2.xpose.msra.mxu0 0.0
      %1051 = vmatprep.subr.mxu0 0.0
      %1052 = vmatpush2.xpose.msra.mxu0 0.0
      %1053 = vmatprep.subr.mxu0 0.0
      %1054 = vmatpush2.xpose.msra.mxu0 0.0
      %1055 = vmatprep.subr.mxu0 0.0
      %1056 = vmatpush2.xpose.msra.mxu0 0.0
      %1057 = vmatprep.subr.mxu0 0.0
      %1058 = vmatpush2.xpose.msra.mxu0 0.0
      %1059 = vmatprep.subr.mxu0 0.0
      %1060 = vmatpush2.xpose.msra.mxu0 0.0
      %1061 = vmatprep.subr.mxu0 0.0
      %1062 = vmatpush2.xpose.msra.mxu0 0.0
      %1063 = vmatprep.subr.mxu0 0.0
      %1064 = vmatpush2.xpose.msra.mxu0 0.0
      %1065 = vmatprep.subr.mxu0 0.0
      %1066 = vmatpush2.xpose.msra.mxu0 0.0
      %1067 = vmatprep.mubr.f32.mxu0 0.0
      %1068 = vmatmul.mubr.f32.gmra.mxu0 %v980
      %v1069 = vpop.f32.mrf.mxu0
      %v1070 = vadd.f32 0.0, %v1069
      %v1071 = vpop.f32.mrf.mxu0
      %1072 = vmatprep.mubr.f32.mxu0 0.0
      %1073 = vmatmul.mubr.f32.gmra.mxu0 %v983
      %v1074 = vpop.f32.mrf.mxu0
      %v1075 = vadd.f32 0.0, %v1074
      %v1076 = vpop.f32.mrf.mxu0
      %1077 = vmatprep.mubr.f32.mxu0 0.0
      %1078 = vmatmul.mubr.f32.gmra.mxu0 %v986
      %v1079 = vpop.f32.mrf.mxu0
      %v1080 = vadd.f32 0.0, %v1079
      %v1081 = vpop.f32.mrf.mxu0
      %1082 = vmatprep.mubr.f32.mxu0 0.0
      %1083 = vmatmul.mubr.f32.gmra.mxu0 %v989
      %v1084 = vpop.f32.mrf.mxu0
      %v1085 = vadd.f32 0.0, %v1084
      %v1086 = vpop.f32.mrf.mxu0
      %1087 = vdwg.mxu0
      %v1089 = vsel %vm760, %v570, 0
      %v1092 = vsel %vm760, %v576, 0
      %v1095 = vsel %vm760, %v582, 0
      %v1098 = vsel %vm760, %v588, 0
      %v1101 = vsel %vm760, %v572, 0
      %v1104 = vsel %vm760, %v578, 0
      %v1107 = vsel %vm760, %v584, 0
      %v1110 = vsel %vm760, %v590, 0
      %1112 = vmatprep.subr.mxu0 0.0
      %1113 = vmatpush1.xpose.msra.mxu0 0.0
      %1114 = vmatprep.subr.mxu0 0.0
      %1115 = vmatpush1.xpose.msra.mxu0 0.0
      %1116 = vmatprep.subr.mxu0 0.0
      %1117 = vmatpush1.xpose.msra.mxu0 0.0
      %1118 = vmatprep.subr.mxu0 0.0
      %1119 = vmatpush1.xpose.msra.mxu0 0.0
      %1120 = vmatprep.subr.mxu0 0.0
      %1121 = vmatpush1.xpose.msra.mxu0 0.0
      %1122 = vmatprep.subr.mxu0 0.0
      %1123 = vmatpush1.xpose.msra.mxu0 0.0
      %1124 = vmatprep.subr.mxu0 0.0
      %1125 = vmatpush1.xpose.msra.mxu0 0.0
      %1126 = vmatprep.subr.mxu0 0.0
      %1127 = vmatpush1.xpose.msra.mxu0 0.0
      %1128 = vmatprep.subr.mxu0 0.0
      %1129 = vmatpush1.xpose.msra.mxu0 0.0
      %1130 = vmatprep.subr.mxu0 0.0
      %1131 = vmatpush1.xpose.msra.mxu0 0.0
      %1132 = vmatprep.subr.mxu0 0.0
      %1133 = vmatpush1.xpose.msra.mxu0 0.0
      %1134 = vmatprep.subr.mxu0 0.0
      %1135 = vmatpush1.xpose.msra.mxu0 0.0
      %1136 = vmatprep.subr.mxu0 0.0
      %1137 = vmatpush1.xpose.msra.mxu0 %v1110
      %1138 = vmatprep.subr.mxu0 0.0
      %1139 = vmatpush1.xpose.msra.mxu0 %v1107
      %1140 = vmatprep.subr.mxu0 0.0
      %1141 = vmatpush1.xpose.msra.mxu0 %v1104
      %1142 = vmatprep.subr.mxu0 0.0
      %1143 = vmatpush1.xpose.msra.mxu0 %v1101
      %1144 = vmatprep.subr.mxu0 0.0
      %1145 = vmatpush2.xpose.msra.mxu0 0.0
      %1146 = vmatprep.subr.mxu0 0.0
      %1147 = vmatpush2.xpose.msra.mxu0 0.0
      %1148 = vmatprep.subr.mxu0 0.0
      %1149 = vmatpush2.xpose.msra.mxu0 0.0
      %1150 = vmatprep.subr.mxu0 0.0
      %1151 = vmatpush2.xpose.msra.mxu0 0.0
      %1152 = vmatprep.subr.mxu0 0.0
      %1153 = vmatpush2.xpose.msra.mxu0 0.0
      %1154 = vmatprep.subr.mxu0 0.0
      %1155 = vmatpush2.xpose.msra.mxu0 0.0
      %1156 = vmatprep.subr.mxu0 0.0
      %1157 = vmatpush2.xpose.msra.mxu0 0.0
      %1158 = vmatprep.subr.mxu0 0.0
      %1159 = vmatpush2.xpose.msra.mxu0 0.0
      %1160 = vmatprep.subr.mxu0 0.0
      %1161 = vmatpush2.xpose.msra.mxu0 0.0
      %1162 = vmatprep.subr.mxu0 0.0
      %1163 = vmatpush2.xpose.msra.mxu0 0.0
      %1164 = vmatprep.subr.mxu0 0.0
      %1165 = vmatpush2.xpose.msra.mxu0 0.0
      %1166 = vmatprep.subr.mxu0 0.0
      %1167 = vmatpush2.xpose.msra.mxu0 0.0
      %1168 = vmatprep.subr.mxu0 0.0
      %1169 = vmatpush2.xpose.msra.mxu0 0.0
      %1170 = vmatprep.subr.mxu0 0.0
      %1171 = vmatpush2.xpose.msra.mxu0 0.0
      %1172 = vmatprep.subr.mxu0 0.0
      %1173 = vmatpush2.xpose.msra.mxu0 0.0
      %1174 = vmatprep.subr.mxu0 0.0
      %1175 = vmatpush2.xpose.msra.mxu0 0.0
      %1176 = vmatprep.mubr.f32.mxu0 0.0
      %1177 = vmatmul.mubr.f32.gmra.mxu0 %v1089
      %v1178 = vpop.f32.mrf.mxu0
      %v1179 = vadd.f32 0.0, %v1178
      %v1180 = vpop.f32.mrf.mxu0
      %1181 = vmatprep.mubr.f32.mxu0 0.0
      %1182 = vmatmul.mubr.f32.gmra.mxu0 %v1092
      %v1183 = vpop.f32.mrf.mxu0
      %v1184 = vadd.f32 0.0, %v1183
      %v1185 = vpop.f32.mrf.mxu0
      %1186 = vmatprep.mubr.f32.mxu0 0.0
      %1187 = vmatmul.mubr.f32.gmra.mxu0 %v1095
      %v1188 = vpop.f32.mrf.mxu0
      %v1189 = vadd.f32 0.0, %v1188
      %v1190 = vpop.f32.mrf.mxu0
      %1191 = vmatprep.mubr.f32.mxu0 0.0
      %1192 = vmatmul.mubr.f32.gmra.mxu0 %v1098
      %v1193 = vpop.f32.mrf.mxu0
      %v1194 = vadd.f32 0.0, %v1193
      %v1195 = vpop.f32.mrf.mxu0
      %1196 = vdwg.mxu0
      %v1197 = vsel %vm760, %v852, -inf
      %1198 = vmax.xlane.f32.xlu0 %v1197
      %v1199 = vpop.xlane.xlu0 %1198
      %v1200 = vsel %vm760, %v857, -inf
      %1201 = vmax.xlane.f32.xlu0 %v1200
      %v1202 = vpop.xlane.xlu0 %1201
      %v1203 = vsel %vm760, %v862, -inf
      %1204 = vmax.xlane.f32.xlu0 %v1203
      %v1205 = vpop.xlane.xlu0 %1204
      %v1206 = vsel %vm760, %v867, -inf
      %1207 = vmax.xlane.f32.xlu0 %v1206
      %v1208 = vpop.xlane.xlu0 %1207
      %v1209 = vsel %vm760, %v961, -inf
      %1210 = vmax.xlane.f32.xlu0 %v1209
      %v1211 = vpop.xlane.xlu0 %1210
      %v1212 = vsel %vm760, %v966, -inf
      %1213 = vmax.xlane.f32.xlu0 %v1212
      %v1214 = vpop.xlane.xlu0 %1213
      %v1215 = vsel %vm760, %v971, -inf
      %1216 = vmax.xlane.f32.xlu0 %v1215
      %v1217 = vpop.xlane.xlu0 %1216
      %v1218 = vsel %vm760, %v976, -inf
      %1219 = vmax.xlane.f32.xlu0 %v1218
      %v1220 = vpop.xlane.xlu0 %1219
      %v1221 = vsel %vm760, %v1070, -inf
      %1222 = vmax.xlane.f32.xlu0 %v1221
      %v1223 = vpop.xlane.xlu0 %1222
      %v1224 = vsel %vm760, %v1075, -inf
      %1225 = vmax.xlane.f32.xlu0 %v1224
      %v1226 = vpop.xlane.xlu0 %1225
      %v1227 = vsel %vm760, %v1080, -inf
      %1228 = vmax.xlane.f32.xlu0 %v1227
      %v1229 = vpop.xlane.xlu0 %1228
      %v1230 = vsel %vm760, %v1085, -inf
      %1231 = vmax.xlane.f32.xlu0 %v1230
      %v1232 = vpop.xlane.xlu0 %1231
      %v1233 = vsel %vm760, %v1179, -inf
      %1234 = vmax.xlane.f32.xlu0 %v1233
      %v1235 = vpop.xlane.xlu0 %1234
      %v1236 = vsel %vm760, %v1184, -inf
      %1237 = vmax.xlane.f32.xlu0 %v1236
      %v1238 = vpop.xlane.xlu0 %1237
      %v1239 = vsel %vm760, %v1189, -inf
      %1240 = vmax.xlane.f32.xlu0 %v1239
      %v1241 = vpop.xlane.xlu0 %1240
      %v1242 = vsel %vm760, %v1194, -inf
      %1243 = vmax.xlane.f32.xlu0 %v1242
      %v1244 = vpop.xlane.xlu0 %1243
      %v1245 = vsub.f32 %v852, %v1199
      %v1246 = vsub.f32 %v857, %v1202
      %v1247 = vsub.f32 %v862, %v1205
      %v1248 = vsub.f32 %v867, %v1208
      %v1249 = vsub.f32 %v961, %v1211
      %v1250 = vsub.f32 %v966, %v1214
      %v1251 = vsub.f32 %v971, %v1217
      %v1252 = vsub.f32 %v976, %v1220
      %v1253 = vsub.f32 %v1070, %v1223
      %v1254 = vsub.f32 %v1075, %v1226
      %v1255 = vsub.f32 %v1080, %v1229
      %v1256 = vsub.f32 %v1085, %v1232
      %v1257 = vsub.f32 %v1179, %v1235
      %v1258 = vsub.f32 %v1184, %v1238
      %v1259 = vsub.f32 %v1189, %v1241
      %v1260 = vsub.f32 %v1194, %v1244
      %v1261 = vmul.f32 %v1245, 1.442695
      %v1262 = vpow.pop %v1261
      %v1263 = vmul.f32 %v1246, 1.442695
      %v1264 = vpow.pop %v1263
      %v1265 = vmul.f32 %v1247, 1.442695
      %v1266 = vpow.pop %v1265
      %v1267 = vmul.f32 %v1248, 1.442695
      %v1268 = vpow.pop %v1267
      %v1269 = vmul.f32 %v1249, 1.442695
      %v1270 = vpow.pop %v1269
      %v1271 = vmul.f32 %v1250, 1.442695
      %v1272 = vpow.pop %v1271
      %v1273 = vmul.f32 %v1251, 1.442695
      %v1274 = vpow.pop %v1273
      %v1275 = vmul.f32 %v1252, 1.442695
      %v1276 = vpow.pop %v1275
      %v1277 = vmul.f32 %v1253, 1.442695
      %v1278 = vpow.pop %v1277
      %v1279 = vmul.f32 %v1254, 1.442695
      %v1280 = vpow.pop %v1279
      %v1281 = vmul.f32 %v1255, 1.442695
      %v1282 = vpow.pop %v1281
      %v1283 = vmul.f32 %v1256, 1.442695
      %v1284 = vpow.pop %v1283
      %v1285 = vmul.f32 %v1257, 1.442695
      %v1286 = vpow.pop %v1285
      %v1287 = vmul.f32 %v1258, 1.442695
      %v1288 = vpow.pop %v1287
      %v1289 = vmul.f32 %v1259, 1.442695
      %v1290 = vpow.pop %v1289
      %v1291 = vmul.f32 %v1260, 1.442695
      %v1292 = vpow.pop %v1291
      %v1293 = vsel %vm760, %v1262, 0.0
      %1294 = vadd.xlane.f32.xlu0 %v1293
      %v1295 = vpop.xlane.xlu0 %1294
      %v1296 = vsel %vm760, %v1264, 0.0
      %1297 = vadd.xlane.f32.xlu0 %v1296
      %v1298 = vpop.xlane.xlu0 %1297
      %v1299 = vsel %vm760, %v1266, 0.0
      %1300 = vadd.xlane.f32.xlu0 %v1299
      %v1301 = vpop.xlane.xlu0 %1300
      %v1302 = vsel %vm760, %v1268, 0.0
      %1303 = vadd.xlane.f32.xlu0 %v1302
      %v1304 = vpop.xlane.xlu0 %1303
      %v1305 = vsel %vm760, %v1270, 0.0
      %1306 = vadd.xlane.f32.xlu0 %v1305
      %v1307 = vpop.xlane.xlu0 %1306
      %v1308 = vsel %vm760, %v1272, 0.0
      %1309 = vadd.xlane.f32.xlu0 %v1308
      %v1310 = vpop.xlane.xlu0 %1309
      %v1311 = vsel %vm760, %v1274, 0.0
      %1312 = vadd.xlane.f32.xlu0 %v1311
      %v1313 = vpop.xlane.xlu0 %1312
      %v1314 = vsel %vm760, %v1276, 0.0
      %1315 = vadd.xlane.f32.xlu0 %v1314
      %v1316 = vpop.xlane.xlu0 %1315
      %v1317 = vsel %vm760, %v1278, 0.0
      %1318 = vadd.xlane.f32.xlu0 %v1317
      %v1319 = vpop.xlane.xlu0 %1318
      %v1320 = vsel %vm760, %v1280, 0.0
      %1321 = vadd.xlane.f32.xlu0 %v1320
      %v1322 = vpop.xlane.xlu0 %1321
      %v1323 = vsel %vm760, %v1282, 0.0
      %1324 = vadd.xlane.f32.xlu0 %v1323
      %v1325 = vpop.xlane.xlu0 %1324
      %v1326 = vsel %vm760, %v1284, 0.0
      %1327 = vadd.xlane.f32.xlu0 %v1326
      %v1328 = vpop.xlane.xlu0 %1327
      %v1329 = vsel %vm760, %v1286, 0.0
      %1330 = vadd.xlane.f32.xlu0 %v1329
      %v1331 = vpop.xlane.xlu0 %1330
      %v1332 = vsel %vm760, %v1288, 0.0
      %1333 = vadd.xlane.f32.xlu0 %v1332
      %v1334 = vpop.xlane.xlu0 %1333
      %v1335 = vsel %vm760, %v1290, 0.0
      %1336 = vadd.xlane.f32.xlu0 %v1335
      %v1337 = vpop.xlane.xlu0 %1336
      %v1338 = vsel %vm760, %v1292, 0.0
      %1339 = vadd.xlane.f32.xlu0 %v1338
      %v1340 = vpop.xlane.xlu0 %1339
      %v1341 = vrcp.pop %v1295
      %v1342 = vmul.f32 %v1262, %v1341
      %v1343 = vrcp.pop %v1298
      %v1344 = vmul.f32 %v1264, %v1343
      %v1345 = vrcp.pop %v1301
      %v1346 = vmul.f32 %v1266, %v1345
      %v1347 = vrcp.pop %v1304
      %v1348 = vmul.f32 %v1268, %v1347
      %v1349 = vrcp.pop %v1307
      %v1350 = vmul.f32 %v1270, %v1349
      %v1351 = vrcp.pop %v1310
      %v1352 = vmul.f32 %v1272, %v1351
      %v1353 = vrcp.pop %v1313
      %v1354 = vmul.f32 %v1274, %v1353
      %v1355 = vrcp.pop %v1316
      %v1356 = vmul.f32 %v1276, %v1355
      %v1357 = vrcp.pop %v1319
      %v1358 = vmul.f32 %v1278, %v1357
      %v1359 = vrcp.pop %v1322
      %v1360 = vmul.f32 %v1280, %v1359
      %v1361 = vrcp.pop %v1325
      %v1362 = vmul.f32 %v1282, %v1361
      %v1363 = vrcp.pop %v1328
      %v1364 = vmul.f32 %v1284, %v1363
      %v1365 = vrcp.pop %v1331
      %v1366 = vmul.f32 %v1286, %v1365
      %v1367 = vrcp.pop %v1334
      %v1368 = vmul.f32 %v1288, %v1367
      %v1369 = vrcp.pop %v1337
      %v1370 = vmul.f32 %v1290, %v1369
      %v1371 = vrcp.pop %v1340
      %v1372 = vmul.f32 %v1292, %v1371
      %v1374 = vsel %vm760, %v1342, 0
      %v1377 = vsel %vm760, %v1344, 0
      %v1380 = vsel %vm760, %v1346, 0
      %v1383 = vsel %vm760, %v1348, 0
      %1385 = vmatprep.subr.mxu0 0.0
      %1386 = vmatpush1.msra.mxu0 0.0
      %1387 = vmatprep.subr.mxu0 0.0
      %1388 = vmatpush1.msra.mxu0 0.0
      %1389 = vmatprep.subr.mxu0 0.0
      %1390 = vmatpush1.msra.mxu0 0.0
      %1391 = vmatprep.subr.mxu0 0.0
      %1392 = vmatpush1.msra.mxu0 0.0
      %1393 = vmatprep.subr.mxu0 0.0
      %1394 = vmatpush1.msra.mxu0 0.0
      %1395 = vmatprep.subr.mxu0 0.0
      %1396 = vmatpush1.msra.mxu0 0.0
      %1397 = vmatprep.subr.mxu0 0.0
      %1398 = vmatpush1.msra.mxu0 0.0
      %1399 = vmatprep.subr.mxu0 0.0
      %1400 = vmatpush1.msra.mxu0 0.0
      %1401 = vmatprep.subr.mxu0 0.0
      %1402 = vmatpush1.msra.mxu0 0.0
      %1403 = vmatprep.subr.mxu0 0.0
      %1404 = vmatpush1.msra.mxu0 0.0
      %1405 = vmatprep.subr.mxu0 0.0
      %1406 = vmatpush1.msra.mxu0 0.0
      %1407 = vmatprep.subr.mxu0 0.0
      %1408 = vmatpush1.msra.mxu0 0.0
      %1409 = vmatprep.subr.mxu0 0.0
      %1410 = vmatpush1.msra.mxu0 %v697
      %1411 = vmatprep.subr.mxu0 0.0
      %1412 = vmatpush1.msra.mxu0 %v692
      %1413 = vmatprep.subr.mxu0 0.0
      %1414 = vmatpush1.msra.mxu0 %v687
      %1415 = vmatprep.subr.mxu0 0.0
      %1416 = vmatpush1.msra.mxu0 %v682
      %1417 = vmatprep.subr.mxu0 0.0
      %1418 = vmatpush2.msra.mxu0 0.0
      %1419 = vmatprep.subr.mxu0 0.0
      %1420 = vmatpush2.msra.mxu0 0.0
      %1421 = vmatprep.subr.mxu0 0.0
      %1422 = vmatpush2.msra.mxu0 0.0
      %1423 = vmatprep.subr.mxu0 0.0
      %1424 = vmatpush2.msra.mxu0 0.0
      %1425 = vmatprep.subr.mxu0 0.0
      %1426 = vmatpush2.msra.mxu0 0.0
      %1427 = vmatprep.subr.mxu0 0.0
      %1428 = vmatpush2.msra.mxu0 0.0
      %1429 = vmatprep.subr.mxu0 0.0
      %1430 = vmatpush2.msra.mxu0 0.0
      %1431 = vmatprep.subr.mxu0 0.0
      %1432 = vmatpush2.msra.mxu0 0.0
      %1433 = vmatprep.subr.mxu0 0.0
      %1434 = vmatpush2.msra.mxu0 0.0
      %1435 = vmatprep.subr.mxu0 0.0
      %1436 = vmatpush2.msra.mxu0 0.0
      %1437 = vmatprep.subr.mxu0 0.0
      %1438 = vmatpush2.msra.mxu0 0.0
      %1439 = vmatprep.subr.mxu0 0.0
      %1440 = vmatpush2.msra.mxu0 0.0
      %1441 = vmatprep.subr.mxu0 0.0
      %1442 = vmatpush2.msra.mxu0 0.0
      %1443 = vmatprep.subr.mxu0 0.0
      %1444 = vmatpush2.msra.mxu0 0.0
      %1445 = vmatprep.subr.mxu0 0.0
      %1446 = vmatpush2.msra.mxu0 0.0
      %1447 = vmatprep.subr.mxu0 0.0
      %1448 = vmatpush2.msra.mxu0 0.0
      %1449 = vmatprep.mubr.f32.mxu0 0.0
      %1450 = vmatmul.mubr.f32.gmra.mxu0 %v1374
      %v1451 = vpop.f32.mrf.mxu0
      %v1452 = vadd.f32 0.0, %v1451
      %v1453 = vpop.f32.mrf.mxu0
      %1454 = vmatprep.mubr.f32.mxu0 0.0
      %1455 = vmatmul.mubr.f32.gmra.mxu0 %v1377
      %v1456 = vpop.f32.mrf.mxu0
      %v1457 = vadd.f32 0.0, %v1456
      %v1458 = vpop.f32.mrf.mxu0
      %1459 = vmatprep.mubr.f32.mxu0 0.0
      %1460 = vmatmul.mubr.f32.gmra.mxu0 %v1380
      %v1461 = vpop.f32.mrf.mxu0
      %v1462 = vadd.f32 0.0, %v1461
      %v1463 = vpop.f32.mrf.mxu0
      %1464 = vmatprep.mubr.f32.mxu0 0.0
      %1465 = vmatmul.mubr.f32.gmra.mxu0 %v1383
      %v1466 = vpop.f32.mrf.mxu0
      %v1467 = vadd.f32 0.0, %v1466
      %v1468 = vpop.f32.mrf.mxu0
      %1469 = vdwg.mxu0
      %v1471 = vsel %vm760, %v1350, 0
      %v1474 = vsel %vm760, %v1352, 0
      %v1477 = vsel %vm760, %v1354, 0
      %v1480 = vsel %vm760, %v1356, 0
      %1482 = vmatprep.subr.mxu0 0.0
      %1483 = vmatpush1.msra.mxu0 0.0
      %1484 = vmatprep.subr.mxu0 0.0
      %1485 = vmatpush1.msra.mxu0 0.0
      %1486 = vmatprep.subr.mxu0 0.0
      %1487 = vmatpush1.msra.mxu0 0.0
      %1488 = vmatprep.subr.mxu0 0.0
      %1489 = vmatpush1.msra.mxu0 0.0
      %1490 = vmatprep.subr.mxu0 0.0
      %1491 = vmatpush1.msra.mxu0 0.0
      %1492 = vmatprep.subr.mxu0 0.0
      %1493 = vmatpush1.msra.mxu0 0.0
      %1494 = vmatprep.subr.mxu0 0.0
      %1495 = vmatpush1.msra.mxu0 0.0
      %1496 = vmatprep.subr.mxu0 0.0
      %1497 = vmatpush1.msra.mxu0 0.0
      %1498 = vmatprep.subr.mxu0 0.0
      %1499 = vmatpush1.msra.mxu0 0.0
      %1500 = vmatprep.subr.mxu0 0.0
      %1501 = vmatpush1.msra.mxu0 0.0
      %1502 = vmatprep.subr.mxu0 0.0
      %1503 = vmatpush1.msra.mxu0 0.0
      %1504 = vmatprep.subr.mxu0 0.0
      %1505 = vmatpush1.msra.mxu0 0.0
      %1506 = vmatprep.subr.mxu0 0.0
      %1507 = vmatpush1.msra.mxu0 %v717
      %1508 = vmatprep.subr.mxu0 0.0
      %1509 = vmatpush1.msra.mxu0 %v712
      %1510 = vmatprep.subr.mxu0 0.0
      %1511 = vmatpush1.msra.mxu0 %v707
      %1512 = vmatprep.subr.mxu0 0.0
      %1513 = vmatpush1.msra.mxu0 %v702
      %1514 = vmatprep.subr.mxu0 0.0
      %1515 = vmatpush2.msra.mxu0 0.0
      %1516 = vmatprep.subr.mxu0 0.0
      %1517 = vmatpush2.msra.mxu0 0.0
      %1518 = vmatprep.subr.mxu0 0.0
      %1519 = vmatpush2.msra.mxu0 0.0
      %1520 = vmatprep.subr.mxu0 0.0
      %1521 = vmatpush2.msra.mxu0 0.0
      %1522 = vmatprep.subr.mxu0 0.0
      %1523 = vmatpush2.msra.mxu0 0.0
      %1524 = vmatprep.subr.mxu0 0.0
      %1525 = vmatpush2.msra.mxu0 0.0
      %1526 = vmatprep.subr.mxu0 0.0
      %1527 = vmatpush2.msra.mxu0 0.0
      %1528 = vmatprep.subr.mxu0 0.0
      %1529 = vmatpush2.msra.mxu0 0.0
      %1530 = vmatprep.subr.mxu0 0.0
      %1531 = vmatpush2.msra.mxu0 0.0
      %1532 = vmatprep.subr.mxu0 0.0
      %1533 = vmatpush2.msra.mxu0 0.0
      %1534 = vmatprep.subr.mxu0 0.0
      %1535 = vmatpush2.msra.mxu0 0.0
      %1536 = vmatprep.subr.mxu0 0.0
      %1537 = vmatpush2.msra.mxu0 0.0
      %1538 = vmatprep.subr.mxu0 0.0
      %1539 = vmatpush2.msra.mxu0 0.0
      %1540 = vmatprep.subr.mxu0 0.0
      %1541 = vmatpush2.msra.mxu0 0.0
      %1542 = vmatprep.subr.mxu0 0.0
      %1543 = vmatpush2.msra.mxu0 0.0
      %1544 = vmatprep.subr.mxu0 0.0
      %1545 = vmatpush2.msra.mxu0 0.0
      %1546 = vmatprep.mubr.f32.mxu0 0.0
      %1547 = vmatmul.mubr.f32.gmra.mxu0 %v1471
      %v1548 = vpop.f32.mrf.mxu0
      %v1549 = vadd.f32 0.0, %v1548
      %v1550 = vpop.f32.mrf.mxu0
      %1551 = vmatprep.mubr.f32.mxu0 0.0
      %1552 = vmatmul.mubr.f32.gmra.mxu0 %v1474
      %v1553 = vpop.f32.mrf.mxu0
      %v1554 = vadd.f32 0.0, %v1553
      %v1555 = vpop.f32.mrf.mxu0
      %1556 = vmatprep.mubr.f32.mxu0 0.0
      %1557 = vmatmul.mubr.f32.gmra.mxu0 %v1477
      %v1558 = vpop.f32.mrf.mxu0
      %v1559 = vadd.f32 0.0, %v1558
      %v1560 = vpop.f32.mrf.mxu0
      %1561 = vmatprep.mubr.f32.mxu0 0.0
      %1562 = vmatmul.mubr.f32.gmra.mxu0 %v1480
      %v1563 = vpop.f32.mrf.mxu0
      %v1564 = vadd.f32 0.0, %v1563
      %v1565 = vpop.f32.mrf.mxu0
      %1566 = vdwg.mxu0
      %v1568 = vsel %vm760, %v1358, 0
      %v1571 = vsel %vm760, %v1360, 0
      %v1574 = vsel %vm760, %v1362, 0
      %v1577 = vsel %vm760, %v1364, 0
      %1579 = vmatprep.subr.mxu0 0.0
      %1580 = vmatpush1.msra.mxu0 0.0
      %1581 = vmatprep.subr.mxu0 0.0
      %1582 = vmatpush1.msra.mxu0 0.0
      %1583 = vmatprep.subr.mxu0 0.0
      %1584 = vmatpush1.msra.mxu0 0.0
      %1585 = vmatprep.subr.mxu0 0.0
      %1586 = vmatpush1.msra.mxu0 0.0
      %1587 = vmatprep.subr.mxu0 0.0
      %1588 = vmatpush1.msra.mxu0 0.0
      %1589 = vmatprep.subr.mxu0 0.0
      %1590 = vmatpush1.msra.mxu0 0.0
      %1591 = vmatprep.subr.mxu0 0.0
      %1592 = vmatpush1.msra.mxu0 0.0
      %1593 = vmatprep.subr.mxu0 0.0
      %1594 = vmatpush1.msra.mxu0 0.0
      %1595 = vmatprep.subr.mxu0 0.0
      %1596 = vmatpush1.msra.mxu0 0.0
      %1597 = vmatprep.subr.mxu0 0.0
      %1598 = vmatpush1.msra.mxu0 0.0
      %1599 = vmatprep.subr.mxu0 0.0
      %1600 = vmatpush1.msra.mxu0 0.0
      %1601 = vmatprep.subr.mxu0 0.0
      %1602 = vmatpush1.msra.mxu0 0.0
      %1603 = vmatprep.subr.mxu0 0.0
      %1604 = vmatpush1.msra.mxu0 %v737
      %1605 = vmatprep.subr.mxu0 0.0
      %1606 = vmatpush1.msra.mxu0 %v732
      %1607 = vmatprep.subr.mxu0 0.0
      %1608 = vmatpush1.msra.mxu0 %v727
      %1609 = vmatprep.subr.mxu0 0.0
      %1610 = vmatpush1.msra.mxu0 %v722
      %1611 = vmatprep.subr.mxu0 0.0
      %1612 = vmatpush2.msra.mxu0 0.0
      %1613 = vmatprep.subr.mxu0 0.0
      %1614 = vmatpush2.msra.mxu0 0.0
      %1615 = vmatprep.subr.mxu0 0.0
      %1616 = vmatpush2.msra.mxu0 0.0
      %1617 = vmatprep.subr.mxu0 0.0
      %1618 = vmatpush2.msra.mxu0 0.0
      %1619 = vmatprep.subr.mxu0 0.0
      %1620 = vmatpush2.msra.mxu0 0.0
      %1621 = vmatprep.subr.mxu0 0.0
      %1622 = vmatpush2.msra.mxu0 0.0
      %1623 = vmatprep.subr.mxu0 0.0
      %1624 = vmatpush2.msra.mxu0 0.0
      %1625 = vmatprep.subr.mxu0 0.0
      %1626 = vmatpush2.msra.mxu0 0.0
      %1627 = vmatprep.subr.mxu0 0.0
      %1628 = vmatpush2.msra.mxu0 0.0
      %1629 = vmatprep.subr.mxu0 0.0
      %1630 = vmatpush2.msra.mxu0 0.0
      %1631 = vmatprep.subr.mxu0 0.0
      %1632 = vmatpush2.msra.mxu0 0.0
      %1633 = vmatprep.subr.mxu0 0.0
      %1634 = vmatpush2.msra.mxu0 0.0
      %1635 = vmatprep.subr.mxu0 0.0
      %1636 = vmatpush2.msra.mxu0 0.0
      %1637 = vmatprep.subr.mxu0 0.0
      %1638 = vmatpush2.msra.mxu0 0.0
      %1639 = vmatprep.subr.mxu0 0.0
      %1640 = vmatpush2.msra.mxu0 0.0
      %1641 = vmatprep.subr.mxu0 0.0
      %1642 = vmatpush2.msra.mxu0 0.0
      %1643 = vmatprep.mubr.f32.mxu0 0.0
      %1644 = vmatmul.mubr.f32.gmra.mxu0 %v1568
      %v1645 = vpop.f32.mrf.mxu0
      %v1646 = vadd.f32 0.0, %v1645
      %v1647 = vpop.f32.mrf.mxu0
      %1648 = vmatprep.mubr.f32.mxu0 0.0
      %1649 = vmatmul.mubr.f32.gmra.mxu0 %v1571
      %v1650 = vpop.f32.mrf.mxu0
      %v1651 = vadd.f32 0.0, %v1650
      %v1652 = vpop.f32.mrf.mxu0
      %1653 = vmatprep.mubr.f32.mxu0 0.0
      %1654 = vmatmul.mubr.f32.gmra.mxu0 %v1574
      %v1655 = vpop.f32.mrf.mxu0
      %v1656 = vadd.f32 0.0, %v1655
      %v1657 = vpop.f32.mrf.mxu0
      %1658 = vmatprep.mubr.f32.mxu0 0.0
      %1659 = vmatmul.mubr.f32.gmra.mxu0 %v1577
      %v1660 = vpop.f32.mrf.mxu0
      %v1661 = vadd.f32 0.0, %v1660
      %v1662 = vpop.f32.mrf.mxu0
      %1663 = vdwg.mxu0
      %v1665 = vsel %vm760, %v1366, 0
      %v1668 = vsel %vm760, %v1368, 0
      %v1671 = vsel %vm760, %v1370, 0
      %v1674 = vsel %vm760, %v1372, 0
      %1676 = vmatprep.subr.mxu0 0.0
      %1677 = vmatpush1.msra.mxu0 0.0
      %1678 = vmatprep.subr.mxu0 0.0
      %1679 = vmatpush1.msra.mxu0 0.0
      %1680 = vmatprep.subr.mxu0 0.0
      %1681 = vmatpush1.msra.mxu0 0.0
      %1682 = vmatprep.subr.mxu0 0.0
      %1683 = vmatpush1.msra.mxu0 0.0
      %1684 = vmatprep.subr.mxu0 0.0
      %1685 = vmatpush1.msra.mxu0 0.0
      %1686 = vmatprep.subr.mxu0 0.0
      %1687 = vmatpush1.msra.mxu0 0.0
      %1688 = vmatprep.subr.mxu0 0.0
      %1689 = vmatpush1.msra.mxu0 0.0
      %1690 = vmatprep.subr.mxu0 0.0
      %1691 = vmatpush1.msra.mxu0 0.0
      %1692 = vmatprep.subr.mxu0 0.0
      %1693 = vmatpush1.msra.mxu0 0.0
      %1694 = vmatprep.subr.mxu0 0.0
      %1695 = vmatpush1.msra.mxu0 0.0
      %1696 = vmatprep.subr.mxu0 0.0
      %1697 = vmatpush1.msra.mxu0 0.0
      %1698 = vmatprep.subr.mxu0 0.0
      %1699 = vmatpush1.msra.mxu0 0.0
      %1700 = vmatprep.subr.mxu0 0.0
      %1701 = vmatpush1.msra.mxu0 %v757
      %1702 = vmatprep.subr.mxu0 0.0
      %1703 = vmatpush1.msra.mxu0 %v752
      %1704 = vmatprep.subr.mxu0 0.0
      %1705 = vmatpush1.msra.mxu0 %v747
      %1706 = vmatprep.subr.mxu0 0.0
      %1707 = vmatpush1.msra.mxu0 %v742
      %1708 = vmatprep.subr.mxu0 0.0
      %1709 = vmatpush2.msra.mxu0 0.0
      %1710 = vmatprep.subr.mxu0 0.0
      %1711 = vmatpush2.msra.mxu0 0.0
      %1712 = vmatprep.subr.mxu0 0.0
      %1713 = vmatpush2.msra.mxu0 0.0
      %1714 = vmatprep.subr.mxu0 0.0
      %1715 = vmatpush2.msra.mxu0 0.0
      %1716 = vmatprep.subr.mxu0 0.0
      %1717 = vmatpush2.msra.mxu0 0.0
      %1718 = vmatprep.subr.mxu0 0.0
      %1719 = vmatpush2.msra.mxu0 0.0
      %1720 = vmatprep.subr.mxu0 0.0
      %1721 = vmatpush2.msra.mxu0 0.0
      %1722 = vmatprep.subr.mxu0 0.0
      %1723 = vmatpush2.msra.mxu0 0.0
      %1724 = vmatprep.subr.mxu0 0.0
      %1725 = vmatpush2.msra.mxu0 0.0
      %1726 = vmatprep.subr.mxu0 0.0
      %1727 = vmatpush2.msra.mxu0 0.0
      %1728 = vmatprep.subr.mxu0 0.0
      %1729 = vmatpush2.msra.mxu0 0.0
      %1730 = vmatprep.subr.mxu0 0.0
      %1731 = vmatpush2.msra.mxu0 0.0
      %1732 = vmatprep.subr.mxu0 0.0
      %1733 = vmatpush2.msra.mxu0 0.0
      %1734 = vmatprep.subr.mxu0 0.0
      %1735 = vmatpush2.msra.mxu0 0.0
      %1736 = vmatprep.subr.mxu0 0.0
      %1737 = vmatpush2.msra.mxu0 0.0
      %1738 = vmatprep.subr.mxu0 0.0
      %1739 = vmatpush2.msra.mxu0 0.0
      %1740 = vmatprep.mubr.f32.mxu0 0.0
      %1741 = vmatmul.mubr.f32.gmra.mxu0 %v1665
      %v1742 = vpop.f32.mrf.mxu0
      %v1743 = vadd.f32 0.0, %v1742
      %v1744 = vpop.f32.mrf.mxu0
      %1745 = vmatprep.mubr.f32.mxu0 0.0
      %1746 = vmatmul.mubr.f32.gmra.mxu0 %v1668
      %v1747 = vpop.f32.mrf.mxu0
      %v1748 = vadd.f32 0.0, %v1747
      %v1749 = vpop.f32.mrf.mxu0
      %1750 = vmatprep.mubr.f32.mxu0 0.0
      %1751 = vmatmul.mubr.f32.gmra.mxu0 %v1671
      %v1752 = vpop.f32.mrf.mxu0
      %v1753 = vadd.f32 0.0, %v1752
      %v1754 = vpop.f32.mrf.mxu0
      %1755 = vmatprep.mubr.f32.mxu0 0.0
      %1756 = vmatmul.mubr.f32.gmra.mxu0 %v1674
      %v1757 = vpop.f32.mrf.mxu0
      %v1758 = vadd.f32 0.0, %v1757
      %v1759 = vpop.f32.mrf.mxu0
      %1760 = vdwg.mxu0
      %1761 = vrot.lane.b32.xlu0 %v498, 96
      %v1762 = vpop.permute.xlu0 %1761
      %1763 = vrot.lane.b32.xlu0 %v504, 96
      %v1764 = vpop.permute.xlu0 %1763
      %1765 = vrot.lane.b32.xlu0 %v510, 96
      %v1766 = vpop.permute.xlu0 %1765
      %1767 = vrot.lane.b32.xlu0 %v516, 96
      %v1768 = vpop.permute.xlu0 %1767
      %1769 = vrot.lane.b32.xlu0 %v500, 96
      %v1770 = vpop.permute.xlu0 %1769
      %1771 = vrot.lane.b32.xlu0 %v506, 96
      %v1772 = vpop.permute.xlu0 %1771
      %1773 = vrot.lane.b32.xlu0 %v512, 96
      %v1774 = vpop.permute.xlu0 %1773
      %1775 = vrot.lane.b32.xlu0 %v518, 96
      %v1776 = vpop.permute.xlu0 %1775
      %v1777 = vsel %vm760, %v1762, 0
      %v1779 = vsel %vm760, %v1764, 0
      %v1781 = vsel %vm760, %v1766, 0
      %v1783 = vsel %vm760, %v1768, 0
      %v1785 = vsel %vm760, %v1770, 0
      %v1787 = vsel %vm760, %v1772, 0
      %v1789 = vsel %vm760, %v1774, 0
      %v1791 = vsel %vm760, %v1776, 0
      %1793 = vmatprep.subr.mxu0 0.0
      %1794 = vmatpush1.xpose.msra.mxu0 0.0
      %1795 = vmatprep.subr.mxu0 0.0
      %1796 = vmatpush1.xpose.msra.mxu0 0.0
      %1797 = vmatprep.subr.mxu0 0.0
      %1798 = vmatpush1.xpose.msra.mxu0 0.0
      %1799 = vmatprep.subr.mxu0 0.0
      %1800 = vmatpush1.xpose.msra.mxu0 0.0
      %1801 = vmatprep.subr.mxu0 0.0
      %1802 = vmatpush1.xpose.msra.mxu0 0.0
      %1803 = vmatprep.subr.mxu0 0.0
      %1804 = vmatpush1.xpose.msra.mxu0 0.0
      %1805 = vmatprep.subr.mxu0 0.0
      %1806 = vmatpush1.xpose.msra.mxu0 0.0
      %1807 = vmatprep.subr.mxu0 0.0
      %1808 = vmatpush1.xpose.msra.mxu0 0.0
      %1809 = vmatprep.subr.mxu0 0.0
      %1810 = vmatpush1.xpose.msra.mxu0 0.0
      %1811 = vmatprep.subr.mxu0 0.0
      %1812 = vmatpush1.xpose.msra.mxu0 0.0
      %1813 = vmatprep.subr.mxu0 0.0
      %1814 = vmatpush1.xpose.msra.mxu0 0.0
      %1815 = vmatprep.subr.mxu0 0.0
      %1816 = vmatpush1.xpose.msra.mxu0 0.0
      %1817 = vmatprep.subr.mxu0 0.0
      %1818 = vmatpush1.xpose.msra.mxu0 %v1791
      %1819 = vmatprep.subr.mxu0 0.0
      %1820 = vmatpush1.xpose.msra.mxu0 %v1789
      %1821 = vmatprep.subr.mxu0 0.0
      %1822 = vmatpush1.xpose.msra.mxu0 %v1787
      %1823 = vmatprep.subr.mxu0 0.0
      %1824 = vmatpush1.xpose.msra.mxu0 %v1785
      %1825 = vmatprep.subr.mxu0 0.0
      %1826 = vmatpush2.xpose.msra.mxu0 0.0
      %1827 = vmatprep.subr.mxu0 0.0
      %1828 = vmatpush2.xpose.msra.mxu0 0.0
      %1829 = vmatprep.subr.mxu0 0.0
      %1830 = vmatpush2.xpose.msra.mxu0 0.0
      %1831 = vmatprep.subr.mxu0 0.0
      %1832 = vmatpush2.xpose.msra.mxu0 0.0
      %1833 = vmatprep.subr.mxu0 0.0
      %1834 = vmatpush2.xpose.msra.mxu0 0.0
      %1835 = vmatprep.subr.mxu0 0.0
      %1836 = vmatpush2.xpose.msra.mxu0 0.0
      %1837 = vmatprep.subr.mxu0 0.0
      %1838 = vmatpush2.xpose.msra.mxu0 0.0
      %1839 = vmatprep.subr.mxu0 0.0
      %1840 = vmatpush2.xpose.msra.mxu0 0.0
      %1841 = vmatprep.subr.mxu0 0.0
      %1842 = vmatpush2.xpose.msra.mxu0 0.0
      %1843 = vmatprep.subr.mxu0 0.0
      %1844 = vmatpush2.xpose.msra.mxu0 0.0
      %1845 = vmatprep.subr.mxu0 0.0
      %1846 = vmatpush2.xpose.msra.mxu0 0.0
      %1847 = vmatprep.subr.mxu0 0.0
      %1848 = vmatpush2.xpose.msra.mxu0 0.0
      %1849 = vmatprep.subr.mxu0 0.0
      %1850 = vmatpush2.xpose.msra.mxu0 0.0
      %1851 = vmatprep.subr.mxu0 0.0
      %1852 = vmatpush2.xpose.msra.mxu0 0.0
      %1853 = vmatprep.subr.mxu0 0.0
      %1854 = vmatpush2.xpose.msra.mxu0 0.0
      %1855 = vmatprep.subr.mxu0 0.0
      %1856 = vmatpush2.xpose.msra.mxu0 0.0
      %1857 = vmatprep.mubr.f32.mxu0 0.0
      %1858 = vmatmul.mubr.f32.gmra.mxu0 %v1777
      %v1859 = vpop.f32.mrf.mxu0
      %v1860 = vadd.f32 0.0, %v1859
      %v1861 = vpop.f32.mrf.mxu0
      %1862 = vmatprep.mubr.f32.mxu0 0.0
      %1863 = vmatmul.mubr.f32.gmra.mxu0 %v1779
      %v1864 = vpop.f32.mrf.mxu0
      %v1865 = vadd.f32 0.0, %v1864
      %v1866 = vpop.f32.mrf.mxu0
      %1867 = vmatprep.mubr.f32.mxu0 0.0
      %1868 = vmatmul.mubr.f32.gmra.mxu0 %v1781
      %v1869 = vpop.f32.mrf.mxu0
      %v1870 = vadd.f32 0.0, %v1869
      %v1871 = vpop.f32.mrf.mxu0
      %1872 = vmatprep.mubr.f32.mxu0 0.0
      %1873 = vmatmul.mubr.f32.gmra.mxu0 %v1783
      %v1874 = vpop.f32.mrf.mxu0
      %v1875 = vadd.f32 0.0, %v1874
      %v1876 = vpop.f32.mrf.mxu0
      %1877 = vdwg.mxu0
      %1878 = vrot.lane.b32.xlu0 %v522, 96
      %v1879 = vpop.permute.xlu0 %1878
      %1880 = vrot.lane.b32.xlu0 %v528, 96
      %v1881 = vpop.permute.xlu0 %1880
      %1882 = vrot.lane.b32.xlu0 %v534, 96
      %v1883 = vpop.permute.xlu0 %1882
      %1884 = vrot.lane.b32.xlu0 %v540, 96
      %v1885 = vpop.permute.xlu0 %1884
      %1886 = vrot.lane.b32.xlu0 %v524, 96
      %v1887 = vpop.permute.xlu0 %1886
      %1888 = vrot.lane.b32.xlu0 %v530, 96
      %v1889 = vpop.permute.xlu0 %1888
      %1890 = vrot.lane.b32.xlu0 %v536, 96
      %v1891 = vpop.permute.xlu0 %1890
      %1892 = vrot.lane.b32.xlu0 %v542, 96
      %v1893 = vpop.permute.xlu0 %1892
      %v1894 = vsel %vm760, %v1879, 0
      %v1896 = vsel %vm760, %v1881, 0
      %v1898 = vsel %vm760, %v1883, 0
      %v1900 = vsel %vm760, %v1885, 0
      %v1902 = vsel %vm760, %v1887, 0
      %v1904 = vsel %vm760, %v1889, 0
      %v1906 = vsel %vm760, %v1891, 0
      %v1908 = vsel %vm760, %v1893, 0
      %1910 = vmatprep.subr.mxu0 0.0
      %1911 = vmatpush1.xpose.msra.mxu0 0.0
      %1912 = vmatprep.subr.mxu0 0.0
      %1913 = vmatpush1.xpose.msra.mxu0 0.0
      %1914 = vmatprep.subr.mxu0 0.0
      %1915 = vmatpush1.xpose.msra.mxu0 0.0
      %1916 = vmatprep.subr.mxu0 0.0
      %1917 = vmatpush1.xpose.msra.mxu0 0.0
      %1918 = vmatprep.subr.mxu0 0.0
      %1919 = vmatpush1.xpose.msra.mxu0 0.0
      %1920 = vmatprep.subr.mxu0 0.0
      %1921 = vmatpush1.xpose.msra.mxu0 0.0
      %1922 = vmatprep.subr.mxu0 0.0
      %1923 = vmatpush1.xpose.msra.mxu0 0.0
      %1924 = vmatprep.subr.mxu0 0.0
      %1925 = vmatpush1.xpose.msra.mxu0 0.0
      %1926 = vmatprep.subr.mxu0 0.0
      %1927 = vmatpush1.xpose.msra.mxu0 0.0
      %1928 = vmatprep.subr.mxu0 0.0
      %1929 = vmatpush1.xpose.msra.mxu0 0.0
      %1930 = vmatprep.subr.mxu0 0.0
      %1931 = vmatpush1.xpose.msra.mxu0 0.0
      %1932 = vmatprep.subr.mxu0 0.0
      %1933 = vmatpush1.xpose.msra.mxu0 0.0
      %1934 = vmatprep.subr.mxu0 0.0
      %1935 = vmatpush1.xpose.msra.mxu0 %v1908
      %1936 = vmatprep.subr.mxu0 0.0
      %1937 = vmatpush1.xpose.msra.mxu0 %v1906
      %1938 = vmatprep.subr.mxu0 0.0
      %1939 = vmatpush1.xpose.msra.mxu0 %v1904
      %1940 = vmatprep.subr.mxu0 0.0
      %1941 = vmatpush1.xpose.msra.mxu0 %v1902
      %1942 = vmatprep.subr.mxu0 0.0
      %1943 = vmatpush2.xpose.msra.mxu0 0.0
      %1944 = vmatprep.subr.mxu0 0.0
      %1945 = vmatpush2.xpose.msra.mxu0 0.0
      %1946 = vmatprep.subr.mxu0 0.0
      %1947 = vmatpush2.xpose.msra.mxu0 0.0
      %1948 = vmatprep.subr.mxu0 0.0
      %1949 = vmatpush2.xpose.msra.mxu0 0.0
      %1950 = vmatprep.subr.mxu0 0.0
      %1951 = vmatpush2.xpose.msra.mxu0 0.0
      %1952 = vmatprep.subr.mxu0 0.0
      %1953 = vmatpush2.xpose.msra.mxu0 0.0
      %1954 = vmatprep.subr.mxu0 0.0
      %1955 = vmatpush2.xpose.msra.mxu0 0.0
      %1956 = vmatprep.subr.mxu0 0.0
      %1957 = vmatpush2.xpose.msra.mxu0 0.0
      %1958 = vmatprep.subr.mxu0 0.0
      %1959 = vmatpush2.xpose.msra.mxu0 0.0
      %1960 = vmatprep.subr.mxu0 0.0
      %1961 = vmatpush2.xpose.msra.mxu0 0.0
      %1962 = vmatprep.subr.mxu0 0.0
      %1963 = vmatpush2.xpose.msra.mxu0 0.0
      %1964 = vmatprep.subr.mxu0 0.0
      %1965 = vmatpush2.xpose.msra.mxu0 0.0
      %1966 = vmatprep.subr.mxu0 0.0
      %1967 = vmatpush2.xpose.msra.mxu0 0.0
      %1968 = vmatprep.subr.mxu0 0.0
      %1969 = vmatpush2.xpose.msra.mxu0 0.0
      %1970 = vmatprep.subr.mxu0 0.0
      %1971 = vmatpush2.xpose.msra.mxu0 0.0
      %1972 = vmatprep.subr.mxu0 0.0
      %1973 = vmatpush2.xpose.msra.mxu0 0.0
      %1974 = vmatprep.mubr.f32.mxu0 0.0
      %1975 = vmatmul.mubr.f32.gmra.mxu0 %v1894
      %v1976 = vpop.f32.mrf.mxu0
      %v1977 = vadd.f32 0.0, %v1976
      %v1978 = vpop.f32.mrf.mxu0
      %1979 = vmatprep.mubr.f32.mxu0 0.0
      %1980 = vmatmul.mubr.f32.gmra.mxu0 %v1896
      %v1981 = vpop.f32.mrf.mxu0
      %v1982 = vadd.f32 0.0, %v1981
      %v1983 = vpop.f32.mrf.mxu0
      %1984 = vmatprep.mubr.f32.mxu0 0.0
      %1985 = vmatmul.mubr.f32.gmra.mxu0 %v1898
      %v1986 = vpop.f32.mrf.mxu0
      %v1987 = vadd.f32 0.0, %v1986
      %v1988 = vpop.f32.mrf.mxu0
      %1989 = vmatprep.mubr.f32.mxu0 0.0
      %1990 = vmatmul.mubr.f32.gmra.mxu0 %v1900
      %v1991 = vpop.f32.mrf.mxu0
      %v1992 = vadd.f32 0.0, %v1991
      %v1993 = vpop.f32.mrf.mxu0
      %1994 = vdwg.mxu0
      %1995 = vrot.lane.b32.xlu0 %v546, 96
      %v1996 = vpop.permute.xlu0 %1995
      %1997 = vrot.lane.b32.xlu0 %v552, 96
      %v1998 = vpop.permute.xlu0 %1997
      %1999 = vrot.lane.b32.xlu0 %v558, 96
      %v2000 = vpop.permute.xlu0 %1999
      %2001 = vrot.lane.b32.xlu0 %v564, 96
      %v2002 = vpop.permute.xlu0 %2001
      %2003 = vrot.lane.b32.xlu0 %v548, 96
      %v2004 = vpop.permute.xlu0 %2003
      %2005 = vrot.lane.b32.xlu0 %v554, 96
      %v2006 = vpop.permute.xlu0 %2005
      %2007 = vrot.lane.b32.xlu0 %v560, 96
      %v2008 = vpop.permute.xlu0 %2007
      %2009 = vrot.lane.b32.xlu0 %v566, 96
      %v2010 = vpop.permute.xlu0 %2009
      %v2011 = vsel %vm760, %v1996, 0
      %v2013 = vsel %vm760, %v1998, 0
      %v2015 = vsel %vm760, %v2000, 0
      %v2017 = vsel %vm760, %v2002, 0
      %v2019 = vsel %vm760, %v2004, 0
      %v2021 = vsel %vm760, %v2006, 0
      %v2023 = vsel %vm760, %v2008, 0
      %v2025 = vsel %vm760, %v2010, 0
      %2027 = vmatprep.subr.mxu0 0.0
      %2028 = vmatpush1.xpose.msra.mxu0 0.0
      %2029 = vmatprep.subr.mxu0 0.0
      %2030 = vmatpush1.xpose.msra.mxu0 0.0
      %2031 = vmatprep.subr.mxu0 0.0
      %2032 = vmatpush1.xpose.msra.mxu0 0.0
      %2033 = vmatprep.subr.mxu0 0.0
      %2034 = vmatpush1.xpose.msra.mxu0 0.0
      %2035 = vmatprep.subr.mxu0 0.0
      %2036 = vmatpush1.xpose.msra.mxu0 0.0
      %2037 = vmatprep.subr.mxu0 0.0
      %2038 = vmatpush1.xpose.msra.mxu0 0.0
      %2039 = vmatprep.subr.mxu0 0.0
      %2040 = vmatpush1.xpose.msra.mxu0 0.0
      %2041 = vmatprep.subr.mxu0 0.0
      %2042 = vmatpush1.xpose.msra.mxu0 0.0
      %2043 = vmatprep.subr.mxu0 0.0
      %2044 = vmatpush1.xpose.msra.mxu0 0.0
      %2045 = vmatprep.subr.mxu0 0.0
      %2046 = vmatpush1.xpose.msra.mxu0 0.0
      %2047 = vmatprep.subr.mxu0 0.0
      %2048 = vmatpush1.xpose.msra.mxu0 0.0
      %2049 = vmatprep.subr.mxu0 0.0
      %2050 = vmatpush1.xpose.msra.mxu0 0.0
      %2051 = vmatprep.subr.mxu0 0.0
      %2052 = vmatpush1.xpose.msra.mxu0 %v2025
      %2053 = vmatprep.subr.mxu0 0.0
      %2054 = vmatpush1.xpose.msra.mxu0 %v2023
      %2055 = vmatprep.subr.mxu0 0.0
      %2056 = vmatpush1.xpose.msra.mxu0 %v2021
      %2057 = vmatprep.subr.mxu0 0.0
      %2058 = vmatpush1.xpose.msra.mxu0 %v2019
      %2059 = vmatprep.subr.mxu0 0.0
      %2060 = vmatpush2.xpose.msra.mxu0 0.0
      %2061 = vmatprep.subr.mxu0 0.0
      %2062 = vmatpush2.xpose.msra.mxu0 0.0
      %2063 = vmatprep.subr.mxu0 0.0
      %2064 = vmatpush2.xpose.msra.mxu0 0.0
      %2065 = vmatprep.subr.mxu0 0.0
      %2066 = vmatpush2.xpose.msra.mxu0 0.0
      %2067 = vmatprep.subr.mxu0 0.0
      %2068 = vmatpush2.xpose.msra.mxu0 0.0
      %2069 = vmatprep.subr.mxu0 0.0
      %2070 = vmatpush2.xpose.msra.mxu0 0.0
      %2071 = vmatprep.subr.mxu0 0.0
      %2072 = vmatpush2.xpose.msra.mxu0 0.0
      %2073 = vmatprep.subr.mxu0 0.0
      %2074 = vmatpush2.xpose.msra.mxu0 0.0
      %2075 = vmatprep.subr.mxu0 0.0
      %2076 = vmatpush2.xpose.msra.mxu0 0.0
      %2077 = vmatprep.subr.mxu0 0.0
      %2078 = vmatpush2.xpose.msra.mxu0 0.0
      %2079 = vmatprep.subr.mxu0 0.0
      %2080 = vmatpush2.xpose.msra.mxu0 0.0
      %2081 = vmatprep.subr.mxu0 0.0
      %2082 = vmatpush2.xpose.msra.mxu0 0.0
      %2083 = vmatprep.subr.mxu0 0.0
      %2084 = vmatpush2.xpose.msra.mxu0 0.0
      %2085 = vmatprep.subr.mxu0 0.0
      %2086 = vmatpush2.xpose.msra.mxu0 0.0
      %2087 = vmatprep.subr.mxu0 0.0
      %2088 = vmatpush2.xpose.msra.mxu0 0.0
      %2089 = vmatprep.subr.mxu0 0.0
      %2090 = vmatpush2.xpose.msra.mxu0 0.0
      %2091 = vmatprep.mubr.f32.mxu0 0.0
      %2092 = vmatmul.mubr.f32.gmra.mxu0 %v2011
      %v2093 = vpop.f32.mrf.mxu0
      %v2094 = vadd.f32 0.0, %v2093
      %v2095 = vpop.f32.mrf.mxu0
      %2096 = vmatprep.mubr.f32.mxu0 0.0
      %2097 = vmatmul.mubr.f32.gmra.mxu0 %v2013
      %v2098 = vpop.f32.mrf.mxu0
      %v2099 = vadd.f32 0.0, %v2098
      %v2100 = vpop.f32.mrf.mxu0
      %2101 = vmatprep.mubr.f32.mxu0 0.0
      %2102 = vmatmul.mubr.f32.gmra.mxu0 %v2015
      %v2103 = vpop.f32.mrf.mxu0
      %v2104 = vadd.f32 0.0, %v2103
      %v2105 = vpop.f32.mrf.mxu0
      %2106 = vmatprep.mubr.f32.mxu0 0.0
      %2107 = vmatmul.mubr.f32.gmra.mxu0 %v2017
      %v2108 = vpop.f32.mrf.mxu0
      %v2109 = vadd.f32 0.0, %v2108
      %v2110 = vpop.f32.mrf.mxu0
      %2111 = vdwg.mxu0
      %2112 = vrot.lane.b32.xlu0 %v570, 96
      %v2113 = vpop.permute.xlu0 %2112
      %2114 = vrot.lane.b32.xlu0 %v576, 96
      %v2115 = vpop.permute.xlu0 %2114
      %2116 = vrot.lane.b32.xlu0 %v582, 96
      %v2117 = vpop.permute.xlu0 %2116
      %2118 = vrot.lane.b32.xlu0 %v588, 96
      %v2119 = vpop.permute.xlu0 %2118
      %2120 = vrot.lane.b32.xlu0 %v572, 96
      %v2121 = vpop.permute.xlu0 %2120
      %2122 = vrot.lane.b32.xlu0 %v578, 96
      %v2123 = vpop.permute.xlu0 %2122
      %2124 = vrot.lane.b32.xlu0 %v584, 96
      %v2125 = vpop.permute.xlu0 %2124
      %2126 = vrot.lane.b32.xlu0 %v590, 96
      %v2127 = vpop.permute.xlu0 %2126
      %v2128 = vsel %vm760, %v2113, 0
      %v2130 = vsel %vm760, %v2115, 0
      %v2132 = vsel %vm760, %v2117, 0
      %v2134 = vsel %vm760, %v2119, 0
      %v2136 = vsel %vm760, %v2121, 0
      %v2138 = vsel %vm760, %v2123, 0
      %v2140 = vsel %vm760, %v2125, 0
      %v2142 = vsel %vm760, %v2127, 0
      %2144 = vmatprep.subr.mxu0 0.0
      %2145 = vmatpush1.xpose.msra.mxu0 0.0
      %2146 = vmatprep.subr.mxu0 0.0
      %2147 = vmatpush1.xpose.msra.mxu0 0.0
      %2148 = vmatprep.subr.mxu0 0.0
      %2149 = vmatpush1.xpose.msra.mxu0 0.0
      %2150 = vmatprep.subr.mxu0 0.0
      %2151 = vmatpush1.xpose.msra.mxu0 0.0
      %2152 = vmatprep.subr.mxu0 0.0
      %2153 = vmatpush1.xpose.msra.mxu0 0.0
      %2154 = vmatprep.subr.mxu0 0.0
      %2155 = vmatpush1.xpose.msra.mxu0 0.0
      %2156 = vmatprep.subr.mxu0 0.0
      %2157 = vmatpush1.xpose.msra.mxu0 0.0
      %2158 = vmatprep.subr.mxu0 0.0
      %2159 = vmatpush1.xpose.msra.mxu0 0.0
      %2160 = vmatprep.subr.mxu0 0.0
      %2161 = vmatpush1.xpose.msra.mxu0 0.0
      %2162 = vmatprep.subr.mxu0 0.0
      %2163 = vmatpush1.xpose.msra.mxu0 0.0
      %2164 = vmatprep.subr.mxu0 0.0
      %2165 = vmatpush1.xpose.msra.mxu0 0.0
      %2166 = vmatprep.subr.mxu0 0.0
      %2167 = vmatpush1.xpose.msra.mxu0 0.0
      %2168 = vmatprep.subr.mxu0 0.0
      %2169 = vmatpush1.xpose.msra.mxu0 %v2142
      %2170 = vmatprep.subr.mxu0 0.0
      %2171 = vmatpush1.xpose.msra.mxu0 %v2140
      %2172 = vmatprep.subr.mxu0 0.0
      %2173 = vmatpush1.xpose.msra.mxu0 %v2138
      %2174 = vmatprep.subr.mxu0 0.0
      %2175 = vmatpush1.xpose.msra.mxu0 %v2136
      %2176 = vmatprep.subr.mxu0 0.0
      %2177 = vmatpush2.xpose.msra.mxu0 0.0
      %2178 = vmatprep.subr.mxu0 0.0
      %2179 = vmatpush2.xpose.msra.mxu0 0.0
      %2180 = vmatprep.subr.mxu0 0.0
      %2181 = vmatpush2.xpose.msra.mxu0 0.0
      %2182 = vmatprep.subr.mxu0 0.0
      %2183 = vmatpush2.xpose.msra.mxu0 0.0
      %2184 = vmatprep.subr.mxu0 0.0
      %2185 = vmatpush2.xpose.msra.mxu0 0.0
      %2186 = vmatprep.subr.mxu0 0.0
      %2187 = vmatpush2.xpose.msra.mxu0 0.0
      %2188 = vmatprep.subr.mxu0 0.0
      %2189 = vmatpush2.xpose.msra.mxu0 0.0
      %2190 = vmatprep.subr.mxu0 0.0
      %2191 = vmatpush2.xpose.msra.mxu0 0.0
      %2192 = vmatprep.subr.mxu0 0.0
      %2193 = vmatpush2.xpose.msra.mxu0 0.0
      %2194 = vmatprep.subr.mxu0 0.0
      %2195 = vmatpush2.xpose.msra.mxu0 0.0
      %2196 = vmatprep.subr.mxu0 0.0
      %2197 = vmatpush2.xpose.msra.mxu0 0.0
      %2198 = vmatprep.subr.mxu0 0.0
      %2199 = vmatpush2.xpose.msra.mxu0 0.0
      %2200 = vmatprep.subr.mxu0 0.0
      %2201 = vmatpush2.xpose.msra.mxu0 0.0
      %2202 = vmatprep.subr.mxu0 0.0
      %2203 = vmatpush2.xpose.msra.mxu0 0.0
      %2204 = vmatprep.subr.mxu0 0.0
      %2205 = vmatpush2.xpose.msra.mxu0 0.0
      %2206 = vmatprep.subr.mxu0 0.0
      %2207 = vmatpush2.xpose.msra.mxu0 0.0
      %2208 = vmatprep.mubr.f32.mxu0 0.0
      %2209 = vmatmul.mubr.f32.gmra.mxu0 %v2128
      %v2210 = vpop.f32.mrf.mxu0
      %v2211 = vadd.f32 0.0, %v2210
      %v2212 = vpop.f32.mrf.mxu0
      %2213 = vmatprep.mubr.f32.mxu0 0.0
      %2214 = vmatmul.mubr.f32.gmra.mxu0 %v2130
      %v2215 = vpop.f32.mrf.mxu0
      %v2216 = vadd.f32 0.0, %v2215
      %v2217 = vpop.f32.mrf.mxu0
      %2218 = vmatprep.mubr.f32.mxu0 0.0
      %2219 = vmatmul.mubr.f32.gmra.mxu0 %v2132
      %v2220 = vpop.f32.mrf.mxu0
      %v2221 = vadd.f32 0.0, %v2220
      %v2222 = vpop.f32.mrf.mxu0
      %2223 = vmatprep.mubr.f32.mxu0 0.0
      %2224 = vmatmul.mubr.f32.gmra.mxu0 %v2134
      %v2225 = vpop.f32.mrf.mxu0
      %v2226 = vadd.f32 0.0, %v2225
      %v2227 = vpop.f32.mrf.mxu0
      %2228 = vdwg.mxu0
      %v2229 = vsel %vm760, %v1860, -inf
      %2230 = vmax.xlane.f32.xlu0 %v2229
      %v2231 = vpop.xlane.xlu0 %2230
      %v2232 = vsel %vm760, %v1865, -inf
      %2233 = vmax.xlane.f32.xlu0 %v2232
      %v2234 = vpop.xlane.xlu0 %2233
      %v2235 = vsel %vm760, %v1870, -inf
      %2236 = vmax.xlane.f32.xlu0 %v2235
      %v2237 = vpop.xlane.xlu0 %2236
      %v2238 = vsel %vm760, %v1875, -inf
      %2239 = vmax.xlane.f32.xlu0 %v2238
      %v2240 = vpop.xlane.xlu0 %2239
      %v2241 = vsel %vm760, %v1977, -inf
      %2242 = vmax.xlane.f32.xlu0 %v2241
      %v2243 = vpop.xlane.xlu0 %2242
      %v2244 = vsel %vm760, %v1982, -inf
      %2245 = vmax.xlane.f32.xlu0 %v2244
      %v2246 = vpop.xlane.xlu0 %2245
      %v2247 = vsel %vm760, %v1987, -inf
      %2248 = vmax.xlane.f32.xlu0 %v2247
      %v2249 = vpop.xlane.xlu0 %2248
      %v2250 = vsel %vm760, %v1992, -inf
      %2251 = vmax.xlane.f32.xlu0 %v2250
      %v2252 = vpop.xlane.xlu0 %2251
      %v2253 = vsel %vm760, %v2094, -inf
      %2254 = vmax.xlane.f32.xlu0 %v2253
      %v2255 = vpop.xlane.xlu0 %2254
      %v2256 = vsel %vm760, %v2099, -inf
      %2257 = vmax.xlane.f32.xlu0 %v2256
      %v2258 = vpop.xlane.xlu0 %2257
      %v2259 = vsel %vm760, %v2104, -inf
      %2260 = vmax.xlane.f32.xlu0 %v2259
      %v2261 = vpop.xlane.xlu0 %2260
      %v2262 = vsel %vm760, %v2109, -inf
      %2263 = vmax.xlane.f32.xlu0 %v2262
      %v2264 = vpop.xlane.xlu0 %2263
      %v2265 = vsel %vm760, %v2211, -inf
      %2266 = vmax.xlane.f32.xlu0 %v2265
      %v2267 = vpop.xlane.xlu0 %2266
      %v2268 = vsel %vm760, %v2216, -inf
      %2269 = vmax.xlane.f32.xlu0 %v2268
      %v2270 = vpop.xlane.xlu0 %2269
      %v2271 = vsel %vm760, %v2221, -inf
      %2272 = vmax.xlane.f32.xlu0 %v2271
      %v2273 = vpop.xlane.xlu0 %2272
      %v2274 = vsel %vm760, %v2226, -inf
      %2275 = vmax.xlane.f32.xlu0 %v2274
      %v2276 = vpop.xlane.xlu0 %2275
      %v2277 = vsub.f32 %v1860, %v2231
      %v2278 = vsub.f32 %v1865, %v2234
      %v2279 = vsub.f32 %v1870, %v2237
      %v2280 = vsub.f32 %v1875, %v2240
      %v2281 = vsub.f32 %v1977, %v2243
      %v2282 = vsub.f32 %v1982, %v2246
      %v2283 = vsub.f32 %v1987, %v2249
      %v2284 = vsub.f32 %v1992, %v2252
      %v2285 = vsub.f32 %v2094, %v2255
      %v2286 = vsub.f32 %v2099, %v2258
      %v2287 = vsub.f32 %v2104, %v2261
      %v2288 = vsub.f32 %v2109, %v2264
      %v2289 = vsub.f32 %v2211, %v2267
      %v2290 = vsub.f32 %v2216, %v2270
      %v2291 = vsub.f32 %v2221, %v2273
      %v2292 = vsub.f32 %v2226, %v2276
      %v2293 = vmul.f32 %v2277, 1.442695
      %v2294 = vpow.pop %v2293
      %v2295 = vmul.f32 %v2278, 1.442695
      %v2296 = vpow.pop %v2295
      %v2297 = vmul.f32 %v2279, 1.442695
      %v2298 = vpow.pop %v2297
      %v2299 = vmul.f32 %v2280, 1.442695
      %v2300 = vpow.pop %v2299
      %v2301 = vmul.f32 %v2281, 1.442695
      %v2302 = vpow.pop %v2301
      %v2303 = vmul.f32 %v2282, 1.442695
      %v2304 = vpow.pop %v2303
      %v2305 = vmul.f32 %v2283, 1.442695
      %v2306 = vpow.pop %v2305
      %v2307 = vmul.f32 %v2284, 1.442695
      %v2308 = vpow.pop %v2307
      %v2309 = vmul.f32 %v2285, 1.442695
      %v2310 = vpow.pop %v2309
      %v2311 = vmul.f32 %v2286, 1.442695
      %v2312 = vpow.pop %v2311
      %v2313 = vmul.f32 %v2287, 1.442695
      %v2314 = vpow.pop %v2313
      %v2315 = vmul.f32 %v2288, 1.442695
      %v2316 = vpow.pop %v2315
      %v2317 = vmul.f32 %v2289, 1.442695
      %v2318 = vpow.pop %v2317
      %v2319 = vmul.f32 %v2290, 1.442695
      %v2320 = vpow.pop %v2319
      %v2321 = vmul.f32 %v2291, 1.442695
      %v2322 = vpow.pop %v2321
      %v2323 = vmul.f32 %v2292, 1.442695
      %v2324 = vpow.pop %v2323
      %v2325 = vsel %vm760, %v2294, 0.0
      %2326 = vadd.xlane.f32.xlu0 %v2325
      %v2327 = vpop.xlane.xlu0 %2326
      %v2328 = vsel %vm760, %v2296, 0.0
      %2329 = vadd.xlane.f32.xlu0 %v2328
      %v2330 = vpop.xlane.xlu0 %2329
      %v2331 = vsel %vm760, %v2298, 0.0
      %2332 = vadd.xlane.f32.xlu0 %v2331
      %v2333 = vpop.xlane.xlu0 %2332
      %v2334 = vsel %vm760, %v2300, 0.0
      %2335 = vadd.xlane.f32.xlu0 %v2334
      %v2336 = vpop.xlane.xlu0 %2335
      %v2337 = vsel %vm760, %v2302, 0.0
      %2338 = vadd.xlane.f32.xlu0 %v2337
      %v2339 = vpop.xlane.xlu0 %2338
      %v2340 = vsel %vm760, %v2304, 0.0
      %2341 = vadd.xlane.f32.xlu0 %v2340
      %v2342 = vpop.xlane.xlu0 %2341
      %v2343 = vsel %vm760, %v2306, 0.0
      %2344 = vadd.xlane.f32.xlu0 %v2343
      %v2345 = vpop.xlane.xlu0 %2344
      %v2346 = vsel %vm760, %v2308, 0.0
      %2347 = vadd.xlane.f32.xlu0 %v2346
      %v2348 = vpop.xlane.xlu0 %2347
      %v2349 = vsel %vm760, %v2310, 0.0
      %2350 = vadd.xlane.f32.xlu0 %v2349
      %v2351 = vpop.xlane.xlu0 %2350
      %v2352 = vsel %vm760, %v2312, 0.0
      %2353 = vadd.xlane.f32.xlu0 %v2352
      %v2354 = vpop.xlane.xlu0 %2353
      %v2355 = vsel %vm760, %v2314, 0.0
      %2356 = vadd.xlane.f32.xlu0 %v2355
      %v2357 = vpop.xlane.xlu0 %2356
      %v2358 = vsel %vm760, %v2316, 0.0
      %2359 = vadd.xlane.f32.xlu0 %v2358
      %v2360 = vpop.xlane.xlu0 %2359
      %v2361 = vsel %vm760, %v2318, 0.0
      %2362 = vadd.xlane.f32.xlu0 %v2361
      %v2363 = vpop.xlane.xlu0 %2362
      %v2364 = vsel %vm760, %v2320, 0.0
      %2365 = vadd.xlane.f32.xlu0 %v2364
      %v2366 = vpop.xlane.xlu0 %2365
      %v2367 = vsel %vm760, %v2322, 0.0
      %2368 = vadd.xlane.f32.xlu0 %v2367
      %v2369 = vpop.xlane.xlu0 %2368
      %v2370 = vsel %vm760, %v2324, 0.0
      %2371 = vadd.xlane.f32.xlu0 %v2370
      %v2372 = vpop.xlane.xlu0 %2371
      %v2373 = vrcp.pop %v2327
      %v2374 = vmul.f32 %v2294, %v2373
      %v2375 = vrcp.pop %v2330
      %v2376 = vmul.f32 %v2296, %v2375
      %v2377 = vrcp.pop %v2333
      %v2378 = vmul.f32 %v2298, %v2377
      %v2379 = vrcp.pop %v2336
      %v2380 = vmul.f32 %v2300, %v2379
      %v2381 = vrcp.pop %v2339
      %v2382 = vmul.f32 %v2302, %v2381
      %v2383 = vrcp.pop %v2342
      %v2384 = vmul.f32 %v2304, %v2383
      %v2385 = vrcp.pop %v2345
      %v2386 = vmul.f32 %v2306, %v2385
      %v2387 = vrcp.pop %v2348
      %v2388 = vmul.f32 %v2308, %v2387
      %v2389 = vrcp.pop %v2351
      %v2390 = vmul.f32 %v2310, %v2389
      %v2391 = vrcp.pop %v2354
      %v2392 = vmul.f32 %v2312, %v2391
      %v2393 = vrcp.pop %v2357
      %v2394 = vmul.f32 %v2314, %v2393
      %v2395 = vrcp.pop %v2360
      %v2396 = vmul.f32 %v2316, %v2395
      %v2397 = vrcp.pop %v2363
      %v2398 = vmul.f32 %v2318, %v2397
      %v2399 = vrcp.pop %v2366
      %v2400 = vmul.f32 %v2320, %v2399
      %v2401 = vrcp.pop %v2369
      %v2402 = vmul.f32 %v2322, %v2401
      %v2403 = vrcp.pop %v2372
      %v2404 = vmul.f32 %v2324, %v2403
      %2409 = vrot.lane.b32.xlu0 %v682, 96
      %v2410 = vpop.permute.xlu0 %2409
      %2411 = vrot.lane.b32.xlu0 %v687, 96
      %v2412 = vpop.permute.xlu0 %2411
      %2413 = vrot.lane.b32.xlu0 %v692, 96
      %v2414 = vpop.permute.xlu0 %2413
      %2415 = vrot.lane.b32.xlu0 %v697, 96
      %v2416 = vpop.permute.xlu0 %2415
      %v2422 = vsel %vm760, %v2374, 0
      %v2425 = vsel %vm760, %v2376, 0
      %v2428 = vsel %vm760, %v2378, 0
      %v2431 = vsel %vm760, %v2380, 0
      %2433 = vmatprep.subr.mxu0 0.0
      %2434 = vmatpush1.msra.mxu0 0.0
      %2435 = vmatprep.subr.mxu0 0.0
      %2436 = vmatpush1.msra.mxu0 0.0
      %2437 = vmatprep.subr.mxu0 0.0
      %2438 = vmatpush1.msra.mxu0 0.0
      %2439 = vmatprep.subr.mxu0 0.0
      %2440 = vmatpush1.msra.mxu0 0.0
      %2441 = vmatprep.subr.mxu0 0.0
      %2442 = vmatpush1.msra.mxu0 0.0
      %2443 = vmatprep.subr.mxu0 0.0
      %2444 = vmatpush1.msra.mxu0 0.0
      %2445 = vmatprep.subr.mxu0 0.0
      %2446 = vmatpush1.msra.mxu0 0.0
      %2447 = vmatprep.subr.mxu0 0.0
      %2448 = vmatpush1.msra.mxu0 0.0
      %2449 = vmatprep.subr.mxu0 0.0
      %2450 = vmatpush1.msra.mxu0 0.0
      %2451 = vmatprep.subr.mxu0 0.0
      %2452 = vmatpush1.msra.mxu0 0.0
      %2453 = vmatprep.subr.mxu0 0.0
      %2454 = vmatpush1.msra.mxu0 0.0
      %2455 = vmatprep.subr.mxu0 0.0
      %2456 = vmatpush1.msra.mxu0 0.0
      %2457 = vmatprep.subr.mxu0 0.0
      %2458 = vmatpush1.msra.mxu0 %v2416
      %2459 = vmatprep.subr.mxu0 0.0
      %2460 = vmatpush1.msra.mxu0 %v2414
      %2461 = vmatprep.subr.mxu0 0.0
      %2462 = vmatpush1.msra.mxu0 %v2412
      %2463 = vmatprep.subr.mxu0 0.0
      %2464 = vmatpush1.msra.mxu0 %v2410
      %2465 = vmatprep.subr.mxu0 0.0
      %2466 = vmatpush2.msra.mxu0 0.0
      %2467 = vmatprep.subr.mxu0 0.0
      %2468 = vmatpush2.msra.mxu0 0.0
      %2469 = vmatprep.subr.mxu0 0.0
      %2470 = vmatpush2.msra.mxu0 0.0
      %2471 = vmatprep.subr.mxu0 0.0
      %2472 = vmatpush2.msra.mxu0 0.0
      %2473 = vmatprep.subr.mxu0 0.0
      %2474 = vmatpush2.msra.mxu0 0.0
      %2475 = vmatprep.subr.mxu0 0.0
      %2476 = vmatpush2.msra.mxu0 0.0
      %2477 = vmatprep.subr.mxu0 0.0
      %2478 = vmatpush2.msra.mxu0 0.0
      %2479 = vmatprep.subr.mxu0 0.0
      %2480 = vmatpush2.msra.mxu0 0.0
      %2481 = vmatprep.subr.mxu0 0.0
      %2482 = vmatpush2.msra.mxu0 0.0
      %2483 = vmatprep.subr.mxu0 0.0
      %2484 = vmatpush2.msra.mxu0 0.0
      %2485 = vmatprep.subr.mxu0 0.0
      %2486 = vmatpush2.msra.mxu0 0.0
      %2487 = vmatprep.subr.mxu0 0.0
      %2488 = vmatpush2.msra.mxu0 0.0
      %2489 = vmatprep.subr.mxu0 0.0
      %2490 = vmatpush2.msra.mxu0 0.0
      %2491 = vmatprep.subr.mxu0 0.0
      %2492 = vmatpush2.msra.mxu0 0.0
      %2493 = vmatprep.subr.mxu0 0.0
      %2494 = vmatpush2.msra.mxu0 0.0
      %2495 = vmatprep.subr.mxu0 0.0
      %2496 = vmatpush2.msra.mxu0 0.0
      %2497 = vmatprep.mubr.f32.mxu0 0.0
      %2498 = vmatmul.mubr.f32.gmra.mxu0 %v2422
      %v2499 = vpop.f32.mrf.mxu0
      %v2500 = vadd.f32 0.0, %v2499
      %v2501 = vpop.f32.mrf.mxu0
      %2502 = vmatprep.mubr.f32.mxu0 0.0
      %2503 = vmatmul.mubr.f32.gmra.mxu0 %v2425
      %v2504 = vpop.f32.mrf.mxu0
      %v2505 = vadd.f32 0.0, %v2504
      %v2506 = vpop.f32.mrf.mxu0
      %2507 = vmatprep.mubr.f32.mxu0 0.0
      %2508 = vmatmul.mubr.f32.gmra.mxu0 %v2428
      %v2509 = vpop.f32.mrf.mxu0
      %v2510 = vadd.f32 0.0, %v2509
      %v2511 = vpop.f32.mrf.mxu0
      %2512 = vmatprep.mubr.f32.mxu0 0.0
      %2513 = vmatmul.mubr.f32.gmra.mxu0 %v2431
      %v2514 = vpop.f32.mrf.mxu0
      %v2515 = vadd.f32 0.0, %v2514
      %v2516 = vpop.f32.mrf.mxu0
      %2517 = vdwg.mxu0
      %2522 = vrot.lane.b32.xlu0 %v702, 96
      %v2523 = vpop.permute.xlu0 %2522
      %2524 = vrot.lane.b32.xlu0 %v707, 96
      %v2525 = vpop.permute.xlu0 %2524
      %2526 = vrot.lane.b32.xlu0 %v712, 96
      %v2527 = vpop.permute.xlu0 %2526
      %2528 = vrot.lane.b32.xlu0 %v717, 96
      %v2529 = vpop.permute.xlu0 %2528
      %v2535 = vsel %vm760, %v2382, 0
      %v2538 = vsel %vm760, %v2384, 0
      %v2541 = vsel %vm760, %v2386, 0
      %v2544 = vsel %vm760, %v2388, 0
      %2546 = vmatprep.subr.mxu0 0.0
      %2547 = vmatpush1.msra.mxu0 0.0
      %2548 = vmatprep.subr.mxu0 0.0
      %2549 = vmatpush1.msra.mxu0 0.0
      %2550 = vmatprep.subr.mxu0 0.0
      %2551 = vmatpush1.msra.mxu0 0.0
      %2552 = vmatprep.subr.mxu0 0.0
      %2553 = vmatpush1.msra.mxu0 0.0
      %2554 = vmatprep.subr.mxu0 0.0
      %2555 = vmatpush1.msra.mxu0 0.0
      %2556 = vmatprep.subr.mxu0 0.0
      %2557 = vmatpush1.msra.mxu0 0.0
      %2558 = vmatprep.subr.mxu0 0.0
      %2559 = vmatpush1.msra.mxu0 0.0
      %2560 = vmatprep.subr.mxu0 0.0
      %2561 = vmatpush1.msra.mxu0 0.0
      %2562 = vmatprep.subr.mxu0 0.0
      %2563 = vmatpush1.msra.mxu0 0.0
      %2564 = vmatprep.subr.mxu0 0.0
      %2565 = vmatpush1.msra.mxu0 0.0
      %2566 = vmatprep.subr.mxu0 0.0
      %2567 = vmatpush1.msra.mxu0 0.0
      %2568 = vmatprep.subr.mxu0 0.0
      %2569 = vmatpush1.msra.mxu0 0.0
      %2570 = vmatprep.subr.mxu0 0.0
      %2571 = vmatpush1.msra.mxu0 %v2529
      %2572 = vmatprep.subr.mxu0 0.0
      %2573 = vmatpush1.msra.mxu0 %v2527
      %2574 = vmatprep.subr.mxu0 0.0
      %2575 = vmatpush1.msra.mxu0 %v2525
      %2576 = vmatprep.subr.mxu0 0.0
      %2577 = vmatpush1.msra.mxu0 %v2523
      %2578 = vmatprep.subr.mxu0 0.0
      %2579 = vmatpush2.msra.mxu0 0.0
      %2580 = vmatprep.subr.mxu0 0.0
      %2581 = vmatpush2.msra.mxu0 0.0
      %2582 = vmatprep.subr.mxu0 0.0
      %2583 = vmatpush2.msra.mxu0 0.0
      %2584 = vmatprep.subr.mxu0 0.0
      %2585 = vmatpush2.msra.mxu0 0.0
      %2586 = vmatprep.subr.mxu0 0.0
      %2587 = vmatpush2.msra.mxu0 0.0
      %2588 = vmatprep.subr.mxu0 0.0
      %2589 = vmatpush2.msra.mxu0 0.0
      %2590 = vmatprep.subr.mxu0 0.0
      %2591 = vmatpush2.msra.mxu0 0.0
      %2592 = vmatprep.subr.mxu0 0.0
      %2593 = vmatpush2.msra.mxu0 0.0
      %2594 = vmatprep.subr.mxu0 0.0
      %2595 = vmatpush2.msra.mxu0 0.0
      %2596 = vmatprep.subr.mxu0 0.0
      %2597 = vmatpush2.msra.mxu0 0.0
      %2598 = vmatprep.subr.mxu0 0.0
      %2599 = vmatpush2.msra.mxu0 0.0
      %2600 = vmatprep.subr.mxu0 0.0
      %2601 = vmatpush2.msra.mxu0 0.0
      %2602 = vmatprep.subr.mxu0 0.0
      %2603 = vmatpush2.msra.mxu0 0.0
      %2604 = vmatprep.subr.mxu0 0.0
      %2605 = vmatpush2.msra.mxu0 0.0
      %2606 = vmatprep.subr.mxu0 0.0
      %2607 = vmatpush2.msra.mxu0 0.0
      %2608 = vmatprep.subr.mxu0 0.0
      %2609 = vmatpush2.msra.mxu0 0.0
      %2610 = vmatprep.mubr.f32.mxu0 0.0
      %2611 = vmatmul.mubr.f32.gmra.mxu0 %v2535
      %v2612 = vpop.f32.mrf.mxu0
      %v2613 = vadd.f32 0.0, %v2612
      %v2614 = vpop.f32.mrf.mxu0
      %2615 = vmatprep.mubr.f32.mxu0 0.0
      %2616 = vmatmul.mubr.f32.gmra.mxu0 %v2538
      %v2617 = vpop.f32.mrf.mxu0
      %v2618 = vadd.f32 0.0, %v2617
      %v2619 = vpop.f32.mrf.mxu0
      %2620 = vmatprep.mubr.f32.mxu0 0.0
      %2621 = vmatmul.mubr.f32.gmra.mxu0 %v2541
      %v2622 = vpop.f32.mrf.mxu0
      %v2623 = vadd.f32 0.0, %v2622
      %v2624 = vpop.f32.mrf.mxu0
      %2625 = vmatprep.mubr.f32.mxu0 0.0
      %2626 = vmatmul.mubr.f32.gmra.mxu0 %v2544
      %v2627 = vpop.f32.mrf.mxu0
      %v2628 = vadd.f32 0.0, %v2627
      %v2629 = vpop.f32.mrf.mxu0
      %2630 = vdwg.mxu0
      %2635 = vrot.lane.b32.xlu0 %v722, 96
      %v2636 = vpop.permute.xlu0 %2635
      %2637 = vrot.lane.b32.xlu0 %v727, 96
      %v2638 = vpop.permute.xlu0 %2637
      %2639 = vrot.lane.b32.xlu0 %v732, 96
      %v2640 = vpop.permute.xlu0 %2639
      %2641 = vrot.lane.b32.xlu0 %v737, 96
      %v2642 = vpop.permute.xlu0 %2641
      %v2648 = vsel %vm760, %v2390, 0
      %v2651 = vsel %vm760, %v2392, 0
      %v2654 = vsel %vm760, %v2394, 0
      %v2657 = vsel %vm760, %v2396, 0
      %2659 = vmatprep.subr.mxu0 0.0
      %2660 = vmatpush1.msra.mxu0 0.0
      %2661 = vmatprep.subr.mxu0 0.0
      %2662 = vmatpush1.msra.mxu0 0.0
      %2663 = vmatprep.subr.mxu0 0.0
      %2664 = vmatpush1.msra.mxu0 0.0
      %2665 = vmatprep.subr.mxu0 0.0
      %2666 = vmatpush1.msra.mxu0 0.0
      %2667 = vmatprep.subr.mxu0 0.0
      %2668 = vmatpush1.msra.mxu0 0.0
      %2669 = vmatprep.subr.mxu0 0.0
      %2670 = vmatpush1.msra.mxu0 0.0
      %2671 = vmatprep.subr.mxu0 0.0
      %2672 = vmatpush1.msra.mxu0 0.0
      %2673 = vmatprep.subr.mxu0 0.0
      %2674 = vmatpush1.msra.mxu0 0.0
      %2675 = vmatprep.subr.mxu0 0.0
      %2676 = vmatpush1.msra.mxu0 0.0
      %2677 = vmatprep.subr.mxu0 0.0
      %2678 = vmatpush1.msra.mxu0 0.0
      %2679 = vmatprep.subr.mxu0 0.0
      %2680 = vmatpush1.msra.mxu0 0.0
      %2681 = vmatprep.subr.mxu0 0.0
      %2682 = vmatpush1.msra.mxu0 0.0
      %2683 = vmatprep.subr.mxu0 0.0
      %2684 = vmatpush1.msra.mxu0 %v2642
      %2685 = vmatprep.subr.mxu0 0.0
      %2686 = vmatpush1.msra.mxu0 %v2640
      %2687 = vmatprep.subr.mxu0 0.0
      %2688 = vmatpush1.msra.mxu0 %v2638
      %2689 = vmatprep.subr.mxu0 0.0
      %2690 = vmatpush1.msra.mxu0 %v2636
      %2691 = vmatprep.subr.mxu0 0.0
      %2692 = vmatpush2.msra.mxu0 0.0
      %2693 = vmatprep.subr.mxu0 0.0
      %2694 = vmatpush2.msra.mxu0 0.0
      %2695 = vmatprep.subr.mxu0 0.0
      %2696 = vmatpush2.msra.mxu0 0.0
      %2697 = vmatprep.subr.mxu0 0.0
      %2698 = vmatpush2.msra.mxu0 0.0
      %2699 = vmatprep.subr.mxu0 0.0
      %2700 = vmatpush2.msra.mxu0 0.0
      %2701 = vmatprep.subr.mxu0 0.0
      %2702 = vmatpush2.msra.mxu0 0.0
      %2703 = vmatprep.subr.mxu0 0.0
      %2704 = vmatpush2.msra.mxu0 0.0
      %2705 = vmatprep.subr.mxu0 0.0
      %2706 = vmatpush2.msra.mxu0 0.0
      %2707 = vmatprep.subr.mxu0 0.0
      %2708 = vmatpush2.msra.mxu0 0.0
      %2709 = vmatprep.subr.mxu0 0.0
      %2710 = vmatpush2.msra.mxu0 0.0
      %2711 = vmatprep.subr.mxu0 0.0
      %2712 = vmatpush2.msra.mxu0 0.0
      %2713 = vmatprep.subr.mxu0 0.0
      %2714 = vmatpush2.msra.mxu0 0.0
      %2715 = vmatprep.subr.mxu0 0.0
      %2716 = vmatpush2.msra.mxu0 0.0
      %2717 = vmatprep.subr.mxu0 0.0
      %2718 = vmatpush2.msra.mxu0 0.0
      %2719 = vmatprep.subr.mxu0 0.0
      %2720 = vmatpush2.msra.mxu0 0.0
      %2721 = vmatprep.subr.mxu0 0.0
      %2722 = vmatpush2.msra.mxu0 0.0
      %2723 = vmatprep.mubr.f32.mxu0 0.0
      %2724 = vmatmul.mubr.f32.gmra.mxu0 %v2648
      %v2725 = vpop.f32.mrf.mxu0
      %v2726 = vadd.f32 0.0, %v2725
      %v2727 = vpop.f32.mrf.mxu0
      %2728 = vmatprep.mubr.f32.mxu0 0.0
      %2729 = vmatmul.mubr.f32.gmra.mxu0 %v2651
      %v2730 = vpop.f32.mrf.mxu0
      %v2731 = vadd.f32 0.0, %v2730
      %v2732 = vpop.f32.mrf.mxu0
      %2733 = vmatprep.mubr.f32.mxu0 0.0
      %2734 = vmatmul.mubr.f32.gmra.mxu0 %v2654
      %v2735 = vpop.f32.mrf.mxu0
      %v2736 = vadd.f32 0.0, %v2735
      %v2737 = vpop.f32.mrf.mxu0
      %2738 = vmatprep.mubr.f32.mxu0 0.0
      %2739 = vmatmul.mubr.f32.gmra.mxu0 %v2657
      %v2740 = vpop.f32.mrf.mxu0
      %v2741 = vadd.f32 0.0, %v2740
      %v2742 = vpop.f32.mrf.mxu0
      %2743 = vdwg.mxu0
      %2748 = vrot.lane.b32.xlu0 %v742, 96
      %v2749 = vpop.permute.xlu0 %2748
      %2750 = vrot.lane.b32.xlu0 %v747, 96
      %v2751 = vpop.permute.xlu0 %2750
      %2752 = vrot.lane.b32.xlu0 %v752, 96
      %v2753 = vpop.permute.xlu0 %2752
      %2754 = vrot.lane.b32.xlu0 %v757, 96
      %v2755 = vpop.permute.xlu0 %2754
      %v2761 = vsel %vm760, %v2398, 0
      %v2764 = vsel %vm760, %v2400, 0
      %v2767 = vsel %vm760, %v2402, 0
      %v2770 = vsel %vm760, %v2404, 0
      %2772 = vmatprep.subr.mxu0 0.0
      %2773 = vmatpush1.msra.mxu0 0.0
      %2774 = vmatprep.subr.mxu0 0.0
      %2775 = vmatpush1.msra.mxu0 0.0
      %2776 = vmatprep.subr.mxu0 0.0
      %2777 = vmatpush1.msra.mxu0 0.0
      %2778 = vmatprep.subr.mxu0 0.0
      %2779 = vmatpush1.msra.mxu0 0.0
      %2780 = vmatprep.subr.mxu0 0.0
      %2781 = vmatpush1.msra.mxu0 0.0
      %2782 = vmatprep.subr.mxu0 0.0
      %2783 = vmatpush1.msra.mxu0 0.0
      %2784 = vmatprep.subr.mxu0 0.0
      %2785 = vmatpush1.msra.mxu0 0.0
      %2786 = vmatprep.subr.mxu0 0.0
      %2787 = vmatpush1.msra.mxu0 0.0
      %2788 = vmatprep.subr.mxu0 0.0
      %2789 = vmatpush1.msra.mxu0 0.0
      %2790 = vmatprep.subr.mxu0 0.0
      %2791 = vmatpush1.msra.mxu0 0.0
      %2792 = vmatprep.subr.mxu0 0.0
      %2793 = vmatpush1.msra.mxu0 0.0
      %2794 = vmatprep.subr.mxu0 0.0
      %2795 = vmatpush1.msra.mxu0 0.0
      %2796 = vmatprep.subr.mxu0 0.0
      %2797 = vmatpush1.msra.mxu0 %v2755
      %2798 = vmatprep.subr.mxu0 0.0
      %2799 = vmatpush1.msra.mxu0 %v2753
      %2800 = vmatprep.subr.mxu0 0.0
      %2801 = vmatpush1.msra.mxu0 %v2751
      %2802 = vmatprep.subr.mxu0 0.0
      %2803 = vmatpush1.msra.mxu0 %v2749
      %2804 = vmatprep.subr.mxu0 0.0
      %2805 = vmatpush2.msra.mxu0 0.0
      %2806 = vmatprep.subr.mxu0 0.0
      %2807 = vmatpush2.msra.mxu0 0.0
      %2808 = vmatprep.subr.mxu0 0.0
      %2809 = vmatpush2.msra.mxu0 0.0
      %2810 = vmatprep.subr.mxu0 0.0
      %2811 = vmatpush2.msra.mxu0 0.0
      %2812 = vmatprep.subr.mxu0 0.0
      %2813 = vmatpush2.msra.mxu0 0.0
      %2814 = vmatprep.subr.mxu0 0.0
      %2815 = vmatpush2.msra.mxu0 0.0
      %2816 = vmatprep.subr.mxu0 0.0
      %2817 = vmatpush2.msra.mxu0 0.0
      %2818 = vmatprep.subr.mxu0 0.0
      %2819 = vmatpush2.msra.mxu0 0.0
      %2820 = vmatprep.subr.mxu0 0.0
      %2821 = vmatpush2.msra.mxu0 0.0
      %2822 = vmatprep.subr.mxu0 0.0
      %2823 = vmatpush2.msra.mxu0 0.0
      %2824 = vmatprep.subr.mxu0 0.0
      %2825 = vmatpush2.msra.mxu0 0.0
      %2826 = vmatprep.subr.mxu0 0.0
      %2827 = vmatpush2.msra.mxu0 0.0
      %2828 = vmatprep.subr.mxu0 0.0
      %2829 = vmatpush2.msra.mxu0 0.0
      %2830 = vmatprep.subr.mxu0 0.0
      %2831 = vmatpush2.msra.mxu0 0.0
      %2832 = vmatprep.subr.mxu0 0.0
      %2833 = vmatpush2.msra.mxu0 0.0
      %2834 = vmatprep.subr.mxu0 0.0
      %2835 = vmatpush2.msra.mxu0 0.0
      %2836 = vmatprep.mubr.f32.mxu0 0.0
      %2837 = vmatmul.mubr.f32.gmra.mxu0 %v2761
      %v2838 = vpop.f32.mrf.mxu0
      %v2839 = vadd.f32 0.0, %v2838
      %v2840 = vpop.f32.mrf.mxu0
      %2841 = vmatprep.mubr.f32.mxu0 0.0
      %2842 = vmatmul.mubr.f32.gmra.mxu0 %v2764
      %v2843 = vpop.f32.mrf.mxu0
      %v2844 = vadd.f32 0.0, %v2843
      %v2845 = vpop.f32.mrf.mxu0
      %2846 = vmatprep.mubr.f32.mxu0 0.0
      %2847 = vmatmul.mubr.f32.gmra.mxu0 %v2767
      %v2848 = vpop.f32.mrf.mxu0
      %v2849 = vadd.f32 0.0, %v2848
      %v2850 = vpop.f32.mrf.mxu0
      %2851 = vmatprep.mubr.f32.mxu0 0.0
      %2852 = vmatmul.mubr.f32.gmra.mxu0 %v2770
      %v2853 = vpop.f32.mrf.mxu0
      %v2854 = vadd.f32 0.0, %v2853
      %v2855 = vpop.f32.mrf.mxu0
      %2856 = vdwg.mxu0
      %2857 = vrot.lane.b32.xlu0 %v498, 64
      %v2858 = vpop.permute.xlu0 %2857
      %2859 = vrot.lane.b32.xlu0 %v504, 64
      %v2860 = vpop.permute.xlu0 %2859
      %2861 = vrot.lane.b32.xlu0 %v510, 64
      %v2862 = vpop.permute.xlu0 %2861
      %2863 = vrot.lane.b32.xlu0 %v516, 64
      %v2864 = vpop.permute.xlu0 %2863
      %2865 = vrot.lane.b32.xlu0 %v500, 64
      %v2866 = vpop.permute.xlu0 %2865
      %2867 = vrot.lane.b32.xlu0 %v506, 64
      %v2868 = vpop.permute.xlu0 %2867
      %2869 = vrot.lane.b32.xlu0 %v512, 64
      %v2870 = vpop.permute.xlu0 %2869
      %2871 = vrot.lane.b32.xlu0 %v518, 64
      %v2872 = vpop.permute.xlu0 %2871
      %v2873 = vsel %vm760, %v2858, 0
      %v2875 = vsel %vm760, %v2860, 0
      %v2877 = vsel %vm760, %v2862, 0
      %v2879 = vsel %vm760, %v2864, 0
      %v2881 = vsel %vm760, %v2866, 0
      %v2883 = vsel %vm760, %v2868, 0
      %v2885 = vsel %vm760, %v2870, 0
      %v2887 = vsel %vm760, %v2872, 0
      %2889 = vmatprep.subr.mxu0 0.0
      %2890 = vmatpush1.xpose.msra.mxu0 0.0
      %2891 = vmatprep.subr.mxu0 0.0
      %2892 = vmatpush1.xpose.msra.mxu0 0.0
      %2893 = vmatprep.subr.mxu0 0.0
      %2894 = vmatpush1.xpose.msra.mxu0 0.0
      %2895 = vmatprep.subr.mxu0 0.0
      %2896 = vmatpush1.xpose.msra.mxu0 0.0
      %2897 = vmatprep.subr.mxu0 0.0
      %2898 = vmatpush1.xpose.msra.mxu0 0.0
      %2899 = vmatprep.subr.mxu0 0.0
      %2900 = vmatpush1.xpose.msra.mxu0 0.0
      %2901 = vmatprep.subr.mxu0 0.0
      %2902 = vmatpush1.xpose.msra.mxu0 0.0
      %2903 = vmatprep.subr.mxu0 0.0
      %2904 = vmatpush1.xpose.msra.mxu0 0.0
      %2905 = vmatprep.subr.mxu0 0.0
      %2906 = vmatpush1.xpose.msra.mxu0 0.0
      %2907 = vmatprep.subr.mxu0 0.0
      %2908 = vmatpush1.xpose.msra.mxu0 0.0
      %2909 = vmatprep.subr.mxu0 0.0
      %2910 = vmatpush1.xpose.msra.mxu0 0.0
      %2911 = vmatprep.subr.mxu0 0.0
      %2912 = vmatpush1.xpose.msra.mxu0 0.0
      %2913 = vmatprep.subr.mxu0 0.0
      %2914 = vmatpush1.xpose.msra.mxu0 %v2887
      %2915 = vmatprep.subr.mxu0 0.0
      %2916 = vmatpush1.xpose.msra.mxu0 %v2885
      %2917 = vmatprep.subr.mxu0 0.0
      %2918 = vmatpush1.xpose.msra.mxu0 %v2883
      %2919 = vmatprep.subr.mxu0 0.0
      %2920 = vmatpush1.xpose.msra.mxu0 %v2881
      %2921 = vmatprep.subr.mxu0 0.0
      %2922 = vmatpush2.xpose.msra.mxu0 0.0
      %2923 = vmatprep.subr.mxu0 0.0
      %2924 = vmatpush2.xpose.msra.mxu0 0.0
      %2925 = vmatprep.subr.mxu0 0.0
      %2926 = vmatpush2.xpose.msra.mxu0 0.0
      %2927 = vmatprep.subr.mxu0 0.0
      %2928 = vmatpush2.xpose.msra.mxu0 0.0
      %2929 = vmatprep.subr.mxu0 0.0
      %2930 = vmatpush2.xpose.msra.mxu0 0.0
      %2931 = vmatprep.subr.mxu0 0.0
      %2932 = vmatpush2.xpose.msra.mxu0 0.0
      %2933 = vmatprep.subr.mxu0 0.0
      %2934 = vmatpush2.xpose.msra.mxu0 0.0
      %2935 = vmatprep.subr.mxu0 0.0
      %2936 = vmatpush2.xpose.msra.mxu0 0.0
      %2937 = vmatprep.subr.mxu0 0.0
      %2938 = vmatpush2.xpose.msra.mxu0 0.0
      %2939 = vmatprep.subr.mxu0 0.0
      %2940 = vmatpush2.xpose.msra.mxu0 0.0
      %2941 = vmatprep.subr.mxu0 0.0
      %2942 = vmatpush2.xpose.msra.mxu0 0.0
      %2943 = vmatprep.subr.mxu0 0.0
      %2944 = vmatpush2.xpose.msra.mxu0 0.0
      %2945 = vmatprep.subr.mxu0 0.0
      %2946 = vmatpush2.xpose.msra.mxu0 0.0
      %2947 = vmatprep.subr.mxu0 0.0
      %2948 = vmatpush2.xpose.msra.mxu0 0.0
      %2949 = vmatprep.subr.mxu0 0.0
      %2950 = vmatpush2.xpose.msra.mxu0 0.0
      %2951 = vmatprep.subr.mxu0 0.0
      %2952 = vmatpush2.xpose.msra.mxu0 0.0
      %2953 = vmatprep.mubr.f32.mxu0 0.0
      %2954 = vmatmul.mubr.f32.gmra.mxu0 %v2873
      %v2955 = vpop.f32.mrf.mxu0
      %v2956 = vadd.f32 0.0, %v2955
      %v2957 = vpop.f32.mrf.mxu0
      %2958 = vmatprep.mubr.f32.mxu0 0.0
      %2959 = vmatmul.mubr.f32.gmra.mxu0 %v2875
      %v2960 = vpop.f32.mrf.mxu0
      %v2961 = vadd.f32 0.0, %v2960
      %v2962 = vpop.f32.mrf.mxu0
      %2963 = vmatprep.mubr.f32.mxu0 0.0
      %2964 = vmatmul.mubr.f32.gmra.mxu0 %v2877
      %v2965 = vpop.f32.mrf.mxu0
      %v2966 = vadd.f32 0.0, %v2965
      %v2967 = vpop.f32.mrf.mxu0
      %2968 = vmatprep.mubr.f32.mxu0 0.0
      %2969 = vmatmul.mubr.f32.gmra.mxu0 %v2879
      %v2970 = vpop.f32.mrf.mxu0
      %v2971 = vadd.f32 0.0, %v2970
      %v2972 = vpop.f32.mrf.mxu0
      %2973 = vdwg.mxu0
      %2974 = vrot.lane.b32.xlu0 %v522, 64
      %v2975 = vpop.permute.xlu0 %2974
      %2976 = vrot.lane.b32.xlu0 %v528, 64
      %v2977 = vpop.permute.xlu0 %2976
      %2978 = vrot.lane.b32.xlu0 %v534, 64
      %v2979 = vpop.permute.xlu0 %2978
      %2980 = vrot.lane.b32.xlu0 %v540, 64
      %v2981 = vpop.permute.xlu0 %2980
      %2982 = vrot.lane.b32.xlu0 %v524, 64
      %v2983 = vpop.permute.xlu0 %2982
      %2984 = vrot.lane.b32.xlu0 %v530, 64
      %v2985 = vpop.permute.xlu0 %2984
      %2986 = vrot.lane.b32.xlu0 %v536, 64
      %v2987 = vpop.permute.xlu0 %2986
      %2988 = vrot.lane.b32.xlu0 %v542, 64
      %v2989 = vpop.permute.xlu0 %2988
      %v2990 = vsel %vm760, %v2975, 0
      %v2992 = vsel %vm760, %v2977, 0
      %v2994 = vsel %vm760, %v2979, 0
      %v2996 = vsel %vm760, %v2981, 0
      %v2998 = vsel %vm760, %v2983, 0
      %v3000 = vsel %vm760, %v2985, 0
      %v3002 = vsel %vm760, %v2987, 0
      %v3004 = vsel %vm760, %v2989, 0
      %3006 = vmatprep.subr.mxu0 0.0
      %3007 = vmatpush1.xpose.msra.mxu0 0.0
      %3008 = vmatprep.subr.mxu0 0.0
      %3009 = vmatpush1.xpose.msra.mxu0 0.0
      %3010 = vmatprep.subr.mxu0 0.0
      %3011 = vmatpush1.xpose.msra.mxu0 0.0
      %3012 = vmatprep.subr.mxu0 0.0
      %3013 = vmatpush1.xpose.msra.mxu0 0.0
      %3014 = vmatprep.subr.mxu0 0.0
      %3015 = vmatpush1.xpose.msra.mxu0 0.0
      %3016 = vmatprep.subr.mxu0 0.0
      %3017 = vmatpush1.xpose.msra.mxu0 0.0
      %3018 = vmatprep.subr.mxu0 0.0
      %3019 = vmatpush1.xpose.msra.mxu0 0.0
      %3020 = vmatprep.subr.mxu0 0.0
      %3021 = vmatpush1.xpose.msra.mxu0 0.0
      %3022 = vmatprep.subr.mxu0 0.0
      %3023 = vmatpush1.xpose.msra.mxu0 0.0
      %3024 = vmatprep.subr.mxu0 0.0
      %3025 = vmatpush1.xpose.msra.mxu0 0.0
      %3026 = vmatprep.subr.mxu0 0.0
      %3027 = vmatpush1.xpose.msra.mxu0 0.0
      %3028 = vmatprep.subr.mxu0 0.0
      %3029 = vmatpush1.xpose.msra.mxu0 0.0
      %3030 = vmatprep.subr.mxu0 0.0
      %3031 = vmatpush1.xpose.msra.mxu0 %v3004
      %3032 = vmatprep.subr.mxu0 0.0
      %3033 = vmatpush1.xpose.msra.mxu0 %v3002
      %3034 = vmatprep.subr.mxu0 0.0
      %3035 = vmatpush1.xpose.msra.mxu0 %v3000
      %3036 = vmatprep.subr.mxu0 0.0
      %3037 = vmatpush1.xpose.msra.mxu0 %v2998
      %3038 = vmatprep.subr.mxu0 0.0
      %3039 = vmatpush2.xpose.msra.mxu0 0.0
      %3040 = vmatprep.subr.mxu0 0.0
      %3041 = vmatpush2.xpose.msra.mxu0 0.0
      %3042 = vmatprep.subr.mxu0 0.0
      %3043 = vmatpush2.xpose.msra.mxu0 0.0
      %3044 = vmatprep.subr.mxu0 0.0
      %3045 = vmatpush2.xpose.msra.mxu0 0.0
      %3046 = vmatprep.subr.mxu0 0.0
      %3047 = vmatpush2.xpose.msra.mxu0 0.0
      %3048 = vmatprep.subr.mxu0 0.0
      %3049 = vmatpush2.xpose.msra.mxu0 0.0
      %3050 = vmatprep.subr.mxu0 0.0
      %3051 = vmatpush2.xpose.msra.mxu0 0.0
      %3052 = vmatprep.subr.mxu0 0.0
      %3053 = vmatpush2.xpose.msra.mxu0 0.0
      %3054 = vmatprep.subr.mxu0 0.0
      %3055 = vmatpush2.xpose.msra.mxu0 0.0
      %3056 = vmatprep.subr.mxu0 0.0
      %3057 = vmatpush2.xpose.msra.mxu0 0.0
      %3058 = vmatprep.subr.mxu0 0.0
      %3059 = vmatpush2.xpose.msra.mxu0 0.0
      %3060 = vmatprep.subr.mxu0 0.0
      %3061 = vmatpush2.xpose.msra.mxu0 0.0
      %3062 = vmatprep.subr.mxu0 0.0
      %3063 = vmatpush2.xpose.msra.mxu0 0.0
      %3064 = vmatprep.subr.mxu0 0.0
      %3065 = vmatpush2.xpose.msra.mxu0 0.0
      %3066 = vmatprep.subr.mxu0 0.0
      %3067 = vmatpush2.xpose.msra.mxu0 0.0
      %3068 = vmatprep.subr.mxu0 0.0
      %3069 = vmatpush2.xpose.msra.mxu0 0.0
      %3070 = vmatprep.mubr.f32.mxu0 0.0
      %3071 = vmatmul.mubr.f32.gmra.mxu0 %v2990
      %v3072 = vpop.f32.mrf.mxu0
      %v3073 = vadd.f32 0.0, %v3072
      %v3074 = vpop.f32.mrf.mxu0
      %3075 = vmatprep.mubr.f32.mxu0 0.0
      %3076 = vmatmul.mubr.f32.gmra.mxu0 %v2992
      %v3077 = vpop.f32.mrf.mxu0
      %v3078 = vadd.f32 0.0, %v3077
      %v3079 = vpop.f32.mrf.mxu0
      %3080 = vmatprep.mubr.f32.mxu0 0.0
      %3081 = vmatmul.mubr.f32.gmra.mxu0 %v2994
      %v3082 = vpop.f32.mrf.mxu0
      %v3083 = vadd.f32 0.0, %v3082
      %v3084 = vpop.f32.mrf.mxu0
      %3085 = vmatprep.mubr.f32.mxu0 0.0
      %3086 = vmatmul.mubr.f32.gmra.mxu0 %v2996
      %v3087 = vpop.f32.mrf.mxu0
      %v3088 = vadd.f32 0.0, %v3087
      %v3089 = vpop.f32.mrf.mxu0
      %3090 = vdwg.mxu0
      %3091 = vrot.lane.b32.xlu0 %v546, 64
      %v3092 = vpop.permute.xlu0 %3091
      %3093 = vrot.lane.b32.xlu0 %v552, 64
      %v3094 = vpop.permute.xlu0 %3093
      %3095 = vrot.lane.b32.xlu0 %v558, 64
      %v3096 = vpop.permute.xlu0 %3095
      %3097 = vrot.lane.b32.xlu0 %v564, 64
      %v3098 = vpop.permute.xlu0 %3097
      %3099 = vrot.lane.b32.xlu0 %v548, 64
      %v3100 = vpop.permute.xlu0 %3099
      %3101 = vrot.lane.b32.xlu0 %v554, 64
      %v3102 = vpop.permute.xlu0 %3101
      %3103 = vrot.lane.b32.xlu0 %v560, 64
      %v3104 = vpop.permute.xlu0 %3103
      %3105 = vrot.lane.b32.xlu0 %v566, 64
      %v3106 = vpop.permute.xlu0 %3105
      %v3107 = vsel %vm760, %v3092, 0
      %v3109 = vsel %vm760, %v3094, 0
      %v3111 = vsel %vm760, %v3096, 0
      %v3113 = vsel %vm760, %v3098, 0
      %v3115 = vsel %vm760, %v3100, 0
      %v3117 = vsel %vm760, %v3102, 0
      %v3119 = vsel %vm760, %v3104, 0
      %v3121 = vsel %vm760, %v3106, 0
      %3123 = vmatprep.subr.mxu0 0.0
      %3124 = vmatpush1.xpose.msra.mxu0 0.0
      %3125 = vmatprep.subr.mxu0 0.0
      %3126 = vmatpush1.xpose.msra.mxu0 0.0
      %3127 = vmatprep.subr.mxu0 0.0
      %3128 = vmatpush1.xpose.msra.mxu0 0.0
      %3129 = vmatprep.subr.mxu0 0.0
      %3130 = vmatpush1.xpose.msra.mxu0 0.0
      %3131 = vmatprep.subr.mxu0 0.0
      %3132 = vmatpush1.xpose.msra.mxu0 0.0
      %3133 = vmatprep.subr.mxu0 0.0
      %3134 = vmatpush1.xpose.msra.mxu0 0.0
      %3135 = vmatprep.subr.mxu0 0.0
      %3136 = vmatpush1.xpose.msra.mxu0 0.0
      %3137 = vmatprep.subr.mxu0 0.0
      %3138 = vmatpush1.xpose.msra.mxu0 0.0
      %3139 = vmatprep.subr.mxu0 0.0
      %3140 = vmatpush1.xpose.msra.mxu0 0.0
      %3141 = vmatprep.subr.mxu0 0.0
      %3142 = vmatpush1.xpose.msra.mxu0 0.0
      %3143 = vmatprep.subr.mxu0 0.0
      %3144 = vmatpush1.xpose.msra.mxu0 0.0
      %3145 = vmatprep.subr.mxu0 0.0
      %3146 = vmatpush1.xpose.msra.mxu0 0.0
      %3147 = vmatprep.subr.mxu0 0.0
      %3148 = vmatpush1.xpose.msra.mxu0 %v3121
      %3149 = vmatprep.subr.mxu0 0.0
      %3150 = vmatpush1.xpose.msra.mxu0 %v3119
      %3151 = vmatprep.subr.mxu0 0.0
      %3152 = vmatpush1.xpose.msra.mxu0 %v3117
      %3153 = vmatprep.subr.mxu0 0.0
      %3154 = vmatpush1.xpose.msra.mxu0 %v3115
      %3155 = vmatprep.subr.mxu0 0.0
      %3156 = vmatpush2.xpose.msra.mxu0 0.0
      %3157 = vmatprep.subr.mxu0 0.0
      %3158 = vmatpush2.xpose.msra.mxu0 0.0
      %3159 = vmatprep.subr.mxu0 0.0
      %3160 = vmatpush2.xpose.msra.mxu0 0.0
      %3161 = vmatprep.subr.mxu0 0.0
      %3162 = vmatpush2.xpose.msra.mxu0 0.0
      %3163 = vmatprep.subr.mxu0 0.0
      %3164 = vmatpush2.xpose.msra.mxu0 0.0
      %3165 = vmatprep.subr.mxu0 0.0
      %3166 = vmatpush2.xpose.msra.mxu0 0.0
      %3167 = vmatprep.subr.mxu0 0.0
      %3168 = vmatpush2.xpose.msra.mxu0 0.0
      %3169 = vmatprep.subr.mxu0 0.0
      %3170 = vmatpush2.xpose.msra.mxu0 0.0
      %3171 = vmatprep.subr.mxu0 0.0
      %3172 = vmatpush2.xpose.msra.mxu0 0.0
      %3173 = vmatprep.subr.mxu0 0.0
      %3174 = vmatpush2.xpose.msra.mxu0 0.0
      %3175 = vmatprep.subr.mxu0 0.0
      %3176 = vmatpush2.xpose.msra.mxu0 0.0
      %3177 = vmatprep.subr.mxu0 0.0
      %3178 = vmatpush2.xpose.msra.mxu0 0.0
      %3179 = vmatprep.subr.mxu0 0.0
      %3180 = vmatpush2.xpose.msra.mxu0 0.0
      %3181 = vmatprep.subr.mxu0 0.0
      %3182 = vmatpush2.xpose.msra.mxu0 0.0
      %3183 = vmatprep.subr.mxu0 0.0
      %3184 = vmatpush2.xpose.msra.mxu0 0.0
      %3185 = vmatprep.subr.mxu0 0.0
      %3186 = vmatpush2.xpose.msra.mxu0 0.0
      %3187 = vmatprep.mubr.f32.mxu0 0.0
      %3188 = vmatmul.mubr.f32.gmra.mxu0 %v3107
      %v3189 = vpop.f32.mrf.mxu0
      %v3190 = vadd.f32 0.0, %v3189
      %v3191 = vpop.f32.mrf.mxu0
      %3192 = vmatprep.mubr.f32.mxu0 0.0
      %3193 = vmatmul.mubr.f32.gmra.mxu0 %v3109
      %v3194 = vpop.f32.mrf.mxu0
      %v3195 = vadd.f32 0.0, %v3194
      %v3196 = vpop.f32.mrf.mxu0
      %3197 = vmatprep.mubr.f32.mxu0 0.0
      %3198 = vmatmul.mubr.f32.gmra.mxu0 %v3111
      %v3199 = vpop.f32.mrf.mxu0
      %v3200 = vadd.f32 0.0, %v3199
      %v3201 = vpop.f32.mrf.mxu0
      %3202 = vmatprep.mubr.f32.mxu0 0.0
      %3203 = vmatmul.mubr.f32.gmra.mxu0 %v3113
      %v3204 = vpop.f32.mrf.mxu0
      %v3205 = vadd.f32 0.0, %v3204
      %v3206 = vpop.f32.mrf.mxu0
      %3207 = vdwg.mxu0
      %3208 = vrot.lane.b32.xlu0 %v570, 64
      %v3209 = vpop.permute.xlu0 %3208
      %3210 = vrot.lane.b32.xlu0 %v576, 64
      %v3211 = vpop.permute.xlu0 %3210
      %3212 = vrot.lane.b32.xlu0 %v582, 64
      %v3213 = vpop.permute.xlu0 %3212
      %3214 = vrot.lane.b32.xlu0 %v588, 64
      %v3215 = vpop.permute.xlu0 %3214
      %3216 = vrot.lane.b32.xlu0 %v572, 64
      %v3217 = vpop.permute.xlu0 %3216
      %3218 = vrot.lane.b32.xlu0 %v578, 64
      %v3219 = vpop.permute.xlu0 %3218
      %3220 = vrot.lane.b32.xlu0 %v584, 64
      %v3221 = vpop.permute.xlu0 %3220
      %3222 = vrot.lane.b32.xlu0 %v590, 64
      %v3223 = vpop.permute.xlu0 %3222
      %v3224 = vsel %vm760, %v3209, 0
      %v3226 = vsel %vm760, %v3211, 0
      %v3228 = vsel %vm760, %v3213, 0
      %v3230 = vsel %vm760, %v3215, 0
      %v3232 = vsel %vm760, %v3217, 0
      %v3234 = vsel %vm760, %v3219, 0
      %v3236 = vsel %vm760, %v3221, 0
      %v3238 = vsel %vm760, %v3223, 0
      %3240 = vmatprep.subr.mxu0 0.0
      %3241 = vmatpush1.xpose.msra.mxu0 0.0
      %3242 = vmatprep.subr.mxu0 0.0
      %3243 = vmatpush1.xpose.msra.mxu0 0.0
      %3244 = vmatprep.subr.mxu0 0.0
      %3245 = vmatpush1.xpose.msra.mxu0 0.0
      %3246 = vmatprep.subr.mxu0 0.0
      %3247 = vmatpush1.xpose.msra.mxu0 0.0
      %3248 = vmatprep.subr.mxu0 0.0
      %3249 = vmatpush1.xpose.msra.mxu0 0.0
      %3250 = vmatprep.subr.mxu0 0.0
      %3251 = vmatpush1.xpose.msra.mxu0 0.0
      %3252 = vmatprep.subr.mxu0 0.0
      %3253 = vmatpush1.xpose.msra.mxu0 0.0
      %3254 = vmatprep.subr.mxu0 0.0
      %3255 = vmatpush1.xpose.msra.mxu0 0.0
      %3256 = vmatprep.subr.mxu0 0.0
      %3257 = vmatpush1.xpose.msra.mxu0 0.0
      %3258 = vmatprep.subr.mxu0 0.0
      %3259 = vmatpush1.xpose.msra.mxu0 0.0
      %3260 = vmatprep.subr.mxu0 0.0
      %3261 = vmatpush1.xpose.msra.mxu0 0.0
      %3262 = vmatprep.subr.mxu0 0.0
      %3263 = vmatpush1.xpose.msra.mxu0 0.0
      %3264 = vmatprep.subr.mxu0 0.0
      %3265 = vmatpush1.xpose.msra.mxu0 %v3238
      %3266 = vmatprep.subr.mxu0 0.0
      %3267 = vmatpush1.xpose.msra.mxu0 %v3236
      %3268 = vmatprep.subr.mxu0 0.0
      %3269 = vmatpush1.xpose.msra.mxu0 %v3234
      %3270 = vmatprep.subr.mxu0 0.0
      %3271 = vmatpush1.xpose.msra.mxu0 %v3232
      %3272 = vmatprep.subr.mxu0 0.0
      %3273 = vmatpush2.xpose.msra.mxu0 0.0
      %3274 = vmatprep.subr.mxu0 0.0
      %3275 = vmatpush2.xpose.msra.mxu0 0.0
      %3276 = vmatprep.subr.mxu0 0.0
      %3277 = vmatpush2.xpose.msra.mxu0 0.0
      %3278 = vmatprep.subr.mxu0 0.0
      %3279 = vmatpush2.xpose.msra.mxu0 0.0
      %3280 = vmatprep.subr.mxu0 0.0
      %3281 = vmatpush2.xpose.msra.mxu0 0.0
      %3282 = vmatprep.subr.mxu0 0.0
      %3283 = vmatpush2.xpose.msra.mxu0 0.0
      %3284 = vmatprep.subr.mxu0 0.0
      %3285 = vmatpush2.xpose.msra.mxu0 0.0
      %3286 = vmatprep.subr.mxu0 0.0
      %3287 = vmatpush2.xpose.msra.mxu0 0.0
      %3288 = vmatprep.subr.mxu0 0.0
      %3289 = vmatpush2.xpose.msra.mxu0 0.0
      %3290 = vmatprep.subr.mxu0 0.0
      %3291 = vmatpush2.xpose.msra.mxu0 0.0
      %3292 = vmatprep.subr.mxu0 0.0
      %3293 = vmatpush2.xpose.msra.mxu0 0.0
      %3294 = vmatprep.subr.mxu0 0.0
      %3295 = vmatpush2.xpose.msra.mxu0 0.0
      %3296 = vmatprep.subr.mxu0 0.0
      %3297 = vmatpush2.xpose.msra.mxu0 0.0
      %3298 = vmatprep.subr.mxu0 0.0
      %3299 = vmatpush2.xpose.msra.mxu0 0.0
      %3300 = vmatprep.subr.mxu0 0.0
      %3301 = vmatpush2.xpose.msra.mxu0 0.0
      %3302 = vmatprep.subr.mxu0 0.0
      %3303 = vmatpush2.xpose.msra.mxu0 0.0
      %3304 = vmatprep.mubr.f32.mxu0 0.0
      %3305 = vmatmul.mubr.f32.gmra.mxu0 %v3224
      %v3306 = vpop.f32.mrf.mxu0
      %v3307 = vadd.f32 0.0, %v3306
      %v3308 = vpop.f32.mrf.mxu0
      %3309 = vmatprep.mubr.f32.mxu0 0.0
      %3310 = vmatmul.mubr.f32.gmra.mxu0 %v3226
      %v3311 = vpop.f32.mrf.mxu0
      %v3312 = vadd.f32 0.0, %v3311
      %v3313 = vpop.f32.mrf.mxu0
      %3314 = vmatprep.mubr.f32.mxu0 0.0
      %3315 = vmatmul.mubr.f32.gmra.mxu0 %v3228
      %v3316 = vpop.f32.mrf.mxu0
      %v3317 = vadd.f32 0.0, %v3316
      %v3318 = vpop.f32.mrf.mxu0
      %3319 = vmatprep.mubr.f32.mxu0 0.0
      %3320 = vmatmul.mubr.f32.gmra.mxu0 %v3230
      %v3321 = vpop.f32.mrf.mxu0
      %v3322 = vadd.f32 0.0, %v3321
      %v3323 = vpop.f32.mrf.mxu0
      %3324 = vdwg.mxu0
      %v3325 = vsel %vm760, %v2956, -inf
      %3326 = vmax.xlane.f32.xlu0 %v3325
      %v3327 = vpop.xlane.xlu0 %3326
      %v3328 = vsel %vm760, %v2961, -inf
      %3329 = vmax.xlane.f32.xlu0 %v3328
      %v3330 = vpop.xlane.xlu0 %3329
      %v3331 = vsel %vm760, %v2966, -inf
      %3332 = vmax.xlane.f32.xlu0 %v3331
      %v3333 = vpop.xlane.xlu0 %3332
      %v3334 = vsel %vm760, %v2971, -inf
      %3335 = vmax.xlane.f32.xlu0 %v3334
      %v3336 = vpop.xlane.xlu0 %3335
      %v3337 = vsel %vm760, %v3073, -inf
      %3338 = vmax.xlane.f32.xlu0 %v3337
      %v3339 = vpop.xlane.xlu0 %3338
      %v3340 = vsel %vm760, %v3078, -inf
      %3341 = vmax.xlane.f32.xlu0 %v3340
      %v3342 = vpop.xlane.xlu0 %3341
      %v3343 = vsel %vm760, %v3083, -inf
      %3344 = vmax.xlane.f32.xlu0 %v3343
      %v3345 = vpop.xlane.xlu0 %3344
      %v3346 = vsel %vm760, %v3088, -inf
      %3347 = vmax.xlane.f32.xlu0 %v3346
      %v3348 = vpop.xlane.xlu0 %3347
      %v3349 = vsel %vm760, %v3190, -inf
      %3350 = vmax.xlane.f32.xlu0 %v3349
      %v3351 = vpop.xlane.xlu0 %3350
      %v3352 = vsel %vm760, %v3195, -inf
      %3353 = vmax.xlane.f32.xlu0 %v3352
      %v3354 = vpop.xlane.xlu0 %3353
      %v3355 = vsel %vm760, %v3200, -inf
      %3356 = vmax.xlane.f32.xlu0 %v3355
      %v3357 = vpop.xlane.xlu0 %3356
      %v3358 = vsel %vm760, %v3205, -inf
      %3359 = vmax.xlane.f32.xlu0 %v3358
      %v3360 = vpop.xlane.xlu0 %3359
      %v3361 = vsel %vm760, %v3307, -inf
      %3362 = vmax.xlane.f32.xlu0 %v3361
      %v3363 = vpop.xlane.xlu0 %3362
      %v3364 = vsel %vm760, %v3312, -inf
      %3365 = vmax.xlane.f32.xlu0 %v3364
      %v3366 = vpop.xlane.xlu0 %3365
      %v3367 = vsel %vm760, %v3317, -inf
      %3368 = vmax.xlane.f32.xlu0 %v3367
      %v3369 = vpop.xlane.xlu0 %3368
      %v3370 = vsel %vm760, %v3322, -inf
      %3371 = vmax.xlane.f32.xlu0 %v3370
      %v3372 = vpop.xlane.xlu0 %3371
      %v3373 = vsub.f32 %v2956, %v3327
      %v3374 = vsub.f32 %v2961, %v3330
      %v3375 = vsub.f32 %v2966, %v3333
      %v3376 = vsub.f32 %v2971, %v3336
      %v3377 = vsub.f32 %v3073, %v3339
      %v3378 = vsub.f32 %v3078, %v3342
      %v3379 = vsub.f32 %v3083, %v3345
      %v3380 = vsub.f32 %v3088, %v3348
      %v3381 = vsub.f32 %v3190, %v3351
      %v3382 = vsub.f32 %v3195, %v3354
      %v3383 = vsub.f32 %v3200, %v3357
      %v3384 = vsub.f32 %v3205, %v3360
      %v3385 = vsub.f32 %v3307, %v3363
      %v3386 = vsub.f32 %v3312, %v3366
      %v3387 = vsub.f32 %v3317, %v3369
      %v3388 = vsub.f32 %v3322, %v3372
      %v3389 = vmul.f32 %v3373, 1.442695
      %v3390 = vpow.pop %v3389
      %v3391 = vmul.f32 %v3374, 1.442695
      %v3392 = vpow.pop %v3391
      %v3393 = vmul.f32 %v3375, 1.442695
      %v3394 = vpow.pop %v3393
      %v3395 = vmul.f32 %v3376, 1.442695
      %v3396 = vpow.pop %v3395
      %v3397 = vmul.f32 %v3377, 1.442695
      %v3398 = vpow.pop %v3397
      %v3399 = vmul.f32 %v3378, 1.442695
      %v3400 = vpow.pop %v3399
      %v3401 = vmul.f32 %v3379, 1.442695
      %v3402 = vpow.pop %v3401
      %v3403 = vmul.f32 %v3380, 1.442695
      %v3404 = vpow.pop %v3403
      %v3405 = vmul.f32 %v3381, 1.442695
      %v3406 = vpow.pop %v3405
      %v3407 = vmul.f32 %v3382, 1.442695
      %v3408 = vpow.pop %v3407
      %v3409 = vmul.f32 %v3383, 1.442695
      %v3410 = vpow.pop %v3409
      %v3411 = vmul.f32 %v3384, 1.442695
      %v3412 = vpow.pop %v3411
      %v3413 = vmul.f32 %v3385, 1.442695
      %v3414 = vpow.pop %v3413
      %v3415 = vmul.f32 %v3386, 1.442695
      %v3416 = vpow.pop %v3415
      %v3417 = vmul.f32 %v3387, 1.442695
      %v3418 = vpow.pop %v3417
      %v3419 = vmul.f32 %v3388, 1.442695
      %v3420 = vpow.pop %v3419
      %v3421 = vsel %vm760, %v3390, 0.0
      %3422 = vadd.xlane.f32.xlu0 %v3421
      %v3423 = vpop.xlane.xlu0 %3422
      %v3424 = vsel %vm760, %v3392, 0.0
      %3425 = vadd.xlane.f32.xlu0 %v3424
      %v3426 = vpop.xlane.xlu0 %3425
      %v3427 = vsel %vm760, %v3394, 0.0
      %3428 = vadd.xlane.f32.xlu0 %v3427
      %v3429 = vpop.xlane.xlu0 %3428
      %v3430 = vsel %vm760, %v3396, 0.0
      %3431 = vadd.xlane.f32.xlu0 %v3430
      %v3432 = vpop.xlane.xlu0 %3431
      %v3433 = vsel %vm760, %v3398, 0.0
      %3434 = vadd.xlane.f32.xlu0 %v3433
      %v3435 = vpop.xlane.xlu0 %3434
      %v3436 = vsel %vm760, %v3400, 0.0
      %3437 = vadd.xlane.f32.xlu0 %v3436
      %v3438 = vpop.xlane.xlu0 %3437
      %v3439 = vsel %vm760, %v3402, 0.0
      %3440 = vadd.xlane.f32.xlu0 %v3439
      %v3441 = vpop.xlane.xlu0 %3440
      %v3442 = vsel %vm760, %v3404, 0.0
      %3443 = vadd.xlane.f32.xlu0 %v3442
      %v3444 = vpop.xlane.xlu0 %3443
      %v3445 = vsel %vm760, %v3406, 0.0
      %3446 = vadd.xlane.f32.xlu0 %v3445
      %v3447 = vpop.xlane.xlu0 %3446
      %v3448 = vsel %vm760, %v3408, 0.0
      %3449 = vadd.xlane.f32.xlu0 %v3448
      %v3450 = vpop.xlane.xlu0 %3449
      %v3451 = vsel %vm760, %v3410, 0.0
      %3452 = vadd.xlane.f32.xlu0 %v3451
      %v3453 = vpop.xlane.xlu0 %3452
      %v3454 = vsel %vm760, %v3412, 0.0
      %3455 = vadd.xlane.f32.xlu0 %v3454
      %v3456 = vpop.xlane.xlu0 %3455
      %v3457 = vsel %vm760, %v3414, 0.0
      %3458 = vadd.xlane.f32.xlu0 %v3457
      %v3459 = vpop.xlane.xlu0 %3458
      %v3460 = vsel %vm760, %v3416, 0.0
      %3461 = vadd.xlane.f32.xlu0 %v3460
      %v3462 = vpop.xlane.xlu0 %3461
      %v3463 = vsel %vm760, %v3418, 0.0
      %3464 = vadd.xlane.f32.xlu0 %v3463
      %v3465 = vpop.xlane.xlu0 %3464
      %v3466 = vsel %vm760, %v3420, 0.0
      %3467 = vadd.xlane.f32.xlu0 %v3466
      %v3468 = vpop.xlane.xlu0 %3467
      %v3469 = vrcp.pop %v3423
      %v3470 = vmul.f32 %v3390, %v3469
      %v3471 = vrcp.pop %v3426
      %v3472 = vmul.f32 %v3392, %v3471
      %v3473 = vrcp.pop %v3429
      %v3474 = vmul.f32 %v3394, %v3473
      %v3475 = vrcp.pop %v3432
      %v3476 = vmul.f32 %v3396, %v3475
      %v3477 = vrcp.pop %v3435
      %v3478 = vmul.f32 %v3398, %v3477
      %v3479 = vrcp.pop %v3438
      %v3480 = vmul.f32 %v3400, %v3479
      %v3481 = vrcp.pop %v3441
      %v3482 = vmul.f32 %v3402, %v3481
      %v3483 = vrcp.pop %v3444
      %v3484 = vmul.f32 %v3404, %v3483
      %v3485 = vrcp.pop %v3447
      %v3486 = vmul.f32 %v3406, %v3485
      %v3487 = vrcp.pop %v3450
      %v3488 = vmul.f32 %v3408, %v3487
      %v3489 = vrcp.pop %v3453
      %v3490 = vmul.f32 %v3410, %v3489
      %v3491 = vrcp.pop %v3456
      %v3492 = vmul.f32 %v3412, %v3491
      %v3493 = vrcp.pop %v3459
      %v3494 = vmul.f32 %v3414, %v3493
      %v3495 = vrcp.pop %v3462
      %v3496 = vmul.f32 %v3416, %v3495
      %v3497 = vrcp.pop %v3465
      %v3498 = vmul.f32 %v3418, %v3497
      %v3499 = vrcp.pop %v3468
      %v3500 = vmul.f32 %v3420, %v3499
      %3501 = vrot.lane.b32.xlu0 %v682, 64
      %v3502 = vpop.permute.xlu0 %3501
      %3503 = vrot.lane.b32.xlu0 %v687, 64
      %v3504 = vpop.permute.xlu0 %3503
      %3505 = vrot.lane.b32.xlu0 %v692, 64
      %v3506 = vpop.permute.xlu0 %3505
      %3507 = vrot.lane.b32.xlu0 %v697, 64
      %v3508 = vpop.permute.xlu0 %3507
      %v3514 = vsel %vm760, %v3470, 0
      %v3517 = vsel %vm760, %v3472, 0
      %v3520 = vsel %vm760, %v3474, 0
      %v3523 = vsel %vm760, %v3476, 0
      %3525 = vmatprep.subr.mxu0 0.0
      %3526 = vmatpush1.msra.mxu0 0.0
      %3527 = vmatprep.subr.mxu0 0.0
      %3528 = vmatpush1.msra.mxu0 0.0
      %3529 = vmatprep.subr.mxu0 0.0
      %3530 = vmatpush1.msra.mxu0 0.0
      %3531 = vmatprep.subr.mxu0 0.0
      %3532 = vmatpush1.msra.mxu0 0.0
      %3533 = vmatprep.subr.mxu0 0.0
      %3534 = vmatpush1.msra.mxu0 0.0
      %3535 = vmatprep.subr.mxu0 0.0
      %3536 = vmatpush1.msra.mxu0 0.0
      %3537 = vmatprep.subr.mxu0 0.0
      %3538 = vmatpush1.msra.mxu0 0.0
      %3539 = vmatprep.subr.mxu0 0.0
      %3540 = vmatpush1.msra.mxu0 0.0
      %3541 = vmatprep.subr.mxu0 0.0
      %3542 = vmatpush1.msra.mxu0 0.0
      %3543 = vmatprep.subr.mxu0 0.0
      %3544 = vmatpush1.msra.mxu0 0.0
      %3545 = vmatprep.subr.mxu0 0.0
      %3546 = vmatpush1.msra.mxu0 0.0
      %3547 = vmatprep.subr.mxu0 0.0
      %3548 = vmatpush1.msra.mxu0 0.0
      %3549 = vmatprep.subr.mxu0 0.0
      %3550 = vmatpush1.msra.mxu0 %v3508
      %3551 = vmatprep.subr.mxu0 0.0
      %3552 = vmatpush1.msra.mxu0 %v3506
      %3553 = vmatprep.subr.mxu0 0.0
      %3554 = vmatpush1.msra.mxu0 %v3504
      %3555 = vmatprep.subr.mxu0 0.0
      %3556 = vmatpush1.msra.mxu0 %v3502
      %3557 = vmatprep.subr.mxu0 0.0
      %3558 = vmatpush2.msra.mxu0 0.0
      %3559 = vmatprep.subr.mxu0 0.0
      %3560 = vmatpush2.msra.mxu0 0.0
      %3561 = vmatprep.subr.mxu0 0.0
      %3562 = vmatpush2.msra.mxu0 0.0
      %3563 = vmatprep.subr.mxu0 0.0
      %3564 = vmatpush2.msra.mxu0 0.0
      %3565 = vmatprep.subr.mxu0 0.0
      %3566 = vmatpush2.msra.mxu0 0.0
      %3567 = vmatprep.subr.mxu0 0.0
      %3568 = vmatpush2.msra.mxu0 0.0
      %3569 = vmatprep.subr.mxu0 0.0
      %3570 = vmatpush2.msra.mxu0 0.0
      %3571 = vmatprep.subr.mxu0 0.0
      %3572 = vmatpush2.msra.mxu0 0.0
      %3573 = vmatprep.subr.mxu0 0.0
      %3574 = vmatpush2.msra.mxu0 0.0
      %3575 = vmatprep.subr.mxu0 0.0
      %3576 = vmatpush2.msra.mxu0 0.0
      %3577 = vmatprep.subr.mxu0 0.0
      %3578 = vmatpush2.msra.mxu0 0.0
      %3579 = vmatprep.subr.mxu0 0.0
      %3580 = vmatpush2.msra.mxu0 0.0
      %3581 = vmatprep.subr.mxu0 0.0
      %3582 = vmatpush2.msra.mxu0 0.0
      %3583 = vmatprep.subr.mxu0 0.0
      %3584 = vmatpush2.msra.mxu0 0.0
      %3585 = vmatprep.subr.mxu0 0.0
      %3586 = vmatpush2.msra.mxu0 0.0
      %3587 = vmatprep.subr.mxu0 0.0
      %3588 = vmatpush2.msra.mxu0 0.0
      %3589 = vmatprep.mubr.f32.mxu0 0.0
      %3590 = vmatmul.mubr.f32.gmra.mxu0 %v3514
      %v3591 = vpop.f32.mrf.mxu0
      %v3592 = vadd.f32 0.0, %v3591
      %v3593 = vpop.f32.mrf.mxu0
      %3594 = vmatprep.mubr.f32.mxu0 0.0
      %3595 = vmatmul.mubr.f32.gmra.mxu0 %v3517
      %v3596 = vpop.f32.mrf.mxu0
      %v3597 = vadd.f32 0.0, %v3596
      %v3598 = vpop.f32.mrf.mxu0
      %3599 = vmatprep.mubr.f32.mxu0 0.0
      %3600 = vmatmul.mubr.f32.gmra.mxu0 %v3520
      %v3601 = vpop.f32.mrf.mxu0
      %v3602 = vadd.f32 0.0, %v3601
      %v3603 = vpop.f32.mrf.mxu0
      %3604 = vmatprep.mubr.f32.mxu0 0.0
      %3605 = vmatmul.mubr.f32.gmra.mxu0 %v3523
      %v3606 = vpop.f32.mrf.mxu0
      %v3607 = vadd.f32 0.0, %v3606
      %v3608 = vpop.f32.mrf.mxu0
      %3609 = vdwg.mxu0
      %3610 = vrot.lane.b32.xlu0 %v702, 64
      %v3611 = vpop.permute.xlu0 %3610
      %3612 = vrot.lane.b32.xlu0 %v707, 64
      %v3613 = vpop.permute.xlu0 %3612
      %3614 = vrot.lane.b32.xlu0 %v712, 64
      %v3615 = vpop.permute.xlu0 %3614
      %3616 = vrot.lane.b32.xlu0 %v717, 64
      %v3617 = vpop.permute.xlu0 %3616
      %v3623 = vsel %vm760, %v3478, 0
      %v3626 = vsel %vm760, %v3480, 0
      %v3629 = vsel %vm760, %v3482, 0
      %v3632 = vsel %vm760, %v3484, 0
      %3634 = vmatprep.subr.mxu0 0.0
      %3635 = vmatpush1.msra.mxu0 0.0
      %3636 = vmatprep.subr.mxu0 0.0
      %3637 = vmatpush1.msra.mxu0 0.0
      %3638 = vmatprep.subr.mxu0 0.0
      %3639 = vmatpush1.msra.mxu0 0.0
      %3640 = vmatprep.subr.mxu0 0.0
      %3641 = vmatpush1.msra.mxu0 0.0
      %3642 = vmatprep.subr.mxu0 0.0
      %3643 = vmatpush1.msra.mxu0 0.0
      %3644 = vmatprep.subr.mxu0 0.0
      %3645 = vmatpush1.msra.mxu0 0.0
      %3646 = vmatprep.subr.mxu0 0.0
      %3647 = vmatpush1.msra.mxu0 0.0
      %3648 = vmatprep.subr.mxu0 0.0
      %3649 = vmatpush1.msra.mxu0 0.0
      %3650 = vmatprep.subr.mxu0 0.0
      %3651 = vmatpush1.msra.mxu0 0.0
      %3652 = vmatprep.subr.mxu0 0.0
      %3653 = vmatpush1.msra.mxu0 0.0
      %3654 = vmatprep.subr.mxu0 0.0
      %3655 = vmatpush1.msra.mxu0 0.0
      %3656 = vmatprep.subr.mxu0 0.0
      %3657 = vmatpush1.msra.mxu0 0.0
      %3658 = vmatprep.subr.mxu0 0.0
      %3659 = vmatpush1.msra.mxu0 %v3617
      %3660 = vmatprep.subr.mxu0 0.0
      %3661 = vmatpush1.msra.mxu0 %v3615
      %3662 = vmatprep.subr.mxu0 0.0
      %3663 = vmatpush1.msra.mxu0 %v3613
      %3664 = vmatprep.subr.mxu0 0.0
      %3665 = vmatpush1.msra.mxu0 %v3611
      %3666 = vmatprep.subr.mxu0 0.0
      %3667 = vmatpush2.msra.mxu0 0.0
      %3668 = vmatprep.subr.mxu0 0.0
      %3669 = vmatpush2.msra.mxu0 0.0
      %3670 = vmatprep.subr.mxu0 0.0
      %3671 = vmatpush2.msra.mxu0 0.0
      %3672 = vmatprep.subr.mxu0 0.0
      %3673 = vmatpush2.msra.mxu0 0.0
      %3674 = vmatprep.subr.mxu0 0.0
      %3675 = vmatpush2.msra.mxu0 0.0
      %3676 = vmatprep.subr.mxu0 0.0
      %3677 = vmatpush2.msra.mxu0 0.0
      %3678 = vmatprep.subr.mxu0 0.0
      %3679 = vmatpush2.msra.mxu0 0.0
      %3680 = vmatprep.subr.mxu0 0.0
      %3681 = vmatpush2.msra.mxu0 0.0
      %3682 = vmatprep.subr.mxu0 0.0
      %3683 = vmatpush2.msra.mxu0 0.0
      %3684 = vmatprep.subr.mxu0 0.0
      %3685 = vmatpush2.msra.mxu0 0.0
      %3686 = vmatprep.subr.mxu0 0.0
      %3687 = vmatpush2.msra.mxu0 0.0
      %3688 = vmatprep.subr.mxu0 0.0
      %3689 = vmatpush2.msra.mxu0 0.0
      %3690 = vmatprep.subr.mxu0 0.0
      %3691 = vmatpush2.msra.mxu0 0.0
      %3692 = vmatprep.subr.mxu0 0.0
      %3693 = vmatpush2.msra.mxu0 0.0
      %3694 = vmatprep.subr.mxu0 0.0
      %3695 = vmatpush2.msra.mxu0 0.0
      %3696 = vmatprep.subr.mxu0 0.0
      %3697 = vmatpush2.msra.mxu0 0.0
      %3698 = vmatprep.mubr.f32.mxu0 0.0
      %3699 = vmatmul.mubr.f32.gmra.mxu0 %v3623
      %v3700 = vpop.f32.mrf.mxu0
      %v3701 = vadd.f32 0.0, %v3700
      %v3702 = vpop.f32.mrf.mxu0
      %3703 = vmatprep.mubr.f32.mxu0 0.0
      %3704 = vmatmul.mubr.f32.gmra.mxu0 %v3626
      %v3705 = vpop.f32.mrf.mxu0
      %v3706 = vadd.f32 0.0, %v3705
      %v3707 = vpop.f32.mrf.mxu0
      %3708 = vmatprep.mubr.f32.mxu0 0.0
      %3709 = vmatmul.mubr.f32.gmra.mxu0 %v3629
      %v3710 = vpop.f32.mrf.mxu0
      %v3711 = vadd.f32 0.0, %v3710
      %v3712 = vpop.f32.mrf.mxu0
      %3713 = vmatprep.mubr.f32.mxu0 0.0
      %3714 = vmatmul.mubr.f32.gmra.mxu0 %v3632
      %v3715 = vpop.f32.mrf.mxu0
      %v3716 = vadd.f32 0.0, %v3715
      %v3717 = vpop.f32.mrf.mxu0
      %3718 = vdwg.mxu0
      %3719 = vrot.lane.b32.xlu0 %v722, 64
      %v3720 = vpop.permute.xlu0 %3719
      %3721 = vrot.lane.b32.xlu0 %v727, 64
      %v3722 = vpop.permute.xlu0 %3721
      %3723 = vrot.lane.b32.xlu0 %v732, 64
      %v3724 = vpop.permute.xlu0 %3723
      %3725 = vrot.lane.b32.xlu0 %v737, 64
      %v3726 = vpop.permute.xlu0 %3725
      %v3732 = vsel %vm760, %v3486, 0
      %v3735 = vsel %vm760, %v3488, 0
      %v3738 = vsel %vm760, %v3490, 0
      %v3741 = vsel %vm760, %v3492, 0
      %3743 = vmatprep.subr.mxu0 0.0
      %3744 = vmatpush1.msra.mxu0 0.0
      %3745 = vmatprep.subr.mxu0 0.0
      %3746 = vmatpush1.msra.mxu0 0.0
      %3747 = vmatprep.subr.mxu0 0.0
      %3748 = vmatpush1.msra.mxu0 0.0
      %3749 = vmatprep.subr.mxu0 0.0
      %3750 = vmatpush1.msra.mxu0 0.0
      %3751 = vmatprep.subr.mxu0 0.0
      %3752 = vmatpush1.msra.mxu0 0.0
      %3753 = vmatprep.subr.mxu0 0.0
      %3754 = vmatpush1.msra.mxu0 0.0
      %3755 = vmatprep.subr.mxu0 0.0
      %3756 = vmatpush1.msra.mxu0 0.0
      %3757 = vmatprep.subr.mxu0 0.0
      %3758 = vmatpush1.msra.mxu0 0.0
      %3759 = vmatprep.subr.mxu0 0.0
      %3760 = vmatpush1.msra.mxu0 0.0
      %3761 = vmatprep.subr.mxu0 0.0
      %3762 = vmatpush1.msra.mxu0 0.0
      %3763 = vmatprep.subr.mxu0 0.0
      %3764 = vmatpush1.msra.mxu0 0.0
      %3765 = vmatprep.subr.mxu0 0.0
      %3766 = vmatpush1.msra.mxu0 0.0
      %3767 = vmatprep.subr.mxu0 0.0
      %3768 = vmatpush1.msra.mxu0 %v3726
      %3769 = vmatprep.subr.mxu0 0.0
      %3770 = vmatpush1.msra.mxu0 %v3724
      %3771 = vmatprep.subr.mxu0 0.0
      %3772 = vmatpush1.msra.mxu0 %v3722
      %3773 = vmatprep.subr.mxu0 0.0
      %3774 = vmatpush1.msra.mxu0 %v3720
      %3775 = vmatprep.subr.mxu0 0.0
      %3776 = vmatpush2.msra.mxu0 0.0
      %3777 = vmatprep.subr.mxu0 0.0
      %3778 = vmatpush2.msra.mxu0 0.0
      %3779 = vmatprep.subr.mxu0 0.0
      %3780 = vmatpush2.msra.mxu0 0.0
      %3781 = vmatprep.subr.mxu0 0.0
      %3782 = vmatpush2.msra.mxu0 0.0
      %3783 = vmatprep.subr.mxu0 0.0
      %3784 = vmatpush2.msra.mxu0 0.0
      %3785 = vmatprep.subr.mxu0 0.0
      %3786 = vmatpush2.msra.mxu0 0.0
      %3787 = vmatprep.subr.mxu0 0.0
      %3788 = vmatpush2.msra.mxu0 0.0
      %3789 = vmatprep.subr.mxu0 0.0
      %3790 = vmatpush2.msra.mxu0 0.0
      %3791 = vmatprep.subr.mxu0 0.0
      %3792 = vmatpush2.msra.mxu0 0.0
      %3793 = vmatprep.subr.mxu0 0.0
      %3794 = vmatpush2.msra.mxu0 0.0
      %3795 = vmatprep.subr.mxu0 0.0
      %3796 = vmatpush2.msra.mxu0 0.0
      %3797 = vmatprep.subr.mxu0 0.0
      %3798 = vmatpush2.msra.mxu0 0.0
      %3799 = vmatprep.subr.mxu0 0.0
      %3800 = vmatpush2.msra.mxu0 0.0
      %3801 = vmatprep.subr.mxu0 0.0
      %3802 = vmatpush2.msra.mxu0 0.0
      %3803 = vmatprep.subr.mxu0 0.0
      %3804 = vmatpush2.msra.mxu0 0.0
      %3805 = vmatprep.subr.mxu0 0.0
      %3806 = vmatpush2.msra.mxu0 0.0
      %3807 = vmatprep.mubr.f32.mxu0 0.0
      %3808 = vmatmul.mubr.f32.gmra.mxu0 %v3732
      %v3809 = vpop.f32.mrf.mxu0
      %v3810 = vadd.f32 0.0, %v3809
      %v3811 = vpop.f32.mrf.mxu0
      %3812 = vmatprep.mubr.f32.mxu0 0.0
      %3813 = vmatmul.mubr.f32.gmra.mxu0 %v3735
      %v3814 = vpop.f32.mrf.mxu0
      %v3815 = vadd.f32 0.0, %v3814
      %v3816 = vpop.f32.mrf.mxu0
      %3817 = vmatprep.mubr.f32.mxu0 0.0
      %3818 = vmatmul.mubr.f32.gmra.mxu0 %v3738
      %v3819 = vpop.f32.mrf.mxu0
      %v3820 = vadd.f32 0.0, %v3819
      %v3821 = vpop.f32.mrf.mxu0
      %3822 = vmatprep.mubr.f32.mxu0 0.0
      %3823 = vmatmul.mubr.f32.gmra.mxu0 %v3741
      %v3824 = vpop.f32.mrf.mxu0
      %v3825 = vadd.f32 0.0, %v3824
      %v3826 = vpop.f32.mrf.mxu0
      %3827 = vdwg.mxu0
      %3828 = vrot.lane.b32.xlu0 %v742, 64
      %v3829 = vpop.permute.xlu0 %3828
      %3830 = vrot.lane.b32.xlu0 %v747, 64
      %v3831 = vpop.permute.xlu0 %3830
      %3832 = vrot.lane.b32.xlu0 %v752, 64
      %v3833 = vpop.permute.xlu0 %3832
      %3834 = vrot.lane.b32.xlu0 %v757, 64
      %v3835 = vpop.permute.xlu0 %3834
      %v3841 = vsel %vm760, %v3494, 0
      %v3844 = vsel %vm760, %v3496, 0
      %v3847 = vsel %vm760, %v3498, 0
      %v3850 = vsel %vm760, %v3500, 0
      %3852 = vmatprep.subr.mxu0 0.0
      %3853 = vmatpush1.msra.mxu0 0.0
      %3854 = vmatprep.subr.mxu0 0.0
      %3855 = vmatpush1.msra.mxu0 0.0
      %3856 = vmatprep.subr.mxu0 0.0
      %3857 = vmatpush1.msra.mxu0 0.0
      %3858 = vmatprep.subr.mxu0 0.0
      %3859 = vmatpush1.msra.mxu0 0.0
      %3860 = vmatprep.subr.mxu0 0.0
      %3861 = vmatpush1.msra.mxu0 0.0
      %3862 = vmatprep.subr.mxu0 0.0
      %3863 = vmatpush1.msra.mxu0 0.0
      %3864 = vmatprep.subr.mxu0 0.0
      %3865 = vmatpush1.msra.mxu0 0.0
      %3866 = vmatprep.subr.mxu0 0.0
      %3867 = vmatpush1.msra.mxu0 0.0
      %3868 = vmatprep.subr.mxu0 0.0
      %3869 = vmatpush1.msra.mxu0 0.0
      %3870 = vmatprep.subr.mxu0 0.0
      %3871 = vmatpush1.msra.mxu0 0.0
      %3872 = vmatprep.subr.mxu0 0.0
      %3873 = vmatpush1.msra.mxu0 0.0
      %3874 = vmatprep.subr.mxu0 0.0
      %3875 = vmatpush1.msra.mxu0 0.0
      %3876 = vmatprep.subr.mxu0 0.0
      %3877 = vmatpush1.msra.mxu0 %v3835
      %3878 = vmatprep.subr.mxu0 0.0
      %3879 = vmatpush1.msra.mxu0 %v3833
      %3880 = vmatprep.subr.mxu0 0.0
      %3881 = vmatpush1.msra.mxu0 %v3831
      %3882 = vmatprep.subr.mxu0 0.0
      %3883 = vmatpush1.msra.mxu0 %v3829
      %3884 = vmatprep.subr.mxu0 0.0
      %3885 = vmatpush2.msra.mxu0 0.0
      %3886 = vmatprep.subr.mxu0 0.0
      %3887 = vmatpush2.msra.mxu0 0.0
      %3888 = vmatprep.subr.mxu0 0.0
      %3889 = vmatpush2.msra.mxu0 0.0
      %3890 = vmatprep.subr.mxu0 0.0
      %3891 = vmatpush2.msra.mxu0 0.0
      %3892 = vmatprep.subr.mxu0 0.0
      %3893 = vmatpush2.msra.mxu0 0.0
      %3894 = vmatprep.subr.mxu0 0.0
      %3895 = vmatpush2.msra.mxu0 0.0
      %3896 = vmatprep.subr.mxu0 0.0
      %3897 = vmatpush2.msra.mxu0 0.0
      %3898 = vmatprep.subr.mxu0 0.0
      %3899 = vmatpush2.msra.mxu0 0.0
      %3900 = vmatprep.subr.mxu0 0.0
      %3901 = vmatpush2.msra.mxu0 0.0
      %3902 = vmatprep.subr.mxu0 0.0
      %3903 = vmatpush2.msra.mxu0 0.0
      %3904 = vmatprep.subr.mxu0 0.0
      %3905 = vmatpush2.msra.mxu0 0.0
      %3906 = vmatprep.subr.mxu0 0.0
      %3907 = vmatpush2.msra.mxu0 0.0
      %3908 = vmatprep.subr.mxu0 0.0
      %3909 = vmatpush2.msra.mxu0 0.0
      %3910 = vmatprep.subr.mxu0 0.0
      %3911 = vmatpush2.msra.mxu0 0.0
      %3912 = vmatprep.subr.mxu0 0.0
      %3913 = vmatpush2.msra.mxu0 0.0
      %3914 = vmatprep.subr.mxu0 0.0
      %3915 = vmatpush2.msra.mxu0 0.0
      %3916 = vmatprep.mubr.f32.mxu0 0.0
      %3917 = vmatmul.mubr.f32.gmra.mxu0 %v3841
      %v3918 = vpop.f32.mrf.mxu0
      %v3919 = vadd.f32 0.0, %v3918
      %v3920 = vpop.f32.mrf.mxu0
      %3921 = vmatprep.mubr.f32.mxu0 0.0
      %3922 = vmatmul.mubr.f32.gmra.mxu0 %v3844
      %v3923 = vpop.f32.mrf.mxu0
      %v3924 = vadd.f32 0.0, %v3923
      %v3925 = vpop.f32.mrf.mxu0
      %3926 = vmatprep.mubr.f32.mxu0 0.0
      %3927 = vmatmul.mubr.f32.gmra.mxu0 %v3847
      %v3928 = vpop.f32.mrf.mxu0
      %v3929 = vadd.f32 0.0, %v3928
      %v3930 = vpop.f32.mrf.mxu0
      %3931 = vmatprep.mubr.f32.mxu0 0.0
      %3932 = vmatmul.mubr.f32.gmra.mxu0 %v3850
      %v3933 = vpop.f32.mrf.mxu0
      %v3934 = vadd.f32 0.0, %v3933
      %v3935 = vpop.f32.mrf.mxu0
      %3936 = vdwg.mxu0
      %3937 = vrot.lane.b32.xlu0 %v498, 32
      %v3938 = vpop.permute.xlu0 %3937
      %3939 = vrot.lane.b32.xlu0 %v504, 32
      %v3940 = vpop.permute.xlu0 %3939
      %3941 = vrot.lane.b32.xlu0 %v510, 32
      %v3942 = vpop.permute.xlu0 %3941
      %3943 = vrot.lane.b32.xlu0 %v516, 32
      %v3944 = vpop.permute.xlu0 %3943
      %3945 = vrot.lane.b32.xlu0 %v500, 32
      %v3946 = vpop.permute.xlu0 %3945
      %3947 = vrot.lane.b32.xlu0 %v506, 32
      %v3948 = vpop.permute.xlu0 %3947
      %3949 = vrot.lane.b32.xlu0 %v512, 32
      %v3950 = vpop.permute.xlu0 %3949
      %3951 = vrot.lane.b32.xlu0 %v518, 32
      %v3952 = vpop.permute.xlu0 %3951
      %v3953 = vsel %vm760, %v3938, 0
      %v3955 = vsel %vm760, %v3940, 0
      %v3957 = vsel %vm760, %v3942, 0
      %v3959 = vsel %vm760, %v3944, 0
      %v3961 = vsel %vm760, %v3946, 0
      %v3963 = vsel %vm760, %v3948, 0
      %v3965 = vsel %vm760, %v3950, 0
      %v3967 = vsel %vm760, %v3952, 0
      %3969 = vmatprep.subr.mxu0 0.0
      %3970 = vmatpush1.xpose.msra.mxu0 0.0
      %3971 = vmatprep.subr.mxu0 0.0
      %3972 = vmatpush1.xpose.msra.mxu0 0.0
      %3973 = vmatprep.subr.mxu0 0.0
      %3974 = vmatpush1.xpose.msra.mxu0 0.0
      %3975 = vmatprep.subr.mxu0 0.0
      %3976 = vmatpush1.xpose.msra.mxu0 0.0
      %3977 = vmatprep.subr.mxu0 0.0
      %3978 = vmatpush1.xpose.msra.mxu0 0.0
      %3979 = vmatprep.subr.mxu0 0.0
      %3980 = vmatpush1.xpose.msra.mxu0 0.0
      %3981 = vmatprep.subr.mxu0 0.0
      %3982 = vmatpush1.xpose.msra.mxu0 0.0
      %3983 = vmatprep.subr.mxu0 0.0
      %3984 = vmatpush1.xpose.msra.mxu0 0.0
      %3985 = vmatprep.subr.mxu0 0.0
      %3986 = vmatpush1.xpose.msra.mxu0 0.0
      %3987 = vmatprep.subr.mxu0 0.0
      %3988 = vmatpush1.xpose.msra.mxu0 0.0
      %3989 = vmatprep.subr.mxu0 0.0
      %3990 = vmatpush1.xpose.msra.mxu0 0.0
      %3991 = vmatprep.subr.mxu0 0.0
      %3992 = vmatpush1.xpose.msra.mxu0 0.0
      %3993 = vmatprep.subr.mxu0 0.0
      %3994 = vmatpush1.xpose.msra.mxu0 %v3967
      %3995 = vmatprep.subr.mxu0 0.0
      %3996 = vmatpush1.xpose.msra.mxu0 %v3965
      %3997 = vmatprep.subr.mxu0 0.0
      %3998 = vmatpush1.xpose.msra.mxu0 %v3963
      %3999 = vmatprep.subr.mxu0 0.0
      %4000 = vmatpush1.xpose.msra.mxu0 %v3961
      %4001 = vmatprep.subr.mxu0 0.0
      %4002 = vmatpush2.xpose.msra.mxu0 0.0
      %4003 = vmatprep.subr.mxu0 0.0
      %4004 = vmatpush2.xpose.msra.mxu0 0.0
      %4005 = vmatprep.subr.mxu0 0.0
      %4006 = vmatpush2.xpose.msra.mxu0 0.0
      %4007 = vmatprep.subr.mxu0 0.0
      %4008 = vmatpush2.xpose.msra.mxu0 0.0
      %4009 = vmatprep.subr.mxu0 0.0
      %4010 = vmatpush2.xpose.msra.mxu0 0.0
      %4011 = vmatprep.subr.mxu0 0.0
      %4012 = vmatpush2.xpose.msra.mxu0 0.0
      %4013 = vmatprep.subr.mxu0 0.0
      %4014 = vmatpush2.xpose.msra.mxu0 0.0
      %4015 = vmatprep.subr.mxu0 0.0
      %4016 = vmatpush2.xpose.msra.mxu0 0.0
      %4017 = vmatprep.subr.mxu0 0.0
      %4018 = vmatpush2.xpose.msra.mxu0 0.0
      %4019 = vmatprep.subr.mxu0 0.0
      %4020 = vmatpush2.xpose.msra.mxu0 0.0
      %4021 = vmatprep.subr.mxu0 0.0
      %4022 = vmatpush2.xpose.msra.mxu0 0.0
      %4023 = vmatprep.subr.mxu0 0.0
      %4024 = vmatpush2.xpose.msra.mxu0 0.0
      %4025 = vmatprep.subr.mxu0 0.0
      %4026 = vmatpush2.xpose.msra.mxu0 0.0
      %4027 = vmatprep.subr.mxu0 0.0
      %4028 = vmatpush2.xpose.msra.mxu0 0.0
      %4029 = vmatprep.subr.mxu0 0.0
      %4030 = vmatpush2.xpose.msra.mxu0 0.0
      %4031 = vmatprep.subr.mxu0 0.0
      %4032 = vmatpush2.xpose.msra.mxu0 0.0
      %4033 = vmatprep.mubr.f32.mxu0 0.0
      %4034 = vmatmul.mubr.f32.gmra.mxu0 %v3953
      %v4035 = vpop.f32.mrf.mxu0
      %v4036 = vadd.f32 0.0, %v4035
      %v4037 = vpop.f32.mrf.mxu0
      %4038 = vmatprep.mubr.f32.mxu0 0.0
      %4039 = vmatmul.mubr.f32.gmra.mxu0 %v3955
      %v4040 = vpop.f32.mrf.mxu0
      %v4041 = vadd.f32 0.0, %v4040
      %v4042 = vpop.f32.mrf.mxu0
      %4043 = vmatprep.mubr.f32.mxu0 0.0
      %4044 = vmatmul.mubr.f32.gmra.mxu0 %v3957
      %v4045 = vpop.f32.mrf.mxu0
      %v4046 = vadd.f32 0.0, %v4045
      %v4047 = vpop.f32.mrf.mxu0
      %4048 = vmatprep.mubr.f32.mxu0 0.0
      %4049 = vmatmul.mubr.f32.gmra.mxu0 %v3959
      %v4050 = vpop.f32.mrf.mxu0
      %v4051 = vadd.f32 0.0, %v4050
      %v4052 = vpop.f32.mrf.mxu0
      %4053 = vdwg.mxu0
      %4054 = vrot.lane.b32.xlu0 %v522, 32
      %v4055 = vpop.permute.xlu0 %4054
      %4056 = vrot.lane.b32.xlu0 %v528, 32
      %v4057 = vpop.permute.xlu0 %4056
      %4058 = vrot.lane.b32.xlu0 %v534, 32
      %v4059 = vpop.permute.xlu0 %4058
      %4060 = vrot.lane.b32.xlu0 %v540, 32
      %v4061 = vpop.permute.xlu0 %4060
      %4062 = vrot.lane.b32.xlu0 %v524, 32
      %v4063 = vpop.permute.xlu0 %4062
      %4064 = vrot.lane.b32.xlu0 %v530, 32
      %v4065 = vpop.permute.xlu0 %4064
      %4066 = vrot.lane.b32.xlu0 %v536, 32
      %v4067 = vpop.permute.xlu0 %4066
      %4068 = vrot.lane.b32.xlu0 %v542, 32
      %v4069 = vpop.permute.xlu0 %4068
      %v4070 = vsel %vm760, %v4055, 0
      %v4072 = vsel %vm760, %v4057, 0
      %v4074 = vsel %vm760, %v4059, 0
      %v4076 = vsel %vm760, %v4061, 0
      %v4078 = vsel %vm760, %v4063, 0
      %v4080 = vsel %vm760, %v4065, 0
      %v4082 = vsel %vm760, %v4067, 0
      %v4084 = vsel %vm760, %v4069, 0
      %4086 = vmatprep.subr.mxu0 0.0
      %4087 = vmatpush1.xpose.msra.mxu0 0.0
      %4088 = vmatprep.subr.mxu0 0.0
      %4089 = vmatpush1.xpose.msra.mxu0 0.0
      %4090 = vmatprep.subr.mxu0 0.0
      %4091 = vmatpush1.xpose.msra.mxu0 0.0
      %4092 = vmatprep.subr.mxu0 0.0
      %4093 = vmatpush1.xpose.msra.mxu0 0.0
      %4094 = vmatprep.subr.mxu0 0.0
      %4095 = vmatpush1.xpose.msra.mxu0 0.0
      %4096 = vmatprep.subr.mxu0 0.0
      %4097 = vmatpush1.xpose.msra.mxu0 0.0
      %4098 = vmatprep.subr.mxu0 0.0
      %4099 = vmatpush1.xpose.msra.mxu0 0.0
      %4100 = vmatprep.subr.mxu0 0.0
      %4101 = vmatpush1.xpose.msra.mxu0 0.0
      %4102 = vmatprep.subr.mxu0 0.0
      %4103 = vmatpush1.xpose.msra.mxu0 0.0
      %4104 = vmatprep.subr.mxu0 0.0
      %4105 = vmatpush1.xpose.msra.mxu0 0.0
      %4106 = vmatprep.subr.mxu0 0.0
      %4107 = vmatpush1.xpose.msra.mxu0 0.0
      %4108 = vmatprep.subr.mxu0 0.0
      %4109 = vmatpush1.xpose.msra.mxu0 0.0
      %4110 = vmatprep.subr.mxu0 0.0
      %4111 = vmatpush1.xpose.msra.mxu0 %v4084
      %4112 = vmatprep.subr.mxu0 0.0
      %4113 = vmatpush1.xpose.msra.mxu0 %v4082
      %4114 = vmatprep.subr.mxu0 0.0
      %4115 = vmatpush1.xpose.msra.mxu0 %v4080
      %4116 = vmatprep.subr.mxu0 0.0
      %4117 = vmatpush1.xpose.msra.mxu0 %v4078
      %4118 = vmatprep.subr.mxu0 0.0
      %4119 = vmatpush2.xpose.msra.mxu0 0.0
      %4120 = vmatprep.subr.mxu0 0.0
      %4121 = vmatpush2.xpose.msra.mxu0 0.0
      %4122 = vmatprep.subr.mxu0 0.0
      %4123 = vmatpush2.xpose.msra.mxu0 0.0
      %4124 = vmatprep.subr.mxu0 0.0
      %4125 = vmatpush2.xpose.msra.mxu0 0.0
      %4126 = vmatprep.subr.mxu0 0.0
      %4127 = vmatpush2.xpose.msra.mxu0 0.0
      %4128 = vmatprep.subr.mxu0 0.0
      %4129 = vmatpush2.xpose.msra.mxu0 0.0
      %4130 = vmatprep.subr.mxu0 0.0
      %4131 = vmatpush2.xpose.msra.mxu0 0.0
      %4132 = vmatprep.subr.mxu0 0.0
      %4133 = vmatpush2.xpose.msra.mxu0 0.0
      %4134 = vmatprep.subr.mxu0 0.0
      %4135 = vmatpush2.xpose.msra.mxu0 0.0
      %4136 = vmatprep.subr.mxu0 0.0
      %4137 = vmatpush2.xpose.msra.mxu0 0.0
      %4138 = vmatprep.subr.mxu0 0.0
      %4139 = vmatpush2.xpose.msra.mxu0 0.0
      %4140 = vmatprep.subr.mxu0 0.0
      %4141 = vmatpush2.xpose.msra.mxu0 0.0
      %4142 = vmatprep.subr.mxu0 0.0
      %4143 = vmatpush2.xpose.msra.mxu0 0.0
      %4144 = vmatprep.subr.mxu0 0.0
      %4145 = vmatpush2.xpose.msra.mxu0 0.0
      %4146 = vmatprep.subr.mxu0 0.0
      %4147 = vmatpush2.xpose.msra.mxu0 0.0
      %4148 = vmatprep.subr.mxu0 0.0
      %4149 = vmatpush2.xpose.msra.mxu0 0.0
      %4150 = vmatprep.mubr.f32.mxu0 0.0
      %4151 = vmatmul.mubr.f32.gmra.mxu0 %v4070
      %v4152 = vpop.f32.mrf.mxu0
      %v4153 = vadd.f32 0.0, %v4152
      %v4154 = vpop.f32.mrf.mxu0
      %4155 = vmatprep.mubr.f32.mxu0 0.0
      %4156 = vmatmul.mubr.f32.gmra.mxu0 %v4072
      %v4157 = vpop.f32.mrf.mxu0
      %v4158 = vadd.f32 0.0, %v4157
      %v4159 = vpop.f32.mrf.mxu0
      %4160 = vmatprep.mubr.f32.mxu0 0.0
      %4161 = vmatmul.mubr.f32.gmra.mxu0 %v4074
      %v4162 = vpop.f32.mrf.mxu0
      %v4163 = vadd.f32 0.0, %v4162
      %v4164 = vpop.f32.mrf.mxu0
      %4165 = vmatprep.mubr.f32.mxu0 0.0
      %4166 = vmatmul.mubr.f32.gmra.mxu0 %v4076
      %v4167 = vpop.f32.mrf.mxu0
      %v4168 = vadd.f32 0.0, %v4167
      %v4169 = vpop.f32.mrf.mxu0
      %4170 = vdwg.mxu0
      %4171 = vrot.lane.b32.xlu0 %v546, 32
      %v4172 = vpop.permute.xlu0 %4171
      %4173 = vrot.lane.b32.xlu0 %v552, 32
      %v4174 = vpop.permute.xlu0 %4173
      %4175 = vrot.lane.b32.xlu0 %v558, 32
      %v4176 = vpop.permute.xlu0 %4175
      %4177 = vrot.lane.b32.xlu0 %v564, 32
      %v4178 = vpop.permute.xlu0 %4177
      %4179 = vrot.lane.b32.xlu0 %v548, 32
      %v4180 = vpop.permute.xlu0 %4179
      %4181 = vrot.lane.b32.xlu0 %v554, 32
      %v4182 = vpop.permute.xlu0 %4181
      %4183 = vrot.lane.b32.xlu0 %v560, 32
      %v4184 = vpop.permute.xlu0 %4183
      %4185 = vrot.lane.b32.xlu0 %v566, 32
      %v4186 = vpop.permute.xlu0 %4185
      %v4187 = vsel %vm760, %v4172, 0
      %v4189 = vsel %vm760, %v4174, 0
      %v4191 = vsel %vm760, %v4176, 0
      %v4193 = vsel %vm760, %v4178, 0
      %v4195 = vsel %vm760, %v4180, 0
      %v4197 = vsel %vm760, %v4182, 0
      %v4199 = vsel %vm760, %v4184, 0
      %v4201 = vsel %vm760, %v4186, 0
      %4203 = vmatprep.subr.mxu0 0.0
      %4204 = vmatpush1.xpose.msra.mxu0 0.0
      %4205 = vmatprep.subr.mxu0 0.0
      %4206 = vmatpush1.xpose.msra.mxu0 0.0
      %4207 = vmatprep.subr.mxu0 0.0
      %4208 = vmatpush1.xpose.msra.mxu0 0.0
      %4209 = vmatprep.subr.mxu0 0.0
      %4210 = vmatpush1.xpose.msra.mxu0 0.0
      %4211 = vmatprep.subr.mxu0 0.0
      %4212 = vmatpush1.xpose.msra.mxu0 0.0
      %4213 = vmatprep.subr.mxu0 0.0
      %4214 = vmatpush1.xpose.msra.mxu0 0.0
      %4215 = vmatprep.subr.mxu0 0.0
      %4216 = vmatpush1.xpose.msra.mxu0 0.0
      %4217 = vmatprep.subr.mxu0 0.0
      %4218 = vmatpush1.xpose.msra.mxu0 0.0
      %4219 = vmatprep.subr.mxu0 0.0
      %4220 = vmatpush1.xpose.msra.mxu0 0.0
      %4221 = vmatprep.subr.mxu0 0.0
      %4222 = vmatpush1.xpose.msra.mxu0 0.0
      %4223 = vmatprep.subr.mxu0 0.0
      %4224 = vmatpush1.xpose.msra.mxu0 0.0
      %4225 = vmatprep.subr.mxu0 0.0
      %4226 = vmatpush1.xpose.msra.mxu0 0.0
      %4227 = vmatprep.subr.mxu0 0.0
      %4228 = vmatpush1.xpose.msra.mxu0 %v4201
      %4229 = vmatprep.subr.mxu0 0.0
      %4230 = vmatpush1.xpose.msra.mxu0 %v4199
      %4231 = vmatprep.subr.mxu0 0.0
      %4232 = vmatpush1.xpose.msra.mxu0 %v4197
      %4233 = vmatprep.subr.mxu0 0.0
      %4234 = vmatpush1.xpose.msra.mxu0 %v4195
      %4235 = vmatprep.subr.mxu0 0.0
      %4236 = vmatpush2.xpose.msra.mxu0 0.0
      %4237 = vmatprep.subr.mxu0 0.0
      %4238 = vmatpush2.xpose.msra.mxu0 0.0
      %4239 = vmatprep.subr.mxu0 0.0
      %4240 = vmatpush2.xpose.msra.mxu0 0.0
      %4241 = vmatprep.subr.mxu0 0.0
      %4242 = vmatpush2.xpose.msra.mxu0 0.0
      %4243 = vmatprep.subr.mxu0 0.0
      %4244 = vmatpush2.xpose.msra.mxu0 0.0
      %4245 = vmatprep.subr.mxu0 0.0
      %4246 = vmatpush2.xpose.msra.mxu0 0.0
      %4247 = vmatprep.subr.mxu0 0.0
      %4248 = vmatpush2.xpose.msra.mxu0 0.0
      %4249 = vmatprep.subr.mxu0 0.0
      %4250 = vmatpush2.xpose.msra.mxu0 0.0
      %4251 = vmatprep.subr.mxu0 0.0
      %4252 = vmatpush2.xpose.msra.mxu0 0.0
      %4253 = vmatprep.subr.mxu0 0.0
      %4254 = vmatpush2.xpose.msra.mxu0 0.0
      %4255 = vmatprep.subr.mxu0 0.0
      %4256 = vmatpush2.xpose.msra.mxu0 0.0
      %4257 = vmatprep.subr.mxu0 0.0
      %4258 = vmatpush2.xpose.msra.mxu0 0.0
      %4259 = vmatprep.subr.mxu0 0.0
      %4260 = vmatpush2.xpose.msra.mxu0 0.0
      %4261 = vmatprep.subr.mxu0 0.0
      %4262 = vmatpush2.xpose.msra.mxu0 0.0
      %4263 = vmatprep.subr.mxu0 0.0
      %4264 = vmatpush2.xpose.msra.mxu0 0.0
      %4265 = vmatprep.subr.mxu0 0.0
      %4266 = vmatpush2.xpose.msra.mxu0 0.0
      %4267 = vmatprep.mubr.f32.mxu0 0.0
      %4268 = vmatmul.mubr.f32.gmra.mxu0 %v4187
      %v4269 = vpop.f32.mrf.mxu0
      %v4270 = vadd.f32 0.0, %v4269
      %v4271 = vpop.f32.mrf.mxu0
      %4272 = vmatprep.mubr.f32.mxu0 0.0
      %4273 = vmatmul.mubr.f32.gmra.mxu0 %v4189
      %v4274 = vpop.f32.mrf.mxu0
      %v4275 = vadd.f32 0.0, %v4274
      %v4276 = vpop.f32.mrf.mxu0
      %4277 = vmatprep.mubr.f32.mxu0 0.0
      %4278 = vmatmul.mubr.f32.gmra.mxu0 %v4191
      %v4279 = vpop.f32.mrf.mxu0
      %v4280 = vadd.f32 0.0, %v4279
      %v4281 = vpop.f32.mrf.mxu0
      %4282 = vmatprep.mubr.f32.mxu0 0.0
      %4283 = vmatmul.mubr.f32.gmra.mxu0 %v4193
      %v4284 = vpop.f32.mrf.mxu0
      %v4285 = vadd.f32 0.0, %v4284
      %v4286 = vpop.f32.mrf.mxu0
      %4287 = vdwg.mxu0
      %4288 = vrot.lane.b32.xlu0 %v570, 32
      %v4289 = vpop.permute.xlu0 %4288
      %4290 = vrot.lane.b32.xlu0 %v576, 32
      %v4291 = vpop.permute.xlu0 %4290
      %4292 = vrot.lane.b32.xlu0 %v582, 32
      %v4293 = vpop.permute.xlu0 %4292
      %4294 = vrot.lane.b32.xlu0 %v588, 32
      %v4295 = vpop.permute.xlu0 %4294
      %4296 = vrot.lane.b32.xlu0 %v572, 32
      %v4297 = vpop.permute.xlu0 %4296
      %4298 = vrot.lane.b32.xlu0 %v578, 32
      %v4299 = vpop.permute.xlu0 %4298
      %4300 = vrot.lane.b32.xlu0 %v584, 32
      %v4301 = vpop.permute.xlu0 %4300
      %4302 = vrot.lane.b32.xlu0 %v590, 32
      %v4303 = vpop.permute.xlu0 %4302
      %v4304 = vsel %vm760, %v4289, 0
      %v4306 = vsel %vm760, %v4291, 0
      %v4308 = vsel %vm760, %v4293, 0
      %v4310 = vsel %vm760, %v4295, 0
      %v4312 = vsel %vm760, %v4297, 0
      %v4314 = vsel %vm760, %v4299, 0
      %v4316 = vsel %vm760, %v4301, 0
      %v4318 = vsel %vm760, %v4303, 0
      %4320 = vmatprep.subr.mxu0 0.0
      %4321 = vmatpush1.xpose.msra.mxu0 0.0
      %4322 = vmatprep.subr.mxu0 0.0
      %4323 = vmatpush1.xpose.msra.mxu0 0.0
      %4324 = vmatprep.subr.mxu0 0.0
      %4325 = vmatpush1.xpose.msra.mxu0 0.0
      %4326 = vmatprep.subr.mxu0 0.0
      %4327 = vmatpush1.xpose.msra.mxu0 0.0
      %4328 = vmatprep.subr.mxu0 0.0
      %4329 = vmatpush1.xpose.msra.mxu0 0.0
      %4330 = vmatprep.subr.mxu0 0.0
      %4331 = vmatpush1.xpose.msra.mxu0 0.0
      %4332 = vmatprep.subr.mxu0 0.0
      %4333 = vmatpush1.xpose.msra.mxu0 0.0
      %4334 = vmatprep.subr.mxu0 0.0
      %4335 = vmatpush1.xpose.msra.mxu0 0.0
      %4336 = vmatprep.subr.mxu0 0.0
      %4337 = vmatpush1.xpose.msra.mxu0 0.0
      %4338 = vmatprep.subr.mxu0 0.0
      %4339 = vmatpush1.xpose.msra.mxu0 0.0
      %4340 = vmatprep.subr.mxu0 0.0
      %4341 = vmatpush1.xpose.msra.mxu0 0.0
      %4342 = vmatprep.subr.mxu0 0.0
      %4343 = vmatpush1.xpose.msra.mxu0 0.0
      %4344 = vmatprep.subr.mxu0 0.0
      %4345 = vmatpush1.xpose.msra.mxu0 %v4318
      %4346 = vmatprep.subr.mxu0 0.0
      %4347 = vmatpush1.xpose.msra.mxu0 %v4316
      %4348 = vmatprep.subr.mxu0 0.0
      %4349 = vmatpush1.xpose.msra.mxu0 %v4314
      %4350 = vmatprep.subr.mxu0 0.0
      %4351 = vmatpush1.xpose.msra.mxu0 %v4312
      %4352 = vmatprep.subr.mxu0 0.0
      %4353 = vmatpush2.xpose.msra.mxu0 0.0
      %4354 = vmatprep.subr.mxu0 0.0
      %4355 = vmatpush2.xpose.msra.mxu0 0.0
      %4356 = vmatprep.subr.mxu0 0.0
      %4357 = vmatpush2.xpose.msra.mxu0 0.0
      %4358 = vmatprep.subr.mxu0 0.0
      %4359 = vmatpush2.xpose.msra.mxu0 0.0
      %4360 = vmatprep.subr.mxu0 0.0
      %4361 = vmatpush2.xpose.msra.mxu0 0.0
      %4362 = vmatprep.subr.mxu0 0.0
      %4363 = vmatpush2.xpose.msra.mxu0 0.0
      %4364 = vmatprep.subr.mxu0 0.0
      %4365 = vmatpush2.xpose.msra.mxu0 0.0
      %4366 = vmatprep.subr.mxu0 0.0
      %4367 = vmatpush2.xpose.msra.mxu0 0.0
      %4368 = vmatprep.subr.mxu0 0.0
      %4369 = vmatpush2.xpose.msra.mxu0 0.0
      %4370 = vmatprep.subr.mxu0 0.0
      %4371 = vmatpush2.xpose.msra.mxu0 0.0
      %4372 = vmatprep.subr.mxu0 0.0
      %4373 = vmatpush2.xpose.msra.mxu0 0.0
      %4374 = vmatprep.subr.mxu0 0.0
      %4375 = vmatpush2.xpose.msra.mxu0 0.0
      %4376 = vmatprep.subr.mxu0 0.0
      %4377 = vmatpush2.xpose.msra.mxu0 0.0
      %4378 = vmatprep.subr.mxu0 0.0
      %4379 = vmatpush2.xpose.msra.mxu0 0.0
      %4380 = vmatprep.subr.mxu0 0.0
      %4381 = vmatpush2.xpose.msra.mxu0 0.0
      %4382 = vmatprep.subr.mxu0 0.0
      %4383 = vmatpush2.xpose.msra.mxu0 0.0
      %4384 = vmatprep.mubr.f32.mxu0 0.0
      %4385 = vmatmul.mubr.f32.gmra.mxu0 %v4304
      %v4386 = vpop.f32.mrf.mxu0
      %v4387 = vadd.f32 0.0, %v4386
      %v4388 = vpop.f32.mrf.mxu0
      %4389 = vmatprep.mubr.f32.mxu0 0.0
      %4390 = vmatmul.mubr.f32.gmra.mxu0 %v4306
      %v4391 = vpop.f32.mrf.mxu0
      %v4392 = vadd.f32 0.0, %v4391
      %v4393 = vpop.f32.mrf.mxu0
      %4394 = vmatprep.mubr.f32.mxu0 0.0
      %4395 = vmatmul.mubr.f32.gmra.mxu0 %v4308
      %v4396 = vpop.f32.mrf.mxu0
      %v4397 = vadd.f32 0.0, %v4396
      %v4398 = vpop.f32.mrf.mxu0
      %4399 = vmatprep.mubr.f32.mxu0 0.0
      %4400 = vmatmul.mubr.f32.gmra.mxu0 %v4310
      %v4401 = vpop.f32.mrf.mxu0
      %v4402 = vadd.f32 0.0, %v4401
      %v4403 = vpop.f32.mrf.mxu0
      %4404 = vdwg.mxu0
      %v4405 = vsel %vm760, %v4036, -inf
      %4406 = vmax.xlane.f32.xlu0 %v4405
      %v4407 = vpop.xlane.xlu0 %4406
      %v4408 = vsel %vm760, %v4041, -inf
      %4409 = vmax.xlane.f32.xlu0 %v4408
      %v4410 = vpop.xlane.xlu0 %4409
      %v4411 = vsel %vm760, %v4046, -inf
      %4412 = vmax.xlane.f32.xlu0 %v4411
      %v4413 = vpop.xlane.xlu0 %4412
      %v4414 = vsel %vm760, %v4051, -inf
      %4415 = vmax.xlane.f32.xlu0 %v4414
      %v4416 = vpop.xlane.xlu0 %4415
      %v4417 = vsel %vm760, %v4153, -inf
      %4418 = vmax.xlane.f32.xlu0 %v4417
      %v4419 = vpop.xlane.xlu0 %4418
      %v4420 = vsel %vm760, %v4158, -inf
      %4421 = vmax.xlane.f32.xlu0 %v4420
      %v4422 = vpop.xlane.xlu0 %4421
      %v4423 = vsel %vm760, %v4163, -inf
      %4424 = vmax.xlane.f32.xlu0 %v4423
      %v4425 = vpop.xlane.xlu0 %4424
      %v4426 = vsel %vm760, %v4168, -inf
      %4427 = vmax.xlane.f32.xlu0 %v4426
      %v4428 = vpop.xlane.xlu0 %4427
      %v4429 = vsel %vm760, %v4270, -inf
      %4430 = vmax.xlane.f32.xlu0 %v4429
      %v4431 = vpop.xlane.xlu0 %4430
      %v4432 = vsel %vm760, %v4275, -inf
      %4433 = vmax.xlane.f32.xlu0 %v4432
      %v4434 = vpop.xlane.xlu0 %4433
      %v4435 = vsel %vm760, %v4280, -inf
      %4436 = vmax.xlane.f32.xlu0 %v4435
      %v4437 = vpop.xlane.xlu0 %4436
      %v4438 = vsel %vm760, %v4285, -inf
      %4439 = vmax.xlane.f32.xlu0 %v4438
      %v4440 = vpop.xlane.xlu0 %4439
      %v4441 = vsel %vm760, %v4387, -inf
      %4442 = vmax.xlane.f32.xlu0 %v4441
      %v4443 = vpop.xlane.xlu0 %4442
      %v4444 = vsel %vm760, %v4392, -inf
      %4445 = vmax.xlane.f32.xlu0 %v4444
      %v4446 = vpop.xlane.xlu0 %4445
      %v4447 = vsel %vm760, %v4397, -inf
      %4448 = vmax.xlane.f32.xlu0 %v4447
      %v4449 = vpop.xlane.xlu0 %4448
      %v4450 = vsel %vm760, %v4402, -inf
      %4451 = vmax.xlane.f32.xlu0 %v4450
      %v4452 = vpop.xlane.xlu0 %4451
      %v4453 = vsub.f32 %v4036, %v4407
      %v4454 = vsub.f32 %v4041, %v4410
      %v4455 = vsub.f32 %v4046, %v4413
      %v4456 = vsub.f32 %v4051, %v4416
      %v4457 = vsub.f32 %v4153, %v4419
      %v4458 = vsub.f32 %v4158, %v4422
      %v4459 = vsub.f32 %v4163, %v4425
      %v4460 = vsub.f32 %v4168, %v4428
      %v4461 = vsub.f32 %v4270, %v4431
      %v4462 = vsub.f32 %v4275, %v4434
      %v4463 = vsub.f32 %v4280, %v4437
      %v4464 = vsub.f32 %v4285, %v4440
      %v4465 = vsub.f32 %v4387, %v4443
      %v4466 = vsub.f32 %v4392, %v4446
      %v4467 = vsub.f32 %v4397, %v4449
      %v4468 = vsub.f32 %v4402, %v4452
      %v4469 = vmul.f32 %v4453, 1.442695
      %v4470 = vpow.pop %v4469
      %v4471 = vmul.f32 %v4454, 1.442695
      %v4472 = vpow.pop %v4471
      %v4473 = vmul.f32 %v4455, 1.442695
      %v4474 = vpow.pop %v4473
      %v4475 = vmul.f32 %v4456, 1.442695
      %v4476 = vpow.pop %v4475
      %v4477 = vmul.f32 %v4457, 1.442695
      %v4478 = vpow.pop %v4477
      %v4479 = vmul.f32 %v4458, 1.442695
      %v4480 = vpow.pop %v4479
      %v4481 = vmul.f32 %v4459, 1.442695
      %v4482 = vpow.pop %v4481
      %v4483 = vmul.f32 %v4460, 1.442695
      %v4484 = vpow.pop %v4483
      %v4485 = vmul.f32 %v4461, 1.442695
      %v4486 = vpow.pop %v4485
      %v4487 = vmul.f32 %v4462, 1.442695
      %v4488 = vpow.pop %v4487
      %v4489 = vmul.f32 %v4463, 1.442695
      %v4490 = vpow.pop %v4489
      %v4491 = vmul.f32 %v4464, 1.442695
      %v4492 = vpow.pop %v4491
      %v4493 = vmul.f32 %v4465, 1.442695
      %v4494 = vpow.pop %v4493
      %v4495 = vmul.f32 %v4466, 1.442695
      %v4496 = vpow.pop %v4495
      %v4497 = vmul.f32 %v4467, 1.442695
      %v4498 = vpow.pop %v4497
      %v4499 = vmul.f32 %v4468, 1.442695
      %v4500 = vpow.pop %v4499
      %v4501 = vsel %vm760, %v4470, 0.0
      %4502 = vadd.xlane.f32.xlu0 %v4501
      %v4503 = vpop.xlane.xlu0 %4502
      %v4504 = vsel %vm760, %v4472, 0.0
      %4505 = vadd.xlane.f32.xlu0 %v4504
      %v4506 = vpop.xlane.xlu0 %4505
      %v4507 = vsel %vm760, %v4474, 0.0
      %4508 = vadd.xlane.f32.xlu0 %v4507
      %v4509 = vpop.xlane.xlu0 %4508
      %v4510 = vsel %vm760, %v4476, 0.0
      %4511 = vadd.xlane.f32.xlu0 %v4510
      %v4512 = vpop.xlane.xlu0 %4511
      %v4513 = vsel %vm760, %v4478, 0.0
      %4514 = vadd.xlane.f32.xlu0 %v4513
      %v4515 = vpop.xlane.xlu0 %4514
      %v4516 = vsel %vm760, %v4480, 0.0
      %4517 = vadd.xlane.f32.xlu0 %v4516
      %v4518 = vpop.xlane.xlu0 %4517
      %v4519 = vsel %vm760, %v4482, 0.0
      %4520 = vadd.xlane.f32.xlu0 %v4519
      %v4521 = vpop.xlane.xlu0 %4520
      %v4522 = vsel %vm760, %v4484, 0.0
      %4523 = vadd.xlane.f32.xlu0 %v4522
      %v4524 = vpop.xlane.xlu0 %4523
      %v4525 = vsel %vm760, %v4486, 0.0
      %4526 = vadd.xlane.f32.xlu0 %v4525
      %v4527 = vpop.xlane.xlu0 %4526
      %v4528 = vsel %vm760, %v4488, 0.0
      %4529 = vadd.xlane.f32.xlu0 %v4528
      %v4530 = vpop.xlane.xlu0 %4529
      %v4531 = vsel %vm760, %v4490, 0.0
      %4532 = vadd.xlane.f32.xlu0 %v4531
      %v4533 = vpop.xlane.xlu0 %4532
      %v4534 = vsel %vm760, %v4492, 0.0
      %4535 = vadd.xlane.f32.xlu0 %v4534
      %v4536 = vpop.xlane.xlu0 %4535
      %v4537 = vsel %vm760, %v4494, 0.0
      %4538 = vadd.xlane.f32.xlu0 %v4537
      %v4539 = vpop.xlane.xlu0 %4538
      %v4540 = vsel %vm760, %v4496, 0.0
      %4541 = vadd.xlane.f32.xlu0 %v4540
      %v4542 = vpop.xlane.xlu0 %4541
      %v4543 = vsel %vm760, %v4498, 0.0
      %4544 = vadd.xlane.f32.xlu0 %v4543
      %v4545 = vpop.xlane.xlu0 %4544
      %v4546 = vsel %vm760, %v4500, 0.0
      %4547 = vadd.xlane.f32.xlu0 %v4546
      %v4548 = vpop.xlane.xlu0 %4547
      %v4549 = vrcp.pop %v4503
      %v4550 = vmul.f32 %v4470, %v4549
      %v4551 = vrcp.pop %v4506
      %v4552 = vmul.f32 %v4472, %v4551
      %v4553 = vrcp.pop %v4509
      %v4554 = vmul.f32 %v4474, %v4553
      %v4555 = vrcp.pop %v4512
      %v4556 = vmul.f32 %v4476, %v4555
      %v4557 = vrcp.pop %v4515
      %v4558 = vmul.f32 %v4478, %v4557
      %v4559 = vrcp.pop %v4518
      %v4560 = vmul.f32 %v4480, %v4559
      %v4561 = vrcp.pop %v4521
      %v4562 = vmul.f32 %v4482, %v4561
      %v4563 = vrcp.pop %v4524
      %v4564 = vmul.f32 %v4484, %v4563
      %v4565 = vrcp.pop %v4527
      %v4566 = vmul.f32 %v4486, %v4565
      %v4567 = vrcp.pop %v4530
      %v4568 = vmul.f32 %v4488, %v4567
      %v4569 = vrcp.pop %v4533
      %v4570 = vmul.f32 %v4490, %v4569
      %v4571 = vrcp.pop %v4536
      %v4572 = vmul.f32 %v4492, %v4571
      %v4573 = vrcp.pop %v4539
      %v4574 = vmul.f32 %v4494, %v4573
      %v4575 = vrcp.pop %v4542
      %v4576 = vmul.f32 %v4496, %v4575
      %v4577 = vrcp.pop %v4545
      %v4578 = vmul.f32 %v4498, %v4577
      %v4579 = vrcp.pop %v4548
      %v4580 = vmul.f32 %v4500, %v4579
      %4581 = vrot.lane.b32.xlu0 %v682, 32
      %v4582 = vpop.permute.xlu0 %4581
      %4583 = vrot.lane.b32.xlu0 %v687, 32
      %v4584 = vpop.permute.xlu0 %4583
      %4585 = vrot.lane.b32.xlu0 %v692, 32
      %v4586 = vpop.permute.xlu0 %4585
      %4587 = vrot.lane.b32.xlu0 %v697, 32
      %v4588 = vpop.permute.xlu0 %4587
      %v4594 = vsel %vm760, %v4550, 0
      %v4597 = vsel %vm760, %v4552, 0
      %v4600 = vsel %vm760, %v4554, 0
      %v4603 = vsel %vm760, %v4556, 0
      %4605 = vmatprep.subr.mxu0 0.0
      %4606 = vmatpush1.msra.mxu0 0.0
      %4607 = vmatprep.subr.mxu0 0.0
      %4608 = vmatpush1.msra.mxu0 0.0
      %4609 = vmatprep.subr.mxu0 0.0
      %4610 = vmatpush1.msra.mxu0 0.0
      %4611 = vmatprep.subr.mxu0 0.0
      %4612 = vmatpush1.msra.mxu0 0.0
      %4613 = vmatprep.subr.mxu0 0.0
      %4614 = vmatpush1.msra.mxu0 0.0
      %4615 = vmatprep.subr.mxu0 0.0
      %4616 = vmatpush1.msra.mxu0 0.0
      %4617 = vmatprep.subr.mxu0 0.0
      %4618 = vmatpush1.msra.mxu0 0.0
      %4619 = vmatprep.subr.mxu0 0.0
      %4620 = vmatpush1.msra.mxu0 0.0
      %4621 = vmatprep.subr.mxu0 0.0
      %4622 = vmatpush1.msra.mxu0 0.0
      %4623 = vmatprep.subr.mxu0 0.0
      %4624 = vmatpush1.msra.mxu0 0.0
      %4625 = vmatprep.subr.mxu0 0.0
      %4626 = vmatpush1.msra.mxu0 0.0
      %4627 = vmatprep.subr.mxu0 0.0
      %4628 = vmatpush1.msra.mxu0 0.0
      %4629 = vmatprep.subr.mxu0 0.0
      %4630 = vmatpush1.msra.mxu0 %v4588
      %4631 = vmatprep.subr.mxu0 0.0
      %4632 = vmatpush1.msra.mxu0 %v4586
      %4633 = vmatprep.subr.mxu0 0.0
      %4634 = vmatpush1.msra.mxu0 %v4584
      %4635 = vmatprep.subr.mxu0 0.0
      %4636 = vmatpush1.msra.mxu0 %v4582
      %4637 = vmatprep.subr.mxu0 0.0
      %4638 = vmatpush2.msra.mxu0 0.0
      %4639 = vmatprep.subr.mxu0 0.0
      %4640 = vmatpush2.msra.mxu0 0.0
      %4641 = vmatprep.subr.mxu0 0.0
      %4642 = vmatpush2.msra.mxu0 0.0
      %4643 = vmatprep.subr.mxu0 0.0
      %4644 = vmatpush2.msra.mxu0 0.0
      %4645 = vmatprep.subr.mxu0 0.0
      %4646 = vmatpush2.msra.mxu0 0.0
      %4647 = vmatprep.subr.mxu0 0.0
      %4648 = vmatpush2.msra.mxu0 0.0
      %4649 = vmatprep.subr.mxu0 0.0
      %4650 = vmatpush2.msra.mxu0 0.0
      %4651 = vmatprep.subr.mxu0 0.0
      %4652 = vmatpush2.msra.mxu0 0.0
      %4653 = vmatprep.subr.mxu0 0.0
      %4654 = vmatpush2.msra.mxu0 0.0
      %4655 = vmatprep.subr.mxu0 0.0
      %4656 = vmatpush2.msra.mxu0 0.0
      %4657 = vmatprep.subr.mxu0 0.0
      %4658 = vmatpush2.msra.mxu0 0.0
      %4659 = vmatprep.subr.mxu0 0.0
      %4660 = vmatpush2.msra.mxu0 0.0
      %4661 = vmatprep.subr.mxu0 0.0
      %4662 = vmatpush2.msra.mxu0 0.0
      %4663 = vmatprep.subr.mxu0 0.0
      %4664 = vmatpush2.msra.mxu0 0.0
      %4665 = vmatprep.subr.mxu0 0.0
      %4666 = vmatpush2.msra.mxu0 0.0
      %4667 = vmatprep.subr.mxu0 0.0
      %4668 = vmatpush2.msra.mxu0 0.0
      %4669 = vmatprep.mubr.f32.mxu0 0.0
      %4670 = vmatmul.mubr.f32.gmra.mxu0 %v4594
      %v4671 = vpop.f32.mrf.mxu0
      %v4672 = vadd.f32 0.0, %v4671
      %v4673 = vpop.f32.mrf.mxu0
      %4674 = vmatprep.mubr.f32.mxu0 0.0
      %4675 = vmatmul.mubr.f32.gmra.mxu0 %v4597
      %v4676 = vpop.f32.mrf.mxu0
      %v4677 = vadd.f32 0.0, %v4676
      %v4678 = vpop.f32.mrf.mxu0
      %4679 = vmatprep.mubr.f32.mxu0 0.0
      %4680 = vmatmul.mubr.f32.gmra.mxu0 %v4600
      %v4681 = vpop.f32.mrf.mxu0
      %v4682 = vadd.f32 0.0, %v4681
      %v4683 = vpop.f32.mrf.mxu0
      %4684 = vmatprep.mubr.f32.mxu0 0.0
      %4685 = vmatmul.mubr.f32.gmra.mxu0 %v4603
      %v4686 = vpop.f32.mrf.mxu0
      %v4687 = vadd.f32 0.0, %v4686
      %v4688 = vpop.f32.mrf.mxu0
      %4689 = vdwg.mxu0
      %4690 = vrot.lane.b32.xlu0 %v702, 32
      %v4691 = vpop.permute.xlu0 %4690
      %4692 = vrot.lane.b32.xlu0 %v707, 32
      %v4693 = vpop.permute.xlu0 %4692
      %4694 = vrot.lane.b32.xlu0 %v712, 32
      %v4695 = vpop.permute.xlu0 %4694
      %4696 = vrot.lane.b32.xlu0 %v717, 32
      %v4697 = vpop.permute.xlu0 %4696
      %v4703 = vsel %vm760, %v4558, 0
      %v4706 = vsel %vm760, %v4560, 0
      %v4709 = vsel %vm760, %v4562, 0
      %v4712 = vsel %vm760, %v4564, 0
      %4714 = vmatprep.subr.mxu0 0.0
      %4715 = vmatpush1.msra.mxu0 0.0
      %4716 = vmatprep.subr.mxu0 0.0
      %4717 = vmatpush1.msra.mxu0 0.0
      %4718 = vmatprep.subr.mxu0 0.0
      %4719 = vmatpush1.msra.mxu0 0.0
      %4720 = vmatprep.subr.mxu0 0.0
      %4721 = vmatpush1.msra.mxu0 0.0
      %4722 = vmatprep.subr.mxu0 0.0
      %4723 = vmatpush1.msra.mxu0 0.0
      %4724 = vmatprep.subr.mxu0 0.0
      %4725 = vmatpush1.msra.mxu0 0.0
      %4726 = vmatprep.subr.mxu0 0.0
      %4727 = vmatpush1.msra.mxu0 0.0
      %4728 = vmatprep.subr.mxu0 0.0
      %4729 = vmatpush1.msra.mxu0 0.0
      %4730 = vmatprep.subr.mxu0 0.0
      %4731 = vmatpush1.msra.mxu0 0.0
      %4732 = vmatprep.subr.mxu0 0.0
      %4733 = vmatpush1.msra.mxu0 0.0
      %4734 = vmatprep.subr.mxu0 0.0
      %4735 = vmatpush1.msra.mxu0 0.0
      %4736 = vmatprep.subr.mxu0 0.0
      %4737 = vmatpush1.msra.mxu0 0.0
      %4738 = vmatprep.subr.mxu0 0.0
      %4739 = vmatpush1.msra.mxu0 %v4697
      %4740 = vmatprep.subr.mxu0 0.0
      %4741 = vmatpush1.msra.mxu0 %v4695
      %4742 = vmatprep.subr.mxu0 0.0
      %4743 = vmatpush1.msra.mxu0 %v4693
      %4744 = vmatprep.subr.mxu0 0.0
      %4745 = vmatpush1.msra.mxu0 %v4691
      %4746 = vmatprep.subr.mxu0 0.0
      %4747 = vmatpush2.msra.mxu0 0.0
      %4748 = vmatprep.subr.mxu0 0.0
      %4749 = vmatpush2.msra.mxu0 0.0
      %4750 = vmatprep.subr.mxu0 0.0
      %4751 = vmatpush2.msra.mxu0 0.0
      %4752 = vmatprep.subr.mxu0 0.0
      %4753 = vmatpush2.msra.mxu0 0.0
      %4754 = vmatprep.subr.mxu0 0.0
      %4755 = vmatpush2.msra.mxu0 0.0
      %4756 = vmatprep.subr.mxu0 0.0
      %4757 = vmatpush2.msra.mxu0 0.0
      %4758 = vmatprep.subr.mxu0 0.0
      %4759 = vmatpush2.msra.mxu0 0.0
      %4760 = vmatprep.subr.mxu0 0.0
      %4761 = vmatpush2.msra.mxu0 0.0
      %4762 = vmatprep.subr.mxu0 0.0
      %4763 = vmatpush2.msra.mxu0 0.0
      %4764 = vmatprep.subr.mxu0 0.0
      %4765 = vmatpush2.msra.mxu0 0.0
      %4766 = vmatprep.subr.mxu0 0.0
      %4767 = vmatpush2.msra.mxu0 0.0
      %4768 = vmatprep.subr.mxu0 0.0
      %4769 = vmatpush2.msra.mxu0 0.0
      %4770 = vmatprep.subr.mxu0 0.0
      %4771 = vmatpush2.msra.mxu0 0.0
      %4772 = vmatprep.subr.mxu0 0.0
      %4773 = vmatpush2.msra.mxu0 0.0
      %4774 = vmatprep.subr.mxu0 0.0
      %4775 = vmatpush2.msra.mxu0 0.0
      %4776 = vmatprep.subr.mxu0 0.0
      %4777 = vmatpush2.msra.mxu0 0.0
      %4778 = vmatprep.mubr.f32.mxu0 0.0
      %4779 = vmatmul.mubr.f32.gmra.mxu0 %v4703
      %v4780 = vpop.f32.mrf.mxu0
      %v4781 = vadd.f32 0.0, %v4780
      %v4782 = vpop.f32.mrf.mxu0
      %4783 = vmatprep.mubr.f32.mxu0 0.0
      %4784 = vmatmul.mubr.f32.gmra.mxu0 %v4706
      %v4785 = vpop.f32.mrf.mxu0
      %v4786 = vadd.f32 0.0, %v4785
      %v4787 = vpop.f32.mrf.mxu0
      %4788 = vmatprep.mubr.f32.mxu0 0.0
      %4789 = vmatmul.mubr.f32.gmra.mxu0 %v4709
      %v4790 = vpop.f32.mrf.mxu0
      %v4791 = vadd.f32 0.0, %v4790
      %v4792 = vpop.f32.mrf.mxu0
      %4793 = vmatprep.mubr.f32.mxu0 0.0
      %4794 = vmatmul.mubr.f32.gmra.mxu0 %v4712
      %v4795 = vpop.f32.mrf.mxu0
      %v4796 = vadd.f32 0.0, %v4795
      %v4797 = vpop.f32.mrf.mxu0
      %4798 = vdwg.mxu0
      %4799 = vrot.lane.b32.xlu0 %v722, 32
      %v4800 = vpop.permute.xlu0 %4799
      %4801 = vrot.lane.b32.xlu0 %v727, 32
      %v4802 = vpop.permute.xlu0 %4801
      %4803 = vrot.lane.b32.xlu0 %v732, 32
      %v4804 = vpop.permute.xlu0 %4803
      %4805 = vrot.lane.b32.xlu0 %v737, 32
      %v4806 = vpop.permute.xlu0 %4805
      %v4812 = vsel %vm760, %v4566, 0
      %v4815 = vsel %vm760, %v4568, 0
      %v4818 = vsel %vm760, %v4570, 0
      %v4821 = vsel %vm760, %v4572, 0
      %4823 = vmatprep.subr.mxu0 0.0
      %4824 = vmatpush1.msra.mxu0 0.0
      %4825 = vmatprep.subr.mxu0 0.0
      %4826 = vmatpush1.msra.mxu0 0.0
      %4827 = vmatprep.subr.mxu0 0.0
      %4828 = vmatpush1.msra.mxu0 0.0
      %4829 = vmatprep.subr.mxu0 0.0
      %4830 = vmatpush1.msra.mxu0 0.0
      %4831 = vmatprep.subr.mxu0 0.0
      %4832 = vmatpush1.msra.mxu0 0.0
      %4833 = vmatprep.subr.mxu0 0.0
      %4834 = vmatpush1.msra.mxu0 0.0
      %4835 = vmatprep.subr.mxu0 0.0
      %4836 = vmatpush1.msra.mxu0 0.0
      %4837 = vmatprep.subr.mxu0 0.0
      %4838 = vmatpush1.msra.mxu0 0.0
      %4839 = vmatprep.subr.mxu0 0.0
      %4840 = vmatpush1.msra.mxu0 0.0
      %4841 = vmatprep.subr.mxu0 0.0
      %4842 = vmatpush1.msra.mxu0 0.0
      %4843 = vmatprep.subr.mxu0 0.0
      %4844 = vmatpush1.msra.mxu0 0.0
      %4845 = vmatprep.subr.mxu0 0.0
      %4846 = vmatpush1.msra.mxu0 0.0
      %4847 = vmatprep.subr.mxu0 0.0
      %4848 = vmatpush1.msra.mxu0 %v4806
      %4849 = vmatprep.subr.mxu0 0.0
      %4850 = vmatpush1.msra.mxu0 %v4804
      %4851 = vmatprep.subr.mxu0 0.0
      %4852 = vmatpush1.msra.mxu0 %v4802
      %4853 = vmatprep.subr.mxu0 0.0
      %4854 = vmatpush1.msra.mxu0 %v4800
      %4855 = vmatprep.subr.mxu0 0.0
      %4856 = vmatpush2.msra.mxu0 0.0
      %4857 = vmatprep.subr.mxu0 0.0
      %4858 = vmatpush2.msra.mxu0 0.0
      %4859 = vmatprep.subr.mxu0 0.0
      %4860 = vmatpush2.msra.mxu0 0.0
      %4861 = vmatprep.subr.mxu0 0.0
      %4862 = vmatpush2.msra.mxu0 0.0
      %4863 = vmatprep.subr.mxu0 0.0
      %4864 = vmatpush2.msra.mxu0 0.0
      %4865 = vmatprep.subr.mxu0 0.0
      %4866 = vmatpush2.msra.mxu0 0.0
      %4867 = vmatprep.subr.mxu0 0.0
      %4868 = vmatpush2.msra.mxu0 0.0
      %4869 = vmatprep.subr.mxu0 0.0
      %4870 = vmatpush2.msra.mxu0 0.0
      %4871 = vmatprep.subr.mxu0 0.0
      %4872 = vmatpush2.msra.mxu0 0.0
      %4873 = vmatprep.subr.mxu0 0.0
      %4874 = vmatpush2.msra.mxu0 0.0
      %4875 = vmatprep.subr.mxu0 0.0
      %4876 = vmatpush2.msra.mxu0 0.0
      %4877 = vmatprep.subr.mxu0 0.0
      %4878 = vmatpush2.msra.mxu0 0.0
      %4879 = vmatprep.subr.mxu0 0.0
      %4880 = vmatpush2.msra.mxu0 0.0
      %4881 = vmatprep.subr.mxu0 0.0
      %4882 = vmatpush2.msra.mxu0 0.0
      %4883 = vmatprep.subr.mxu0 0.0
      %4884 = vmatpush2.msra.mxu0 0.0
      %4885 = vmatprep.subr.mxu0 0.0
      %4886 = vmatpush2.msra.mxu0 0.0
      %4887 = vmatprep.mubr.f32.mxu0 0.0
      %4888 = vmatmul.mubr.f32.gmra.mxu0 %v4812
      %v4889 = vpop.f32.mrf.mxu0
      %v4890 = vadd.f32 0.0, %v4889
      %v4891 = vpop.f32.mrf.mxu0
      %4892 = vmatprep.mubr.f32.mxu0 0.0
      %4893 = vmatmul.mubr.f32.gmra.mxu0 %v4815
      %v4894 = vpop.f32.mrf.mxu0
      %v4895 = vadd.f32 0.0, %v4894
      %v4896 = vpop.f32.mrf.mxu0
      %4897 = vmatprep.mubr.f32.mxu0 0.0
      %4898 = vmatmul.mubr.f32.gmra.mxu0 %v4818
      %v4899 = vpop.f32.mrf.mxu0
      %v4900 = vadd.f32 0.0, %v4899
      %v4901 = vpop.f32.mrf.mxu0
      %4902 = vmatprep.mubr.f32.mxu0 0.0
      %4903 = vmatmul.mubr.f32.gmra.mxu0 %v4821
      %v4904 = vpop.f32.mrf.mxu0
      %v4905 = vadd.f32 0.0, %v4904
      %v4906 = vpop.f32.mrf.mxu0
      %4907 = vdwg.mxu0
      %4908 = vrot.lane.b32.xlu0 %v742, 32
      %v4909 = vpop.permute.xlu0 %4908
      %4910 = vrot.lane.b32.xlu0 %v747, 32
      %v4911 = vpop.permute.xlu0 %4910
      %4912 = vrot.lane.b32.xlu0 %v752, 32
      %v4913 = vpop.permute.xlu0 %4912
      %4914 = vrot.lane.b32.xlu0 %v757, 32
      %v4915 = vpop.permute.xlu0 %4914
      %v4921 = vsel %vm760, %v4574, 0
      %v4924 = vsel %vm760, %v4576, 0
      %v4927 = vsel %vm760, %v4578, 0
      %v4930 = vsel %vm760, %v4580, 0
      %4932 = vmatprep.subr.mxu0 0.0
      %4933 = vmatpush1.msra.mxu0 0.0
      %4934 = vmatprep.subr.mxu0 0.0
      %4935 = vmatpush1.msra.mxu0 0.0
      %4936 = vmatprep.subr.mxu0 0.0
      %4937 = vmatpush1.msra.mxu0 0.0
      %4938 = vmatprep.subr.mxu0 0.0
      %4939 = vmatpush1.msra.mxu0 0.0
      %4940 = vmatprep.subr.mxu0 0.0
      %4941 = vmatpush1.msra.mxu0 0.0
      %4942 = vmatprep.subr.mxu0 0.0
      %4943 = vmatpush1.msra.mxu0 0.0
      %4944 = vmatprep.subr.mxu0 0.0
      %4945 = vmatpush1.msra.mxu0 0.0
      %4946 = vmatprep.subr.mxu0 0.0
      %4947 = vmatpush1.msra.mxu0 0.0
      %4948 = vmatprep.subr.mxu0 0.0
      %4949 = vmatpush1.msra.mxu0 0.0
      %4950 = vmatprep.subr.mxu0 0.0
      %4951 = vmatpush1.msra.mxu0 0.0
      %4952 = vmatprep.subr.mxu0 0.0
      %4953 = vmatpush1.msra.mxu0 0.0
      %4954 = vmatprep.subr.mxu0 0.0
      %4955 = vmatpush1.msra.mxu0 0.0
      %4956 = vmatprep.subr.mxu0 0.0
      %4957 = vmatpush1.msra.mxu0 %v4915
      %4958 = vmatprep.subr.mxu0 0.0
      %4959 = vmatpush1.msra.mxu0 %v4913
      %4960 = vmatprep.subr.mxu0 0.0
      %4961 = vmatpush1.msra.mxu0 %v4911
      %4962 = vmatprep.subr.mxu0 0.0
      %4963 = vmatpush1.msra.mxu0 %v4909
      %4964 = vmatprep.subr.mxu0 0.0
      %4965 = vmatpush2.msra.mxu0 0.0
      %4966 = vmatprep.subr.mxu0 0.0
      %4967 = vmatpush2.msra.mxu0 0.0
      %4968 = vmatprep.subr.mxu0 0.0
      %4969 = vmatpush2.msra.mxu0 0.0
      %4970 = vmatprep.subr.mxu0 0.0
      %4971 = vmatpush2.msra.mxu0 0.0
      %4972 = vmatprep.subr.mxu0 0.0
      %4973 = vmatpush2.msra.mxu0 0.0
      %4974 = vmatprep.subr.mxu0 0.0
      %4975 = vmatpush2.msra.mxu0 0.0
      %4976 = vmatprep.subr.mxu0 0.0
      %4977 = vmatpush2.msra.mxu0 0.0
      %4978 = vmatprep.subr.mxu0 0.0
      %4979 = vmatpush2.msra.mxu0 0.0
      %4980 = vmatprep.subr.mxu0 0.0
      %4981 = vmatpush2.msra.mxu0 0.0
      %4982 = vmatprep.subr.mxu0 0.0
      %4983 = vmatpush2.msra.mxu0 0.0
      %4984 = vmatprep.subr.mxu0 0.0
      %4985 = vmatpush2.msra.mxu0 0.0
      %4986 = vmatprep.subr.mxu0 0.0
      %4987 = vmatpush2.msra.mxu0 0.0
      %4988 = vmatprep.subr.mxu0 0.0
      %4989 = vmatpush2.msra.mxu0 0.0
      %4990 = vmatprep.subr.mxu0 0.0
      %4991 = vmatpush2.msra.mxu0 0.0
      %4992 = vmatprep.subr.mxu0 0.0
      %4993 = vmatpush2.msra.mxu0 0.0
      %4994 = vmatprep.subr.mxu0 0.0
      %4995 = vmatpush2.msra.mxu0 0.0
      %4996 = vmatprep.mubr.f32.mxu0 0.0
      %4997 = vmatmul.mubr.f32.gmra.mxu0 %v4921
      %v4998 = vpop.f32.mrf.mxu0
      %v4999 = vadd.f32 0.0, %v4998
      %v5000 = vpop.f32.mrf.mxu0
      %5001 = vmatprep.mubr.f32.mxu0 0.0
      %5002 = vmatmul.mubr.f32.gmra.mxu0 %v4924
      %v5003 = vpop.f32.mrf.mxu0
      %v5004 = vadd.f32 0.0, %v5003
      %v5005 = vpop.f32.mrf.mxu0
      %5006 = vmatprep.mubr.f32.mxu0 0.0
      %5007 = vmatmul.mubr.f32.gmra.mxu0 %v4927
      %v5008 = vpop.f32.mrf.mxu0
      %v5009 = vadd.f32 0.0, %v5008
      %v5010 = vpop.f32.mrf.mxu0
      %5011 = vmatprep.mubr.f32.mxu0 0.0
      %5012 = vmatmul.mubr.f32.gmra.mxu0 %v4930
      %v5013 = vpop.f32.mrf.mxu0
      %v5014 = vadd.f32 0.0, %v5013
      %v5015 = vpop.f32.mrf.mxu0
      %5016 = vdwg.mxu0
      %5033 = vrot.lane.b32.xlu0 %v2500, 32
      %v5034 = vpop.permute.xlu0 %5033
      %5035 = vrot.lane.b32.xlu0 %v2505, 32
      %v5036 = vpop.permute.xlu0 %5035
      %5037 = vrot.lane.b32.xlu0 %v2510, 32
      %v5038 = vpop.permute.xlu0 %5037
      %5039 = vrot.lane.b32.xlu0 %v2515, 32
      %v5040 = vpop.permute.xlu0 %5039
      %5041 = vrot.lane.b32.xlu0 %v2613, 32
      %v5042 = vpop.permute.xlu0 %5041
      %5043 = vrot.lane.b32.xlu0 %v2618, 32
      %v5044 = vpop.permute.xlu0 %5043
      %5045 = vrot.lane.b32.xlu0 %v2623, 32
      %v5046 = vpop.permute.xlu0 %5045
      %5047 = vrot.lane.b32.xlu0 %v2628, 32
      %v5048 = vpop.permute.xlu0 %5047
      %5049 = vrot.lane.b32.xlu0 %v2726, 32
      %v5050 = vpop.permute.xlu0 %5049
      %5051 = vrot.lane.b32.xlu0 %v2731, 32
      %v5052 = vpop.permute.xlu0 %5051
      %5053 = vrot.lane.b32.xlu0 %v2736, 32
      %v5054 = vpop.permute.xlu0 %5053
      %5055 = vrot.lane.b32.xlu0 %v2741, 32
      %v5056 = vpop.permute.xlu0 %5055
      %5057 = vrot.lane.b32.xlu0 %v2839, 32
      %v5058 = vpop.permute.xlu0 %5057
      %5059 = vrot.lane.b32.xlu0 %v2844, 32
      %v5060 = vpop.permute.xlu0 %5059
      %5061 = vrot.lane.b32.xlu0 %v2849, 32
      %v5062 = vpop.permute.xlu0 %5061
      %5063 = vrot.lane.b32.xlu0 %v2854, 32
      %v5064 = vpop.permute.xlu0 %5063
      %5097 = vrot.lane.b32.xlu0 %v3592, 64
      %v5098 = vpop.permute.xlu0 %5097
      %5099 = vrot.lane.b32.xlu0 %v3597, 64
      %v5100 = vpop.permute.xlu0 %5099
      %5101 = vrot.lane.b32.xlu0 %v3602, 64
      %v5102 = vpop.permute.xlu0 %5101
      %5103 = vrot.lane.b32.xlu0 %v3607, 64
      %v5104 = vpop.permute.xlu0 %5103
      %5105 = vrot.lane.b32.xlu0 %v3701, 64
      %v5106 = vpop.permute.xlu0 %5105
      %5107 = vrot.lane.b32.xlu0 %v3706, 64
      %v5108 = vpop.permute.xlu0 %5107
      %5109 = vrot.lane.b32.xlu0 %v3711, 64
      %v5110 = vpop.permute.xlu0 %5109
      %5111 = vrot.lane.b32.xlu0 %v3716, 64
      %v5112 = vpop.permute.xlu0 %5111
      %5113 = vrot.lane.b32.xlu0 %v3810, 64
      %v5114 = vpop.permute.xlu0 %5113
      %5115 = vrot.lane.b32.xlu0 %v3815, 64
      %v5116 = vpop.permute.xlu0 %5115
      %5117 = vrot.lane.b32.xlu0 %v3820, 64
      %v5118 = vpop.permute.xlu0 %5117
      %5119 = vrot.lane.b32.xlu0 %v3825, 64
      %v5120 = vpop.permute.xlu0 %5119
      %5121 = vrot.lane.b32.xlu0 %v3919, 64
      %v5122 = vpop.permute.xlu0 %5121
      %5123 = vrot.lane.b32.xlu0 %v3924, 64
      %v5124 = vpop.permute.xlu0 %5123
      %5125 = vrot.lane.b32.xlu0 %v3929, 64
      %v5126 = vpop.permute.xlu0 %5125
      %5127 = vrot.lane.b32.xlu0 %v3934, 64
      %v5128 = vpop.permute.xlu0 %5127
      %5161 = vrot.lane.b32.xlu0 %v4672, 96
      %v5162 = vpop.permute.xlu0 %5161
      %5163 = vrot.lane.b32.xlu0 %v4677, 96
      %v5164 = vpop.permute.xlu0 %5163
      %5165 = vrot.lane.b32.xlu0 %v4682, 96
      %v5166 = vpop.permute.xlu0 %5165
      %5167 = vrot.lane.b32.xlu0 %v4687, 96
      %v5168 = vpop.permute.xlu0 %5167
      %5169 = vrot.lane.b32.xlu0 %v4781, 96
      %v5170 = vpop.permute.xlu0 %5169
      %5171 = vrot.lane.b32.xlu0 %v4786, 96
      %v5172 = vpop.permute.xlu0 %5171
      %5173 = vrot.lane.b32.xlu0 %v4791, 96
      %v5174 = vpop.permute.xlu0 %5173
      %5175 = vrot.lane.b32.xlu0 %v4796, 96
      %v5176 = vpop.permute.xlu0 %5175
      %5177 = vrot.lane.b32.xlu0 %v4890, 96
      %v5178 = vpop.permute.xlu0 %5177
      %5179 = vrot.lane.b32.xlu0 %v4895, 96
      %v5180 = vpop.permute.xlu0 %5179
      %5181 = vrot.lane.b32.xlu0 %v4900, 96
      %v5182 = vpop.permute.xlu0 %5181
      %5183 = vrot.lane.b32.xlu0 %v4905, 96
      %v5184 = vpop.permute.xlu0 %5183
      %5185 = vrot.lane.b32.xlu0 %v4999, 96
      %v5186 = vpop.permute.xlu0 %5185
      %5187 = vrot.lane.b32.xlu0 %v5004, 96
      %v5188 = vpop.permute.xlu0 %5187
      %5189 = vrot.lane.b32.xlu0 %v5009, 96
      %v5190 = vpop.permute.xlu0 %5189
      %5191 = vrot.lane.b32.xlu0 %v5014, 96
      %v5192 = vpop.permute.xlu0 %5191
      %v5209 = vsel %vm760, %v1452, %v5034
      %v5210 = vsel %vm760, %v1457, %v5036
      %v5211 = vsel %vm760, %v1462, %v5038
      %v5212 = vsel %vm760, %v1467, %v5040
      %v5213 = vsel %vm760, %v1549, %v5042
      %v5214 = vsel %vm760, %v1554, %v5044
      %v5215 = vsel %vm760, %v1559, %v5046
      %v5216 = vsel %vm760, %v1564, %v5048
      %v5217 = vsel %vm760, %v1646, %v5050
      %v5218 = vsel %vm760, %v1651, %v5052
      %v5219 = vsel %vm760, %v1656, %v5054
      %v5220 = vsel %vm760, %v1661, %v5056
      %v5221 = vsel %vm760, %v1743, %v5058
      %v5222 = vsel %vm760, %v1748, %v5060
      %v5223 = vsel %vm760, %v1753, %v5062
      %v5224 = vsel %vm760, %v1758, %v5064
      %vm5225 = vcmask 523264
      %v5226 = vsel %vm5225, %v5209, %v5098
      %v5227 = vsel %vm5225, %v5210, %v5100
      %v5228 = vsel %vm5225, %v5211, %v5102
      %v5229 = vsel %vm5225, %v5212, %v5104
      %v5230 = vsel %vm5225, %v5213, %v5106
      %v5231 = vsel %vm5225, %v5214, %v5108
      %v5232 = vsel %vm5225, %v5215, %v5110
      %v5233 = vsel %vm5225, %v5216, %v5112
      %v5234 = vsel %vm5225, %v5217, %v5114
      %v5235 = vsel %vm5225, %v5218, %v5116
      %v5236 = vsel %vm5225, %v5219, %v5118
      %v5237 = vsel %vm5225, %v5220, %v5120
      %v5238 = vsel %vm5225, %v5221, %v5122
      %v5239 = vsel %vm5225, %v5222, %v5124
      %v5240 = vsel %vm5225, %v5223, %v5126
      %v5241 = vsel %vm5225, %v5224, %v5128
      %vm5242 = vcmask 785408
      %v5243 = vsel %vm5242, %v5226, %v5162
      %v5244 = vsel %vm5242, %v5227, %v5164
      %v5245 = vsel %vm5242, %v5228, %v5166
      %v5246 = vsel %vm5242, %v5229, %v5168
      %v5247 = vsel %vm5242, %v5230, %v5170
      %v5248 = vsel %vm5242, %v5231, %v5172
      %v5249 = vsel %vm5242, %v5232, %v5174
      %v5250 = vsel %vm5242, %v5233, %v5176
      %v5251 = vsel %vm5242, %v5234, %v5178
      %v5252 = vsel %vm5242, %v5235, %v5180
      %v5253 = vsel %vm5242, %v5236, %v5182
      %v5254 = vsel %vm5242, %v5237, %v5184
      %v5255 = vsel %vm5242, %v5238, %v5186
      %v5256 = vsel %vm5242, %v5239, %v5188
      %v5257 = vsel %vm5242, %v5240, %v5190
      %v5258 = vsel %vm5242, %v5241, %v5192
      %v5259 = vld [vmem:[%s6] sm:$0xff]
      %v5260 = vld [vmem:[%s6 + $0x8] sm:$0xff]
      %v5261 = vld [vmem:[%s6 + $0x10] sm:$0xff]
      %v5262 = vld [vmem:[%s6 + $0x18] sm:$0xff]
      %v5263 = vld [vmem:[%s6 + $0x20] sm:$0xff]
      %v5264 = vld [vmem:[%s6 + $0x28] sm:$0xff]
      %v5265 = vld [vmem:[%s6 + $0x30] sm:$0xff]
      %v5266 = vld [vmem:[%s6 + $0x38] sm:$0xff]
      %v5267 = vld [vmem:[%s6 + $0x40] sm:$0xff]
      %v5268 = vld [vmem:[%s6 + $0x48] sm:$0xff]
      %v5269 = vld [vmem:[%s6 + $0x50] sm:$0xff]
      %v5270 = vld [vmem:[%s6 + $0x58] sm:$0xff]
      %v5271 = vld [vmem:[%s6 + $0x60] sm:$0xff]
      %v5272 = vld [vmem:[%s6 + $0x68] sm:$0xff]
      %v5273 = vld [vmem:[%s6 + $0x70] sm:$0xff]
      %v5274 = vld [vmem:[%s6 + $0x78] sm:$0xff]
      %v5275 = vld [vmem:[%s7] sm:$0x1]
      %v5277 = vlaneseq
      %v5278 = vshrl.u32 %v5277, 7
      %v5279 = vsub.s32 0, %v5278
      %v5280 = vrot.slane %v5275, %v5279
      %5282 = vmatprep.subr.mxu0 0.0
      %5283 = vmatpush1.msra.mxu0 %v5274
      %5284 = vmatprep.subr.mxu0 0.0
      %5285 = vmatpush1.msra.mxu0 %v5273
      %5286 = vmatprep.subr.mxu0 0.0
      %5287 = vmatpush1.msra.mxu0 %v5272
      %5288 = vmatprep.subr.mxu0 0.0
      %5289 = vmatpush1.msra.mxu0 %v5271
      %5290 = vmatprep.subr.mxu0 0.0
      %5291 = vmatpush1.msra.mxu0 %v5270
      %5292 = vmatprep.subr.mxu0 0.0
      %5293 = vmatpush1.msra.mxu0 %v5269
      %5294 = vmatprep.subr.mxu0 0.0
      %5295 = vmatpush1.msra.mxu0 %v5268
      %5296 = vmatprep.subr.mxu0 0.0
      %5297 = vmatpush1.msra.mxu0 %v5267
      %5298 = vmatprep.subr.mxu0 0.0
      %5299 = vmatpush1.msra.mxu0 %v5266
      %5300 = vmatprep.subr.mxu0 0.0
      %5301 = vmatpush1.msra.mxu0 %v5265
      %5302 = vmatprep.subr.mxu0 0.0
      %5303 = vmatpush1.msra.mxu0 %v5264
      %5304 = vmatprep.subr.mxu0 0.0
      %5305 = vmatpush1.msra.mxu0 %v5263
      %5306 = vmatprep.subr.mxu0 0.0
      %5307 = vmatpush1.msra.mxu0 %v5262
      %5308 = vmatprep.subr.mxu0 0.0
      %5309 = vmatpush1.msra.mxu0 %v5261
      %5310 = vmatprep.subr.mxu0 0.0
      %5311 = vmatpush1.msra.mxu0 %v5260
      %5312 = vmatprep.subr.mxu0 0.0
      %5313 = vmatpush1.msra.mxu0 %v5259
      %5314 = vmatprep.subr.mxu0 0.0
      %5315 = vmatpush2.msra.mxu0 0.0
      %5316 = vmatprep.subr.mxu0 0.0
      %5317 = vmatpush2.msra.mxu0 0.0
      %5318 = vmatprep.subr.mxu0 0.0
      %5319 = vmatpush2.msra.mxu0 0.0
      %5320 = vmatprep.subr.mxu0 0.0
      %5321 = vmatpush2.msra.mxu0 0.0
      %5322 = vmatprep.subr.mxu0 0.0
      %5323 = vmatpush2.msra.mxu0 0.0
      %5324 = vmatprep.subr.mxu0 0.0
      %5325 = vmatpush2.msra.mxu0 0.0
      %5326 = vmatprep.subr.mxu0 0.0
      %5327 = vmatpush2.msra.mxu0 0.0
      %5328 = vmatprep.subr.mxu0 0.0
      %5329 = vmatpush2.msra.mxu0 0.0
      %5330 = vmatprep.subr.mxu0 0.0
      %5331 = vmatpush2.msra.mxu0 0.0
      %5332 = vmatprep.subr.mxu0 0.0
      %5333 = vmatpush2.msra.mxu0 0.0
      %5334 = vmatprep.subr.mxu0 0.0
      %5335 = vmatpush2.msra.mxu0 0.0
      %5336 = vmatprep.subr.mxu0 0.0
      %5337 = vmatpush2.msra.mxu0 0.0
      %5338 = vmatprep.subr.mxu0 0.0
      %5339 = vmatpush2.msra.mxu0 0.0
      %5340 = vmatprep.subr.mxu0 0.0
      %5341 = vmatpush2.msra.mxu0 0.0
      %5342 = vmatprep.subr.mxu0 0.0
      %5343 = vmatpush2.msra.mxu0 0.0
      %5344 = vmatprep.subr.mxu0 0.0
      %5345 = vmatpush2.msra.mxu0 0.0
      %5346 = vmatprep.mubr.f32.mxu0 0.0
      %5347 = vmatmul.mubr.f32.gmra.mxu0 %v5243
      %v5348 = vpop.f32.mrf.mxu0
      %v5349 = vadd.f32 %v5280, %v5348
      %v5350 = vpop.f32.mrf.mxu0
      %5351 = vmatprep.mubr.f32.mxu0 0.0
      %5352 = vmatmul.mubr.f32.gmra.mxu0 %v5244
      %v5353 = vpop.f32.mrf.mxu0
      %v5354 = vadd.f32 %v5280, %v5353
      %v5355 = vpop.f32.mrf.mxu0
      %5356 = vmatprep.mubr.f32.mxu0 0.0
      %5357 = vmatmul.mubr.f32.gmra.mxu0 %v5245
      %v5358 = vpop.f32.mrf.mxu0
      %v5359 = vadd.f32 %v5280, %v5358
      %v5360 = vpop.f32.mrf.mxu0
      %5361 = vmatprep.mubr.f32.mxu0 0.0
      %5362 = vmatmul.mubr.f32.gmra.mxu0 %v5246
      %v5363 = vpop.f32.mrf.mxu0
      %v5364 = vadd.f32 %v5280, %v5363
      %v5365 = vpop.f32.mrf.mxu0
      %5366 = vmatprep.mubr.f32.mxu0 0.0
      %5367 = vmatmul.mubr.f32.gmra.mxu0 %v5247
      %v5368 = vpop.f32.mrf.mxu0
      %v5369 = vadd.f32 %v5280, %v5368
      %v5370 = vpop.f32.mrf.mxu0
      %5371 = vmatprep.mubr.f32.mxu0 0.0
      %5372 = vmatmul.mubr.f32.gmra.mxu0 %v5248
      %v5373 = vpop.f32.mrf.mxu0
      %v5374 = vadd.f32 %v5280, %v5373
      %v5375 = vpop.f32.mrf.mxu0
      %5376 = vmatprep.mubr.f32.mxu0 0.0
      %5377 = vmatmul.mubr.f32.gmra.mxu0 %v5249
      %v5378 = vpop.f32.mrf.mxu0
      %v5379 = vadd.f32 %v5280, %v5378
      %v5380 = vpop.f32.mrf.mxu0
      %5381 = vmatprep.mubr.f32.mxu0 0.0
      %5382 = vmatmul.mubr.f32.gmra.mxu0 %v5250
      %v5383 = vpop.f32.mrf.mxu0
      %v5384 = vadd.f32 %v5280, %v5383
      %v5385 = vpop.f32.mrf.mxu0
      %5386 = vmatprep.mubr.f32.mxu0 0.0
      %5387 = vmatmul.mubr.f32.gmra.mxu0 %v5251
      %v5388 = vpop.f32.mrf.mxu0
      %v5389 = vadd.f32 %v5280, %v5388
      %v5390 = vpop.f32.mrf.mxu0
      %5391 = vmatprep.mubr.f32.mxu0 0.0
      %5392 = vmatmul.mubr.f32.gmra.mxu0 %v5252
      %v5393 = vpop.f32.mrf.mxu0
      %v5394 = vadd.f32 %v5280, %v5393
      %v5395 = vpop.f32.mrf.mxu0
      %5396 = vmatprep.mubr.f32.mxu0 0.0
      %5397 = vmatmul.mubr.f32.gmra.mxu0 %v5253
      %v5398 = vpop.f32.mrf.mxu0
      %v5399 = vadd.f32 %v5280, %v5398
      %v5400 = vpop.f32.mrf.mxu0
      %5401 = vmatprep.mubr.f32.mxu0 0.0
      %5402 = vmatmul.mubr.f32.gmra.mxu0 %v5254
      %v5403 = vpop.f32.mrf.mxu0
      %v5404 = vadd.f32 %v5280, %v5403
      %v5405 = vpop.f32.mrf.mxu0
      %5406 = vmatprep.mubr.f32.mxu0 0.0
      %5407 = vmatmul.mubr.f32.gmra.mxu0 %v5255
      %v5408 = vpop.f32.mrf.mxu0
      %v5409 = vadd.f32 %v5280, %v5408
      %v5410 = vpop.f32.mrf.mxu0
      %5411 = vmatprep.mubr.f32.mxu0 0.0
      %5412 = vmatmul.mubr.f32.gmra.mxu0 %v5256
      %v5413 = vpop.f32.mrf.mxu0
      %v5414 = vadd.f32 %v5280, %v5413
      %v5415 = vpop.f32.mrf.mxu0
      %5416 = vmatprep.mubr.f32.mxu0 0.0
      %5417 = vmatmul.mubr.f32.gmra.mxu0 %v5257
      %v5418 = vpop.f32.mrf.mxu0
      %v5419 = vadd.f32 %v5280, %v5418
      %v5420 = vpop.f32.mrf.mxu0
      %5421 = vmatprep.mubr.f32.mxu0 0.0
      %5422 = vmatmul.mubr.f32.gmra.mxu0 %v5258
      %v5423 = vpop.f32.mrf.mxu0
      %v5424 = vadd.f32 %v5280, %v5423
      %v5425 = vpop.f32.mrf.mxu0
      %5426 = vdwg.mxu0
      %v5427 = vadd.f32 %v339, %v5349
      %v5428 = vadd.f32 %v340, %v5354
      %v5429 = vadd.f32 %v341, %v5359
      %v5430 = vadd.f32 %v342, %v5364
      %v5431 = vadd.f32 %v343, %v5369
      %v5432 = vadd.f32 %v344, %v5374
      %v5433 = vadd.f32 %v345, %v5379
      %v5434 = vadd.f32 %v346, %v5384
      %v5435 = vadd.f32 %v347, %v5389
      %v5436 = vadd.f32 %v348, %v5394
      %v5437 = vadd.f32 %v349, %v5399
      %v5438 = vadd.f32 %v350, %v5404
      %v5439 = vadd.f32 %v351, %v5409
      %v5440 = vadd.f32 %v352, %v5414
      %v5441 = vadd.f32 %v353, %v5419
      %v5442 = vadd.f32 %v354, %v5424
      %5443 = vst [vmem:[%s337] sm:$0xff] %v5427
      %5444 = vst [vmem:[%s337 + $0x8] sm:$0xff] %v5428
      %5445 = vst [vmem:[%s337 + $0x10] sm:$0xff] %v5429
      %5446 = vst [vmem:[%s337 + $0x18] sm:$0xff] %v5430
      %5447 = vst [vmem:[%s337 + $0x20] sm:$0xff] %v5431
      %5448 = vst [vmem:[%s337 + $0x28] sm:$0xff] %v5432
      %5449 = vst [vmem:[%s337 + $0x30] sm:$0xff] %v5433
      %5450 = vst [vmem:[%s337 + $0x38] sm:$0xff] %v5434
      %5451 = vst [vmem:[%s337 + $0x40] sm:$0xff] %v5435
      %5452 = vst [vmem:[%s337 + $0x48] sm:$0xff] %v5436
      %5453 = vst [vmem:[%s337 + $0x50] sm:$0xff] %v5437
      %5454 = vst [vmem:[%s337 + $0x58] sm:$0xff] %v5438
      %5455 = vst [vmem:[%s337 + $0x60] sm:$0xff] %v5439
      %5456 = vst [vmem:[%s337 + $0x68] sm:$0xff] %v5440
      %5457 = vst [vmem:[%s337 + $0x70] sm:$0xff] %v5441
      %5458 = vst [vmem:[%s337 + $0x78] sm:$0xff] %v5442
      %s5459 = smul.u32 4, %s19
      %p5460 = scmp.lt.s32.totalorder %s5459, 7
      %s5461 = scalar_select %p5460, %s5459, 7
      %s5462 = smul.addr %s5461, 4
      %s5463 = smul.addr %s5462, 8
      %s5464 = scalar_lea.vmem %s8, %s5463
      // Predicated region
      $region53: #{temporal_attention_forward.2} parent=51 // pred_check
        %p5465 = pneg %p215
      $region54: #{temporal_attention_forward.2} parent=51 // pred_check_branch
        %5467 = sbr.rel (%p5465) target = $region56
      $region55: #{temporal_attention_forward.2} parent=51 // pred_region
        %s5468 = smul.u32 4, %s19
      $region56: #{temporal_attention_forward.2} parent=51 // pred_fallthru
        _
    $region52: #{temporal_attention_forward.2} parent=5 // pred_fallthru
      _
    %p5469 = scmp.le.s32.totalorder 2, %s14
    // Predicated region
    $region57: #{temporal_attention_forward.2} parent=5 // pred_check
      %p5470 = pneg %p5469
    $region58: #{temporal_attention_forward.2} parent=5 // pred_check_branch
      %5472 = sbr.rel (%p5470) target = $region60
    $region59: #{temporal_attention_forward.2} parent=5 // pred_region
      %s5473 = ssub.s32 %s14, 2
      // Predicated region
      $region61: #{temporal_attention_forward.2} parent=59 // pred_check
        %p5474 = pneg %p221
      $region62: #{temporal_attention_forward.2} parent=59 // pred_check_branch
        %5476 = sbr.rel (%p5474) target = $region64
      $region63: #{temporal_attention_forward.2} parent=59 // pred_region
        %s5477 = smul.u32 4, %s20
        %p5478 = scmp.lt.s32.totalorder %s5477, 7
        %s5479 = scalar_select %p5478, %s5477, 7
        %s5480 = smul.addr %s5479, 4
        %s5481 = smul.addr %s5480, 8
        %s5482 = scalar_lea.vmem %s8, %s5481
      $region64: #{temporal_attention_forward.2} parent=59 // pred_fallthru
        _
    $region60: #{temporal_attention_forward.2} parent=5 // pred_fallthru
      _
  $region6: #{temporal_attention_forward.2} parent=0 // loop_footer
    %s18 = sadd.s32 1, %s14
  $region7: #{temporal_attention_forward.2} parent=0 // loop_footer_branch
    %13 = sbr.rel target = $region3
  $region8: #{temporal_attention_forward.2} parent=0 // loop_exit
    _

</llo_original>
